<compile_context>
chip_gen: v6e
topology: v6e:2x2x1
jax: 0.10.0
libtpu: 0.0.40
codegen_flags: <defaults>
</compile_context>

<pallas_src>
import math

import jax
import jax.numpy as jnp
from jax.experimental import pallas as pl
from jax.experimental.pallas import tpu as pltpu

HIDDEN = 1024
NUM_HEADS = 8
HEAD_DIM = HIDDEN // NUM_HEADS      # 128
QKV = 3 * HIDDEN                    # fused Q|K|V column width


def qkv_attn_kernel(x_ref, w_ref, b_ref, o_ref):
    # ---- fused QKV projection: single bf16 MXU matmul with f32 accumulation
    x_bf16 = x_ref[...].astype(jnp.bfloat16)                     # (N, H)
    qkv = jnp.dot(x_bf16, w_ref[...],
                  preferred_element_type=jnp.float32)            # (N, 3H) f32
    qkv = qkv + b_ref[...]                                       # (1, 3H) bias bcast

    q = qkv[:, 0 * HIDDEN:1 * HIDDEN]
    k = qkv[:, 1 * HIDDEN:2 * HIDDEN]
    v = qkv[:, 2 * HIDDEN:3 * HIDDEN]

    scale = -1.0 / math.sqrt(HEAD_DIM)   # NEGATIVE scale, as in the module

    # ---- per-position attention over the head axis ------------------------
    for h in range(NUM_HEADS):
        qh = q[:, h * HEAD_DIM:(h + 1) * HEAD_DIM]               # (N, 128)
        # scores: s[n, g] = <q[n,h,:], k[n,g,:]> * scale
        s = [
            jnp.sum(qh * k[:, g * HEAD_DIM:(g + 1) * HEAD_DIM],
                    axis=-1, keepdims=True) * scale              # (N, 1)
            for g in range(NUM_HEADS)
        ]
        m = s[0]
        for g in range(1, NUM_HEADS):
            m = jnp.maximum(m, s[g])
        e = [jnp.exp(sg - m) for sg in s]
        denom = e[0]
        for g in range(1, NUM_HEADS):
            denom = denom + e[g]
        inv = pl.reciprocal(denom, approx=True)                  # EUP slot

        acc = (e[0] * inv) * v[:, 0:HEAD_DIM]
        for g in range(1, NUM_HEADS):
            acc = acc + (e[g] * inv) * v[:, g * HEAD_DIM:(g + 1) * HEAD_DIM]

        # direct 128-lane-aligned per-head store (unmasked vst, no concat)
        o_ref[:, h * HEAD_DIM:(h + 1) * HEAD_DIM] = acc.astype(o_ref.dtype)


def prepare_weights(wq, wk, wv, bq, bk, bv):
    """Build the fused bf16 weight / f32 bias ONCE (weights are static)."""
    w_qkv = jnp.concatenate([wq, wk, wv], axis=1).astype(jnp.bfloat16)  # (H, 3H)
    b_qkv = jnp.concatenate([bq, bk, bv]).reshape(1, QKV).astype(jnp.float32)
    return w_qkv, b_qkv


def model_forward(x, w_qkv, b_qkv):
    """x: (B, S, HIDDEN) f32.  w_qkv: (H, 3H) bf16.  b_qkv: (1, 3H) f32."""
    B, S, H = x.shape
    assert H == HIDDEN
    N = B * S
    assert N % 8 == 0, "B*S must be a multiple of the 8-sublane tile"

    xf = x.reshape(N, H)

    cost = pl.CostEstimate(
        flops=2 * N * H * QKV,
        transcendentals=N * NUM_HEADS * (NUM_HEADS + 1),
        bytes_accessed=w_qkv.size * 2 + xf.size * 4 + b_qkv.size * 4 + N * H * 4,
    )

    out = pl.pallas_call(
        qkv_attn_kernel,
        out_shape=jax.ShapeDtypeStruct((N, H), x.dtype),
        grid_spec=pltpu.PrefetchScalarGridSpec(
            num_scalar_prefetch=0,
            grid=(1,),
            in_specs=[
                pl.BlockSpec((N, H), lambda i: (0, 0)),      # x, resident
                pl.BlockSpec((H, QKV), lambda i: (0, 0)),    # fused QKV weight
                pl.BlockSpec((1, QKV), lambda i: (0, 0)),    # fused bias
            ],
            out_specs=pl.BlockSpec((N, H), lambda i: (0, 0)),
        ),
        compiler_params=pltpu.CompilerParams(
            dimension_semantics=("arbitrary",),
            vmem_limit_bytes=32 * 1024 * 1024,
        ),
        cost_estimate=cost,
    )(xf, w_qkv, b_qkv)

    # TODO(synk): the source module reshapes the (B,S,heads,head_dim) output to
    # (B, S, head_dim), which is shape-incompatible and would raise in PyTorch;
    # we merge heads back to hidden_dim (the SDPA intent).
    return out.reshape(B, S, H)


def ref_forward(x, wq, wk, wv, bq, bk, bv):
    """Pure-JAX f32 reference mirroring the torch module."""
    B, S, H = x.shape
    q = x @ wq + bq
    k = x @ wk + bk
    v = x @ wv + bv
    q = q.reshape(B, S, NUM_HEADS, HEAD_DIM)
    k = k.reshape(B, S, NUM_HEADS, HEAD_DIM)
    v = v.reshape(B, S, NUM_HEADS, HEAD_DIM)
    s = jnp.einsum("bshd,bsgd->bshg", q, k) / (-math.sqrt(HEAD_DIM))
    p = jax.nn.softmax(s, axis=-1)
    o = jnp.einsum("bshg,bsgd->bshd", p, v)
    return o.reshape(B, S, H)


if __name__ == "__main__":
    key = jax.random.PRNGKey(0)
    kx, kwq, kwk, kwv, kbq, kbk, kbv = jax.random.split(key, 7)

    # Input matches the module: x1 = torch.randn(8, 1, hidden_dim)
    B, S = 8, 1
    x = jax.random.normal(kx, (B, S, HIDDEN), dtype=jnp.float32)

    # Deterministic nn.Linear-style init: U(-1/sqrt(in), 1/sqrt(in)),
    # stored directly in (in, out) layout so both paths compute x @ W + b.
    bound = 1.0 / math.sqrt(HIDDEN)
    init = lambda k, shape: jax.random.uniform(
        k, shape, dtype=jnp.float32, minval=-bound, maxval=bound
    )
    wq, wk, wv = (
        init(kwq, (HIDDEN, HIDDEN)),
        init(kwk, (HIDDEN, HIDDEN)),
        init(kwv, (HIDDEN, HIDDEN)),
    )
    bq, bk, bv = init(kbq, (HIDDEN,)), init(kbk, (HIDDEN,)), init(kbv, (HIDDEN,))

    # Fused bf16 weights built once, outside the per-call path.
    w_qkv, b_qkv = prepare_weights(wq, wk, wv, bq, bk, bv)
    w_qkv, b_qkv = jax.block_until_ready((w_qkv, b_qkv))

    out = jax.block_until_ready(model_forward(x, w_qkv, b_qkv))
    ref = jax.block_until_ready(ref_forward(x, wq, wk, wv, bq, bk, bv))

    assert out.shape == (B, S, HIDDEN)
    # bf16 weight/activation storage (f32 accumulation) -> relaxed tolerance.
    assert jnp.allclose(out, ref, atol=2e-2, rtol=2e-2), float(
        jnp.max(jnp.abs(out - ref))
    )

    print("KERNEL_OK")
</pallas_src>

<mosaic_0001>
module attributes {stable_mosaic.version = 11 : i64} {
  func.func @qkv_attn_kernel(%arg0: i32, %arg1: memref<8x1024xf32, #tpu.memory_space<vmem>>, %arg2: memref<1024x3072xbf16, #tpu.memory_space<vmem>>, %arg3: memref<1x3072xf32, #tpu.memory_space<vmem>>, %arg4: memref<8x1024xf32, #tpu.memory_space<vmem>>) attributes {dimension_semantics = [#tpu.dimension_semantics<arbitrary>], iteration_bounds = array<i64: 1>, scalar_prefetch = 0 : i64, scratch_operands = 0 : i64, tpu.core_type = #tpu.core_type<tc>, window_params = [{pipeline_mode = #tpu.pipeline_mode<synchronous>, transform_indices = @transform_0, window_bounds = array<i64: 8, 1024>}, {pipeline_mode = #tpu.pipeline_mode<synchronous>, transform_indices = @transform_1, window_bounds = array<i64: 1024, 3072>}, {pipeline_mode = #tpu.pipeline_mode<synchronous>, transform_indices = @transform_2, window_bounds = array<i64: 1, 3072>}, {pipeline_mode = #tpu.pipeline_mode<synchronous>, transform_indices = @transform_3, window_bounds = array<i64: 8, 1024>}]} {
    %c0 = arith.constant 0 : index
    %c0_0 = arith.constant 0 : index
    %0 = vector.load %arg1[%c0, %c0_0] : memref<8x1024xf32, #tpu.memory_space<vmem>>, vector<8x1024xf32>
    %1 = arith.truncf %0 : vector<8x1024xf32> to vector<8x1024xbf16>
    %c0_1 = arith.constant 0 : index
    %c0_2 = arith.constant 0 : index
    %2 = vector.load %arg2[%c0_1, %c0_2] : memref<1024x3072xbf16, #tpu.memory_space<vmem>>, vector<1024x3072xbf16>
    %cst = arith.constant dense<0.000000e+00> : vector<8x3072xf32>
    %3 = tpu.matmul %1, %2, %cst {dimension_numbers = #tpu.dot_dimension_numbers<[1], [0], [0], [1], [0, 0, 1, 1], [], []>} : vector<8x1024xbf16>, vector<1024x3072xbf16>, vector<8x3072xf32> -> vector<8x3072xf32>
    %c0_3 = arith.constant 0 : index
    %c0_4 = arith.constant 0 : index
    %4 = vector.load %arg3[%c0_3, %c0_4] : memref<1x3072xf32, #tpu.memory_space<vmem>>, vector<1x3072xf32>
    %5 = vector.broadcast %4 : vector<1x3072xf32> to vector<8x3072xf32>
    %6 = arith.addf %3, %5 : vector<8x3072xf32>
    %7 = vector.extract_strided_slice %6 {offsets = [0, 0], sizes = [8, 1024], strides = [1, 1]} : vector<8x3072xf32> to vector<8x1024xf32>
    %8 = vector.extract_strided_slice %6 {offsets = [0, 1024], sizes = [8, 1024], strides = [1, 1]} : vector<8x3072xf32> to vector<8x1024xf32>
    %9 = vector.extract_strided_slice %6 {offsets = [0, 2048], sizes = [8, 1024], strides = [1, 1]} : vector<8x3072xf32> to vector<8x1024xf32>
    %10 = vector.extract_strided_slice %7 {offsets = [0, 0], sizes = [8, 128], strides = [1, 1]} : vector<8x1024xf32> to vector<8x128xf32>
    %11 = vector.extract_strided_slice %8 {offsets = [0, 0], sizes = [8, 128], strides = [1, 1]} : vector<8x1024xf32> to vector<8x128xf32>
    %12 = arith.mulf %10, %11 : vector<8x128xf32>
    %cst_5 = arith.constant dense<0.000000e+00> : vector<8xf32>
    %13 = vector.multi_reduction <add>, %12, %cst_5 [1] : vector<8x128xf32> to vector<8xf32>
    %14 = vector.shape_cast %13 : vector<8xf32> to vector<8x1xf32>
    %cst_6 = arith.constant -0.0883883461 : f32
    %15 = vector.broadcast %cst_6 : f32 to vector<8x1xf32>
    %16 = arith.mulf %14, %15 : vector<8x1xf32>
    %17 = vector.extract_strided_slice %8 {offsets = [0, 128], sizes = [8, 128], strides = [1, 1]} : vector<8x1024xf32> to vector<8x128xf32>
    %18 = arith.mulf %10, %17 : vector<8x128xf32>
    %cst_7 = arith.constant dense<0.000000e+00> : vector<8xf32>
    %19 = vector.multi_reduction <add>, %18, %cst_7 [1] : vector<8x128xf32> to vector<8xf32>
    %20 = vector.shape_cast %19 : vector<8xf32> to vector<8x1xf32>
    %cst_8 = arith.constant -0.0883883461 : f32
    %21 = vector.broadcast %cst_8 : f32 to vector<8x1xf32>
    %22 = arith.mulf %20, %21 : vector<8x1xf32>
    %23 = vector.extract_strided_slice %8 {offsets = [0, 256], sizes = [8, 128], strides = [1, 1]} : vector<8x1024xf32> to vector<8x128xf32>
    %24 = arith.mulf %10, %23 : vector<8x128xf32>
    %cst_9 = arith.constant dense<0.000000e+00> : vector<8xf32>
    %25 = vector.multi_reduction <add>, %24, %cst_9 [1] : vector<8x128xf32> to vector<8xf32>
    %26 = vector.shape_cast %25 : vector<8xf32> to vector<8x1xf32>
    %cst_10 = arith.constant -0.0883883461 : f32
    %27 = vector.broadcast %cst_10 : f32 to vector<8x1xf32>
    %28 = arith.mulf %26, %27 : vector<8x1xf32>
    %29 = vector.extract_strided_slice %8 {offsets = [0, 384], sizes = [8, 128], strides = [1, 1]} : vector<8x1024xf32> to vector<8x128xf32>
    %30 = arith.mulf %10, %29 : vector<8x128xf32>
    %cst_11 = arith.constant dense<0.000000e+00> : vector<8xf32>
    %31 = vector.multi_reduction <add>, %30, %cst_11 [1] : vector<8x128xf32> to vector<8xf32>
    %32 = vector.shape_cast %31 : vector<8xf32> to vector<8x1xf32>
    %cst_12 = arith.constant -0.0883883461 : f32
    %33 = vector.broadcast %cst_12 : f32 to vector<8x1xf32>
    %34 = arith.mulf %32, %33 : vector<8x1xf32>
    %35 = vector.extract_strided_slice %8 {offsets = [0, 512], sizes = [8, 128], strides = [1, 1]} : vector<8x1024xf32> to vector<8x128xf32>
    %36 = arith.mulf %10, %35 : vector<8x128xf32>
    %cst_13 = arith.constant dense<0.000000e+00> : vector<8xf32>
    %37 = vector.multi_reduction <add>, %36, %cst_13 [1] : vector<8x128xf32> to vector<8xf32>
    %38 = vector.shape_cast %37 : vector<8xf32> to vector<8x1xf32>
    %cst_14 = arith.constant -0.0883883461 : f32
    %39 = vector.broadcast %cst_14 : f32 to vector<8x1xf32>
    %40 = arith.mulf %38, %39 : vector<8x1xf32>
    %41 = vector.extract_strided_slice %8 {offsets = [0, 640], sizes = [8, 128], strides = [1, 1]} : vector<8x1024xf32> to vector<8x128xf32>
    %42 = arith.mulf %10, %41 : vector<8x128xf32>
    %cst_15 = arith.constant dense<0.000000e+00> : vector<8xf32>
    %43 = vector.multi_reduction <add>, %42, %cst_15 [1] : vector<8x128xf32> to vector<8xf32>
    %44 = vector.shape_cast %43 : vector<8xf32> to vector<8x1xf32>
    %cst_16 = arith.constant -0.0883883461 : f32
    %45 = vector.broadcast %cst_16 : f32 to vector<8x1xf32>
    %46 = arith.mulf %44, %45 : vector<8x1xf32>
    %47 = vector.extract_strided_slice %8 {offsets = [0, 768], sizes = [8, 128], strides = [1, 1]} : vector<8x1024xf32> to vector<8x128xf32>
    %48 = arith.mulf %10, %47 : vector<8x128xf32>
    %cst_17 = arith.constant dense<0.000000e+00> : vector<8xf32>
    %49 = vector.multi_reduction <add>, %48, %cst_17 [1] : vector<8x128xf32> to vector<8xf32>
    %50 = vector.shape_cast %49 : vector<8xf32> to vector<8x1xf32>
    %cst_18 = arith.constant -0.0883883461 : f32
    %51 = vector.broadcast %cst_18 : f32 to vector<8x1xf32>
    %52 = arith.mulf %50, %51 : vector<8x1xf32>
    %53 = vector.extract_strided_slice %8 {offsets = [0, 896], sizes = [8, 128], strides = [1, 1]} : vector<8x1024xf32> to vector<8x128xf32>
    %54 = arith.mulf %10, %53 : vector<8x128xf32>
    %cst_19 = arith.constant dense<0.000000e+00> : vector<8xf32>
    %55 = vector.multi_reduction <add>, %54, %cst_19 [1] : vector<8x128xf32> to vector<8xf32>
    %56 = vector.shape_cast %55 : vector<8xf32> to vector<8x1xf32>
    %cst_20 = arith.constant -0.0883883461 : f32
    %57 = vector.broadcast %cst_20 : f32 to vector<8x1xf32>
    %58 = arith.mulf %56, %57 : vector<8x1xf32>
    %59 = arith.maximumf %16, %22 : vector<8x1xf32>
    %60 = arith.maximumf %59, %28 : vector<8x1xf32>
    %61 = arith.maximumf %60, %34 : vector<8x1xf32>
    %62 = arith.maximumf %61, %40 : vector<8x1xf32>
    %63 = arith.maximumf %62, %46 : vector<8x1xf32>
    %64 = arith.maximumf %63, %52 : vector<8x1xf32>
    %65 = arith.maximumf %64, %58 : vector<8x1xf32>
    %66 = arith.subf %16, %65 : vector<8x1xf32>
    %67 = math.exp %66 : vector<8x1xf32>
    %68 = arith.subf %22, %65 : vector<8x1xf32>
    %69 = math.exp %68 : vector<8x1xf32>
    %70 = arith.subf %28, %65 : vector<8x1xf32>
    %71 = math.exp %70 : vector<8x1xf32>
    %72 = arith.subf %34, %65 : vector<8x1xf32>
    %73 = math.exp %72 : vector<8x1xf32>
    %74 = arith.subf %40, %65 : vector<8x1xf32>
    %75 = math.exp %74 : vector<8x1xf32>
    %76 = arith.subf %46, %65 : vector<8x1xf32>
    %77 = math.exp %76 : vector<8x1xf32>
    %78 = arith.subf %52, %65 : vector<8x1xf32>
    %79 = math.exp %78 : vector<8x1xf32>
    %80 = arith.subf %58, %65 : vector<8x1xf32>
    %81 = math.exp %80 : vector<8x1xf32>
    %82 = arith.addf %67, %69 : vector<8x1xf32>
    %83 = arith.addf %82, %71 : vector<8x1xf32>
    %84 = arith.addf %83, %73 : vector<8x1xf32>
    %85 = arith.addf %84, %75 : vector<8x1xf32>
    %86 = arith.addf %85, %77 : vector<8x1xf32>
    %87 = arith.addf %86, %79 : vector<8x1xf32>
    %88 = arith.addf %87, %81 : vector<8x1xf32>
    %89 = tpu.reciprocal %88 {approx = true} : vector<8x1xf32> -> vector<8x1xf32>
    %90 = arith.mulf %67, %89 : vector<8x1xf32>
    %91 = vector.extract_strided_slice %9 {offsets = [0, 0], sizes = [8, 128], strides = [1, 1]} : vector<8x1024xf32> to vector<8x128xf32>
    %92 = vector.broadcast %90 : vector<8x1xf32> to vector<8x128xf32>
    %93 = arith.mulf %92, %91 : vector<8x128xf32>
    %94 = arith.mulf %69, %89 : vector<8x1xf32>
    %95 = vector.extract_strided_slice %9 {offsets = [0, 128], sizes = [8, 128], strides = [1, 1]} : vector<8x1024xf32> to vector<8x128xf32>
    %96 = vector.broadcast %94 : vector<8x1xf32> to vector<8x128xf32>
    %97 = arith.mulf %96, %95 : vector<8x128xf32>
    %98 = arith.addf %93, %97 : vector<8x128xf32>
    %99 = arith.mulf %71, %89 : vector<8x1xf32>
    %100 = vector.extract_strided_slice %9 {offsets = [0, 256], sizes = [8, 128], strides = [1, 1]} : vector<8x1024xf32> to vector<8x128xf32>
    %101 = vector.broadcast %99 : vector<8x1xf32> to vector<8x128xf32>
    %102 = arith.mulf %101, %100 : vector<8x128xf32>
    %103 = arith.addf %98, %102 : vector<8x128xf32>
    %104 = arith.mulf %73, %89 : vector<8x1xf32>
    %105 = vector.extract_strided_slice %9 {offsets = [0, 384], sizes = [8, 128], strides = [1, 1]} : vector<8x1024xf32> to vector<8x128xf32>
    %106 = vector.broadcast %104 : vector<8x1xf32> to vector<8x128xf32>
    %107 = arith.mulf %106, %105 : vector<8x128xf32>
    %108 = arith.addf %103, %107 : vector<8x128xf32>
    %109 = arith.mulf %75, %89 : vector<8x1xf32>
    %110 = vector.extract_strided_slice %9 {offsets = [0, 512], sizes = [8, 128], strides = [1, 1]} : vector<8x1024xf32> to vector<8x128xf32>
    %111 = vector.broadcast %109 : vector<8x1xf32> to vector<8x128xf32>
    %112 = arith.mulf %111, %110 : vector<8x128xf32>
    %113 = arith.addf %108, %112 : vector<8x128xf32>
    %114 = arith.mulf %77, %89 : vector<8x1xf32>
    %115 = vector.extract_strided_slice %9 {offsets = [0, 640], sizes = [8, 128], strides = [1, 1]} : vector<8x1024xf32> to vector<8x128xf32>
    %116 = vector.broadcast %114 : vector<8x1xf32> to vector<8x128xf32>
    %117 = arith.mulf %116, %115 : vector<8x128xf32>
    %118 = arith.addf %113, %117 : vector<8x128xf32>
    %119 = arith.mulf %79, %89 : vector<8x1xf32>
    %120 = vector.extract_strided_slice %9 {offsets = [0, 768], sizes = [8, 128], strides = [1, 1]} : vector<8x1024xf32> to vector<8x128xf32>
    %121 = vector.broadcast %119 : vector<8x1xf32> to vector<8x128xf32>
    %122 = arith.mulf %121, %120 : vector<8x128xf32>
    %123 = arith.addf %118, %122 : vector<8x128xf32>
    %124 = arith.mulf %81, %89 : vector<8x1xf32>
    %125 = vector.extract_strided_slice %9 {offsets = [0, 896], sizes = [8, 128], strides = [1, 1]} : vector<8x1024xf32> to vector<8x128xf32>
    %126 = vector.broadcast %124 : vector<8x1xf32> to vector<8x128xf32>
    %127 = arith.mulf %126, %125 : vector<8x128xf32>
    %128 = arith.addf %123, %127 : vector<8x128xf32>
    %c0_21 = arith.constant 0 : index
    %c0_22 = arith.constant 0 : index
    %129 = vector.load %arg4[%c0_21, %c0_22] : memref<8x1024xf32, #tpu.memory_space<vmem>>, vector<8x128xf32>
    tpu.vector_store %arg4[%c0_21, %c0_22], %128 {strides = array<i32>} : memref<8x1024xf32, #tpu.memory_space<vmem>>, vector<8x128xf32>,
    %130 = vector.extract_strided_slice %7 {offsets = [0, 128], sizes = [8, 128], strides = [1, 1]} : vector<8x1024xf32> to vector<8x128xf32>
    %131 = vector.extract_strided_slice %8 {offsets = [0, 0], sizes = [8, 128], strides = [1, 1]} : vector<8x1024xf32> to vector<8x128xf32>
    %132 = arith.mulf %130, %131 : vector<8x128xf32>
    %cst_23 = arith.constant dense<0.000000e+00> : vector<8xf32>
    %133 = vector.multi_reduction <add>, %132, %cst_23 [1] : vector<8x128xf32> to vector<8xf32>
    %134 = vector.shape_cast %133 : vector<8xf32> to vector<8x1xf32>
    %cst_24 = arith.constant -0.0883883461 : f32
    %135 = vector.broadcast %cst_24 : f32 to vector<8x1xf32>
    %136 = arith.mulf %134, %135 : vector<8x1xf32>
    %137 = vector.extract_strided_slice %8 {offsets = [0, 128], sizes = [8, 128], strides = [1, 1]} : vector<8x1024xf32> to vector<8x128xf32>
    %138 = arith.mulf %130, %137 : vector<8x128xf32>
    %cst_25 = arith.constant dense<0.000000e+00> : vector<8xf32>
    %139 = vector.multi_reduction <add>, %138, %cst_25 [1] : vector<8x128xf32> to vector<8xf32>
    %140 = vector.shape_cast %139 : vector<8xf32> to vector<8x1xf32>
    %cst_26 = arith.constant -0.0883883461 : f32
    %141 = vector.broadcast %cst_26 : f32 to vector<8x1xf32>
    %142 = arith.mulf %140, %141 : vector<8x1xf32>
    %143 = vector.extract_strided_slice %8 {offsets = [0, 256], sizes = [8, 128], strides = [1, 1]} : vector<8x1024xf32> to vector<8x128xf32>
    %144 = arith.mulf %130, %143 : vector<8x128xf32>
    %cst_27 = arith.constant dense<0.000000e+00> : vector<8xf32>
    %145 = vector.multi_reduction <add>, %144, %cst_27 [1] : vector<8x128xf32> to vector<8xf32>
    %146 = vector.shape_cast %145 : vector<8xf32> to vector<8x1xf32>
    %cst_28 = arith.constant -0.0883883461 : f32
    %147 = vector.broadcast %cst_28 : f32 to vector<8x1xf32>
    %148 = arith.mulf %146, %147 : vector<8x1xf32>
    %149 = vector.extract_strided_slice %8 {offsets = [0, 384], sizes = [8, 128], strides = [1, 1]} : vector<8x1024xf32> to vector<8x128xf32>
    %150 = arith.mulf %130, %149 : vector<8x128xf32>
    %cst_29 = arith.constant dense<0.000000e+00> : vector<8xf32>
    %151 = vector.multi_reduction <add>, %150, %cst_29 [1] : vector<8x128xf32> to vector<8xf32>
    %152 = vector.shape_cast %151 : vector<8xf32> to vector<8x1xf32>
    %cst_30 = arith.constant -0.0883883461 : f32
    %153 = vector.broadcast %cst_30 : f32 to vector<8x1xf32>
    %154 = arith.mulf %152, %153 : vector<8x1xf32>
    %155 = vector.extract_strided_slice %8 {offsets = [0, 512], sizes = [8, 128], strides = [1, 1]} : vector<8x1024xf32> to vector<8x128xf32>
    %156 = arith.mulf %130, %155 : vector<8x128xf32>
    %cst_31 = arith.constant dense<0.000000e+00> : vector<8xf32>
    %157 = vector.multi_reduction <add>, %156, %cst_31 [1] : vector<8x128xf32> to vector<8xf32>
    %158 = vector.shape_cast %157 : vector<8xf32> to vector<8x1xf32>
    %cst_32 = arith.constant -0.0883883461 : f32
    %159 = vector.broadcast %cst_32 : f32 to vector<8x1xf32>
    %160 = arith.mulf %158, %159 : vector<8x1xf32>
    %161 = vector.extract_strided_slice %8 {offsets = [0, 640], sizes = [8, 128], strides = [1, 1]} : vector<8x1024xf32> to vector<8x128xf32>
    %162 = arith.mulf %130, %161 : vector<8x128xf32>
    %cst_33 = arith.constant dense<0.000000e+00> : vector<8xf32>
    %163 = vector.multi_reduction <add>, %162, %cst_33 [1] : vector<8x128xf32> to vector<8xf32>
    %164 = vector.shape_cast %163 : vector<8xf32> to vector<8x1xf32>
    %cst_34 = arith.constant -0.0883883461 : f32
    %165 = vector.broadcast %cst_34 : f32 to vector<8x1xf32>
    %166 = arith.mulf %164, %165 : vector<8x1xf32>
    %167 = vector.extract_strided_slice %8 {offsets = [0, 768], sizes = [8, 128], strides = [1, 1]} : vector<8x1024xf32> to vector<8x128xf32>
    %168 = arith.mulf %130, %167 : vector<8x128xf32>
    %cst_35 = arith.constant dense<0.000000e+00> : vector<8xf32>
    %169 = vector.multi_reduction <add>, %168, %cst_35 [1] : vector<8x128xf32> to vector<8xf32>
    %170 = vector.shape_cast %169 : vector<8xf32> to vector<8x1xf32>
    %cst_36 = arith.constant -0.0883883461 : f32
    %171 = vector.broadcast %cst_36 : f32 to vector<8x1xf32>
    %172 = arith.mulf %170, %171 : vector<8x1xf32>
    %173 = vector.extract_strided_slice %8 {offsets = [0, 896], sizes = [8, 128], strides = [1, 1]} : vector<8x1024xf32> to vector<8x128xf32>
    %174 = arith.mulf %130, %173 : vector<8x128xf32>
    %cst_37 = arith.constant dense<0.000000e+00> : vector<8xf32>
    %175 = vector.multi_reduction <add>, %174, %cst_37 [1] : vector<8x128xf32> to vector<8xf32>
    %176 = vector.shape_cast %175 : vector<8xf32> to vector<8x1xf32>
    %cst_38 = arith.constant -0.0883883461 : f32
    %177 = vector.broadcast %cst_38 : f32 to vector<8x1xf32>
    %178 = arith.mulf %176, %177 : vector<8x1xf32>
    %179 = arith.maximumf %136, %142 : vector<8x1xf32>
    %180 = arith.maximumf %179, %148 : vector<8x1xf32>
    %181 = arith.maximumf %180, %154 : vector<8x1xf32>
    %182 = arith.maximumf %181, %160 : vector<8x1xf32>
    %183 = arith.maximumf %182, %166 : vector<8x1xf32>
    %184 = arith.maximumf %183, %172 : vector<8x1xf32>
    %185 = arith.maximumf %184, %178 : vector<8x1xf32>
    %186 = arith.subf %136, %185 : vector<8x1xf32>
    %187 = math.exp %186 : vector<8x1xf32>
    %188 = arith.subf %142, %185 : vector<8x1xf32>
    %189 = math.exp %188 : vector<8x1xf32>
    %190 = arith.subf %148, %185 : vector<8x1xf32>
    %191 = math.exp %190 : vector<8x1xf32>
    %192 = arith.subf %154, %185 : vector<8x1xf32>
    %193 = math.exp %192 : vector<8x1xf32>
    %194 = arith.subf %160, %185 : vector<8x1xf32>
    %195 = math.exp %194 : vector<8x1xf32>
    %196 = arith.subf %166, %185 : vector<8x1xf32>
    %197 = math.exp %196 : vector<8x1xf32>
    %198 = arith.subf %172, %185 : vector<8x1xf32>
    %199 = math.exp %198 : vector<8x1xf32>
    %200 = arith.subf %178, %185 : vector<8x1xf32>
    %201 = math.exp %200 : vector<8x1xf32>
    %202 = arith.addf %187, %189 : vector<8x1xf32>
    %203 = arith.addf %202, %191 : vector<8x1xf32>
    %204 = arith.addf %203, %193 : vector<8x1xf32>
    %205 = arith.addf %204, %195 : vector<8x1xf32>
    %206 = arith.addf %205, %197 : vector<8x1xf32>
    %207 = arith.addf %206, %199 : vector<8x1xf32>
    %208 = arith.addf %207, %201 : vector<8x1xf32>
    %209 = tpu.reciprocal %208 {approx = true} : vector<8x1xf32> -> vector<8x1xf32>
    %210 = arith.mulf %187, %209 : vector<8x1xf32>
    %211 = vector.extract_strided_slice %9 {offsets = [0, 0], sizes = [8, 128], strides = [1, 1]} : vector<8x1024xf32> to vector<8x128xf32>
    %212 = vector.broadcast %210 : vector<8x1xf32> to vector<8x128xf32>
    %213 = arith.mulf %212, %211 : vector<8x128xf32>
    %214 = arith.mulf %189, %209 : vector<8x1xf32>
    %215 = vector.extract_strided_slice %9 {offsets = [0, 128], sizes = [8, 128], strides = [1, 1]} : vector<8x1024xf32> to vector<8x128xf32>
    %216 = vector.broadcast %214 : vector<8x1xf32> to vector<8x128xf32>
    %217 = arith.mulf %216, %215 : vector<8x128xf32>
    %218 = arith.addf %213, %217 : vector<8x128xf32>
    %219 = arith.mulf %191, %209 : vector<8x1xf32>
    %220 = vector.extract_strided_slice %9 {offsets = [0, 256], sizes = [8, 128], strides = [1, 1]} : vector<8x1024xf32> to vector<8x128xf32>
    %221 = vector.broadcast %219 : vector<8x1xf32> to vector<8x128xf32>
    %222 = arith.mulf %221, %220 : vector<8x128xf32>
    %223 = arith.addf %218, %222 : vector<8x128xf32>
    %224 = arith.mulf %193, %209 : vector<8x1xf32>
    %225 = vector.extract_strided_slice %9 {offsets = [0, 384], sizes = [8, 128], strides = [1, 1]} : vector<8x1024xf32> to vector<8x128xf32>
    %226 = vector.broadcast %224 : vector<8x1xf32> to vector<8x128xf32>
    %227 = arith.mulf %226, %225 : vector<8x128xf32>
    %228 = arith.addf %223, %227 : vector<8x128xf32>
    %229 = arith.mulf %195, %209 : vector<8x1xf32>
    %230 = vector.extract_strided_slice %9 {offsets = [0, 512], sizes = [8, 128], strides = [1, 1]} : vector<8x1024xf32> to vector<8x128xf32>
    %231 = vector.broadcast %229 : vector<8x1xf32> to vector<8x128xf32>
    %232 = arith.mulf %231, %230 : vector<8x128xf32>
    %233 = arith.addf %228, %232 : vector<8x128xf32>
    %234 = arith.mulf %197, %209 : vector<8x1xf32>
    %235 = vector.extract_strided_slice %9 {offsets = [0, 640], sizes = [8, 128], strides = [1, 1]} : vector<8x1024xf32> to vector<8x128xf32>
    %236 = vector.broadcast %234 : vector<8x1xf32> to vector<8x128xf32>
    %237 = arith.mulf %236, %235 : vector<8x128xf32>
    %238 = arith.addf %233, %237 : vector<8x128xf32>
    %239 = arith.mulf %199, %209 : vector<8x1xf32>
    %240 = vector.extract_strided_slice %9 {offsets = [0, 768], sizes = [8, 128], strides = [1, 1]} : vector<8x1024xf32> to vector<8x128xf32>
    %241 = vector.broadcast %239 : vector<8x1xf32> to vector<8x128xf32>
    %242 = arith.mulf %241, %240 : vector<8x128xf32>
    %243 = arith.addf %238, %242 : vector<8x128xf32>
    %244 = arith.mulf %201, %209 : vector<8x1xf32>
    %245 = vector.extract_strided_slice %9 {offsets = [0, 896], sizes = [8, 128], strides = [1, 1]} : vector<8x1024xf32> to vector<8x128xf32>
    %246 = vector.broadcast %244 : vector<8x1xf32> to vector<8x128xf32>
    %247 = arith.mulf %246, %245 : vector<8x128xf32>
    %248 = arith.addf %243, %247 : vector<8x128xf32>
    %c0_39 = arith.constant 0 : index
    %c128 = arith.constant 128 : index
    %249 = vector.load %arg4[%c0_39, %c128] : memref<8x1024xf32, #tpu.memory_space<vmem>>, vector<8x128xf32>
    tpu.vector_store %arg4[%c0_39, %c128], %248 {strides = array<i32>} : memref<8x1024xf32, #tpu.memory_space<vmem>>, vector<8x128xf32>,
    %250 = vector.extract_strided_slice %7 {offsets = [0, 256], sizes = [8, 128], strides = [1, 1]} : vector<8x1024xf32> to vector<8x128xf32>
    %251 = vector.extract_strided_slice %8 {offsets = [0, 0], sizes = [8, 128], strides = [1, 1]} : vector<8x1024xf32> to vector<8x128xf32>
    %252 = arith.mulf %250, %251 : vector<8x128xf32>
    %cst_40 = arith.constant dense<0.000000e+00> : vector<8xf32>
    %253 = vector.multi_reduction <add>, %252, %cst_40 [1] : vector<8x128xf32> to vector<8xf32>
    %254 = vector.shape_cast %253 : vector<8xf32> to vector<8x1xf32>
    %cst_41 = arith.constant -0.0883883461 : f32
    %255 = vector.broadcast %cst_41 : f32 to vector<8x1xf32>
    %256 = arith.mulf %254, %255 : vector<8x1xf32>
    %257 = vector.extract_strided_slice %8 {offsets = [0, 128], sizes = [8, 128], strides = [1, 1]} : vector<8x1024xf32> to vector<8x128xf32>
    %258 = arith.mulf %250, %257 : vector<8x128xf32>
    %cst_42 = arith.constant dense<0.000000e+00> : vector<8xf32>
    %259 = vector.multi_reduction <add>, %258, %cst_42 [1] : vector<8x128xf32> to vector<8xf32>
    %260 = vector.shape_cast %259 : vector<8xf32> to vector<8x1xf32>
    %cst_43 = arith.constant -0.0883883461 : f32
    %261 = vector.broadcast %cst_43 : f32 to vector<8x1xf32>
    %262 = arith.mulf %260, %261 : vector<8x1xf32>
    %263 = vector.extract_strided_slice %8 {offsets = [0, 256], sizes = [8, 128], strides = [1, 1]} : vector<8x1024xf32> to vector<8x128xf32>
    %264 = arith.mulf %250, %263 : vector<8x128xf32>
    %cst_44 = arith.constant dense<0.000000e+00> : vector<8xf32>
    %265 = vector.multi_reduction <add>, %264, %cst_44 [1] : vector<8x128xf32> to vector<8xf32>
    %266 = vector.shape_cast %265 : vector<8xf32> to vector<8x1xf32>
    %cst_45 = arith.constant -0.0883883461 : f32
    %267 = vector.broadcast %cst_45 : f32 to vector<8x1xf32>
    %268 = arith.mulf %266, %267 : vector<8x1xf32>
    %269 = vector.extract_strided_slice %8 {offsets = [0, 384], sizes = [8, 128], strides = [1, 1]} : vector<8x1024xf32> to vector<8x128xf32>
    %270 = arith.mulf %250, %269 : vector<8x128xf32>
    %cst_46 = arith.constant dense<0.000000e+00> : vector<8xf32>
    %271 = vector.multi_reduction <add>, %270, %cst_46 [1] : vector<8x128xf32> to vector<8xf32>
    %272 = vector.shape_cast %271 : vector<8xf32> to vector<8x1xf32>
    %cst_47 = arith.constant -0.0883883461 : f32
    %273 = vector.broadcast %cst_47 : f32 to vector<8x1xf32>
    %274 = arith.mulf %272, %273 : vector<8x1xf32>
    %275 = vector.extract_strided_slice %8 {offsets = [0, 512], sizes = [8, 128], strides = [1, 1]} : vector<8x1024xf32> to vector<8x128xf32>
    %276 = arith.mulf %250, %275 : vector<8x128xf32>
    %cst_48 = arith.constant dense<0.000000e+00> : vector<8xf32>
    %277 = vector.multi_reduction <add>, %276, %cst_48 [1] : vector<8x128xf32> to vector<8xf32>
    %278 = vector.shape_cast %277 : vector<8xf32> to vector<8x1xf32>
    %cst_49 = arith.constant -0.0883883461 : f32
    %279 = vector.broadcast %cst_49 : f32 to vector<8x1xf32>
    %280 = arith.mulf %278, %279 : vector<8x1xf32>
    %281 = vector.extract_strided_slice %8 {offsets = [0, 640], sizes = [8, 128], strides = [1, 1]} : vector<8x1024xf32> to vector<8x128xf32>
    %282 = arith.mulf %250, %281 : vector<8x128xf32>
    %cst_50 = arith.constant dense<0.000000e+00> : vector<8xf32>
    %283 = vector.multi_reduction <add>, %282, %cst_50 [1] : vector<8x128xf32> to vector<8xf32>
    %284 = vector.shape_cast %283 : vector<8xf32> to vector<8x1xf32>
    %cst_51 = arith.constant -0.0883883461 : f32
    %285 = vector.broadcast %cst_51 : f32 to vector<8x1xf32>
    %286 = arith.mulf %284, %285 : vector<8x1xf32>
    %287 = vector.extract_strided_slice %8 {offsets = [0, 768], sizes = [8, 128], strides = [1, 1]} : vector<8x1024xf32> to vector<8x128xf32>
    %288 = arith.mulf %250, %287 : vector<8x128xf32>
    %cst_52 = arith.constant dense<0.000000e+00> : vector<8xf32>
    %289 = vector.multi_reduction <add>, %288, %cst_52 [1] : vector<8x128xf32> to vector<8xf32>
    %290 = vector.shape_cast %289 : vector<8xf32> to vector<8x1xf32>
    %cst_53 = arith.constant -0.0883883461 : f32
    %291 = vector.broadcast %cst_53 : f32 to vector<8x1xf32>
    %292 = arith.mulf %290, %291 : vector<8x1xf32>
    %293 = vector.extract_strided_slice %8 {offsets = [0, 896], sizes = [8, 128], strides = [1, 1]} : vector<8x1024xf32> to vector<8x128xf32>
    %294 = arith.mulf %250, %293 : vector<8x128xf32>
    %cst_54 = arith.constant dense<0.000000e+00> : vector<8xf32>
    %295 = vector.multi_reduction <add>, %294, %cst_54 [1] : vector<8x128xf32> to vector<8xf32>
    %296 = vector.shape_cast %295 : vector<8xf32> to vector<8x1xf32>
    %cst_55 = arith.constant -0.0883883461 : f32
    %297 = vector.broadcast %cst_55 : f32 to vector<8x1xf32>
    %298 = arith.mulf %296, %297 : vector<8x1xf32>
    %299 = arith.maximumf %256, %262 : vector<8x1xf32>
    %300 = arith.maximumf %299, %268 : vector<8x1xf32>
    %301 = arith.maximumf %300, %274 : vector<8x1xf32>
    %302 = arith.maximumf %301, %280 : vector<8x1xf32>
    %303 = arith.maximumf %302, %286 : vector<8x1xf32>
    %304 = arith.maximumf %303, %292 : vector<8x1xf32>
    %305 = arith.maximumf %304, %298 : vector<8x1xf32>
    %306 = arith.subf %256, %305 : vector<8x1xf32>
    %307 = math.exp %306 : vector<8x1xf32>
    %308 = arith.subf %262, %305 : vector<8x1xf32>
    %309 = math.exp %308 : vector<8x1xf32>
    %310 = arith.subf %268, %305 : vector<8x1xf32>
    %311 = math.exp %310 : vector<8x1xf32>
    %312 = arith.subf %274, %305 : vector<8x1xf32>
    %313 = math.exp %312 : vector<8x1xf32>
    %314 = arith.subf %280, %305 : vector<8x1xf32>
    %315 = math.exp %314 : vector<8x1xf32>
    %316 = arith.subf %286, %305 : vector<8x1xf32>
    %317 = math.exp %316 : vector<8x1xf32>
    %318 = arith.subf %292, %305 : vector<8x1xf32>
    %319 = math.exp %318 : vector<8x1xf32>
    %320 = arith.subf %298, %305 : vector<8x1xf32>
    %321 = math.exp %320 : vector<8x1xf32>
    %322 = arith.addf %307, %309 : vector<8x1xf32>
    %323 = arith.addf %322, %311 : vector<8x1xf32>
    %324 = arith.addf %323, %313 : vector<8x1xf32>
    %325 = arith.addf %324, %315 : vector<8x1xf32>
    %326 = arith.addf %325, %317 : vector<8x1xf32>
    %327 = arith.addf %326, %319 : vector<8x1xf32>
    %328 = arith.addf %327, %321 : vector<8x1xf32>
    %329 = tpu.reciprocal %328 {approx = true} : vector<8x1xf32> -> vector<8x1xf32>
    %330 = arith.mulf %307, %329 : vector<8x1xf32>
    %331 = vector.extract_strided_slice %9 {offsets = [0, 0], sizes = [8, 128], strides = [1, 1]} : vector<8x1024xf32> to vector<8x128xf32>
    %332 = vector.broadcast %330 : vector<8x1xf32> to vector<8x128xf32>
    %333 = arith.mulf %332, %331 : vector<8x128xf32>
    %334 = arith.mulf %309, %329 : vector<8x1xf32>
    %335 = vector.extract_strided_slice %9 {offsets = [0, 128], sizes = [8, 128], strides = [1, 1]} : vector<8x1024xf32> to vector<8x128xf32>
    %336 = vector.broadcast %334 : vector<8x1xf32> to vector<8x128xf32>
    %337 = arith.mulf %336, %335 : vector<8x128xf32>
    %338 = arith.addf %333, %337 : vector<8x128xf32>
    %339 = arith.mulf %311, %329 : vector<8x1xf32>
    %340 = vector.extract_strided_slice %9 {offsets = [0, 256], sizes = [8, 128], strides = [1, 1]} : vector<8x1024xf32> to vector<8x128xf32>
    %341 = vector.broadcast %339 : vector<8x1xf32> to vector<8x128xf32>
    %342 = arith.mulf %341, %340 : vector<8x128xf32>
    %343 = arith.addf %338, %342 : vector<8x128xf32>
    %344 = arith.mulf %313, %329 : vector<8x1xf32>
    %345 = vector.extract_strided_slice %9 {offsets = [0, 384], sizes = [8, 128], strides = [1, 1]} : vector<8x1024xf32> to vector<8x128xf32>
    %346 = vector.broadcast %344 : vector<8x1xf32> to vector<8x128xf32>
    %347 = arith.mulf %346, %345 : vector<8x128xf32>
    %348 = arith.addf %343, %347 : vector<8x128xf32>
    %349 = arith.mulf %315, %329 : vector<8x1xf32>
    %350 = vector.extract_strided_slice %9 {offsets = [0, 512], sizes = [8, 128], strides = [1, 1]} : vector<8x1024xf32> to vector<8x128xf32>
    %351 = vector.broadcast %349 : vector<8x1xf32> to vector<8x128xf32>
    %352 = arith.mulf %351, %350 : vector<8x128xf32>
    %353 = arith.addf %348, %352 : vector<8x128xf32>
    %354 = arith.mulf %317, %329 : vector<8x1xf32>
    %355 = vector.extract_strided_slice %9 {offsets = [0, 640], sizes = [8, 128], strides = [1, 1]} : vector<8x1024xf32> to vector<8x128xf32>
    %356 = vector.broadcast %354 : vector<8x1xf32> to vector<8x128xf32>
    %357 = arith.mulf %356, %355 : vector<8x128xf32>
    %358 = arith.addf %353, %357 : vector<8x128xf32>
    %359 = arith.mulf %319, %329 : vector<8x1xf32>
    %360 = vector.extract_strided_slice %9 {offsets = [0, 768], sizes = [8, 128], strides = [1, 1]} : vector<8x1024xf32> to vector<8x128xf32>
    %361 = vector.broadcast %359 : vector<8x1xf32> to vector<8x128xf32>
    %362 = arith.mulf %361, %360 : vector<8x128xf32>
    %363 = arith.addf %358, %362 : vector<8x128xf32>
    %364 = arith.mulf %321, %329 : vector<8x1xf32>
    %365 = vector.extract_strided_slice %9 {offsets = [0, 896], sizes = [8, 128], strides = [1, 1]} : vector<8x1024xf32> to vector<8x128xf32>
    %366 = vector.broadcast %364 : vector<8x1xf32> to vector<8x128xf32>
    %367 = arith.mulf %366, %365 : vector<8x128xf32>
    %368 = arith.addf %363, %367 : vector<8x128xf32>
    %c0_56 = arith.constant 0 : index
    %c256 = arith.constant 256 : index
    %369 = vector.load %arg4[%c0_56, %c256] : memref<8x1024xf32, #tpu.memory_space<vmem>>, vector<8x128xf32>
    tpu.vector_store %arg4[%c0_56, %c256], %368 {strides = array<i32>} : memref<8x1024xf32, #tpu.memory_space<vmem>>, vector<8x128xf32>,
    %370 = vector.extract_strided_slice %7 {offsets = [0, 384], sizes = [8, 128], strides = [1, 1]} : vector<8x1024xf32> to vector<8x128xf32>
    %371 = vector.extract_strided_slice %8 {offsets = [0, 0], sizes = [8, 128], strides = [1, 1]} : vector<8x1024xf32> to vector<8x128xf32>
    %372 = arith.mulf %370, %371 : vector<8x128xf32>
    %cst_57 = arith.constant dense<0.000000e+00> : vector<8xf32>
    %373 = vector.multi_reduction <add>, %372, %cst_57 [1] : vector<8x128xf32> to vector<8xf32>
    %374 = vector.shape_cast %373 : vector<8xf32> to vector<8x1xf32>
    %cst_58 = arith.constant -0.0883883461 : f32
    %375 = vector.broadcast %cst_58 : f32 to vector<8x1xf32>
    %376 = arith.mulf %374, %375 : vector<8x1xf32>
    %377 = vector.extract_strided_slice %8 {offsets = [0, 128], sizes = [8, 128], strides = [1, 1]} : vector<8x1024xf32> to vector<8x128xf32>
    %378 = arith.mulf %370, %377 : vector<8x128xf32>
    %cst_59 = arith.constant dense<0.000000e+00> : vector<8xf32>
    %379 = vector.multi_reduction <add>, %378, %cst_59 [1] : vector<8x128xf32> to vector<8xf32>
    %380 = vector.shape_cast %379 : vector<8xf32> to vector<8x1xf32>
    %cst_60 = arith.constant -0.0883883461 : f32
    %381 = vector.broadcast %cst_60 : f32 to vector<8x1xf32>
    %382 = arith.mulf %380, %381 : vector<8x1xf32>
    %383 = vector.extract_strided_slice %8 {offsets = [0, 256], sizes = [8, 128], strides = [1, 1]} : vector<8x1024xf32> to vector<8x128xf32>
    %384 = arith.mulf %370, %383 : vector<8x128xf32>
    %cst_61 = arith.constant dense<0.000000e+00> : vector<8xf32>
    %385 = vector.multi_reduction <add>, %384, %cst_61 [1] : vector<8x128xf32> to vector<8xf32>
    %386 = vector.shape_cast %385 : vector<8xf32> to vector<8x1xf32>
    %cst_62 = arith.constant -0.0883883461 : f32
    %387 = vector.broadcast %cst_62 : f32 to vector<8x1xf32>
    %388 = arith.mulf %386, %387 : vector<8x1xf32>
    %389 = vector.extract_strided_slice %8 {offsets = [0, 384], sizes = [8, 128], strides = [1, 1]} : vector<8x1024xf32> to vector<8x128xf32>
    %390 = arith.mulf %370, %389 : vector<8x128xf32>
    %cst_63 = arith.constant dense<0.000000e+00> : vector<8xf32>
    %391 = vector.multi_reduction <add>, %390, %cst_63 [1] : vector<8x128xf32> to vector<8xf32>
    %392 = vector.shape_cast %391 : vector<8xf32> to vector<8x1xf32>
    %cst_64 = arith.constant -0.0883883461 : f32
    %393 = vector.broadcast %cst_64 : f32 to vector<8x1xf32>
    %394 = arith.mulf %392, %393 : vector<8x1xf32>
    %395 = vector.extract_strided_slice %8 {offsets = [0, 512], sizes = [8, 128], strides = [1, 1]} : vector<8x1024xf32> to vector<8x128xf32>
    %396 = arith.mulf %370, %395 : vector<8x128xf32>
    %cst_65 = arith.constant dense<0.000000e+00> : vector<8xf32>
    %397 = vector.multi_reduction <add>, %396, %cst_65 [1] : vector<8x128xf32> to vector<8xf32>
    %398 = vector.shape_cast %397 : vector<8xf32> to vector<8x1xf32>
    %cst_66 = arith.constant -0.0883883461 : f32
    %399 = vector.broadcast %cst_66 : f32 to vector<8x1xf32>
    %400 = arith.mulf %398, %399 : vector<8x1xf32>
    %401 = vector.extract_strided_slice %8 {offsets = [0, 640], sizes = [8, 128], strides = [1, 1]} : vector<8x1024xf32> to vector<8x128xf32>
    %402 = arith.mulf %370, %401 : vector<8x128xf32>
    %cst_67 = arith.constant dense<0.000000e+00> : vector<8xf32>
    %403 = vector.multi_reduction <add>, %402, %cst_67 [1] : vector<8x128xf32> to vector<8xf32>
    %404 = vector.shape_cast %403 : vector<8xf32> to vector<8x1xf32>
    %cst_68 = arith.constant -0.0883883461 : f32
    %405 = vector.broadcast %cst_68 : f32 to vector<8x1xf32>
    %406 = arith.mulf %404, %405 : vector<8x1xf32>
    %407 = vector.extract_strided_slice %8 {offsets = [0, 768], sizes = [8, 128], strides = [1, 1]} : vector<8x1024xf32> to vector<8x128xf32>
    %408 = arith.mulf %370, %407 : vector<8x128xf32>
    %cst_69 = arith.constant dense<0.000000e+00> : vector<8xf32>
    %409 = vector.multi_reduction <add>, %408, %cst_69 [1] : vector<8x128xf32> to vector<8xf32>
    %410 = vector.shape_cast %409 : vector<8xf32> to vector<8x1xf32>
    %cst_70 = arith.constant -0.0883883461 : f32
    %411 = vector.broadcast %cst_70 : f32 to vector<8x1xf32>
    %412 = arith.mulf %410, %411 : vector<8x1xf32>
    %413 = vector.extract_strided_slice %8 {offsets = [0, 896], sizes = [8, 128], strides = [1, 1]} : vector<8x1024xf32> to vector<8x128xf32>
    %414 = arith.mulf %370, %413 : vector<8x128xf32>
    %cst_71 = arith.constant dense<0.000000e+00> : vector<8xf32>
    %415 = vector.multi_reduction <add>, %414, %cst_71 [1] : vector<8x128xf32> to vector<8xf32>
    %416 = vector.shape_cast %415 : vector<8xf32> to vector<8x1xf32>
    %cst_72 = arith.constant -0.0883883461 : f32
    %417 = vector.broadcast %cst_72 : f32 to vector<8x1xf32>
    %418 = arith.mulf %416, %417 : vector<8x1xf32>
    %419 = arith.maximumf %376, %382 : vector<8x1xf32>
    %420 = arith.maximumf %419, %388 : vector<8x1xf32>
    %421 = arith.maximumf %420, %394 : vector<8x1xf32>
    %422 = arith.maximumf %421, %400 : vector<8x1xf32>
    %423 = arith.maximumf %422, %406 : vector<8x1xf32>
    %424 = arith.maximumf %423, %412 : vector<8x1xf32>
    %425 = arith.maximumf %424, %418 : vector<8x1xf32>
    %426 = arith.subf %376, %425 : vector<8x1xf32>
    %427 = math.exp %426 : vector<8x1xf32>
    %428 = arith.subf %382, %425 : vector<8x1xf32>
    %429 = math.exp %428 : vector<8x1xf32>
    %430 = arith.subf %388, %425 : vector<8x1xf32>
    %431 = math.exp %430 : vector<8x1xf32>
    %432 = arith.subf %394, %425 : vector<8x1xf32>
    %433 = math.exp %432 : vector<8x1xf32>
    %434 = arith.subf %400, %425 : vector<8x1xf32>
    %435 = math.exp %434 : vector<8x1xf32>
    %436 = arith.subf %406, %425 : vector<8x1xf32>
    %437 = math.exp %436 : vector<8x1xf32>
    %438 = arith.subf %412, %425 : vector<8x1xf32>
    %439 = math.exp %438 : vector<8x1xf32>
    %440 = arith.subf %418, %425 : vector<8x1xf32>
    %441 = math.exp %440 : vector<8x1xf32>
    %442 = arith.addf %427, %429 : vector<8x1xf32>
    %443 = arith.addf %442, %431 : vector<8x1xf32>
    %444 = arith.addf %443, %433 : vector<8x1xf32>
    %445 = arith.addf %444, %435 : vector<8x1xf32>
    %446 = arith.addf %445, %437 : vector<8x1xf32>
    %447 = arith.addf %446, %439 : vector<8x1xf32>
    %448 = arith.addf %447, %441 : vector<8x1xf32>
    %449 = tpu.reciprocal %448 {approx = true} : vector<8x1xf32> -> vector<8x1xf32>
    %450 = arith.mulf %427, %449 : vector<8x1xf32>
    %451 = vector.extract_strided_slice %9 {offsets = [0, 0], sizes = [8, 128], strides = [1, 1]} : vector<8x1024xf32> to vector<8x128xf32>
    %452 = vector.broadcast %450 : vector<8x1xf32> to vector<8x128xf32>
    %453 = arith.mulf %452, %451 : vector<8x128xf32>
    %454 = arith.mulf %429, %449 : vector<8x1xf32>
    %455 = vector.extract_strided_slice %9 {offsets = [0, 128], sizes = [8, 128], strides = [1, 1]} : vector<8x1024xf32> to vector<8x128xf32>
    %456 = vector.broadcast %454 : vector<8x1xf32> to vector<8x128xf32>
    %457 = arith.mulf %456, %455 : vector<8x128xf32>
    %458 = arith.addf %453, %457 : vector<8x128xf32>
    %459 = arith.mulf %431, %449 : vector<8x1xf32>
    %460 = vector.extract_strided_slice %9 {offsets = [0, 256], sizes = [8, 128], strides = [1, 1]} : vector<8x1024xf32> to vector<8x128xf32>
    %461 = vector.broadcast %459 : vector<8x1xf32> to vector<8x128xf32>
    %462 = arith.mulf %461, %460 : vector<8x128xf32>
    %463 = arith.addf %458, %462 : vector<8x128xf32>
    %464 = arith.mulf %433, %449 : vector<8x1xf32>
    %465 = vector.extract_strided_slice %9 {offsets = [0, 384], sizes = [8, 128], strides = [1, 1]} : vector<8x1024xf32> to vector<8x128xf32>
    %466 = vector.broadcast %464 : vector<8x1xf32> to vector<8x128xf32>
    %467 = arith.mulf %466, %465 : vector<8x128xf32>
    %468 = arith.addf %463, %467 : vector<8x128xf32>
    %469 = arith.mulf %435, %449 : vector<8x1xf32>
    %470 = vector.extract_strided_slice %9 {offsets = [0, 512], sizes = [8, 128], strides = [1, 1]} : vector<8x1024xf32> to vector<8x128xf32>
    %471 = vector.broadcast %469 : vector<8x1xf32> to vector<8x128xf32>
    %472 = arith.mulf %471, %470 : vector<8x128xf32>
    %473 = arith.addf %468, %472 : vector<8x128xf32>
    %474 = arith.mulf %437, %449 : vector<8x1xf32>
    %475 = vector.extract_strided_slice %9 {offsets = [0, 640], sizes = [8, 128], strides = [1, 1]} : vector<8x1024xf32> to vector<8x128xf32>
    %476 = vector.broadcast %474 : vector<8x1xf32> to vector<8x128xf32>
    %477 = arith.mulf %476, %475 : vector<8x128xf32>
    %478 = arith.addf %473, %477 : vector<8x128xf32>
    %479 = arith.mulf %439, %449 : vector<8x1xf32>
    %480 = vector.extract_strided_slice %9 {offsets = [0, 768], sizes = [8, 128], strides = [1, 1]} : vector<8x1024xf32> to vector<8x128xf32>
    %481 = vector.broadcast %479 : vector<8x1xf32> to vector<8x128xf32>
    %482 = arith.mulf %481, %480 : vector<8x128xf32>
    %483 = arith.addf %478, %482 : vector<8x128xf32>
    %484 = arith.mulf %441, %449 : vector<8x1xf32>
    %485 = vector.extract_strided_slice %9 {offsets = [0, 896], sizes = [8, 128], strides = [1, 1]} : vector<8x1024xf32> to vector<8x128xf32>
    %486 = vector.broadcast %484 : vector<8x1xf32> to vector<8x128xf32>
    %487 = arith.mulf %486, %485 : vector<8x128xf32>
    %488 = arith.addf %483, %487 : vector<8x128xf32>
    %c0_73 = arith.constant 0 : index
    %c384 = arith.constant 384 : index
    %489 = vector.load %arg4[%c0_73, %c384] : memref<8x1024xf32, #tpu.memory_space<vmem>>, vector<8x128xf32>
    tpu.vector_store %arg4[%c0_73, %c384], %488 {strides = array<i32>} : memref<8x1024xf32, #tpu.memory_space<vmem>>, vector<8x128xf32>,
    %490 = vector.extract_strided_slice %7 {offsets = [0, 512], sizes = [8, 128], strides = [1, 1]} : vector<8x1024xf32> to vector<8x128xf32>
    %491 = vector.extract_strided_slice %8 {offsets = [0, 0], sizes = [8, 128], strides = [1, 1]} : vector<8x1024xf32> to vector<8x128xf32>
    %492 = arith.mulf %490, %491 : vector<8x128xf32>
    %cst_74 = arith.constant dense<0.000000e+00> : vector<8xf32>
    %493 = vector.multi_reduction <add>, %492, %cst_74 [1] : vector<8x128xf32> to vector<8xf32>
    %494 = vector.shape_cast %493 : vector<8xf32> to vector<8x1xf32>
    %cst_75 = arith.constant -0.0883883461 : f32
    %495 = vector.broadcast %cst_75 : f32 to vector<8x1xf32>
    %496 = arith.mulf %494, %495 : vector<8x1xf32>
    %497 = vector.extract_strided_slice %8 {offsets = [0, 128], sizes = [8, 128], strides = [1, 1]} : vector<8x1024xf32> to vector<8x128xf32>
    %498 = arith.mulf %490, %497 : vector<8x128xf32>
    %cst_76 = arith.constant dense<0.000000e+00> : vector<8xf32>
    %499 = vector.multi_reduction <add>, %498, %cst_76 [1] : vector<8x128xf32> to vector<8xf32>
    %500 = vector.shape_cast %499 : vector<8xf32> to vector<8x1xf32>
    %cst_77 = arith.constant -0.0883883461 : f32
    %501 = vector.broadcast %cst_77 : f32 to vector<8x1xf32>
    %502 = arith.mulf %500, %501 : vector<8x1xf32>
    %503 = vector.extract_strided_slice %8 {offsets = [0, 256], sizes = [8, 128], strides = [1, 1]} : vector<8x1024xf32> to vector<8x128xf32>
    %504 = arith.mulf %490, %503 : vector<8x128xf32>
    %cst_78 = arith.constant dense<0.000000e+00> : vector<8xf32>
    %505 = vector.multi_reduction <add>, %504, %cst_78 [1] : vector<8x128xf32> to vector<8xf32>
    %506 = vector.shape_cast %505 : vector<8xf32> to vector<8x1xf32>
    %cst_79 = arith.constant -0.0883883461 : f32
    %507 = vector.broadcast %cst_79 : f32 to vector<8x1xf32>
    %508 = arith.mulf %506, %507 : vector<8x1xf32>
    %509 = vector.extract_strided_slice %8 {offsets = [0, 384], sizes = [8, 128], strides = [1, 1]} : vector<8x1024xf32> to vector<8x128xf32>
    %510 = arith.mulf %490, %509 : vector<8x128xf32>
    %cst_80 = arith.constant dense<0.000000e+00> : vector<8xf32>
    %511 = vector.multi_reduction <add>, %510, %cst_80 [1] : vector<8x128xf32> to vector<8xf32>
    %512 = vector.shape_cast %511 : vector<8xf32> to vector<8x1xf32>
    %cst_81 = arith.constant -0.0883883461 : f32
    %513 = vector.broadcast %cst_81 : f32 to vector<8x1xf32>
    %514 = arith.mulf %512, %513 : vector<8x1xf32>
    %515 = vector.extract_strided_slice %8 {offsets = [0, 512], sizes = [8, 128], strides = [1, 1]} : vector<8x1024xf32> to vector<8x128xf32>
    %516 = arith.mulf %490, %515 : vector<8x128xf32>
    %cst_82 = arith.constant dense<0.000000e+00> : vector<8xf32>
    %517 = vector.multi_reduction <add>, %516, %cst_82 [1] : vector<8x128xf32> to vector<8xf32>
    %518 = vector.shape_cast %517 : vector<8xf32> to vector<8x1xf32>
    %cst_83 = arith.constant -0.0883883461 : f32
    %519 = vector.broadcast %cst_83 : f32 to vector<8x1xf32>
    %520 = arith.mulf %518, %519 : vector<8x1xf32>
    %521 = vector.extract_strided_slice %8 {offsets = [0, 640], sizes = [8, 128], strides = [1, 1]} : vector<8x1024xf32> to vector<8x128xf32>
    %522 = arith.mulf %490, %521 : vector<8x128xf32>
    %cst_84 = arith.constant dense<0.000000e+00> : vector<8xf32>
    %523 = vector.multi_reduction <add>, %522, %cst_84 [1] : vector<8x128xf32> to vector<8xf32>
    %524 = vector.shape_cast %523 : vector<8xf32> to vector<8x1xf32>
    %cst_85 = arith.constant -0.0883883461 : f32
    %525 = vector.broadcast %cst_85 : f32 to vector<8x1xf32>
    %526 = arith.mulf %524, %525 : vector<8x1xf32>
    %527 = vector.extract_strided_slice %8 {offsets = [0, 768], sizes = [8, 128], strides = [1, 1]} : vector<8x1024xf32> to vector<8x128xf32>
    %528 = arith.mulf %490, %527 : vector<8x128xf32>
    %cst_86 = arith.constant dense<0.000000e+00> : vector<8xf32>
    %529 = vector.multi_reduction <add>, %528, %cst_86 [1] : vector<8x128xf32> to vector<8xf32>
    %530 = vector.shape_cast %529 : vector<8xf32> to vector<8x1xf32>
    %cst_87 = arith.constant -0.0883883461 : f32
    %531 = vector.broadcast %cst_87 : f32 to vector<8x1xf32>
    %532 = arith.mulf %530, %531 : vector<8x1xf32>
    %533 = vector.extract_strided_slice %8 {offsets = [0, 896], sizes = [8, 128], strides = [1, 1]} : vector<8x1024xf32> to vector<8x128xf32>
    %534 = arith.mulf %490, %533 : vector<8x128xf32>
    %cst_88 = arith.constant dense<0.000000e+00> : vector<8xf32>
    %535 = vector.multi_reduction <add>, %534, %cst_88 [1] : vector<8x128xf32> to vector<8xf32>
    %536 = vector.shape_cast %535 : vector<8xf32> to vector<8x1xf32>
    %cst_89 = arith.constant -0.0883883461 : f32
    %537 = vector.broadcast %cst_89 : f32 to vector<8x1xf32>
    %538 = arith.mulf %536, %537 : vector<8x1xf32>
    %539 = arith.maximumf %496, %502 : vector<8x1xf32>
    %540 = arith.maximumf %539, %508 : vector<8x1xf32>
    %541 = arith.maximumf %540, %514 : vector<8x1xf32>
    %542 = arith.maximumf %541, %520 : vector<8x1xf32>
    %543 = arith.maximumf %542, %526 : vector<8x1xf32>
    %544 = arith.maximumf %543, %532 : vector<8x1xf32>
    %545 = arith.maximumf %544, %538 : vector<8x1xf32>
    %546 = arith.subf %496, %545 : vector<8x1xf32>
    %547 = math.exp %546 : vector<8x1xf32>
    %548 = arith.subf %502, %545 : vector<8x1xf32>
    %549 = math.exp %548 : vector<8x1xf32>
    %550 = arith.subf %508, %545 : vector<8x1xf32>
    %551 = math.exp %550 : vector<8x1xf32>
    %552 = arith.subf %514, %545 : vector<8x1xf32>
    %553 = math.exp %552 : vector<8x1xf32>
    %554 = arith.subf %520, %545 : vector<8x1xf32>
    %555 = math.exp %554 : vector<8x1xf32>
    %556 = arith.subf %526, %545 : vector<8x1xf32>
    %557 = math.exp %556 : vector<8x1xf32>
    %558 = arith.subf %532, %545 : vector<8x1xf32>
    %559 = math.exp %558 : vector<8x1xf32>
    %560 = arith.subf %538, %545 : vector<8x1xf32>
    %561 = math.exp %560 : vector<8x1xf32>
    %562 = arith.addf %547, %549 : vector<8x1xf32>
    %563 = arith.addf %562, %551 : vector<8x1xf32>
    %564 = arith.addf %563, %553 : vector<8x1xf32>
    %565 = arith.addf %564, %555 : vector<8x1xf32>
    %566 = arith.addf %565, %557 : vector<8x1xf32>
    %567 = arith.addf %566, %559 : vector<8x1xf32>
    %568 = arith.addf %567, %561 : vector<8x1xf32>
    %569 = tpu.reciprocal %568 {approx = true} : vector<8x1xf32> -> vector<8x1xf32>
    %570 = arith.mulf %547, %569 : vector<8x1xf32>
    %571 = vector.extract_strided_slice %9 {offsets = [0, 0], sizes = [8, 128], strides = [1, 1]} : vector<8x1024xf32> to vector<8x128xf32>
    %572 = vector.broadcast %570 : vector<8x1xf32> to vector<8x128xf32>
    %573 = arith.mulf %572, %571 : vector<8x128xf32>
    %574 = arith.mulf %549, %569 : vector<8x1xf32>
    %575 = vector.extract_strided_slice %9 {offsets = [0, 128], sizes = [8, 128], strides = [1, 1]} : vector<8x1024xf32> to vector<8x128xf32>
    %576 = vector.broadcast %574 : vector<8x1xf32> to vector<8x128xf32>
    %577 = arith.mulf %576, %575 : vector<8x128xf32>
    %578 = arith.addf %573, %577 : vector<8x128xf32>
    %579 = arith.mulf %551, %569 : vector<8x1xf32>
    %580 = vector.extract_strided_slice %9 {offsets = [0, 256], sizes = [8, 128], strides = [1, 1]} : vector<8x1024xf32> to vector<8x128xf32>
    %581 = vector.broadcast %579 : vector<8x1xf32> to vector<8x128xf32>
    %582 = arith.mulf %581, %580 : vector<8x128xf32>
    %583 = arith.addf %578, %582 : vector<8x128xf32>
    %584 = arith.mulf %553, %569 : vector<8x1xf32>
    %585 = vector.extract_strided_slice %9 {offsets = [0, 384], sizes = [8, 128], strides = [1, 1]} : vector<8x1024xf32> to vector<8x128xf32>
    %586 = vector.broadcast %584 : vector<8x1xf32> to vector<8x128xf32>
    %587 = arith.mulf %586, %585 : vector<8x128xf32>
    %588 = arith.addf %583, %587 : vector<8x128xf32>
    %589 = arith.mulf %555, %569 : vector<8x1xf32>
    %590 = vector.extract_strided_slice %9 {offsets = [0, 512], sizes = [8, 128], strides = [1, 1]} : vector<8x1024xf32> to vector<8x128xf32>
    %591 = vector.broadcast %589 : vector<8x1xf32> to vector<8x128xf32>
    %592 = arith.mulf %591, %590 : vector<8x128xf32>
    %593 = arith.addf %588, %592 : vector<8x128xf32>
    %594 = arith.mulf %557, %569 : vector<8x1xf32>
    %595 = vector.extract_strided_slice %9 {offsets = [0, 640], sizes = [8, 128], strides = [1, 1]} : vector<8x1024xf32> to vector<8x128xf32>
    %596 = vector.broadcast %594 : vector<8x1xf32> to vector<8x128xf32>
    %597 = arith.mulf %596, %595 : vector<8x128xf32>
    %598 = arith.addf %593, %597 : vector<8x128xf32>
    %599 = arith.mulf %559, %569 : vector<8x1xf32>
    %600 = vector.extract_strided_slice %9 {offsets = [0, 768], sizes = [8, 128], strides = [1, 1]} : vector<8x1024xf32> to vector<8x128xf32>
    %601 = vector.broadcast %599 : vector<8x1xf32> to vector<8x128xf32>
    %602 = arith.mulf %601, %600 : vector<8x128xf32>
    %603 = arith.addf %598, %602 : vector<8x128xf32>
    %604 = arith.mulf %561, %569 : vector<8x1xf32>
    %605 = vector.extract_strided_slice %9 {offsets = [0, 896], sizes = [8, 128], strides = [1, 1]} : vector<8x1024xf32> to vector<8x128xf32>
    %606 = vector.broadcast %604 : vector<8x1xf32> to vector<8x128xf32>
    %607 = arith.mulf %606, %605 : vector<8x128xf32>
    %608 = arith.addf %603, %607 : vector<8x128xf32>
    %c0_90 = arith.constant 0 : index
    %c512 = arith.constant 512 : index
    %609 = vector.load %arg4[%c0_90, %c512] : memref<8x1024xf32, #tpu.memory_space<vmem>>, vector<8x128xf32>
    tpu.vector_store %arg4[%c0_90, %c512], %608 {strides = array<i32>} : memref<8x1024xf32, #tpu.memory_space<vmem>>, vector<8x128xf32>,
    %610 = vector.extract_strided_slice %7 {offsets = [0, 640], sizes = [8, 128], strides = [1, 1]} : vector<8x1024xf32> to vector<8x128xf32>
    %611 = vector.extract_strided_slice %8 {offsets = [0, 0], sizes = [8, 128], strides = [1, 1]} : vector<8x1024xf32> to vector<8x128xf32>
    %612 = arith.mulf %610, %611 : vector<8x128xf32>
    %cst_91 = arith.constant dense<0.000000e+00> : vector<8xf32>
    %613 = vector.multi_reduction <add>, %612, %cst_91 [1] : vector<8x128xf32> to vector<8xf32>
    %614 = vector.shape_cast %613 : vector<8xf32> to vector<8x1xf32>
    %cst_92 = arith.constant -0.0883883461 : f32
    %615 = vector.broadcast %cst_92 : f32 to vector<8x1xf32>
    %616 = arith.mulf %614, %615 : vector<8x1xf32>
    %617 = vector.extract_strided_slice %8 {offsets = [0, 128], sizes = [8, 128], strides = [1, 1]} : vector<8x1024xf32> to vector<8x128xf32>
    %618 = arith.mulf %610, %617 : vector<8x128xf32>
    %cst_93 = arith.constant dense<0.000000e+00> : vector<8xf32>
    %619 = vector.multi_reduction <add>, %618, %cst_93 [1] : vector<8x128xf32> to vector<8xf32>
    %620 = vector.shape_cast %619 : vector<8xf32> to vector<8x1xf32>
    %cst_94 = arith.constant -0.0883883461 : f32
    %621 = vector.broadcast %cst_94 : f32 to vector<8x1xf32>
    %622 = arith.mulf %620, %621 : vector<8x1xf32>
    %623 = vector.extract_strided_slice %8 {offsets = [0, 256], sizes = [8, 128], strides = [1, 1]} : vector<8x1024xf32> to vector<8x128xf32>
    %624 = arith.mulf %610, %623 : vector<8x128xf32>
    %cst_95 = arith.constant dense<0.000000e+00> : vector<8xf32>
    %625 = vector.multi_reduction <add>, %624, %cst_95 [1] : vector<8x128xf32> to vector<8xf32>
    %626 = vector.shape_cast %625 : vector<8xf32> to vector<8x1xf32>
    %cst_96 = arith.constant -0.0883883461 : f32
    %627 = vector.broadcast %cst_96 : f32 to vector<8x1xf32>
    %628 = arith.mulf %626, %627 : vector<8x1xf32>
    %629 = vector.extract_strided_slice %8 {offsets = [0, 384], sizes = [8, 128], strides = [1, 1]} : vector<8x1024xf32> to vector<8x128xf32>
    %630 = arith.mulf %610, %629 : vector<8x128xf32>
    %cst_97 = arith.constant dense<0.000000e+00> : vector<8xf32>
    %631 = vector.multi_reduction <add>, %630, %cst_97 [1] : vector<8x128xf32> to vector<8xf32>
    %632 = vector.shape_cast %631 : vector<8xf32> to vector<8x1xf32>
    %cst_98 = arith.constant -0.0883883461 : f32
    %633 = vector.broadcast %cst_98 : f32 to vector<8x1xf32>
    %634 = arith.mulf %632, %633 : vector<8x1xf32>
    %635 = vector.extract_strided_slice %8 {offsets = [0, 512], sizes = [8, 128], strides = [1, 1]} : vector<8x1024xf32> to vector<8x128xf32>
    %636 = arith.mulf %610, %635 : vector<8x128xf32>
    %cst_99 = arith.constant dense<0.000000e+00> : vector<8xf32>
    %637 = vector.multi_reduction <add>, %636, %cst_99 [1] : vector<8x128xf32> to vector<8xf32>
    %638 = vector.shape_cast %637 : vector<8xf32> to vector<8x1xf32>
    %cst_100 = arith.constant -0.0883883461 : f32
    %639 = vector.broadcast %cst_100 : f32 to vector<8x1xf32>
    %640 = arith.mulf %638, %639 : vector<8x1xf32>
    %641 = vector.extract_strided_slice %8 {offsets = [0, 640], sizes = [8, 128], strides = [1, 1]} : vector<8x1024xf32> to vector<8x128xf32>
    %642 = arith.mulf %610, %641 : vector<8x128xf32>
    %cst_101 = arith.constant dense<0.000000e+00> : vector<8xf32>
    %643 = vector.multi_reduction <add>, %642, %cst_101 [1] : vector<8x128xf32> to vector<8xf32>
    %644 = vector.shape_cast %643 : vector<8xf32> to vector<8x1xf32>
    %cst_102 = arith.constant -0.0883883461 : f32
    %645 = vector.broadcast %cst_102 : f32 to vector<8x1xf32>
    %646 = arith.mulf %644, %645 : vector<8x1xf32>
    %647 = vector.extract_strided_slice %8 {offsets = [0, 768], sizes = [8, 128], strides = [1, 1]} : vector<8x1024xf32> to vector<8x128xf32>
    %648 = arith.mulf %610, %647 : vector<8x128xf32>
    %cst_103 = arith.constant dense<0.000000e+00> : vector<8xf32>
    %649 = vector.multi_reduction <add>, %648, %cst_103 [1] : vector<8x128xf32> to vector<8xf32>
    %650 = vector.shape_cast %649 : vector<8xf32> to vector<8x1xf32>
    %cst_104 = arith.constant -0.0883883461 : f32
    %651 = vector.broadcast %cst_104 : f32 to vector<8x1xf32>
    %652 = arith.mulf %650, %651 : vector<8x1xf32>
    %653 = vector.extract_strided_slice %8 {offsets = [0, 896], sizes = [8, 128], strides = [1, 1]} : vector<8x1024xf32> to vector<8x128xf32>
    %654 = arith.mulf %610, %653 : vector<8x128xf32>
    %cst_105 = arith.constant dense<0.000000e+00> : vector<8xf32>
    %655 = vector.multi_reduction <add>, %654, %cst_105 [1] : vector<8x128xf32> to vector<8xf32>
    %656 = vector.shape_cast %655 : vector<8xf32> to vector<8x1xf32>
    %cst_106 = arith.constant -0.0883883461 : f32
    %657 = vector.broadcast %cst_106 : f32 to vector<8x1xf32>
    %658 = arith.mulf %656, %657 : vector<8x1xf32>
    %659 = arith.maximumf %616, %622 : vector<8x1xf32>
    %660 = arith.maximumf %659, %628 : vector<8x1xf32>
    %661 = arith.maximumf %660, %634 : vector<8x1xf32>
    %662 = arith.maximumf %661, %640 : vector<8x1xf32>
    %663 = arith.maximumf %662, %646 : vector<8x1xf32>
    %664 = arith.maximumf %663, %652 : vector<8x1xf32>
    %665 = arith.maximumf %664, %658 : vector<8x1xf32>
    %666 = arith.subf %616, %665 : vector<8x1xf32>
    %667 = math.exp %666 : vector<8x1xf32>
    %668 = arith.subf %622, %665 : vector<8x1xf32>
    %669 = math.exp %668 : vector<8x1xf32>
    %670 = arith.subf %628, %665 : vector<8x1xf32>
    %671 = math.exp %670 : vector<8x1xf32>
    %672 = arith.subf %634, %665 : vector<8x1xf32>
    %673 = math.exp %672 : vector<8x1xf32>
    %674 = arith.subf %640, %665 : vector<8x1xf32>
    %675 = math.exp %674 : vector<8x1xf32>
    %676 = arith.subf %646, %665 : vector<8x1xf32>
    %677 = math.exp %676 : vector<8x1xf32>
    %678 = arith.subf %652, %665 : vector<8x1xf32>
    %679 = math.exp %678 : vector<8x1xf32>
    %680 = arith.subf %658, %665 : vector<8x1xf32>
    %681 = math.exp %680 : vector<8x1xf32>
    %682 = arith.addf %667, %669 : vector<8x1xf32>
    %683 = arith.addf %682, %671 : vector<8x1xf32>
    %684 = arith.addf %683, %673 : vector<8x1xf32>
    %685 = arith.addf %684, %675 : vector<8x1xf32>
    %686 = arith.addf %685, %677 : vector<8x1xf32>
    %687 = arith.addf %686, %679 : vector<8x1xf32>
    %688 = arith.addf %687, %681 : vector<8x1xf32>
    %689 = tpu.reciprocal %688 {approx = true} : vector<8x1xf32> -> vector<8x1xf32>
    %690 = arith.mulf %667, %689 : vector<8x1xf32>
    %691 = vector.extract_strided_slice %9 {offsets = [0, 0], sizes = [8, 128], strides = [1, 1]} : vector<8x1024xf32> to vector<8x128xf32>
    %692 = vector.broadcast %690 : vector<8x1xf32> to vector<8x128xf32>
    %693 = arith.mulf %692, %691 : vector<8x128xf32>
    %694 = arith.mulf %669, %689 : vector<8x1xf32>
    %695 = vector.extract_strided_slice %9 {offsets = [0, 128], sizes = [8, 128], strides = [1, 1]} : vector<8x1024xf32> to vector<8x128xf32>
    %696 = vector.broadcast %694 : vector<8x1xf32> to vector<8x128xf32>
    %697 = arith.mulf %696, %695 : vector<8x128xf32>
    %698 = arith.addf %693, %697 : vector<8x128xf32>
    %699 = arith.mulf %671, %689 : vector<8x1xf32>
    %700 = vector.extract_strided_slice %9 {offsets = [0, 256], sizes = [8, 128], strides = [1, 1]} : vector<8x1024xf32> to vector<8x128xf32>
    %701 = vector.broadcast %699 : vector<8x1xf32> to vector<8x128xf32>
    %702 = arith.mulf %701, %700 : vector<8x128xf32>
    %703 = arith.addf %698, %702 : vector<8x128xf32>
    %704 = arith.mulf %673, %689 : vector<8x1xf32>
    %705 = vector.extract_strided_slice %9 {offsets = [0, 384], sizes = [8, 128], strides = [1, 1]} : vector<8x1024xf32> to vector<8x128xf32>
    %706 = vector.broadcast %704 : vector<8x1xf32> to vector<8x128xf32>
    %707 = arith.mulf %706, %705 : vector<8x128xf32>
    %708 = arith.addf %703, %707 : vector<8x128xf32>
    %709 = arith.mulf %675, %689 : vector<8x1xf32>
    %710 = vector.extract_strided_slice %9 {offsets = [0, 512], sizes = [8, 128], strides = [1, 1]} : vector<8x1024xf32> to vector<8x128xf32>
    %711 = vector.broadcast %709 : vector<8x1xf32> to vector<8x128xf32>
    %712 = arith.mulf %711, %710 : vector<8x128xf32>
    %713 = arith.addf %708, %712 : vector<8x128xf32>
    %714 = arith.mulf %677, %689 : vector<8x1xf32>
    %715 = vector.extract_strided_slice %9 {offsets = [0, 640], sizes = [8, 128], strides = [1, 1]} : vector<8x1024xf32> to vector<8x128xf32>
    %716 = vector.broadcast %714 : vector<8x1xf32> to vector<8x128xf32>
    %717 = arith.mulf %716, %715 : vector<8x128xf32>
    %718 = arith.addf %713, %717 : vector<8x128xf32>
    %719 = arith.mulf %679, %689 : vector<8x1xf32>
    %720 = vector.extract_strided_slice %9 {offsets = [0, 768], sizes = [8, 128], strides = [1, 1]} : vector<8x1024xf32> to vector<8x128xf32>
    %721 = vector.broadcast %719 : vector<8x1xf32> to vector<8x128xf32>
    %722 = arith.mulf %721, %720 : vector<8x128xf32>
    %723 = arith.addf %718, %722 : vector<8x128xf32>
    %724 = arith.mulf %681, %689 : vector<8x1xf32>
    %725 = vector.extract_strided_slice %9 {offsets = [0, 896], sizes = [8, 128], strides = [1, 1]} : vector<8x1024xf32> to vector<8x128xf32>
    %726 = vector.broadcast %724 : vector<8x1xf32> to vector<8x128xf32>
    %727 = arith.mulf %726, %725 : vector<8x128xf32>
    %728 = arith.addf %723, %727 : vector<8x128xf32>
    %c0_107 = arith.constant 0 : index
    %c640 = arith.constant 640 : index
    %729 = vector.load %arg4[%c0_107, %c640] : memref<8x1024xf32, #tpu.memory_space<vmem>>, vector<8x128xf32>
    tpu.vector_store %arg4[%c0_107, %c640], %728 {strides = array<i32>} : memref<8x1024xf32, #tpu.memory_space<vmem>>, vector<8x128xf32>,
    %730 = vector.extract_strided_slice %7 {offsets = [0, 768], sizes = [8, 128], strides = [1, 1]} : vector<8x1024xf32> to vector<8x128xf32>
    %731 = vector.extract_strided_slice %8 {offsets = [0, 0], sizes = [8, 128], strides = [1, 1]} : vector<8x1024xf32> to vector<8x128xf32>
    %732 = arith.mulf %730, %731 : vector<8x128xf32>
    %cst_108 = arith.constant dense<0.000000e+00> : vector<8xf32>
    %733 = vector.multi_reduction <add>, %732, %cst_108 [1] : vector<8x128xf32> to vector<8xf32>
    %734 = vector.shape_cast %733 : vector<8xf32> to vector<8x1xf32>
    %cst_109 = arith.constant -0.0883883461 : f32
    %735 = vector.broadcast %cst_109 : f32 to vector<8x1xf32>
    %736 = arith.mulf %734, %735 : vector<8x1xf32>
    %737 = vector.extract_strided_slice %8 {offsets = [0, 128], sizes = [8, 128], strides = [1, 1]} : vector<8x1024xf32> to vector<8x128xf32>
    %738 = arith.mulf %730, %737 : vector<8x128xf32>
    %cst_110 = arith.constant dense<0.000000e+00> : vector<8xf32>
    %739 = vector.multi_reduction <add>, %738, %cst_110 [1] : vector<8x128xf32> to vector<8xf32>
    %740 = vector.shape_cast %739 : vector<8xf32> to vector<8x1xf32>
    %cst_111 = arith.constant -0.0883883461 : f32
    %741 = vector.broadcast %cst_111 : f32 to vector<8x1xf32>
    %742 = arith.mulf %740, %741 : vector<8x1xf32>
    %743 = vector.extract_strided_slice %8 {offsets = [0, 256], sizes = [8, 128], strides = [1, 1]} : vector<8x1024xf32> to vector<8x128xf32>
    %744 = arith.mulf %730, %743 : vector<8x128xf32>
    %cst_112 = arith.constant dense<0.000000e+00> : vector<8xf32>
    %745 = vector.multi_reduction <add>, %744, %cst_112 [1] : vector<8x128xf32> to vector<8xf32>
    %746 = vector.shape_cast %745 : vector<8xf32> to vector<8x1xf32>
    %cst_113 = arith.constant -0.0883883461 : f32
    %747 = vector.broadcast %cst_113 : f32 to vector<8x1xf32>
    %748 = arith.mulf %746, %747 : vector<8x1xf32>
    %749 = vector.extract_strided_slice %8 {offsets = [0, 384], sizes = [8, 128], strides = [1, 1]} : vector<8x1024xf32> to vector<8x128xf32>
    %750 = arith.mulf %730, %749 : vector<8x128xf32>
    %cst_114 = arith.constant dense<0.000000e+00> : vector<8xf32>
    %751 = vector.multi_reduction <add>, %750, %cst_114 [1] : vector<8x128xf32> to vector<8xf32>
    %752 = vector.shape_cast %751 : vector<8xf32> to vector<8x1xf32>
    %cst_115 = arith.constant -0.0883883461 : f32
    %753 = vector.broadcast %cst_115 : f32 to vector<8x1xf32>
    %754 = arith.mulf %752, %753 : vector<8x1xf32>
    %755 = vector.extract_strided_slice %8 {offsets = [0, 512], sizes = [8, 128], strides = [1, 1]} : vector<8x1024xf32> to vector<8x128xf32>
    %756 = arith.mulf %730, %755 : vector<8x128xf32>
    %cst_116 = arith.constant dense<0.000000e+00> : vector<8xf32>
    %757 = vector.multi_reduction <add>, %756, %cst_116 [1] : vector<8x128xf32> to vector<8xf32>
    %758 = vector.shape_cast %757 : vector<8xf32> to vector<8x1xf32>
    %cst_117 = arith.constant -0.0883883461 : f32
    %759 = vector.broadcast %cst_117 : f32 to vector<8x1xf32>
    %760 = arith.mulf %758, %759 : vector<8x1xf32>
    %761 = vector.extract_strided_slice %8 {offsets = [0, 640], sizes = [8, 128], strides = [1, 1]} : vector<8x1024xf32> to vector<8x128xf32>
    %762 = arith.mulf %730, %761 : vector<8x128xf32>
    %cst_118 = arith.constant dense<0.000000e+00> : vector<8xf32>
    %763 = vector.multi_reduction <add>, %762, %cst_118 [1] : vector<8x128xf32> to vector<8xf32>
    %764 = vector.shape_cast %763 : vector<8xf32> to vector<8x1xf32>
    %cst_119 = arith.constant -0.0883883461 : f32
    %765 = vector.broadcast %cst_119 : f32 to vector<8x1xf32>
    %766 = arith.mulf %764, %765 : vector<8x1xf32>
    %767 = vector.extract_strided_slice %8 {offsets = [0, 768], sizes = [8, 128], strides = [1, 1]} : vector<8x1024xf32> to vector<8x128xf32>
    %768 = arith.mulf %730, %767 : vector<8x128xf32>
    %cst_120 = arith.constant dense<0.000000e+00> : vector<8xf32>
    %769 = vector.multi_reduction <add>, %768, %cst_120 [1] : vector<8x128xf32> to vector<8xf32>
    %770 = vector.shape_cast %769 : vector<8xf32> to vector<8x1xf32>
    %cst_121 = arith.constant -0.0883883461 : f32
    %771 = vector.broadcast %cst_121 : f32 to vector<8x1xf32>
    %772 = arith.mulf %770, %771 : vector<8x1xf32>
    %773 = vector.extract_strided_slice %8 {offsets = [0, 896], sizes = [8, 128], strides = [1, 1]} : vector<8x1024xf32> to vector<8x128xf32>
    %774 = arith.mulf %730, %773 : vector<8x128xf32>
    %cst_122 = arith.constant dense<0.000000e+00> : vector<8xf32>
    %775 = vector.multi_reduction <add>, %774, %cst_122 [1] : vector<8x128xf32> to vector<8xf32>
    %776 = vector.shape_cast %775 : vector<8xf32> to vector<8x1xf32>
    %cst_123 = arith.constant -0.0883883461 : f32
    %777 = vector.broadcast %cst_123 : f32 to vector<8x1xf32>
    %778 = arith.mulf %776, %777 : vector<8x1xf32>
    %779 = arith.maximumf %736, %742 : vector<8x1xf32>
    %780 = arith.maximumf %779, %748 : vector<8x1xf32>
    %781 = arith.maximumf %780, %754 : vector<8x1xf32>
    %782 = arith.maximumf %781, %760 : vector<8x1xf32>
    %783 = arith.maximumf %782, %766 : vector<8x1xf32>
    %784 = arith.maximumf %783, %772 : vector<8x1xf32>
    %785 = arith.maximumf %784, %778 : vector<8x1xf32>
    %786 = arith.subf %736, %785 : vector<8x1xf32>
    %787 = math.exp %786 : vector<8x1xf32>
    %788 = arith.subf %742, %785 : vector<8x1xf32>
    %789 = math.exp %788 : vector<8x1xf32>
    %790 = arith.subf %748, %785 : vector<8x1xf32>
    %791 = math.exp %790 : vector<8x1xf32>
    %792 = arith.subf %754, %785 : vector<8x1xf32>
    %793 = math.exp %792 : vector<8x1xf32>
    %794 = arith.subf %760, %785 : vector<8x1xf32>
    %795 = math.exp %794 : vector<8x1xf32>
    %796 = arith.subf %766, %785 : vector<8x1xf32>
    %797 = math.exp %796 : vector<8x1xf32>
    %798 = arith.subf %772, %785 : vector<8x1xf32>
    %799 = math.exp %798 : vector<8x1xf32>
    %800 = arith.subf %778, %785 : vector<8x1xf32>
    %801 = math.exp %800 : vector<8x1xf32>
    %802 = arith.addf %787, %789 : vector<8x1xf32>
    %803 = arith.addf %802, %791 : vector<8x1xf32>
    %804 = arith.addf %803, %793 : vector<8x1xf32>
    %805 = arith.addf %804, %795 : vector<8x1xf32>
    %806 = arith.addf %805, %797 : vector<8x1xf32>
    %807 = arith.addf %806, %799 : vector<8x1xf32>
    %808 = arith.addf %807, %801 : vector<8x1xf32>
    %809 = tpu.reciprocal %808 {approx = true} : vector<8x1xf32> -> vector<8x1xf32>
    %810 = arith.mulf %787, %809 : vector<8x1xf32>
    %811 = vector.extract_strided_slice %9 {offsets = [0, 0], sizes = [8, 128], strides = [1, 1]} : vector<8x1024xf32> to vector<8x128xf32>
    %812 = vector.broadcast %810 : vector<8x1xf32> to vector<8x128xf32>
    %813 = arith.mulf %812, %811 : vector<8x128xf32>
    %814 = arith.mulf %789, %809 : vector<8x1xf32>
    %815 = vector.extract_strided_slice %9 {offsets = [0, 128], sizes = [8, 128], strides = [1, 1]} : vector<8x1024xf32> to vector<8x128xf32>
    %816 = vector.broadcast %814 : vector<8x1xf32> to vector<8x128xf32>
    %817 = arith.mulf %816, %815 : vector<8x128xf32>
    %818 = arith.addf %813, %817 : vector<8x128xf32>
    %819 = arith.mulf %791, %809 : vector<8x1xf32>
    %820 = vector.extract_strided_slice %9 {offsets = [0, 256], sizes = [8, 128], strides = [1, 1]} : vector<8x1024xf32> to vector<8x128xf32>
    %821 = vector.broadcast %819 : vector<8x1xf32> to vector<8x128xf32>
    %822 = arith.mulf %821, %820 : vector<8x128xf32>
    %823 = arith.addf %818, %822 : vector<8x128xf32>
    %824 = arith.mulf %793, %809 : vector<8x1xf32>
    %825 = vector.extract_strided_slice %9 {offsets = [0, 384], sizes = [8, 128], strides = [1, 1]} : vector<8x1024xf32> to vector<8x128xf32>
    %826 = vector.broadcast %824 : vector<8x1xf32> to vector<8x128xf32>
    %827 = arith.mulf %826, %825 : vector<8x128xf32>
    %828 = arith.addf %823, %827 : vector<8x128xf32>
    %829 = arith.mulf %795, %809 : vector<8x1xf32>
    %830 = vector.extract_strided_slice %9 {offsets = [0, 512], sizes = [8, 128], strides = [1, 1]} : vector<8x1024xf32> to vector<8x128xf32>
    %831 = vector.broadcast %829 : vector<8x1xf32> to vector<8x128xf32>
    %832 = arith.mulf %831, %830 : vector<8x128xf32>
    %833 = arith.addf %828, %832 : vector<8x128xf32>
    %834 = arith.mulf %797, %809 : vector<8x1xf32>
    %835 = vector.extract_strided_slice %9 {offsets = [0, 640], sizes = [8, 128], strides = [1, 1]} : vector<8x1024xf32> to vector<8x128xf32>
    %836 = vector.broadcast %834 : vector<8x1xf32> to vector<8x128xf32>
    %837 = arith.mulf %836, %835 : vector<8x128xf32>
    %838 = arith.addf %833, %837 : vector<8x128xf32>
    %839 = arith.mulf %799, %809 : vector<8x1xf32>
    %840 = vector.extract_strided_slice %9 {offsets = [0, 768], sizes = [8, 128], strides = [1, 1]} : vector<8x1024xf32> to vector<8x128xf32>
    %841 = vector.broadcast %839 : vector<8x1xf32> to vector<8x128xf32>
    %842 = arith.mulf %841, %840 : vector<8x128xf32>
    %843 = arith.addf %838, %842 : vector<8x128xf32>
    %844 = arith.mulf %801, %809 : vector<8x1xf32>
    %845 = vector.extract_strided_slice %9 {offsets = [0, 896], sizes = [8, 128], strides = [1, 1]} : vector<8x1024xf32> to vector<8x128xf32>
    %846 = vector.broadcast %844 : vector<8x1xf32> to vector<8x128xf32>
    %847 = arith.mulf %846, %845 : vector<8x128xf32>
    %848 = arith.addf %843, %847 : vector<8x128xf32>
    %c0_124 = arith.constant 0 : index
    %c768 = arith.constant 768 : index
    %849 = vector.load %arg4[%c0_124, %c768] : memref<8x1024xf32, #tpu.memory_space<vmem>>, vector<8x128xf32>
    tpu.vector_store %arg4[%c0_124, %c768], %848 {strides = array<i32>} : memref<8x1024xf32, #tpu.memory_space<vmem>>, vector<8x128xf32>,
    %850 = vector.extract_strided_slice %7 {offsets = [0, 896], sizes = [8, 128], strides = [1, 1]} : vector<8x1024xf32> to vector<8x128xf32>
    %851 = vector.extract_strided_slice %8 {offsets = [0, 0], sizes = [8, 128], strides = [1, 1]} : vector<8x1024xf32> to vector<8x128xf32>
    %852 = arith.mulf %850, %851 : vector<8x128xf32>
    %cst_125 = arith.constant dense<0.000000e+00> : vector<8xf32>
    %853 = vector.multi_reduction <add>, %852, %cst_125 [1] : vector<8x128xf32> to vector<8xf32>
    %854 = vector.shape_cast %853 : vector<8xf32> to vector<8x1xf32>
    %cst_126 = arith.constant -0.0883883461 : f32
    %855 = vector.broadcast %cst_126 : f32 to vector<8x1xf32>
    %856 = arith.mulf %854, %855 : vector<8x1xf32>
    %857 = vector.extract_strided_slice %8 {offsets = [0, 128], sizes = [8, 128], strides = [1, 1]} : vector<8x1024xf32> to vector<8x128xf32>
    %858 = arith.mulf %850, %857 : vector<8x128xf32>
    %cst_127 = arith.constant dense<0.000000e+00> : vector<8xf32>
    %859 = vector.multi_reduction <add>, %858, %cst_127 [1] : vector<8x128xf32> to vector<8xf32>
    %860 = vector.shape_cast %859 : vector<8xf32> to vector<8x1xf32>
    %cst_128 = arith.constant -0.0883883461 : f32
    %861 = vector.broadcast %cst_128 : f32 to vector<8x1xf32>
    %862 = arith.mulf %860, %861 : vector<8x1xf32>
    %863 = vector.extract_strided_slice %8 {offsets = [0, 256], sizes = [8, 128], strides = [1, 1]} : vector<8x1024xf32> to vector<8x128xf32>
    %864 = arith.mulf %850, %863 : vector<8x128xf32>
    %cst_129 = arith.constant dense<0.000000e+00> : vector<8xf32>
    %865 = vector.multi_reduction <add>, %864, %cst_129 [1] : vector<8x128xf32> to vector<8xf32>
    %866 = vector.shape_cast %865 : vector<8xf32> to vector<8x1xf32>
    %cst_130 = arith.constant -0.0883883461 : f32
    %867 = vector.broadcast %cst_130 : f32 to vector<8x1xf32>
    %868 = arith.mulf %866, %867 : vector<8x1xf32>
    %869 = vector.extract_strided_slice %8 {offsets = [0, 384], sizes = [8, 128], strides = [1, 1]} : vector<8x1024xf32> to vector<8x128xf32>
    %870 = arith.mulf %850, %869 : vector<8x128xf32>
    %cst_131 = arith.constant dense<0.000000e+00> : vector<8xf32>
    %871 = vector.multi_reduction <add>, %870, %cst_131 [1] : vector<8x128xf32> to vector<8xf32>
    %872 = vector.shape_cast %871 : vector<8xf32> to vector<8x1xf32>
    %cst_132 = arith.constant -0.0883883461 : f32
    %873 = vector.broadcast %cst_132 : f32 to vector<8x1xf32>
    %874 = arith.mulf %872, %873 : vector<8x1xf32>
    %875 = vector.extract_strided_slice %8 {offsets = [0, 512], sizes = [8, 128], strides = [1, 1]} : vector<8x1024xf32> to vector<8x128xf32>
    %876 = arith.mulf %850, %875 : vector<8x128xf32>
    %cst_133 = arith.constant dense<0.000000e+00> : vector<8xf32>
    %877 = vector.multi_reduction <add>, %876, %cst_133 [1] : vector<8x128xf32> to vector<8xf32>
    %878 = vector.shape_cast %877 : vector<8xf32> to vector<8x1xf32>
    %cst_134 = arith.constant -0.0883883461 : f32
    %879 = vector.broadcast %cst_134 : f32 to vector<8x1xf32>
    %880 = arith.mulf %878, %879 : vector<8x1xf32>
    %881 = vector.extract_strided_slice %8 {offsets = [0, 640], sizes = [8, 128], strides = [1, 1]} : vector<8x1024xf32> to vector<8x128xf32>
    %882 = arith.mulf %850, %881 : vector<8x128xf32>
    %cst_135 = arith.constant dense<0.000000e+00> : vector<8xf32>
    %883 = vector.multi_reduction <add>, %882, %cst_135 [1] : vector<8x128xf32> to vector<8xf32>
    %884 = vector.shape_cast %883 : vector<8xf32> to vector<8x1xf32>
    %cst_136 = arith.constant -0.0883883461 : f32
    %885 = vector.broadcast %cst_136 : f32 to vector<8x1xf32>
    %886 = arith.mulf %884, %885 : vector<8x1xf32>
    %887 = vector.extract_strided_slice %8 {offsets = [0, 768], sizes = [8, 128], strides = [1, 1]} : vector<8x1024xf32> to vector<8x128xf32>
    %888 = arith.mulf %850, %887 : vector<8x128xf32>
    %cst_137 = arith.constant dense<0.000000e+00> : vector<8xf32>
    %889 = vector.multi_reduction <add>, %888, %cst_137 [1] : vector<8x128xf32> to vector<8xf32>
    %890 = vector.shape_cast %889 : vector<8xf32> to vector<8x1xf32>
    %cst_138 = arith.constant -0.0883883461 : f32
    %891 = vector.broadcast %cst_138 : f32 to vector<8x1xf32>
    %892 = arith.mulf %890, %891 : vector<8x1xf32>
    %893 = vector.extract_strided_slice %8 {offsets = [0, 896], sizes = [8, 128], strides = [1, 1]} : vector<8x1024xf32> to vector<8x128xf32>
    %894 = arith.mulf %850, %893 : vector<8x128xf32>
    %cst_139 = arith.constant dense<0.000000e+00> : vector<8xf32>
    %895 = vector.multi_reduction <add>, %894, %cst_139 [1] : vector<8x128xf32> to vector<8xf32>
    %896 = vector.shape_cast %895 : vector<8xf32> to vector<8x1xf32>
    %cst_140 = arith.constant -0.0883883461 : f32
    %897 = vector.broadcast %cst_140 : f32 to vector<8x1xf32>
    %898 = arith.mulf %896, %897 : vector<8x1xf32>
    %899 = arith.maximumf %856, %862 : vector<8x1xf32>
    %900 = arith.maximumf %899, %868 : vector<8x1xf32>
    %901 = arith.maximumf %900, %874 : vector<8x1xf32>
    %902 = arith.maximumf %901, %880 : vector<8x1xf32>
    %903 = arith.maximumf %902, %886 : vector<8x1xf32>
    %904 = arith.maximumf %903, %892 : vector<8x1xf32>
    %905 = arith.maximumf %904, %898 : vector<8x1xf32>
    %906 = arith.subf %856, %905 : vector<8x1xf32>
    %907 = math.exp %906 : vector<8x1xf32>
    %908 = arith.subf %862, %905 : vector<8x1xf32>
    %909 = math.exp %908 : vector<8x1xf32>
    %910 = arith.subf %868, %905 : vector<8x1xf32>
    %911 = math.exp %910 : vector<8x1xf32>
    %912 = arith.subf %874, %905 : vector<8x1xf32>
    %913 = math.exp %912 : vector<8x1xf32>
    %914 = arith.subf %880, %905 : vector<8x1xf32>
    %915 = math.exp %914 : vector<8x1xf32>
    %916 = arith.subf %886, %905 : vector<8x1xf32>
    %917 = math.exp %916 : vector<8x1xf32>
    %918 = arith.subf %892, %905 : vector<8x1xf32>
    %919 = math.exp %918 : vector<8x1xf32>
    %920 = arith.subf %898, %905 : vector<8x1xf32>
    %921 = math.exp %920 : vector<8x1xf32>
    %922 = arith.addf %907, %909 : vector<8x1xf32>
    %923 = arith.addf %922, %911 : vector<8x1xf32>
    %924 = arith.addf %923, %913 : vector<8x1xf32>
    %925 = arith.addf %924, %915 : vector<8x1xf32>
    %926 = arith.addf %925, %917 : vector<8x1xf32>
    %927 = arith.addf %926, %919 : vector<8x1xf32>
    %928 = arith.addf %927, %921 : vector<8x1xf32>
    %929 = tpu.reciprocal %928 {approx = true} : vector<8x1xf32> -> vector<8x1xf32>
    %930 = arith.mulf %907, %929 : vector<8x1xf32>
    %931 = vector.extract_strided_slice %9 {offsets = [0, 0], sizes = [8, 128], strides = [1, 1]} : vector<8x1024xf32> to vector<8x128xf32>
    %932 = vector.broadcast %930 : vector<8x1xf32> to vector<8x128xf32>
    %933 = arith.mulf %932, %931 : vector<8x128xf32>
    %934 = arith.mulf %909, %929 : vector<8x1xf32>
    %935 = vector.extract_strided_slice %9 {offsets = [0, 128], sizes = [8, 128], strides = [1, 1]} : vector<8x1024xf32> to vector<8x128xf32>
    %936 = vector.broadcast %934 : vector<8x1xf32> to vector<8x128xf32>
    %937 = arith.mulf %936, %935 : vector<8x128xf32>
    %938 = arith.addf %933, %937 : vector<8x128xf32>
    %939 = arith.mulf %911, %929 : vector<8x1xf32>
    %940 = vector.extract_strided_slice %9 {offsets = [0, 256], sizes = [8, 128], strides = [1, 1]} : vector<8x1024xf32> to vector<8x128xf32>
    %941 = vector.broadcast %939 : vector<8x1xf32> to vector<8x128xf32>
    %942 = arith.mulf %941, %940 : vector<8x128xf32>
    %943 = arith.addf %938, %942 : vector<8x128xf32>
    %944 = arith.mulf %913, %929 : vector<8x1xf32>
    %945 = vector.extract_strided_slice %9 {offsets = [0, 384], sizes = [8, 128], strides = [1, 1]} : vector<8x1024xf32> to vector<8x128xf32>
    %946 = vector.broadcast %944 : vector<8x1xf32> to vector<8x128xf32>
    %947 = arith.mulf %946, %945 : vector<8x128xf32>
    %948 = arith.addf %943, %947 : vector<8x128xf32>
    %949 = arith.mulf %915, %929 : vector<8x1xf32>
    %950 = vector.extract_strided_slice %9 {offsets = [0, 512], sizes = [8, 128], strides = [1, 1]} : vector<8x1024xf32> to vector<8x128xf32>
    %951 = vector.broadcast %949 : vector<8x1xf32> to vector<8x128xf32>
    %952 = arith.mulf %951, %950 : vector<8x128xf32>
    %953 = arith.addf %948, %952 : vector<8x128xf32>
    %954 = arith.mulf %917, %929 : vector<8x1xf32>
    %955 = vector.extract_strided_slice %9 {offsets = [0, 640], sizes = [8, 128], strides = [1, 1]} : vector<8x1024xf32> to vector<8x128xf32>
    %956 = vector.broadcast %954 : vector<8x1xf32> to vector<8x128xf32>
    %957 = arith.mulf %956, %955 : vector<8x128xf32>
    %958 = arith.addf %953, %957 : vector<8x128xf32>
    %959 = arith.mulf %919, %929 : vector<8x1xf32>
    %960 = vector.extract_strided_slice %9 {offsets = [0, 768], sizes = [8, 128], strides = [1, 1]} : vector<8x1024xf32> to vector<8x128xf32>
    %961 = vector.broadcast %959 : vector<8x1xf32> to vector<8x128xf32>
    %962 = arith.mulf %961, %960 : vector<8x128xf32>
    %963 = arith.addf %958, %962 : vector<8x128xf32>
    %964 = arith.mulf %921, %929 : vector<8x1xf32>
    %965 = vector.extract_strided_slice %9 {offsets = [0, 896], sizes = [8, 128], strides = [1, 1]} : vector<8x1024xf32> to vector<8x128xf32>
    %966 = vector.broadcast %964 : vector<8x1xf32> to vector<8x128xf32>
    %967 = arith.mulf %966, %965 : vector<8x128xf32>
    %968 = arith.addf %963, %967 : vector<8x128xf32>
    %c0_141 = arith.constant 0 : index
    %c896 = arith.constant 896 : index
    %969 = vector.load %arg4[%c0_141, %c896] : memref<8x1024xf32, #tpu.memory_space<vmem>>, vector<8x128xf32>
    tpu.vector_store %arg4[%c0_141, %c896], %968 {strides = array<i32>} : memref<8x1024xf32, #tpu.memory_space<vmem>>, vector<8x128xf32>,
    return
  }
  func.func @transform_0(%arg0: i32) -> (i32, i32) {
    %c0_i32 = arith.constant 0 : i32
    %c0_i32_0 = arith.constant 0 : i32
    %c0_i32_1 = arith.constant 0 : i32
    return %c0_i32, %c0_i32_0 : i32, i32
  }
  func.func @transform_1(%arg0: i32) -> (i32, i32) {
    %c0_i32 = arith.constant 0 : i32
    %c0_i32_0 = arith.constant 0 : i32
    %c0_i32_1 = arith.constant 0 : i32
    return %c0_i32, %c0_i32_0 : i32, i32
  }
  func.func @transform_2(%arg0: i32) -> (i32, i32) {
    %c0_i32 = arith.constant 0 : i32
    %c0_i32_0 = arith.constant 0 : i32
    %c0_i32_1 = arith.constant 0 : i32
    return %c0_i32, %c0_i32_0 : i32, i32
  }
  func.func @transform_3(%arg0: i32) -> (i32, i32) {
    %c0_i32 = arith.constant 0 : i32
    %c0_i32_0 = arith.constant 0 : i32
    %c0_i32_1 = arith.constant 0 : i32
    return %c0_i32, %c0_i32_0 : i32, i32
  }
}

</mosaic_0001>

<llo_original>
// kernel: tpu_custom_call.1
$region0: #{tpu_custom_call.1}
  #allocation0 [shape = 'u32[]', space=smem, size = 0x4, offset = 0x4, fixed_abs, tag = 'smem constant byte address 0x4 - core index']
  #allocation1 [shape = 'u32[144,128]{1,0:T(1,128)}', space=vmem, size = 0x12000, scoped, tag = 'internal scratch']
  %s0 = inlined_call_operand.hbm [shape: f32[8,1024], index: 0, kind: input, shape index: {}]
  %s1 = inlined_call_operand.hbm [shape: bf16[1024,3072], index: 1, kind: input, shape index: {}]
  %s2 = inlined_call_operand.hbm [shape: f32[1,3072], index: 2, kind: input, shape index: {}]
  %s3 = inlined_call_operand.hbm [shape: f32[8,1024], index: 3, kind: output, shape index: {}]
  %s4 = sld [smem:[#allocation0]]
  $region34: #{tpu_custom_call.1} parent=0
    _
  %s6 = ssub.s32 1, %s4
  %s7 = scalar_select 0, %s6, %s4
  $region1: #{tpu_custom_call.1} parent=0
    #allocation2 [shape = 'u8[32768]{0}', space=vmem, size = 0x8000, scoped, tag = 'input window, operand 0, single buffered']
    #allocation3 [shape = 's32[1]{0}', space=sflag, size = 0x4, scoped, tag = 'scoped memory for tpu_custom_call.1']
    #allocation4 [shape = 's32[1]{0}', space=sflag, size = 0x4, scoped, tag = 'scoped memory for tpu_custom_call.1']
    #allocation5 [shape = 'u8[6291456]{0}', space=vmem, size = 0x600000, scoped, tag = 'input window, operand 1, single buffered']
    #allocation6 [shape = 's32[1]{0}', space=sflag, size = 0x4, scoped, tag = 'scoped memory for tpu_custom_call.1']
    #allocation7 [shape = 'u8[12288]{0}', space=vmem, size = 0x3000, scoped, tag = 'input window, operand 2, single buffered']
    #allocation8 [shape = 'u8[32768]{0}', space=vmem, size = 0x8000, scoped, tag = 'output window, operand 0, single buffered']
    %8 = vsyncpa [#allocation3], 0
    %9 = vsyncpa [#allocation6], 0
    %10 = vsyncpa [#allocation4], 0
    // Predicated region
    $region2: #{tpu_custom_call.1} parent=1 // pred_check
      _
    $region3: #{tpu_custom_call.1} parent=1 // pred_check_branch
      %12 = sbr.rel (0) target = $region5
    $region4: #{tpu_custom_call.1} parent=1 // pred_region
      %s14 = ssub.s32 1024, 1024
      %15 = vsyncadd [#allocation3], %s14
      %s17 = sshll.u32 [#allocation2], 4
      %s18 = int_to_ptr.vmem [resolvable:$true] %s17
      %20 = dma.hbm_to_vmem [thread:$0]  %s0, 1024, %s18, [#allocation3]
    $region5: #{tpu_custom_call.1} parent=1 // pred_fallthru
      _
    // Predicated region
    $region6: #{tpu_custom_call.1} parent=1 // pred_check
      _
    $region7: #{tpu_custom_call.1} parent=1 // pred_check_branch
      %22 = sbr.rel (0) target = $region9
    $region8: #{tpu_custom_call.1} parent=1 // pred_region
      %s24 = ssub.s32 196608, 196608
      %25 = vsyncadd [#allocation6], %s24
      %s26 = sshll.u32 [#allocation5], 4
      %s27 = int_to_ptr.vmem [resolvable:$true] %s26
      %32 = dma.hbm_to_vmem [thread:$0]  %s1, 196608, %s27, [#allocation6], 1536, 1536, 96
    $region9: #{tpu_custom_call.1} parent=1 // pred_fallthru
      _
    // Predicated region
    $region10: #{tpu_custom_call.1} parent=1 // pred_check
      _
    $region11: #{tpu_custom_call.1} parent=1 // pred_check_branch
      %34 = sbr.rel (0) target = $region13
    $region12: #{tpu_custom_call.1} parent=1 // pred_region
      %s36 = ssub.s32 384, 384
      %37 = vsyncadd [#allocation6], %s36
      %s39 = sshll.u32 [#allocation7], 4
      %s40 = int_to_ptr.vmem [resolvable:$true] %s39
      %42 = dma.hbm_to_vmem [thread:$0]  %s2, 384, %s40, [#allocation6]
    $region13: #{tpu_custom_call.1} parent=1 // pred_fallthru
      _
    // Predicated region
    $region14: #{tpu_custom_call.1} parent=1 // pred_check
      _
    $region15: #{tpu_custom_call.1} parent=1 // pred_check_branch
      %44 = sbr.rel (0) target = $region17
    $region16: #{tpu_custom_call.1} parent=1 // pred_region
      %45 = dma.done [#allocation3], 1024
    $region17: #{tpu_custom_call.1} parent=1 // pred_fallthru
      _
    // Predicated region
    $region18: #{tpu_custom_call.1} parent=1 // pred_check
      _
    $region19: #{tpu_custom_call.1} parent=1 // pred_check_branch
      %47 = sbr.rel (0) target = $region21
    $region20: #{tpu_custom_call.1} parent=1 // pred_region
      %48 = dma.done [#allocation6], 196608
    $region21: #{tpu_custom_call.1} parent=1 // pred_fallthru
      _
    // Predicated region
    $region22: #{tpu_custom_call.1} parent=1 // pred_check
      _
    $region23: #{tpu_custom_call.1} parent=1 // pred_check_branch
      %50 = sbr.rel (0) target = $region25
    $region24: #{tpu_custom_call.1} parent=1 // pred_region
      %51 = dma.done [#allocation6], 384
    $region25: #{tpu_custom_call.1} parent=1 // pred_fallthru
      _
    %v52 = vld [vmem:[#allocation2] sm:$0xff]
    %v53 = vld [vmem:[#allocation2 + $0x8] sm:$0xff]
    %v54 = vld [vmem:[#allocation2 + $0x10] sm:$0xff]
    %v55 = vld [vmem:[#allocation2 + $0x18] sm:$0xff]
    %v56 = vld [vmem:[#allocation2 + $0x20] sm:$0xff]
    %v57 = vld [vmem:[#allocation2 + $0x28] sm:$0xff]
    %v58 = vld [vmem:[#allocation2 + $0x30] sm:$0xff]
    %v59 = vld [vmem:[#allocation2 + $0x38] sm:$0xff]
    %v60 = vpack.c.bf16 %v52, %v52
    %v61 = vpack.c.bf16 %v53, %v53
    %v62 = vpack.c.bf16 %v54, %v54
    %v63 = vpack.c.bf16 %v55, %v55
    %v64 = vpack.c.bf16 %v56, %v56
    %v65 = vpack.c.bf16 %v57, %v57
    %v66 = vpack.c.bf16 %v58, %v58
    %v67 = vpack.c.bf16 %v59, %v59
    %v68 = vld [vmem:[#allocation5] sm:$0xff]
    %v69 = vld [vmem:[#allocation5 + $0x8] sm:$0xff]
    %v70 = vld [vmem:[#allocation5 + $0x10] sm:$0xff]
    %v71 = vld [vmem:[#allocation5 + $0x18] sm:$0xff]
    %v72 = vld [vmem:[#allocation5 + $0x20] sm:$0xff]
    %v73 = vld [vmem:[#allocation5 + $0x28] sm:$0xff]
    %v74 = vld [vmem:[#allocation5 + $0x30] sm:$0xff]
    %v75 = vld [vmem:[#allocation5 + $0x38] sm:$0xff]
    %v76 = vld [vmem:[#allocation5 + $0x40] sm:$0xff]
    %v77 = vld [vmem:[#allocation5 + $0x48] sm:$0xff]
    %v78 = vld [vmem:[#allocation5 + $0x50] sm:$0xff]
    %v79 = vld [vmem:[#allocation5 + $0x58] sm:$0xff]
    %v80 = vld [vmem:[#allocation5 + $0x60] sm:$0xff]
    %v81 = vld [vmem:[#allocation5 + $0x68] sm:$0xff]
    %v82 = vld [vmem:[#allocation5 + $0x70] sm:$0xff]
    %v83 = vld [vmem:[#allocation5 + $0x78] sm:$0xff]
    %v84 = vld [vmem:[#allocation5 + $0x80] sm:$0xff]
    %v85 = vld [vmem:[#allocation5 + $0x88] sm:$0xff]
    %v86 = vld [vmem:[#allocation5 + $0x90] sm:$0xff]
    %v87 = vld [vmem:[#allocation5 + $0x98] sm:$0xff]
    %v88 = vld [vmem:[#allocation5 + $0xa0] sm:$0xff]
    %v89 = vld [vmem:[#allocation5 + $0xa8] sm:$0xff]
    %v90 = vld [vmem:[#allocation5 + $0xb0] sm:$0xff]
    %v91 = vld [vmem:[#allocation5 + $0xb8] sm:$0xff]
    %v92 = vld [vmem:[#allocation5 + $0xc0] sm:$0xff]
    %v93 = vld [vmem:[#allocation5 + $0xc8] sm:$0xff]
    %v94 = vld [vmem:[#allocation5 + $0xd0] sm:$0xff]
    %v95 = vld [vmem:[#allocation5 + $0xd8] sm:$0xff]
    %v96 = vld [vmem:[#allocation5 + $0xe0] sm:$0xff]
    %v97 = vld [vmem:[#allocation5 + $0xe8] sm:$0xff]
    %v98 = vld [vmem:[#allocation5 + $0xf0] sm:$0xff]
    %v99 = vld [vmem:[#allocation5 + $0xf8] sm:$0xff]
    %v100 = vld [vmem:[#allocation5 + $0x100] sm:$0xff]
    %v101 = vld [vmem:[#allocation5 + $0x108] sm:$0xff]
    %v102 = vld [vmem:[#allocation5 + $0x110] sm:$0xff]
    %v103 = vld [vmem:[#allocation5 + $0x118] sm:$0xff]
    %v104 = vld [vmem:[#allocation5 + $0x120] sm:$0xff]
    %v105 = vld [vmem:[#allocation5 + $0x128] sm:$0xff]
    %v106 = vld [vmem:[#allocation5 + $0x130] sm:$0xff]
    %v107 = vld [vmem:[#allocation5 + $0x138] sm:$0xff]
    %v108 = vld [vmem:[#allocation5 + $0x140] sm:$0xff]
    %v109 = vld [vmem:[#allocation5 + $0x148] sm:$0xff]
    %v110 = vld [vmem:[#allocation5 + $0x150] sm:$0xff]
    %v111 = vld [vmem:[#allocation5 + $0x158] sm:$0xff]
    %v112 = vld [vmem:[#allocation5 + $0x160] sm:$0xff]
    %v113 = vld [vmem:[#allocation5 + $0x168] sm:$0xff]
    %v114 = vld [vmem:[#allocation5 + $0x170] sm:$0xff]
    %v115 = vld [vmem:[#allocation5 + $0x178] sm:$0xff]
    %v116 = vld [vmem:[#allocation5 + $0x180] sm:$0xff]
    %v117 = vld [vmem:[#allocation5 + $0x188] sm:$0xff]
    %v118 = vld [vmem:[#allocation5 + $0x190] sm:$0xff]
    %v119 = vld [vmem:[#allocation5 + $0x198] sm:$0xff]
    %v120 = vld [vmem:[#allocation5 + $0x1a0] sm:$0xff]
    %v121 = vld [vmem:[#allocation5 + $0x1a8] sm:$0xff]
    %v122 = vld [vmem:[#allocation5 + $0x1b0] sm:$0xff]
    %v123 = vld [vmem:[#allocation5 + $0x1b8] sm:$0xff]
    %v124 = vld [vmem:[#allocation5 + $0x1c0] sm:$0xff]
    %v125 = vld [vmem:[#allocation5 + $0x1c8] sm:$0xff]
    %v126 = vld [vmem:[#allocation5 + $0x1d0] sm:$0xff]
    %v127 = vld [vmem:[#allocation5 + $0x1d8] sm:$0xff]
    %v128 = vld [vmem:[#allocation5 + $0x1e0] sm:$0xff]
    %v129 = vld [vmem:[#allocation5 + $0x1e8] sm:$0xff]
    %v130 = vld [vmem:[#allocation5 + $0x1f0] sm:$0xff]
    %v131 = vld [vmem:[#allocation5 + $0x1f8] sm:$0xff]
    %v132 = vld [vmem:[#allocation5 + $0x200] sm:$0xff]
    %v133 = vld [vmem:[#allocation5 + $0x208] sm:$0xff]
    %v134 = vld [vmem:[#allocation5 + $0x210] sm:$0xff]
    %v135 = vld [vmem:[#allocation5 + $0x218] sm:$0xff]
    %v136 = vld [vmem:[#allocation5 + $0x220] sm:$0xff]
    %v137 = vld [vmem:[#allocation5 + $0x228] sm:$0xff]
    %v138 = vld [vmem:[#allocation5 + $0x230] sm:$0xff]
    %v139 = vld [vmem:[#allocation5 + $0x238] sm:$0xff]
    %v140 = vld [vmem:[#allocation5 + $0x240] sm:$0xff]
    %v141 = vld [vmem:[#allocation5 + $0x248] sm:$0xff]
    %v142 = vld [vmem:[#allocation5 + $0x250] sm:$0xff]
    %v143 = vld [vmem:[#allocation5 + $0x258] sm:$0xff]
    %v144 = vld [vmem:[#allocation5 + $0x260] sm:$0xff]
    %v145 = vld [vmem:[#allocation5 + $0x268] sm:$0xff]
    %v146 = vld [vmem:[#allocation5 + $0x270] sm:$0xff]
    %v147 = vld [vmem:[#allocation5 + $0x278] sm:$0xff]
    %v148 = vld [vmem:[#allocation5 + $0x280] sm:$0xff]
    %v149 = vld [vmem:[#allocation5 + $0x288] sm:$0xff]
    %v150 = vld [vmem:[#allocation5 + $0x290] sm:$0xff]
    %v151 = vld [vmem:[#allocation5 + $0x298] sm:$0xff]
    %v152 = vld [vmem:[#allocation5 + $0x2a0] sm:$0xff]
    %v153 = vld [vmem:[#allocation5 + $0x2a8] sm:$0xff]
    %v154 = vld [vmem:[#allocation5 + $0x2b0] sm:$0xff]
    %v155 = vld [vmem:[#allocation5 + $0x2b8] sm:$0xff]
    %v156 = vld [vmem:[#allocation5 + $0x2c0] sm:$0xff]
    %v157 = vld [vmem:[#allocation5 + $0x2c8] sm:$0xff]
    %v158 = vld [vmem:[#allocation5 + $0x2d0] sm:$0xff]
    %v159 = vld [vmem:[#allocation5 + $0x2d8] sm:$0xff]
    %v160 = vld [vmem:[#allocation5 + $0x2e0] sm:$0xff]
    %v161 = vld [vmem:[#allocation5 + $0x2e8] sm:$0xff]
    %v162 = vld [vmem:[#allocation5 + $0x2f0] sm:$0xff]
    %v163 = vld [vmem:[#allocation5 + $0x2f8] sm:$0xff]
    %v164 = vld [vmem:[#allocation5 + $0x300] sm:$0xff]
    %v165 = vld [vmem:[#allocation5 + $0x308] sm:$0xff]
    %v166 = vld [vmem:[#allocation5 + $0x310] sm:$0xff]
    %v167 = vld [vmem:[#allocation5 + $0x318] sm:$0xff]
    %v168 = vld [vmem:[#allocation5 + $0x320] sm:$0xff]
    %v169 = vld [vmem:[#allocation5 + $0x328] sm:$0xff]
    %v170 = vld [vmem:[#allocation5 + $0x330] sm:$0xff]
    %v171 = vld [vmem:[#allocation5 + $0x338] sm:$0xff]
    %v172 = vld [vmem:[#allocation5 + $0x340] sm:$0xff]
    %v173 = vld [vmem:[#allocation5 + $0x348] sm:$0xff]
    %v174 = vld [vmem:[#allocation5 + $0x350] sm:$0xff]
    %v175 = vld [vmem:[#allocation5 + $0x358] sm:$0xff]
    %v176 = vld [vmem:[#allocation5 + $0x360] sm:$0xff]
    %v177 = vld [vmem:[#allocation5 + $0x368] sm:$0xff]
    %v178 = vld [vmem:[#allocation5 + $0x370] sm:$0xff]
    %v179 = vld [vmem:[#allocation5 + $0x378] sm:$0xff]
    %v180 = vld [vmem:[#allocation5 + $0x380] sm:$0xff]
    %v181 = vld [vmem:[#allocation5 + $0x388] sm:$0xff]
    %v182 = vld [vmem:[#allocation5 + $0x390] sm:$0xff]
    %v183 = vld [vmem:[#allocation5 + $0x398] sm:$0xff]
    %v184 = vld [vmem:[#allocation5 + $0x3a0] sm:$0xff]
    %v185 = vld [vmem:[#allocation5 + $0x3a8] sm:$0xff]
    %v186 = vld [vmem:[#allocation5 + $0x3b0] sm:$0xff]
    %v187 = vld [vmem:[#allocation5 + $0x3b8] sm:$0xff]
    %v188 = vld [vmem:[#allocation5 + $0x3c0] sm:$0xff]
    %v189 = vld [vmem:[#allocation5 + $0x3c8] sm:$0xff]
    %v190 = vld [vmem:[#allocation5 + $0x3d0] sm:$0xff]
    %v191 = vld [vmem:[#allocation5 + $0x3d8] sm:$0xff]
    %v192 = vld [vmem:[#allocation5 + $0x3e0] sm:$0xff]
    %v193 = vld [vmem:[#allocation5 + $0x3e8] sm:$0xff]
    %v194 = vld [vmem:[#allocation5 + $0x3f0] sm:$0xff]
    %v195 = vld [vmem:[#allocation5 + $0x3f8] sm:$0xff]
    %v196 = vld [vmem:[#allocation5 + $0x400] sm:$0xff]
    %v197 = vld [vmem:[#allocation5 + $0x408] sm:$0xff]
    %v198 = vld [vmem:[#allocation5 + $0x410] sm:$0xff]
    %v199 = vld [vmem:[#allocation5 + $0x418] sm:$0xff]
    %v200 = vld [vmem:[#allocation5 + $0x420] sm:$0xff]
    %v201 = vld [vmem:[#allocation5 + $0x428] sm:$0xff]
    %v202 = vld [vmem:[#allocation5 + $0x430] sm:$0xff]
    %v203 = vld [vmem:[#allocation5 + $0x438] sm:$0xff]
    %v204 = vld [vmem:[#allocation5 + $0x440] sm:$0xff]
    %v205 = vld [vmem:[#allocation5 + $0x448] sm:$0xff]
    %v206 = vld [vmem:[#allocation5 + $0x450] sm:$0xff]
    %v207 = vld [vmem:[#allocation5 + $0x458] sm:$0xff]
    %v208 = vld [vmem:[#allocation5 + $0x460] sm:$0xff]
    %v209 = vld [vmem:[#allocation5 + $0x468] sm:$0xff]
    %v210 = vld [vmem:[#allocation5 + $0x470] sm:$0xff]
    %v211 = vld [vmem:[#allocation5 + $0x478] sm:$0xff]
    %v212 = vld [vmem:[#allocation5 + $0x480] sm:$0xff]
    %v213 = vld [vmem:[#allocation5 + $0x488] sm:$0xff]
    %v214 = vld [vmem:[#allocation5 + $0x490] sm:$0xff]
    %v215 = vld [vmem:[#allocation5 + $0x498] sm:$0xff]
    %v216 = vld [vmem:[#allocation5 + $0x4a0] sm:$0xff]
    %v217 = vld [vmem:[#allocation5 + $0x4a8] sm:$0xff]
    %v218 = vld [vmem:[#allocation5 + $0x4b0] sm:$0xff]
    %v219 = vld [vmem:[#allocation5 + $0x4b8] sm:$0xff]
    %v220 = vld [vmem:[#allocation5 + $0x4c0] sm:$0xff]
    %v221 = vld [vmem:[#allocation5 + $0x4c8] sm:$0xff]
    %v222 = vld [vmem:[#allocation5 + $0x4d0] sm:$0xff]
    %v223 = vld [vmem:[#allocation5 + $0x4d8] sm:$0xff]
    %v224 = vld [vmem:[#allocation5 + $0x4e0] sm:$0xff]
    %v225 = vld [vmem:[#allocation5 + $0x4e8] sm:$0xff]
    %v226 = vld [vmem:[#allocation5 + $0x4f0] sm:$0xff]
    %v227 = vld [vmem:[#allocation5 + $0x4f8] sm:$0xff]
    %v228 = vld [vmem:[#allocation5 + $0x500] sm:$0xff]
    %v229 = vld [vmem:[#allocation5 + $0x508] sm:$0xff]
    %v230 = vld [vmem:[#allocation5 + $0x510] sm:$0xff]
    %v231 = vld [vmem:[#allocation5 + $0x518] sm:$0xff]
    %v232 = vld [vmem:[#allocation5 + $0x520] sm:$0xff]
    %v233 = vld [vmem:[#allocation5 + $0x528] sm:$0xff]
    %v234 = vld [vmem:[#allocation5 + $0x530] sm:$0xff]
    %v235 = vld [vmem:[#allocation5 + $0x538] sm:$0xff]
    %v236 = vld [vmem:[#allocation5 + $0x540] sm:$0xff]
    %v237 = vld [vmem:[#allocation5 + $0x548] sm:$0xff]
    %v238 = vld [vmem:[#allocation5 + $0x550] sm:$0xff]
    %v239 = vld [vmem:[#allocation5 + $0x558] sm:$0xff]
    %v240 = vld [vmem:[#allocation5 + $0x560] sm:$0xff]
    %v241 = vld [vmem:[#allocation5 + $0x568] sm:$0xff]
    %v242 = vld [vmem:[#allocation5 + $0x570] sm:$0xff]
    %v243 = vld [vmem:[#allocation5 + $0x578] sm:$0xff]
    %v244 = vld [vmem:[#allocation5 + $0x580] sm:$0xff]
    %v245 = vld [vmem:[#allocation5 + $0x588] sm:$0xff]
    %v246 = vld [vmem:[#allocation5 + $0x590] sm:$0xff]
    %v247 = vld [vmem:[#allocation5 + $0x598] sm:$0xff]
    %v248 = vld [vmem:[#allocation5 + $0x5a0] sm:$0xff]
    %v249 = vld [vmem:[#allocation5 + $0x5a8] sm:$0xff]
    %v250 = vld [vmem:[#allocation5 + $0x5b0] sm:$0xff]
    %v251 = vld [vmem:[#allocation5 + $0x5b8] sm:$0xff]
    %v252 = vld [vmem:[#allocation5 + $0x5c0] sm:$0xff]
    %v253 = vld [vmem:[#allocation5 + $0x5c8] sm:$0xff]
    %v254 = vld [vmem:[#allocation5 + $0x5d0] sm:$0xff]
    %v255 = vld [vmem:[#allocation5 + $0x5d8] sm:$0xff]
    %v256 = vld [vmem:[#allocation5 + $0x5e0] sm:$0xff]
    %v257 = vld [vmem:[#allocation5 + $0x5e8] sm:$0xff]
    %v258 = vld [vmem:[#allocation5 + $0x5f0] sm:$0xff]
    %v259 = vld [vmem:[#allocation5 + $0x5f8] sm:$0xff]
    %v260 = vld [vmem:[#allocation5 + $0x600] sm:$0xff]
    %v261 = vld [vmem:[#allocation5 + $0x608] sm:$0xff]
    %v262 = vld [vmem:[#allocation5 + $0x610] sm:$0xff]
    %v263 = vld [vmem:[#allocation5 + $0x618] sm:$0xff]
    %v264 = vld [vmem:[#allocation5 + $0x620] sm:$0xff]
    %v265 = vld [vmem:[#allocation5 + $0x628] sm:$0xff]
    %v266 = vld [vmem:[#allocation5 + $0x630] sm:$0xff]
    %v267 = vld [vmem:[#allocation5 + $0x638] sm:$0xff]
    %v268 = vld [vmem:[#allocation5 + $0x640] sm:$0xff]
    %v269 = vld [vmem:[#allocation5 + $0x648] sm:$0xff]
    %v270 = vld [vmem:[#allocation5 + $0x650] sm:$0xff]
    %v271 = vld [vmem:[#allocation5 + $0x658] sm:$0xff]
    %v272 = vld [vmem:[#allocation5 + $0x660] sm:$0xff]
    %v273 = vld [vmem:[#allocation5 + $0x668] sm:$0xff]
    %v274 = vld [vmem:[#allocation5 + $0x670] sm:$0xff]
    %v275 = vld [vmem:[#allocation5 + $0x678] sm:$0xff]
    %v276 = vld [vmem:[#allocation5 + $0x680] sm:$0xff]
    %v277 = vld [vmem:[#allocation5 + $0x688] sm:$0xff]
    %v278 = vld [vmem:[#allocation5 + $0x690] sm:$0xff]
    %v279 = vld [vmem:[#allocation5 + $0x698] sm:$0xff]
    %v280 = vld [vmem:[#allocation5 + $0x6a0] sm:$0xff]
    %v281 = vld [vmem:[#allocation5 + $0x6a8] sm:$0xff]
    %v282 = vld [vmem:[#allocation5 + $0x6b0] sm:$0xff]
    %v283 = vld [vmem:[#allocation5 + $0x6b8] sm:$0xff]
    %v284 = vld [vmem:[#allocation5 + $0x6c0] sm:$0xff]
    %v285 = vld [vmem:[#allocation5 + $0x6c8] sm:$0xff]
    %v286 = vld [vmem:[#allocation5 + $0x6d0] sm:$0xff]
    %v287 = vld [vmem:[#allocation5 + $0x6d8] sm:$0xff]
    %v288 = vld [vmem:[#allocation5 + $0x6e0] sm:$0xff]
    %v289 = vld [vmem:[#allocation5 + $0x6e8] sm:$0xff]
    %v290 = vld [vmem:[#allocation5 + $0x6f0] sm:$0xff]
    %v291 = vld [vmem:[#allocation5 + $0x6f8] sm:$0xff]
    %v292 = vld [vmem:[#allocation5 + $0x700] sm:$0xff]
    %v293 = vld [vmem:[#allocation5 + $0x708] sm:$0xff]
    %v294 = vld [vmem:[#allocation5 + $0x710] sm:$0xff]
    %v295 = vld [vmem:[#allocation5 + $0x718] sm:$0xff]
    %v296 = vld [vmem:[#allocation5 + $0x720] sm:$0xff]
    %v297 = vld [vmem:[#allocation5 + $0x728] sm:$0xff]
    %v298 = vld [vmem:[#allocation5 + $0x730] sm:$0xff]
    %v299 = vld [vmem:[#allocation5 + $0x738] sm:$0xff]
    %v300 = vld [vmem:[#allocation5 + $0x740] sm:$0xff]
    %v301 = vld [vmem:[#allocation5 + $0x748] sm:$0xff]
    %v302 = vld [vmem:[#allocation5 + $0x750] sm:$0xff]
    %v303 = vld [vmem:[#allocation5 + $0x758] sm:$0xff]
    %v304 = vld [vmem:[#allocation5 + $0x760] sm:$0xff]
    %v305 = vld [vmem:[#allocation5 + $0x768] sm:$0xff]
    %v306 = vld [vmem:[#allocation5 + $0x770] sm:$0xff]
    %v307 = vld [vmem:[#allocation5 + $0x778] sm:$0xff]
    %v308 = vld [vmem:[#allocation5 + $0x780] sm:$0xff]
    %v309 = vld [vmem:[#allocation5 + $0x788] sm:$0xff]
    %v310 = vld [vmem:[#allocation5 + $0x790] sm:$0xff]
    %v311 = vld [vmem:[#allocation5 + $0x798] sm:$0xff]
    %v312 = vld [vmem:[#allocation5 + $0x7a0] sm:$0xff]
    %v313 = vld [vmem:[#allocation5 + $0x7a8] sm:$0xff]
    %v314 = vld [vmem:[#allocation5 + $0x7b0] sm:$0xff]
    %v315 = vld [vmem:[#allocation5 + $0x7b8] sm:$0xff]
    %v316 = vld [vmem:[#allocation5 + $0x7c0] sm:$0xff]
    %v317 = vld [vmem:[#allocation5 + $0x7c8] sm:$0xff]
    %v318 = vld [vmem:[#allocation5 + $0x7d0] sm:$0xff]
    %v319 = vld [vmem:[#allocation5 + $0x7d8] sm:$0xff]
    %v320 = vld [vmem:[#allocation5 + $0x7e0] sm:$0xff]
    %v321 = vld [vmem:[#allocation5 + $0x7e8] sm:$0xff]
    %v322 = vld [vmem:[#allocation5 + $0x7f0] sm:$0xff]
    %v323 = vld [vmem:[#allocation5 + $0x7f8] sm:$0xff]
    %v324 = vld [vmem:[#allocation5 + $0x800] sm:$0xff]
    %v325 = vld [vmem:[#allocation5 + $0x808] sm:$0xff]
    %v326 = vld [vmem:[#allocation5 + $0x810] sm:$0xff]
    %v327 = vld [vmem:[#allocation5 + $0x818] sm:$0xff]
    %v328 = vld [vmem:[#allocation5 + $0x820] sm:$0xff]
    %v329 = vld [vmem:[#allocation5 + $0x828] sm:$0xff]
    %v330 = vld [vmem:[#allocation5 + $0x830] sm:$0xff]
    %v331 = vld [vmem:[#allocation5 + $0x838] sm:$0xff]
    %v332 = vld [vmem:[#allocation5 + $0x840] sm:$0xff]
    %v333 = vld [vmem:[#allocation5 + $0x848] sm:$0xff]
    %v334 = vld [vmem:[#allocation5 + $0x850] sm:$0xff]
    %v335 = vld [vmem:[#allocation5 + $0x858] sm:$0xff]
    %v336 = vld [vmem:[#allocation5 + $0x860] sm:$0xff]
    %v337 = vld [vmem:[#allocation5 + $0x868] sm:$0xff]
    %v338 = vld [vmem:[#allocation5 + $0x870] sm:$0xff]
    %v339 = vld [vmem:[#allocation5 + $0x878] sm:$0xff]
    %v340 = vld [vmem:[#allocation5 + $0x880] sm:$0xff]
    %v341 = vld [vmem:[#allocation5 + $0x888] sm:$0xff]
    %v342 = vld [vmem:[#allocation5 + $0x890] sm:$0xff]
    %v343 = vld [vmem:[#allocation5 + $0x898] sm:$0xff]
    %v344 = vld [vmem:[#allocation5 + $0x8a0] sm:$0xff]
    %v345 = vld [vmem:[#allocation5 + $0x8a8] sm:$0xff]
    %v346 = vld [vmem:[#allocation5 + $0x8b0] sm:$0xff]
    %v347 = vld [vmem:[#allocation5 + $0x8b8] sm:$0xff]
    %v348 = vld [vmem:[#allocation5 + $0x8c0] sm:$0xff]
    %v349 = vld [vmem:[#allocation5 + $0x8c8] sm:$0xff]
    %v350 = vld [vmem:[#allocation5 + $0x8d0] sm:$0xff]
    %v351 = vld [vmem:[#allocation5 + $0x8d8] sm:$0xff]
    %v352 = vld [vmem:[#allocation5 + $0x8e0] sm:$0xff]
    %v353 = vld [vmem:[#allocation5 + $0x8e8] sm:$0xff]
    %v354 = vld [vmem:[#allocation5 + $0x8f0] sm:$0xff]
    %v355 = vld [vmem:[#allocation5 + $0x8f8] sm:$0xff]
    %v356 = vld [vmem:[#allocation5 + $0x900] sm:$0xff]
    %v357 = vld [vmem:[#allocation5 + $0x908] sm:$0xff]
    %v358 = vld [vmem:[#allocation5 + $0x910] sm:$0xff]
    %v359 = vld [vmem:[#allocation5 + $0x918] sm:$0xff]
    %v360 = vld [vmem:[#allocation5 + $0x920] sm:$0xff]
    %v361 = vld [vmem:[#allocation5 + $0x928] sm:$0xff]
    %v362 = vld [vmem:[#allocation5 + $0x930] sm:$0xff]
    %v363 = vld [vmem:[#allocation5 + $0x938] sm:$0xff]
    %v364 = vld [vmem:[#allocation5 + $0x940] sm:$0xff]
    %v365 = vld [vmem:[#allocation5 + $0x948] sm:$0xff]
    %v366 = vld [vmem:[#allocation5 + $0x950] sm:$0xff]
    %v367 = vld [vmem:[#allocation5 + $0x958] sm:$0xff]
    %v368 = vld [vmem:[#allocation5 + $0x960] sm:$0xff]
    %v369 = vld [vmem:[#allocation5 + $0x968] sm:$0xff]
    %v370 = vld [vmem:[#allocation5 + $0x970] sm:$0xff]
    %v371 = vld [vmem:[#allocation5 + $0x978] sm:$0xff]
    %v372 = vld [vmem:[#allocation5 + $0x980] sm:$0xff]
    %v373 = vld [vmem:[#allocation5 + $0x988] sm:$0xff]
    %v374 = vld [vmem:[#allocation5 + $0x990] sm:$0xff]
    %v375 = vld [vmem:[#allocation5 + $0x998] sm:$0xff]
    %v376 = vld [vmem:[#allocation5 + $0x9a0] sm:$0xff]
    %v377 = vld [vmem:[#allocation5 + $0x9a8] sm:$0xff]
    %v378 = vld [vmem:[#allocation5 + $0x9b0] sm:$0xff]
    %v379 = vld [vmem:[#allocation5 + $0x9b8] sm:$0xff]
    %v380 = vld [vmem:[#allocation5 + $0x9c0] sm:$0xff]
    %v381 = vld [vmem:[#allocation5 + $0x9c8] sm:$0xff]
    %v382 = vld [vmem:[#allocation5 + $0x9d0] sm:$0xff]
    %v383 = vld [vmem:[#allocation5 + $0x9d8] sm:$0xff]
    %v384 = vld [vmem:[#allocation5 + $0x9e0] sm:$0xff]
    %v385 = vld [vmem:[#allocation5 + $0x9e8] sm:$0xff]
    %v386 = vld [vmem:[#allocation5 + $0x9f0] sm:$0xff]
    %v387 = vld [vmem:[#allocation5 + $0x9f8] sm:$0xff]
    %v388 = vld [vmem:[#allocation5 + $0xa00] sm:$0xff]
    %v389 = vld [vmem:[#allocation5 + $0xa08] sm:$0xff]
    %v390 = vld [vmem:[#allocation5 + $0xa10] sm:$0xff]
    %v391 = vld [vmem:[#allocation5 + $0xa18] sm:$0xff]
    %v392 = vld [vmem:[#allocation5 + $0xa20] sm:$0xff]
    %v393 = vld [vmem:[#allocation5 + $0xa28] sm:$0xff]
    %v394 = vld [vmem:[#allocation5 + $0xa30] sm:$0xff]
    %v395 = vld [vmem:[#allocation5 + $0xa38] sm:$0xff]
    %v396 = vld [vmem:[#allocation5 + $0xa40] sm:$0xff]
    %v397 = vld [vmem:[#allocation5 + $0xa48] sm:$0xff]
    %v398 = vld [vmem:[#allocation5 + $0xa50] sm:$0xff]
    %v399 = vld [vmem:[#allocation5 + $0xa58] sm:$0xff]
    %v400 = vld [vmem:[#allocation5 + $0xa60] sm:$0xff]
    %v401 = vld [vmem:[#allocation5 + $0xa68] sm:$0xff]
    %v402 = vld [vmem:[#allocation5 + $0xa70] sm:$0xff]
    %v403 = vld [vmem:[#allocation5 + $0xa78] sm:$0xff]
    %v404 = vld [vmem:[#allocation5 + $0xa80] sm:$0xff]
    %v405 = vld [vmem:[#allocation5 + $0xa88] sm:$0xff]
    %v406 = vld [vmem:[#allocation5 + $0xa90] sm:$0xff]
    %v407 = vld [vmem:[#allocation5 + $0xa98] sm:$0xff]
    %v408 = vld [vmem:[#allocation5 + $0xaa0] sm:$0xff]
    %v409 = vld [vmem:[#allocation5 + $0xaa8] sm:$0xff]
    %v410 = vld [vmem:[#allocation5 + $0xab0] sm:$0xff]
    %v411 = vld [vmem:[#allocation5 + $0xab8] sm:$0xff]
    %v412 = vld [vmem:[#allocation5 + $0xac0] sm:$0xff]
    %v413 = vld [vmem:[#allocation5 + $0xac8] sm:$0xff]
    %v414 = vld [vmem:[#allocation5 + $0xad0] sm:$0xff]
    %v415 = vld [vmem:[#allocation5 + $0xad8] sm:$0xff]
    %v416 = vld [vmem:[#allocation5 + $0xae0] sm:$0xff]
    %v417 = vld [vmem:[#allocation5 + $0xae8] sm:$0xff]
    %v418 = vld [vmem:[#allocation5 + $0xaf0] sm:$0xff]
    %v419 = vld [vmem:[#allocation5 + $0xaf8] sm:$0xff]
    %v420 = vld [vmem:[#allocation5 + $0xb00] sm:$0xff]
    %v421 = vld [vmem:[#allocation5 + $0xb08] sm:$0xff]
    %v422 = vld [vmem:[#allocation5 + $0xb10] sm:$0xff]
    %v423 = vld [vmem:[#allocation5 + $0xb18] sm:$0xff]
    %v424 = vld [vmem:[#allocation5 + $0xb20] sm:$0xff]
    %v425 = vld [vmem:[#allocation5 + $0xb28] sm:$0xff]
    %v426 = vld [vmem:[#allocation5 + $0xb30] sm:$0xff]
    %v427 = vld [vmem:[#allocation5 + $0xb38] sm:$0xff]
    %v428 = vld [vmem:[#allocation5 + $0xb40] sm:$0xff]
    %v429 = vld [vmem:[#allocation5 + $0xb48] sm:$0xff]
    %v430 = vld [vmem:[#allocation5 + $0xb50] sm:$0xff]
    %v431 = vld [vmem:[#allocation5 + $0xb58] sm:$0xff]
    %v432 = vld [vmem:[#allocation5 + $0xb60] sm:$0xff]
    %v433 = vld [vmem:[#allocation5 + $0xb68] sm:$0xff]
    %v434 = vld [vmem:[#allocation5 + $0xb70] sm:$0xff]
    %v435 = vld [vmem:[#allocation5 + $0xb78] sm:$0xff]
    %v436 = vld [vmem:[#allocation5 + $0xb80] sm:$0xff]
    %v437 = vld [vmem:[#allocation5 + $0xb88] sm:$0xff]
    %v438 = vld [vmem:[#allocation5 + $0xb90] sm:$0xff]
    %v439 = vld [vmem:[#allocation5 + $0xb98] sm:$0xff]
    %v440 = vld [vmem:[#allocation5 + $0xba0] sm:$0xff]
    %v441 = vld [vmem:[#allocation5 + $0xba8] sm:$0xff]
    %v442 = vld [vmem:[#allocation5 + $0xbb0] sm:$0xff]
    %v443 = vld [vmem:[#allocation5 + $0xbb8] sm:$0xff]
    %v444 = vld [vmem:[#allocation5 + $0xbc0] sm:$0xff]
    %v445 = vld [vmem:[#allocation5 + $0xbc8] sm:$0xff]
    %v446 = vld [vmem:[#allocation5 + $0xbd0] sm:$0xff]
    %v447 = vld [vmem:[#allocation5 + $0xbd8] sm:$0xff]
    %v448 = vld [vmem:[#allocation5 + $0xbe0] sm:$0xff]
    %v449 = vld [vmem:[#allocation5 + $0xbe8] sm:$0xff]
    %v450 = vld [vmem:[#allocation5 + $0xbf0] sm:$0xff]
    %v451 = vld [vmem:[#allocation5 + $0xbf8] sm:$0xff]
    %v452 = vld [vmem:[#allocation5 + $0xc00] sm:$0xff]
    %v453 = vld [vmem:[#allocation5 + $0xc08] sm:$0xff]
    %v454 = vld [vmem:[#allocation5 + $0xc10] sm:$0xff]
    %v455 = vld [vmem:[#allocation5 + $0xc18] sm:$0xff]
    %v456 = vld [vmem:[#allocation5 + $0xc20] sm:$0xff]
    %v457 = vld [vmem:[#allocation5 + $0xc28] sm:$0xff]
    %v458 = vld [vmem:[#allocation5 + $0xc30] sm:$0xff]
    %v459 = vld [vmem:[#allocation5 + $0xc38] sm:$0xff]
    %v460 = vld [vmem:[#allocation5 + $0xc40] sm:$0xff]
    %v461 = vld [vmem:[#allocation5 + $0xc48] sm:$0xff]
    %v462 = vld [vmem:[#allocation5 + $0xc50] sm:$0xff]
    %v463 = vld [vmem:[#allocation5 + $0xc58] sm:$0xff]
    %v464 = vld [vmem:[#allocation5 + $0xc60] sm:$0xff]
    %v465 = vld [vmem:[#allocation5 + $0xc68] sm:$0xff]
    %v466 = vld [vmem:[#allocation5 + $0xc70] sm:$0xff]
    %v467 = vld [vmem:[#allocation5 + $0xc78] sm:$0xff]
    %v468 = vld [vmem:[#allocation5 + $0xc80] sm:$0xff]
    %v469 = vld [vmem:[#allocation5 + $0xc88] sm:$0xff]
    %v470 = vld [vmem:[#allocation5 + $0xc90] sm:$0xff]
    %v471 = vld [vmem:[#allocation5 + $0xc98] sm:$0xff]
    %v472 = vld [vmem:[#allocation5 + $0xca0] sm:$0xff]
    %v473 = vld [vmem:[#allocation5 + $0xca8] sm:$0xff]
    %v474 = vld [vmem:[#allocation5 + $0xcb0] sm:$0xff]
    %v475 = vld [vmem:[#allocation5 + $0xcb8] sm:$0xff]
    %v476 = vld [vmem:[#allocation5 + $0xcc0] sm:$0xff]
    %v477 = vld [vmem:[#allocation5 + $0xcc8] sm:$0xff]
    %v478 = vld [vmem:[#allocation5 + $0xcd0] sm:$0xff]
    %v479 = vld [vmem:[#allocation5 + $0xcd8] sm:$0xff]
    %v480 = vld [vmem:[#allocation5 + $0xce0] sm:$0xff]
    %v481 = vld [vmem:[#allocation5 + $0xce8] sm:$0xff]
    %v482 = vld [vmem:[#allocation5 + $0xcf0] sm:$0xff]
    %v483 = vld [vmem:[#allocation5 + $0xcf8] sm:$0xff]
    %v484 = vld [vmem:[#allocation5 + $0xd00] sm:$0xff]
    %v485 = vld [vmem:[#allocation5 + $0xd08] sm:$0xff]
    %v486 = vld [vmem:[#allocation5 + $0xd10] sm:$0xff]
    %v487 = vld [vmem:[#allocation5 + $0xd18] sm:$0xff]
    %v488 = vld [vmem:[#allocation5 + $0xd20] sm:$0xff]
    %v489 = vld [vmem:[#allocation5 + $0xd28] sm:$0xff]
    %v490 = vld [vmem:[#allocation5 + $0xd30] sm:$0xff]
    %v491 = vld [vmem:[#allocation5 + $0xd38] sm:$0xff]
    %v492 = vld [vmem:[#allocation5 + $0xd40] sm:$0xff]
    %v493 = vld [vmem:[#allocation5 + $0xd48] sm:$0xff]
    %v494 = vld [vmem:[#allocation5 + $0xd50] sm:$0xff]
    %v495 = vld [vmem:[#allocation5 + $0xd58] sm:$0xff]
    %v496 = vld [vmem:[#allocation5 + $0xd60] sm:$0xff]
    %v497 = vld [vmem:[#allocation5 + $0xd68] sm:$0xff]
    %v498 = vld [vmem:[#allocation5 + $0xd70] sm:$0xff]
    %v499 = vld [vmem:[#allocation5 + $0xd78] sm:$0xff]
    %v500 = vld [vmem:[#allocation5 + $0xd80] sm:$0xff]
    %v501 = vld [vmem:[#allocation5 + $0xd88] sm:$0xff]
    %v502 = vld [vmem:[#allocation5 + $0xd90] sm:$0xff]
    %v503 = vld [vmem:[#allocation5 + $0xd98] sm:$0xff]
    %v504 = vld [vmem:[#allocation5 + $0xda0] sm:$0xff]
    %v505 = vld [vmem:[#allocation5 + $0xda8] sm:$0xff]
    %v506 = vld [vmem:[#allocation5 + $0xdb0] sm:$0xff]
    %v507 = vld [vmem:[#allocation5 + $0xdb8] sm:$0xff]
    %v508 = vld [vmem:[#allocation5 + $0xdc0] sm:$0xff]
    %v509 = vld [vmem:[#allocation5 + $0xdc8] sm:$0xff]
    %v510 = vld [vmem:[#allocation5 + $0xdd0] sm:$0xff]
    %v511 = vld [vmem:[#allocation5 + $0xdd8] sm:$0xff]
    %v512 = vld [vmem:[#allocation5 + $0xde0] sm:$0xff]
    %v513 = vld [vmem:[#allocation5 + $0xde8] sm:$0xff]
    %v514 = vld [vmem:[#allocation5 + $0xdf0] sm:$0xff]
    %v515 = vld [vmem:[#allocation5 + $0xdf8] sm:$0xff]
    %v516 = vld [vmem:[#allocation5 + $0xe00] sm:$0xff]
    %v517 = vld [vmem:[#allocation5 + $0xe08] sm:$0xff]
    %v518 = vld [vmem:[#allocation5 + $0xe10] sm:$0xff]
    %v519 = vld [vmem:[#allocation5 + $0xe18] sm:$0xff]
    %v520 = vld [vmem:[#allocation5 + $0xe20] sm:$0xff]
    %v521 = vld [vmem:[#allocation5 + $0xe28] sm:$0xff]
    %v522 = vld [vmem:[#allocation5 + $0xe30] sm:$0xff]
    %v523 = vld [vmem:[#allocation5 + $0xe38] sm:$0xff]
    %v524 = vld [vmem:[#allocation5 + $0xe40] sm:$0xff]
    %v525 = vld [vmem:[#allocation5 + $0xe48] sm:$0xff]
    %v526 = vld [vmem:[#allocation5 + $0xe50] sm:$0xff]
    %v527 = vld [vmem:[#allocation5 + $0xe58] sm:$0xff]
    %v528 = vld [vmem:[#allocation5 + $0xe60] sm:$0xff]
    %v529 = vld [vmem:[#allocation5 + $0xe68] sm:$0xff]
    %v530 = vld [vmem:[#allocation5 + $0xe70] sm:$0xff]
    %v531 = vld [vmem:[#allocation5 + $0xe78] sm:$0xff]
    %v532 = vld [vmem:[#allocation5 + $0xe80] sm:$0xff]
    %v533 = vld [vmem:[#allocation5 + $0xe88] sm:$0xff]
    %v534 = vld [vmem:[#allocation5 + $0xe90] sm:$0xff]
    %v535 = vld [vmem:[#allocation5 + $0xe98] sm:$0xff]
    %v536 = vld [vmem:[#allocation5 + $0xea0] sm:$0xff]
    %v537 = vld [vmem:[#allocation5 + $0xea8] sm:$0xff]
    %v538 = vld [vmem:[#allocation5 + $0xeb0] sm:$0xff]
    %v539 = vld [vmem:[#allocation5 + $0xeb8] sm:$0xff]
    %v540 = vld [vmem:[#allocation5 + $0xec0] sm:$0xff]
    %v541 = vld [vmem:[#allocation5 + $0xec8] sm:$0xff]
    %v542 = vld [vmem:[#allocation5 + $0xed0] sm:$0xff]
    %v543 = vld [vmem:[#allocation5 + $0xed8] sm:$0xff]
    %v544 = vld [vmem:[#allocation5 + $0xee0] sm:$0xff]
    %v545 = vld [vmem:[#allocation5 + $0xee8] sm:$0xff]
    %v546 = vld [vmem:[#allocation5 + $0xef0] sm:$0xff]
    %v547 = vld [vmem:[#allocation5 + $0xef8] sm:$0xff]
    %v548 = vld [vmem:[#allocation5 + $0xf00] sm:$0xff]
    %v549 = vld [vmem:[#allocation5 + $0xf08] sm:$0xff]
    %v550 = vld [vmem:[#allocation5 + $0xf10] sm:$0xff]
    %v551 = vld [vmem:[#allocation5 + $0xf18] sm:$0xff]
    %v552 = vld [vmem:[#allocation5 + $0xf20] sm:$0xff]
    %v553 = vld [vmem:[#allocation5 + $0xf28] sm:$0xff]
    %v554 = vld [vmem:[#allocation5 + $0xf30] sm:$0xff]
    %v555 = vld [vmem:[#allocation5 + $0xf38] sm:$0xff]
    %v556 = vld [vmem:[#allocation5 + $0xf40] sm:$0xff]
    %v557 = vld [vmem:[#allocation5 + $0xf48] sm:$0xff]
    %v558 = vld [vmem:[#allocation5 + $0xf50] sm:$0xff]
    %v559 = vld [vmem:[#allocation5 + $0xf58] sm:$0xff]
    %v560 = vld [vmem:[#allocation5 + $0xf60] sm:$0xff]
    %v561 = vld [vmem:[#allocation5 + $0xf68] sm:$0xff]
    %v562 = vld [vmem:[#allocation5 + $0xf70] sm:$0xff]
    %v563 = vld [vmem:[#allocation5 + $0xf78] sm:$0xff]
    %v564 = vld [vmem:[#allocation5 + $0xf80] sm:$0xff]
    %v565 = vld [vmem:[#allocation5 + $0xf88] sm:$0xff]
    %v566 = vld [vmem:[#allocation5 + $0xf90] sm:$0xff]
    %v567 = vld [vmem:[#allocation5 + $0xf98] sm:$0xff]
    %v568 = vld [vmem:[#allocation5 + $0xfa0] sm:$0xff]
    %v569 = vld [vmem:[#allocation5 + $0xfa8] sm:$0xff]
    %v570 = vld [vmem:[#allocation5 + $0xfb0] sm:$0xff]
    %v571 = vld [vmem:[#allocation5 + $0xfb8] sm:$0xff]
    %v572 = vld [vmem:[#allocation5 + $0xfc0] sm:$0xff]
    %v573 = vld [vmem:[#allocation5 + $0xfc8] sm:$0xff]
    %v574 = vld [vmem:[#allocation5 + $0xfd0] sm:$0xff]
    %v575 = vld [vmem:[#allocation5 + $0xfd8] sm:$0xff]
    %v576 = vld [vmem:[#allocation5 + $0xfe0] sm:$0xff]
    %v577 = vld [vmem:[#allocation5 + $0xfe8] sm:$0xff]
    %v578 = vld [vmem:[#allocation5 + $0xff0] sm:$0xff]
    %v579 = vld [vmem:[#allocation5 + $0xff8] sm:$0xff]
    %v580 = vld [vmem:[#allocation5 + $0x1000] sm:$0xff]
    %v581 = vld [vmem:[#allocation5 + $0x1008] sm:$0xff]
    %v582 = vld [vmem:[#allocation5 + $0x1010] sm:$0xff]
    %v583 = vld [vmem:[#allocation5 + $0x1018] sm:$0xff]
    %v584 = vld [vmem:[#allocation5 + $0x1020] sm:$0xff]
    %v585 = vld [vmem:[#allocation5 + $0x1028] sm:$0xff]
    %v586 = vld [vmem:[#allocation5 + $0x1030] sm:$0xff]
    %v587 = vld [vmem:[#allocation5 + $0x1038] sm:$0xff]
    %v588 = vld [vmem:[#allocation5 + $0x1040] sm:$0xff]
    %v589 = vld [vmem:[#allocation5 + $0x1048] sm:$0xff]
    %v590 = vld [vmem:[#allocation5 + $0x1050] sm:$0xff]
    %v591 = vld [vmem:[#allocation5 + $0x1058] sm:$0xff]
    %v592 = vld [vmem:[#allocation5 + $0x1060] sm:$0xff]
    %v593 = vld [vmem:[#allocation5 + $0x1068] sm:$0xff]
    %v594 = vld [vmem:[#allocation5 + $0x1070] sm:$0xff]
    %v595 = vld [vmem:[#allocation5 + $0x1078] sm:$0xff]
    %v596 = vld [vmem:[#allocation5 + $0x1080] sm:$0xff]
    %v597 = vld [vmem:[#allocation5 + $0x1088] sm:$0xff]
    %v598 = vld [vmem:[#allocation5 + $0x1090] sm:$0xff]
    %v599 = vld [vmem:[#allocation5 + $0x1098] sm:$0xff]
    %v600 = vld [vmem:[#allocation5 + $0x10a0] sm:$0xff]
    %v601 = vld [vmem:[#allocation5 + $0x10a8] sm:$0xff]
    %v602 = vld [vmem:[#allocation5 + $0x10b0] sm:$0xff]
    %v603 = vld [vmem:[#allocation5 + $0x10b8] sm:$0xff]
    %v604 = vld [vmem:[#allocation5 + $0x10c0] sm:$0xff]
    %v605 = vld [vmem:[#allocation5 + $0x10c8] sm:$0xff]
    %v606 = vld [vmem:[#allocation5 + $0x10d0] sm:$0xff]
    %v607 = vld [vmem:[#allocation5 + $0x10d8] sm:$0xff]
    %v608 = vld [vmem:[#allocation5 + $0x10e0] sm:$0xff]
    %v609 = vld [vmem:[#allocation5 + $0x10e8] sm:$0xff]
    %v610 = vld [vmem:[#allocation5 + $0x10f0] sm:$0xff]
    %v611 = vld [vmem:[#allocation5 + $0x10f8] sm:$0xff]
    %v612 = vld [vmem:[#allocation5 + $0x1100] sm:$0xff]
    %v613 = vld [vmem:[#allocation5 + $0x1108] sm:$0xff]
    %v614 = vld [vmem:[#allocation5 + $0x1110] sm:$0xff]
    %v615 = vld [vmem:[#allocation5 + $0x1118] sm:$0xff]
    %v616 = vld [vmem:[#allocation5 + $0x1120] sm:$0xff]
    %v617 = vld [vmem:[#allocation5 + $0x1128] sm:$0xff]
    %v618 = vld [vmem:[#allocation5 + $0x1130] sm:$0xff]
    %v619 = vld [vmem:[#allocation5 + $0x1138] sm:$0xff]
    %v620 = vld [vmem:[#allocation5 + $0x1140] sm:$0xff]
    %v621 = vld [vmem:[#allocation5 + $0x1148] sm:$0xff]
    %v622 = vld [vmem:[#allocation5 + $0x1150] sm:$0xff]
    %v623 = vld [vmem:[#allocation5 + $0x1158] sm:$0xff]
    %v624 = vld [vmem:[#allocation5 + $0x1160] sm:$0xff]
    %v625 = vld [vmem:[#allocation5 + $0x1168] sm:$0xff]
    %v626 = vld [vmem:[#allocation5 + $0x1170] sm:$0xff]
    %v627 = vld [vmem:[#allocation5 + $0x1178] sm:$0xff]
    %v628 = vld [vmem:[#allocation5 + $0x1180] sm:$0xff]
    %v629 = vld [vmem:[#allocation5 + $0x1188] sm:$0xff]
    %v630 = vld [vmem:[#allocation5 + $0x1190] sm:$0xff]
    %v631 = vld [vmem:[#allocation5 + $0x1198] sm:$0xff]
    %v632 = vld [vmem:[#allocation5 + $0x11a0] sm:$0xff]
    %v633 = vld [vmem:[#allocation5 + $0x11a8] sm:$0xff]
    %v634 = vld [vmem:[#allocation5 + $0x11b0] sm:$0xff]
    %v635 = vld [vmem:[#allocation5 + $0x11b8] sm:$0xff]
    %v636 = vld [vmem:[#allocation5 + $0x11c0] sm:$0xff]
    %v637 = vld [vmem:[#allocation5 + $0x11c8] sm:$0xff]
    %v638 = vld [vmem:[#allocation5 + $0x11d0] sm:$0xff]
    %v639 = vld [vmem:[#allocation5 + $0x11d8] sm:$0xff]
    %v640 = vld [vmem:[#allocation5 + $0x11e0] sm:$0xff]
    %v641 = vld [vmem:[#allocation5 + $0x11e8] sm:$0xff]
    %v642 = vld [vmem:[#allocation5 + $0x11f0] sm:$0xff]
    %v643 = vld [vmem:[#allocation5 + $0x11f8] sm:$0xff]
    %v644 = vld [vmem:[#allocation5 + $0x1200] sm:$0xff]
    %v645 = vld [vmem:[#allocation5 + $0x1208] sm:$0xff]
    %v646 = vld [vmem:[#allocation5 + $0x1210] sm:$0xff]
    %v647 = vld [vmem:[#allocation5 + $0x1218] sm:$0xff]
    %v648 = vld [vmem:[#allocation5 + $0x1220] sm:$0xff]
    %v649 = vld [vmem:[#allocation5 + $0x1228] sm:$0xff]
    %v650 = vld [vmem:[#allocation5 + $0x1230] sm:$0xff]
    %v651 = vld [vmem:[#allocation5 + $0x1238] sm:$0xff]
    %v652 = vld [vmem:[#allocation5 + $0x1240] sm:$0xff]
    %v653 = vld [vmem:[#allocation5 + $0x1248] sm:$0xff]
    %v654 = vld [vmem:[#allocation5 + $0x1250] sm:$0xff]
    %v655 = vld [vmem:[#allocation5 + $0x1258] sm:$0xff]
    %v656 = vld [vmem:[#allocation5 + $0x1260] sm:$0xff]
    %v657 = vld [vmem:[#allocation5 + $0x1268] sm:$0xff]
    %v658 = vld [vmem:[#allocation5 + $0x1270] sm:$0xff]
    %v659 = vld [vmem:[#allocation5 + $0x1278] sm:$0xff]
    %v660 = vld [vmem:[#allocation5 + $0x1280] sm:$0xff]
    %v661 = vld [vmem:[#allocation5 + $0x1288] sm:$0xff]
    %v662 = vld [vmem:[#allocation5 + $0x1290] sm:$0xff]
    %v663 = vld [vmem:[#allocation5 + $0x1298] sm:$0xff]
    %v664 = vld [vmem:[#allocation5 + $0x12a0] sm:$0xff]
    %v665 = vld [vmem:[#allocation5 + $0x12a8] sm:$0xff]
    %v666 = vld [vmem:[#allocation5 + $0x12b0] sm:$0xff]
    %v667 = vld [vmem:[#allocation5 + $0x12b8] sm:$0xff]
    %v668 = vld [vmem:[#allocation5 + $0x12c0] sm:$0xff]
    %v669 = vld [vmem:[#allocation5 + $0x12c8] sm:$0xff]
    %v670 = vld [vmem:[#allocation5 + $0x12d0] sm:$0xff]
    %v671 = vld [vmem:[#allocation5 + $0x12d8] sm:$0xff]
    %v672 = vld [vmem:[#allocation5 + $0x12e0] sm:$0xff]
    %v673 = vld [vmem:[#allocation5 + $0x12e8] sm:$0xff]
    %v674 = vld [vmem:[#allocation5 + $0x12f0] sm:$0xff]
    %v675 = vld [vmem:[#allocation5 + $0x12f8] sm:$0xff]
    %v676 = vld [vmem:[#allocation5 + $0x1300] sm:$0xff]
    %v677 = vld [vmem:[#allocation5 + $0x1308] sm:$0xff]
    %v678 = vld [vmem:[#allocation5 + $0x1310] sm:$0xff]
    %v679 = vld [vmem:[#allocation5 + $0x1318] sm:$0xff]
    %v680 = vld [vmem:[#allocation5 + $0x1320] sm:$0xff]
    %v681 = vld [vmem:[#allocation5 + $0x1328] sm:$0xff]
    %v682 = vld [vmem:[#allocation5 + $0x1330] sm:$0xff]
    %v683 = vld [vmem:[#allocation5 + $0x1338] sm:$0xff]
    %v684 = vld [vmem:[#allocation5 + $0x1340] sm:$0xff]
    %v685 = vld [vmem:[#allocation5 + $0x1348] sm:$0xff]
    %v686 = vld [vmem:[#allocation5 + $0x1350] sm:$0xff]
    %v687 = vld [vmem:[#allocation5 + $0x1358] sm:$0xff]
    %v688 = vld [vmem:[#allocation5 + $0x1360] sm:$0xff]
    %v689 = vld [vmem:[#allocation5 + $0x1368] sm:$0xff]
    %v690 = vld [vmem:[#allocation5 + $0x1370] sm:$0xff]
    %v691 = vld [vmem:[#allocation5 + $0x1378] sm:$0xff]
    %v692 = vld [vmem:[#allocation5 + $0x1380] sm:$0xff]
    %v693 = vld [vmem:[#allocation5 + $0x1388] sm:$0xff]
    %v694 = vld [vmem:[#allocation5 + $0x1390] sm:$0xff]
    %v695 = vld [vmem:[#allocation5 + $0x1398] sm:$0xff]
    %v696 = vld [vmem:[#allocation5 + $0x13a0] sm:$0xff]
    %v697 = vld [vmem:[#allocation5 + $0x13a8] sm:$0xff]
    %v698 = vld [vmem:[#allocation5 + $0x13b0] sm:$0xff]
    %v699 = vld [vmem:[#allocation5 + $0x13b8] sm:$0xff]
    %v700 = vld [vmem:[#allocation5 + $0x13c0] sm:$0xff]
    %v701 = vld [vmem:[#allocation5 + $0x13c8] sm:$0xff]
    %v702 = vld [vmem:[#allocation5 + $0x13d0] sm:$0xff]
    %v703 = vld [vmem:[#allocation5 + $0x13d8] sm:$0xff]
    %v704 = vld [vmem:[#allocation5 + $0x13e0] sm:$0xff]
    %v705 = vld [vmem:[#allocation5 + $0x13e8] sm:$0xff]
    %v706 = vld [vmem:[#allocation5 + $0x13f0] sm:$0xff]
    %v707 = vld [vmem:[#allocation5 + $0x13f8] sm:$0xff]
    %v708 = vld [vmem:[#allocation5 + $0x1400] sm:$0xff]
    %v709 = vld [vmem:[#allocation5 + $0x1408] sm:$0xff]
    %v710 = vld [vmem:[#allocation5 + $0x1410] sm:$0xff]
    %v711 = vld [vmem:[#allocation5 + $0x1418] sm:$0xff]
    %v712 = vld [vmem:[#allocation5 + $0x1420] sm:$0xff]
    %v713 = vld [vmem:[#allocation5 + $0x1428] sm:$0xff]
    %v714 = vld [vmem:[#allocation5 + $0x1430] sm:$0xff]
    %v715 = vld [vmem:[#allocation5 + $0x1438] sm:$0xff]
    %v716 = vld [vmem:[#allocation5 + $0x1440] sm:$0xff]
    %v717 = vld [vmem:[#allocation5 + $0x1448] sm:$0xff]
    %v718 = vld [vmem:[#allocation5 + $0x1450] sm:$0xff]
    %v719 = vld [vmem:[#allocation5 + $0x1458] sm:$0xff]
    %v720 = vld [vmem:[#allocation5 + $0x1460] sm:$0xff]
    %v721 = vld [vmem:[#allocation5 + $0x1468] sm:$0xff]
    %v722 = vld [vmem:[#allocation5 + $0x1470] sm:$0xff]
    %v723 = vld [vmem:[#allocation5 + $0x1478] sm:$0xff]
    %v724 = vld [vmem:[#allocation5 + $0x1480] sm:$0xff]
    %v725 = vld [vmem:[#allocation5 + $0x1488] sm:$0xff]
    %v726 = vld [vmem:[#allocation5 + $0x1490] sm:$0xff]
    %v727 = vld [vmem:[#allocation5 + $0x1498] sm:$0xff]
    %v728 = vld [vmem:[#allocation5 + $0x14a0] sm:$0xff]
    %v729 = vld [vmem:[#allocation5 + $0x14a8] sm:$0xff]
    %v730 = vld [vmem:[#allocation5 + $0x14b0] sm:$0xff]
    %v731 = vld [vmem:[#allocation5 + $0x14b8] sm:$0xff]
    %v732 = vld [vmem:[#allocation5 + $0x14c0] sm:$0xff]
    %v733 = vld [vmem:[#allocation5 + $0x14c8] sm:$0xff]
    %v734 = vld [vmem:[#allocation5 + $0x14d0] sm:$0xff]
    %v735 = vld [vmem:[#allocation5 + $0x14d8] sm:$0xff]
    %v736 = vld [vmem:[#allocation5 + $0x14e0] sm:$0xff]
    %v737 = vld [vmem:[#allocation5 + $0x14e8] sm:$0xff]
    %v738 = vld [vmem:[#allocation5 + $0x14f0] sm:$0xff]
    %v739 = vld [vmem:[#allocation5 + $0x14f8] sm:$0xff]
    %v740 = vld [vmem:[#allocation5 + $0x1500] sm:$0xff]
    %v741 = vld [vmem:[#allocation5 + $0x1508] sm:$0xff]
    %v742 = vld [vmem:[#allocation5 + $0x1510] sm:$0xff]
    %v743 = vld [vmem:[#allocation5 + $0x1518] sm:$0xff]
    %v744 = vld [vmem:[#allocation5 + $0x1520] sm:$0xff]
    %v745 = vld [vmem:[#allocation5 + $0x1528] sm:$0xff]
    %v746 = vld [vmem:[#allocation5 + $0x1530] sm:$0xff]
    %v747 = vld [vmem:[#allocation5 + $0x1538] sm:$0xff]
    %v748 = vld [vmem:[#allocation5 + $0x1540] sm:$0xff]
    %v749 = vld [vmem:[#allocation5 + $0x1548] sm:$0xff]
    %v750 = vld [vmem:[#allocation5 + $0x1550] sm:$0xff]
    %v751 = vld [vmem:[#allocation5 + $0x1558] sm:$0xff]
    %v752 = vld [vmem:[#allocation5 + $0x1560] sm:$0xff]
    %v753 = vld [vmem:[#allocation5 + $0x1568] sm:$0xff]
    %v754 = vld [vmem:[#allocation5 + $0x1570] sm:$0xff]
    %v755 = vld [vmem:[#allocation5 + $0x1578] sm:$0xff]
    %v756 = vld [vmem:[#allocation5 + $0x1580] sm:$0xff]
    %v757 = vld [vmem:[#allocation5 + $0x1588] sm:$0xff]
    %v758 = vld [vmem:[#allocation5 + $0x1590] sm:$0xff]
    %v759 = vld [vmem:[#allocation5 + $0x1598] sm:$0xff]
    %v760 = vld [vmem:[#allocation5 + $0x15a0] sm:$0xff]
    %v761 = vld [vmem:[#allocation5 + $0x15a8] sm:$0xff]
    %v762 = vld [vmem:[#allocation5 + $0x15b0] sm:$0xff]
    %v763 = vld [vmem:[#allocation5 + $0x15b8] sm:$0xff]
    %v764 = vld [vmem:[#allocation5 + $0x15c0] sm:$0xff]
    %v765 = vld [vmem:[#allocation5 + $0x15c8] sm:$0xff]
    %v766 = vld [vmem:[#allocation5 + $0x15d0] sm:$0xff]
    %v767 = vld [vmem:[#allocation5 + $0x15d8] sm:$0xff]
    %v768 = vld [vmem:[#allocation5 + $0x15e0] sm:$0xff]
    %v769 = vld [vmem:[#allocation5 + $0x15e8] sm:$0xff]
    %v770 = vld [vmem:[#allocation5 + $0x15f0] sm:$0xff]
    %v771 = vld [vmem:[#allocation5 + $0x15f8] sm:$0xff]
    %v772 = vld [vmem:[#allocation5 + $0x1600] sm:$0xff]
    %v773 = vld [vmem:[#allocation5 + $0x1608] sm:$0xff]
    %v774 = vld [vmem:[#allocation5 + $0x1610] sm:$0xff]
    %v775 = vld [vmem:[#allocation5 + $0x1618] sm:$0xff]
    %v776 = vld [vmem:[#allocation5 + $0x1620] sm:$0xff]
    %v777 = vld [vmem:[#allocation5 + $0x1628] sm:$0xff]
    %v778 = vld [vmem:[#allocation5 + $0x1630] sm:$0xff]
    %v779 = vld [vmem:[#allocation5 + $0x1638] sm:$0xff]
    %v780 = vld [vmem:[#allocation5 + $0x1640] sm:$0xff]
    %v781 = vld [vmem:[#allocation5 + $0x1648] sm:$0xff]
    %v782 = vld [vmem:[#allocation5 + $0x1650] sm:$0xff]
    %v783 = vld [vmem:[#allocation5 + $0x1658] sm:$0xff]
    %v784 = vld [vmem:[#allocation5 + $0x1660] sm:$0xff]
    %v785 = vld [vmem:[#allocation5 + $0x1668] sm:$0xff]
    %v786 = vld [vmem:[#allocation5 + $0x1670] sm:$0xff]
    %v787 = vld [vmem:[#allocation5 + $0x1678] sm:$0xff]
    %v788 = vld [vmem:[#allocation5 + $0x1680] sm:$0xff]
    %v789 = vld [vmem:[#allocation5 + $0x1688] sm:$0xff]
    %v790 = vld [vmem:[#allocation5 + $0x1690] sm:$0xff]
    %v791 = vld [vmem:[#allocation5 + $0x1698] sm:$0xff]
    %v792 = vld [vmem:[#allocation5 + $0x16a0] sm:$0xff]
    %v793 = vld [vmem:[#allocation5 + $0x16a8] sm:$0xff]
    %v794 = vld [vmem:[#allocation5 + $0x16b0] sm:$0xff]
    %v795 = vld [vmem:[#allocation5 + $0x16b8] sm:$0xff]
    %v796 = vld [vmem:[#allocation5 + $0x16c0] sm:$0xff]
    %v797 = vld [vmem:[#allocation5 + $0x16c8] sm:$0xff]
    %v798 = vld [vmem:[#allocation5 + $0x16d0] sm:$0xff]
    %v799 = vld [vmem:[#allocation5 + $0x16d8] sm:$0xff]
    %v800 = vld [vmem:[#allocation5 + $0x16e0] sm:$0xff]
    %v801 = vld [vmem:[#allocation5 + $0x16e8] sm:$0xff]
    %v802 = vld [vmem:[#allocation5 + $0x16f0] sm:$0xff]
    %v803 = vld [vmem:[#allocation5 + $0x16f8] sm:$0xff]
    %v804 = vld [vmem:[#allocation5 + $0x1700] sm:$0xff]
    %v805 = vld [vmem:[#allocation5 + $0x1708] sm:$0xff]
    %v806 = vld [vmem:[#allocation5 + $0x1710] sm:$0xff]
    %v807 = vld [vmem:[#allocation5 + $0x1718] sm:$0xff]
    %v808 = vld [vmem:[#allocation5 + $0x1720] sm:$0xff]
    %v809 = vld [vmem:[#allocation5 + $0x1728] sm:$0xff]
    %v810 = vld [vmem:[#allocation5 + $0x1730] sm:$0xff]
    %v811 = vld [vmem:[#allocation5 + $0x1738] sm:$0xff]
    %v812 = vld [vmem:[#allocation5 + $0x1740] sm:$0xff]
    %v813 = vld [vmem:[#allocation5 + $0x1748] sm:$0xff]
    %v814 = vld [vmem:[#allocation5 + $0x1750] sm:$0xff]
    %v815 = vld [vmem:[#allocation5 + $0x1758] sm:$0xff]
    %v816 = vld [vmem:[#allocation5 + $0x1760] sm:$0xff]
    %v817 = vld [vmem:[#allocation5 + $0x1768] sm:$0xff]
    %v818 = vld [vmem:[#allocation5 + $0x1770] sm:$0xff]
    %v819 = vld [vmem:[#allocation5 + $0x1778] sm:$0xff]
    %v820 = vld [vmem:[#allocation5 + $0x1780] sm:$0xff]
    %v821 = vld [vmem:[#allocation5 + $0x1788] sm:$0xff]
    %v822 = vld [vmem:[#allocation5 + $0x1790] sm:$0xff]
    %v823 = vld [vmem:[#allocation5 + $0x1798] sm:$0xff]
    %v824 = vld [vmem:[#allocation5 + $0x17a0] sm:$0xff]
    %v825 = vld [vmem:[#allocation5 + $0x17a8] sm:$0xff]
    %v826 = vld [vmem:[#allocation5 + $0x17b0] sm:$0xff]
    %v827 = vld [vmem:[#allocation5 + $0x17b8] sm:$0xff]
    %v828 = vld [vmem:[#allocation5 + $0x17c0] sm:$0xff]
    %v829 = vld [vmem:[#allocation5 + $0x17c8] sm:$0xff]
    %v830 = vld [vmem:[#allocation5 + $0x17d0] sm:$0xff]
    %v831 = vld [vmem:[#allocation5 + $0x17d8] sm:$0xff]
    %v832 = vld [vmem:[#allocation5 + $0x17e0] sm:$0xff]
    %v833 = vld [vmem:[#allocation5 + $0x17e8] sm:$0xff]
    %v834 = vld [vmem:[#allocation5 + $0x17f0] sm:$0xff]
    %v835 = vld [vmem:[#allocation5 + $0x17f8] sm:$0xff]
    %v836 = vld [vmem:[#allocation5 + $0x1800] sm:$0xff]
    %v837 = vld [vmem:[#allocation5 + $0x1808] sm:$0xff]
    %v838 = vld [vmem:[#allocation5 + $0x1810] sm:$0xff]
    %v839 = vld [vmem:[#allocation5 + $0x1818] sm:$0xff]
    %v840 = vld [vmem:[#allocation5 + $0x1820] sm:$0xff]
    %v841 = vld [vmem:[#allocation5 + $0x1828] sm:$0xff]
    %v842 = vld [vmem:[#allocation5 + $0x1830] sm:$0xff]
    %v843 = vld [vmem:[#allocation5 + $0x1838] sm:$0xff]
    %v844 = vld [vmem:[#allocation5 + $0x1840] sm:$0xff]
    %v845 = vld [vmem:[#allocation5 + $0x1848] sm:$0xff]
    %v846 = vld [vmem:[#allocation5 + $0x1850] sm:$0xff]
    %v847 = vld [vmem:[#allocation5 + $0x1858] sm:$0xff]
    %v848 = vld [vmem:[#allocation5 + $0x1860] sm:$0xff]
    %v849 = vld [vmem:[#allocation5 + $0x1868] sm:$0xff]
    %v850 = vld [vmem:[#allocation5 + $0x1870] sm:$0xff]
    %v851 = vld [vmem:[#allocation5 + $0x1878] sm:$0xff]
    %v852 = vld [vmem:[#allocation5 + $0x1880] sm:$0xff]
    %v853 = vld [vmem:[#allocation5 + $0x1888] sm:$0xff]
    %v854 = vld [vmem:[#allocation5 + $0x1890] sm:$0xff]
    %v855 = vld [vmem:[#allocation5 + $0x1898] sm:$0xff]
    %v856 = vld [vmem:[#allocation5 + $0x18a0] sm:$0xff]
    %v857 = vld [vmem:[#allocation5 + $0x18a8] sm:$0xff]
    %v858 = vld [vmem:[#allocation5 + $0x18b0] sm:$0xff]
    %v859 = vld [vmem:[#allocation5 + $0x18b8] sm:$0xff]
    %v860 = vld [vmem:[#allocation5 + $0x18c0] sm:$0xff]
    %v861 = vld [vmem:[#allocation5 + $0x18c8] sm:$0xff]
    %v862 = vld [vmem:[#allocation5 + $0x18d0] sm:$0xff]
    %v863 = vld [vmem:[#allocation5 + $0x18d8] sm:$0xff]
    %v864 = vld [vmem:[#allocation5 + $0x18e0] sm:$0xff]
    %v865 = vld [vmem:[#allocation5 + $0x18e8] sm:$0xff]
    %v866 = vld [vmem:[#allocation5 + $0x18f0] sm:$0xff]
    %v867 = vld [vmem:[#allocation5 + $0x18f8] sm:$0xff]
    %v868 = vld [vmem:[#allocation5 + $0x1900] sm:$0xff]
    %v869 = vld [vmem:[#allocation5 + $0x1908] sm:$0xff]
    %v870 = vld [vmem:[#allocation5 + $0x1910] sm:$0xff]
    %v871 = vld [vmem:[#allocation5 + $0x1918] sm:$0xff]
    %v872 = vld [vmem:[#allocation5 + $0x1920] sm:$0xff]
    %v873 = vld [vmem:[#allocation5 + $0x1928] sm:$0xff]
    %v874 = vld [vmem:[#allocation5 + $0x1930] sm:$0xff]
    %v875 = vld [vmem:[#allocation5 + $0x1938] sm:$0xff]
    %v876 = vld [vmem:[#allocation5 + $0x1940] sm:$0xff]
    %v877 = vld [vmem:[#allocation5 + $0x1948] sm:$0xff]
    %v878 = vld [vmem:[#allocation5 + $0x1950] sm:$0xff]
    %v879 = vld [vmem:[#allocation5 + $0x1958] sm:$0xff]
    %v880 = vld [vmem:[#allocation5 + $0x1960] sm:$0xff]
    %v881 = vld [vmem:[#allocation5 + $0x1968] sm:$0xff]
    %v882 = vld [vmem:[#allocation5 + $0x1970] sm:$0xff]
    %v883 = vld [vmem:[#allocation5 + $0x1978] sm:$0xff]
    %v884 = vld [vmem:[#allocation5 + $0x1980] sm:$0xff]
    %v885 = vld [vmem:[#allocation5 + $0x1988] sm:$0xff]
    %v886 = vld [vmem:[#allocation5 + $0x1990] sm:$0xff]
    %v887 = vld [vmem:[#allocation5 + $0x1998] sm:$0xff]
    %v888 = vld [vmem:[#allocation5 + $0x19a0] sm:$0xff]
    %v889 = vld [vmem:[#allocation5 + $0x19a8] sm:$0xff]
    %v890 = vld [vmem:[#allocation5 + $0x19b0] sm:$0xff]
    %v891 = vld [vmem:[#allocation5 + $0x19b8] sm:$0xff]
    %v892 = vld [vmem:[#allocation5 + $0x19c0] sm:$0xff]
    %v893 = vld [vmem:[#allocation5 + $0x19c8] sm:$0xff]
    %v894 = vld [vmem:[#allocation5 + $0x19d0] sm:$0xff]
    %v895 = vld [vmem:[#allocation5 + $0x19d8] sm:$0xff]
    %v896 = vld [vmem:[#allocation5 + $0x19e0] sm:$0xff]
    %v897 = vld [vmem:[#allocation5 + $0x19e8] sm:$0xff]
    %v898 = vld [vmem:[#allocation5 + $0x19f0] sm:$0xff]
    %v899 = vld [vmem:[#allocation5 + $0x19f8] sm:$0xff]
    %v900 = vld [vmem:[#allocation5 + $0x1a00] sm:$0xff]
    %v901 = vld [vmem:[#allocation5 + $0x1a08] sm:$0xff]
    %v902 = vld [vmem:[#allocation5 + $0x1a10] sm:$0xff]
    %v903 = vld [vmem:[#allocation5 + $0x1a18] sm:$0xff]
    %v904 = vld [vmem:[#allocation5 + $0x1a20] sm:$0xff]
    %v905 = vld [vmem:[#allocation5 + $0x1a28] sm:$0xff]
    %v906 = vld [vmem:[#allocation5 + $0x1a30] sm:$0xff]
    %v907 = vld [vmem:[#allocation5 + $0x1a38] sm:$0xff]
    %v908 = vld [vmem:[#allocation5 + $0x1a40] sm:$0xff]
    %v909 = vld [vmem:[#allocation5 + $0x1a48] sm:$0xff]
    %v910 = vld [vmem:[#allocation5 + $0x1a50] sm:$0xff]
    %v911 = vld [vmem:[#allocation5 + $0x1a58] sm:$0xff]
    %v912 = vld [vmem:[#allocation5 + $0x1a60] sm:$0xff]
    %v913 = vld [vmem:[#allocation5 + $0x1a68] sm:$0xff]
    %v914 = vld [vmem:[#allocation5 + $0x1a70] sm:$0xff]
    %v915 = vld [vmem:[#allocation5 + $0x1a78] sm:$0xff]
    %v916 = vld [vmem:[#allocation5 + $0x1a80] sm:$0xff]
    %v917 = vld [vmem:[#allocation5 + $0x1a88] sm:$0xff]
    %v918 = vld [vmem:[#allocation5 + $0x1a90] sm:$0xff]
    %v919 = vld [vmem:[#allocation5 + $0x1a98] sm:$0xff]
    %v920 = vld [vmem:[#allocation5 + $0x1aa0] sm:$0xff]
    %v921 = vld [vmem:[#allocation5 + $0x1aa8] sm:$0xff]
    %v922 = vld [vmem:[#allocation5 + $0x1ab0] sm:$0xff]
    %v923 = vld [vmem:[#allocation5 + $0x1ab8] sm:$0xff]
    %v924 = vld [vmem:[#allocation5 + $0x1ac0] sm:$0xff]
    %v925 = vld [vmem:[#allocation5 + $0x1ac8] sm:$0xff]
    %v926 = vld [vmem:[#allocation5 + $0x1ad0] sm:$0xff]
    %v927 = vld [vmem:[#allocation5 + $0x1ad8] sm:$0xff]
    %v928 = vld [vmem:[#allocation5 + $0x1ae0] sm:$0xff]
    %v929 = vld [vmem:[#allocation5 + $0x1ae8] sm:$0xff]
    %v930 = vld [vmem:[#allocation5 + $0x1af0] sm:$0xff]
    %v931 = vld [vmem:[#allocation5 + $0x1af8] sm:$0xff]
    %v932 = vld [vmem:[#allocation5 + $0x1b00] sm:$0xff]
    %v933 = vld [vmem:[#allocation5 + $0x1b08] sm:$0xff]
    %v934 = vld [vmem:[#allocation5 + $0x1b10] sm:$0xff]
    %v935 = vld [vmem:[#allocation5 + $0x1b18] sm:$0xff]
    %v936 = vld [vmem:[#allocation5 + $0x1b20] sm:$0xff]
    %v937 = vld [vmem:[#allocation5 + $0x1b28] sm:$0xff]
    %v938 = vld [vmem:[#allocation5 + $0x1b30] sm:$0xff]
    %v939 = vld [vmem:[#allocation5 + $0x1b38] sm:$0xff]
    %v940 = vld [vmem:[#allocation5 + $0x1b40] sm:$0xff]
    %v941 = vld [vmem:[#allocation5 + $0x1b48] sm:$0xff]
    %v942 = vld [vmem:[#allocation5 + $0x1b50] sm:$0xff]
    %v943 = vld [vmem:[#allocation5 + $0x1b58] sm:$0xff]
    %v944 = vld [vmem:[#allocation5 + $0x1b60] sm:$0xff]
    %v945 = vld [vmem:[#allocation5 + $0x1b68] sm:$0xff]
    %v946 = vld [vmem:[#allocation5 + $0x1b70] sm:$0xff]
    %v947 = vld [vmem:[#allocation5 + $0x1b78] sm:$0xff]
    %v948 = vld [vmem:[#allocation5 + $0x1b80] sm:$0xff]
    %v949 = vld [vmem:[#allocation5 + $0x1b88] sm:$0xff]
    %v950 = vld [vmem:[#allocation5 + $0x1b90] sm:$0xff]
    %v951 = vld [vmem:[#allocation5 + $0x1b98] sm:$0xff]
    %v952 = vld [vmem:[#allocation5 + $0x1ba0] sm:$0xff]
    %v953 = vld [vmem:[#allocation5 + $0x1ba8] sm:$0xff]
    %v954 = vld [vmem:[#allocation5 + $0x1bb0] sm:$0xff]
    %v955 = vld [vmem:[#allocation5 + $0x1bb8] sm:$0xff]
    %v956 = vld [vmem:[#allocation5 + $0x1bc0] sm:$0xff]
    %v957 = vld [vmem:[#allocation5 + $0x1bc8] sm:$0xff]
    %v958 = vld [vmem:[#allocation5 + $0x1bd0] sm:$0xff]
    %v959 = vld [vmem:[#allocation5 + $0x1bd8] sm:$0xff]
    %v960 = vld [vmem:[#allocation5 + $0x1be0] sm:$0xff]
    %v961 = vld [vmem:[#allocation5 + $0x1be8] sm:$0xff]
    %v962 = vld [vmem:[#allocation5 + $0x1bf0] sm:$0xff]
    %v963 = vld [vmem:[#allocation5 + $0x1bf8] sm:$0xff]
    %v964 = vld [vmem:[#allocation5 + $0x1c00] sm:$0xff]
    %v965 = vld [vmem:[#allocation5 + $0x1c08] sm:$0xff]
    %v966 = vld [vmem:[#allocation5 + $0x1c10] sm:$0xff]
    %v967 = vld [vmem:[#allocation5 + $0x1c18] sm:$0xff]
    %v968 = vld [vmem:[#allocation5 + $0x1c20] sm:$0xff]
    %v969 = vld [vmem:[#allocation5 + $0x1c28] sm:$0xff]
    %v970 = vld [vmem:[#allocation5 + $0x1c30] sm:$0xff]
    %v971 = vld [vmem:[#allocation5 + $0x1c38] sm:$0xff]
    %v972 = vld [vmem:[#allocation5 + $0x1c40] sm:$0xff]
    %v973 = vld [vmem:[#allocation5 + $0x1c48] sm:$0xff]
    %v974 = vld [vmem:[#allocation5 + $0x1c50] sm:$0xff]
    %v975 = vld [vmem:[#allocation5 + $0x1c58] sm:$0xff]
    %v976 = vld [vmem:[#allocation5 + $0x1c60] sm:$0xff]
    %v977 = vld [vmem:[#allocation5 + $0x1c68] sm:$0xff]
    %v978 = vld [vmem:[#allocation5 + $0x1c70] sm:$0xff]
    %v979 = vld [vmem:[#allocation5 + $0x1c78] sm:$0xff]
    %v980 = vld [vmem:[#allocation5 + $0x1c80] sm:$0xff]
    %v981 = vld [vmem:[#allocation5 + $0x1c88] sm:$0xff]
    %v982 = vld [vmem:[#allocation5 + $0x1c90] sm:$0xff]
    %v983 = vld [vmem:[#allocation5 + $0x1c98] sm:$0xff]
    %v984 = vld [vmem:[#allocation5 + $0x1ca0] sm:$0xff]
    %v985 = vld [vmem:[#allocation5 + $0x1ca8] sm:$0xff]
    %v986 = vld [vmem:[#allocation5 + $0x1cb0] sm:$0xff]
    %v987 = vld [vmem:[#allocation5 + $0x1cb8] sm:$0xff]
    %v988 = vld [vmem:[#allocation5 + $0x1cc0] sm:$0xff]
    %v989 = vld [vmem:[#allocation5 + $0x1cc8] sm:$0xff]
    %v990 = vld [vmem:[#allocation5 + $0x1cd0] sm:$0xff]
    %v991 = vld [vmem:[#allocation5 + $0x1cd8] sm:$0xff]
    %v992 = vld [vmem:[#allocation5 + $0x1ce0] sm:$0xff]
    %v993 = vld [vmem:[#allocation5 + $0x1ce8] sm:$0xff]
    %v994 = vld [vmem:[#allocation5 + $0x1cf0] sm:$0xff]
    %v995 = vld [vmem:[#allocation5 + $0x1cf8] sm:$0xff]
    %v996 = vld [vmem:[#allocation5 + $0x1d00] sm:$0xff]
    %v997 = vld [vmem:[#allocation5 + $0x1d08] sm:$0xff]
    %v998 = vld [vmem:[#allocation5 + $0x1d10] sm:$0xff]
    %v999 = vld [vmem:[#allocation5 + $0x1d18] sm:$0xff]
    %v1000 = vld [vmem:[#allocation5 + $0x1d20] sm:$0xff]
    %v1001 = vld [vmem:[#allocation5 + $0x1d28] sm:$0xff]
    %v1002 = vld [vmem:[#allocation5 + $0x1d30] sm:$0xff]
    %v1003 = vld [vmem:[#allocation5 + $0x1d38] sm:$0xff]
    %v1004 = vld [vmem:[#allocation5 + $0x1d40] sm:$0xff]
    %v1005 = vld [vmem:[#allocation5 + $0x1d48] sm:$0xff]
    %v1006 = vld [vmem:[#allocation5 + $0x1d50] sm:$0xff]
    %v1007 = vld [vmem:[#allocation5 + $0x1d58] sm:$0xff]
    %v1008 = vld [vmem:[#allocation5 + $0x1d60] sm:$0xff]
    %v1009 = vld [vmem:[#allocation5 + $0x1d68] sm:$0xff]
    %v1010 = vld [vmem:[#allocation5 + $0x1d70] sm:$0xff]
    %v1011 = vld [vmem:[#allocation5 + $0x1d78] sm:$0xff]
    %v1012 = vld [vmem:[#allocation5 + $0x1d80] sm:$0xff]
    %v1013 = vld [vmem:[#allocation5 + $0x1d88] sm:$0xff]
    %v1014 = vld [vmem:[#allocation5 + $0x1d90] sm:$0xff]
    %v1015 = vld [vmem:[#allocation5 + $0x1d98] sm:$0xff]
    %v1016 = vld [vmem:[#allocation5 + $0x1da0] sm:$0xff]
    %v1017 = vld [vmem:[#allocation5 + $0x1da8] sm:$0xff]
    %v1018 = vld [vmem:[#allocation5 + $0x1db0] sm:$0xff]
    %v1019 = vld [vmem:[#allocation5 + $0x1db8] sm:$0xff]
    %v1020 = vld [vmem:[#allocation5 + $0x1dc0] sm:$0xff]
    %v1021 = vld [vmem:[#allocation5 + $0x1dc8] sm:$0xff]
    %v1022 = vld [vmem:[#allocation5 + $0x1dd0] sm:$0xff]
    %v1023 = vld [vmem:[#allocation5 + $0x1dd8] sm:$0xff]
    %v1024 = vld [vmem:[#allocation5 + $0x1de0] sm:$0xff]
    %v1025 = vld [vmem:[#allocation5 + $0x1de8] sm:$0xff]
    %v1026 = vld [vmem:[#allocation5 + $0x1df0] sm:$0xff]
    %v1027 = vld [vmem:[#allocation5 + $0x1df8] sm:$0xff]
    %v1028 = vld [vmem:[#allocation5 + $0x1e00] sm:$0xff]
    %v1029 = vld [vmem:[#allocation5 + $0x1e08] sm:$0xff]
    %v1030 = vld [vmem:[#allocation5 + $0x1e10] sm:$0xff]
    %v1031 = vld [vmem:[#allocation5 + $0x1e18] sm:$0xff]
    %v1032 = vld [vmem:[#allocation5 + $0x1e20] sm:$0xff]
    %v1033 = vld [vmem:[#allocation5 + $0x1e28] sm:$0xff]
    %v1034 = vld [vmem:[#allocation5 + $0x1e30] sm:$0xff]
    %v1035 = vld [vmem:[#allocation5 + $0x1e38] sm:$0xff]
    %v1036 = vld [vmem:[#allocation5 + $0x1e40] sm:$0xff]
    %v1037 = vld [vmem:[#allocation5 + $0x1e48] sm:$0xff]
    %v1038 = vld [vmem:[#allocation5 + $0x1e50] sm:$0xff]
    %v1039 = vld [vmem:[#allocation5 + $0x1e58] sm:$0xff]
    %v1040 = vld [vmem:[#allocation5 + $0x1e60] sm:$0xff]
    %v1041 = vld [vmem:[#allocation5 + $0x1e68] sm:$0xff]
    %v1042 = vld [vmem:[#allocation5 + $0x1e70] sm:$0xff]
    %v1043 = vld [vmem:[#allocation5 + $0x1e78] sm:$0xff]
    %v1044 = vld [vmem:[#allocation5 + $0x1e80] sm:$0xff]
    %v1045 = vld [vmem:[#allocation5 + $0x1e88] sm:$0xff]
    %v1046 = vld [vmem:[#allocation5 + $0x1e90] sm:$0xff]
    %v1047 = vld [vmem:[#allocation5 + $0x1e98] sm:$0xff]
    %v1048 = vld [vmem:[#allocation5 + $0x1ea0] sm:$0xff]
    %v1049 = vld [vmem:[#allocation5 + $0x1ea8] sm:$0xff]
    %v1050 = vld [vmem:[#allocation5 + $0x1eb0] sm:$0xff]
    %v1051 = vld [vmem:[#allocation5 + $0x1eb8] sm:$0xff]
    %v1052 = vld [vmem:[#allocation5 + $0x1ec0] sm:$0xff]
    %v1053 = vld [vmem:[#allocation5 + $0x1ec8] sm:$0xff]
    %v1054 = vld [vmem:[#allocation5 + $0x1ed0] sm:$0xff]
    %v1055 = vld [vmem:[#allocation5 + $0x1ed8] sm:$0xff]
    %v1056 = vld [vmem:[#allocation5 + $0x1ee0] sm:$0xff]
    %v1057 = vld [vmem:[#allocation5 + $0x1ee8] sm:$0xff]
    %v1058 = vld [vmem:[#allocation5 + $0x1ef0] sm:$0xff]
    %v1059 = vld [vmem:[#allocation5 + $0x1ef8] sm:$0xff]
    %v1060 = vld [vmem:[#allocation5 + $0x1f00] sm:$0xff]
    %v1061 = vld [vmem:[#allocation5 + $0x1f08] sm:$0xff]
    %v1062 = vld [vmem:[#allocation5 + $0x1f10] sm:$0xff]
    %v1063 = vld [vmem:[#allocation5 + $0x1f18] sm:$0xff]
    %v1064 = vld [vmem:[#allocation5 + $0x1f20] sm:$0xff]
    %v1065 = vld [vmem:[#allocation5 + $0x1f28] sm:$0xff]
    %v1066 = vld [vmem:[#allocation5 + $0x1f30] sm:$0xff]
    %v1067 = vld [vmem:[#allocation5 + $0x1f38] sm:$0xff]
    %v1068 = vld [vmem:[#allocation5 + $0x1f40] sm:$0xff]
    %v1069 = vld [vmem:[#allocation5 + $0x1f48] sm:$0xff]
    %v1070 = vld [vmem:[#allocation5 + $0x1f50] sm:$0xff]
    %v1071 = vld [vmem:[#allocation5 + $0x1f58] sm:$0xff]
    %v1072 = vld [vmem:[#allocation5 + $0x1f60] sm:$0xff]
    %v1073 = vld [vmem:[#allocation5 + $0x1f68] sm:$0xff]
    %v1074 = vld [vmem:[#allocation5 + $0x1f70] sm:$0xff]
    %v1075 = vld [vmem:[#allocation5 + $0x1f78] sm:$0xff]
    %v1076 = vld [vmem:[#allocation5 + $0x1f80] sm:$0xff]
    %v1077 = vld [vmem:[#allocation5 + $0x1f88] sm:$0xff]
    %v1078 = vld [vmem:[#allocation5 + $0x1f90] sm:$0xff]
    %v1079 = vld [vmem:[#allocation5 + $0x1f98] sm:$0xff]
    %v1080 = vld [vmem:[#allocation5 + $0x1fa0] sm:$0xff]
    %v1081 = vld [vmem:[#allocation5 + $0x1fa8] sm:$0xff]
    %v1082 = vld [vmem:[#allocation5 + $0x1fb0] sm:$0xff]
    %v1083 = vld [vmem:[#allocation5 + $0x1fb8] sm:$0xff]
    %v1084 = vld [vmem:[#allocation5 + $0x1fc0] sm:$0xff]
    %v1085 = vld [vmem:[#allocation5 + $0x1fc8] sm:$0xff]
    %v1086 = vld [vmem:[#allocation5 + $0x1fd0] sm:$0xff]
    %v1087 = vld [vmem:[#allocation5 + $0x1fd8] sm:$0xff]
    %v1088 = vld [vmem:[#allocation5 + $0x1fe0] sm:$0xff]
    %v1089 = vld [vmem:[#allocation5 + $0x1fe8] sm:$0xff]
    %v1090 = vld [vmem:[#allocation5 + $0x1ff0] sm:$0xff]
    %v1091 = vld [vmem:[#allocation5 + $0x1ff8] sm:$0xff]
    %v1092 = vld [vmem:[#allocation5 + $0x2000] sm:$0xff]
    %v1093 = vld [vmem:[#allocation5 + $0x2008] sm:$0xff]
    %v1094 = vld [vmem:[#allocation5 + $0x2010] sm:$0xff]
    %v1095 = vld [vmem:[#allocation5 + $0x2018] sm:$0xff]
    %v1096 = vld [vmem:[#allocation5 + $0x2020] sm:$0xff]
    %v1097 = vld [vmem:[#allocation5 + $0x2028] sm:$0xff]
    %v1098 = vld [vmem:[#allocation5 + $0x2030] sm:$0xff]
    %v1099 = vld [vmem:[#allocation5 + $0x2038] sm:$0xff]
    %v1100 = vld [vmem:[#allocation5 + $0x2040] sm:$0xff]
    %v1101 = vld [vmem:[#allocation5 + $0x2048] sm:$0xff]
    %v1102 = vld [vmem:[#allocation5 + $0x2050] sm:$0xff]
    %v1103 = vld [vmem:[#allocation5 + $0x2058] sm:$0xff]
    %v1104 = vld [vmem:[#allocation5 + $0x2060] sm:$0xff]
    %v1105 = vld [vmem:[#allocation5 + $0x2068] sm:$0xff]
    %v1106 = vld [vmem:[#allocation5 + $0x2070] sm:$0xff]
    %v1107 = vld [vmem:[#allocation5 + $0x2078] sm:$0xff]
    %v1108 = vld [vmem:[#allocation5 + $0x2080] sm:$0xff]
    %v1109 = vld [vmem:[#allocation5 + $0x2088] sm:$0xff]
    %v1110 = vld [vmem:[#allocation5 + $0x2090] sm:$0xff]
    %v1111 = vld [vmem:[#allocation5 + $0x2098] sm:$0xff]
    %v1112 = vld [vmem:[#allocation5 + $0x20a0] sm:$0xff]
    %v1113 = vld [vmem:[#allocation5 + $0x20a8] sm:$0xff]
    %v1114 = vld [vmem:[#allocation5 + $0x20b0] sm:$0xff]
    %v1115 = vld [vmem:[#allocation5 + $0x20b8] sm:$0xff]
    %v1116 = vld [vmem:[#allocation5 + $0x20c0] sm:$0xff]
    %v1117 = vld [vmem:[#allocation5 + $0x20c8] sm:$0xff]
    %v1118 = vld [vmem:[#allocation5 + $0x20d0] sm:$0xff]
    %v1119 = vld [vmem:[#allocation5 + $0x20d8] sm:$0xff]
    %v1120 = vld [vmem:[#allocation5 + $0x20e0] sm:$0xff]
    %v1121 = vld [vmem:[#allocation5 + $0x20e8] sm:$0xff]
    %v1122 = vld [vmem:[#allocation5 + $0x20f0] sm:$0xff]
    %v1123 = vld [vmem:[#allocation5 + $0x20f8] sm:$0xff]
    %v1124 = vld [vmem:[#allocation5 + $0x2100] sm:$0xff]
    %v1125 = vld [vmem:[#allocation5 + $0x2108] sm:$0xff]
    %v1126 = vld [vmem:[#allocation5 + $0x2110] sm:$0xff]
    %v1127 = vld [vmem:[#allocation5 + $0x2118] sm:$0xff]
    %v1128 = vld [vmem:[#allocation5 + $0x2120] sm:$0xff]
    %v1129 = vld [vmem:[#allocation5 + $0x2128] sm:$0xff]
    %v1130 = vld [vmem:[#allocation5 + $0x2130] sm:$0xff]
    %v1131 = vld [vmem:[#allocation5 + $0x2138] sm:$0xff]
    %v1132 = vld [vmem:[#allocation5 + $0x2140] sm:$0xff]
    %v1133 = vld [vmem:[#allocation5 + $0x2148] sm:$0xff]
    %v1134 = vld [vmem:[#allocation5 + $0x2150] sm:$0xff]
    %v1135 = vld [vmem:[#allocation5 + $0x2158] sm:$0xff]
    %v1136 = vld [vmem:[#allocation5 + $0x2160] sm:$0xff]
    %v1137 = vld [vmem:[#allocation5 + $0x2168] sm:$0xff]
    %v1138 = vld [vmem:[#allocation5 + $0x2170] sm:$0xff]
    %v1139 = vld [vmem:[#allocation5 + $0x2178] sm:$0xff]
    %v1140 = vld [vmem:[#allocation5 + $0x2180] sm:$0xff]
    %v1141 = vld [vmem:[#allocation5 + $0x2188] sm:$0xff]
    %v1142 = vld [vmem:[#allocation5 + $0x2190] sm:$0xff]
    %v1143 = vld [vmem:[#allocation5 + $0x2198] sm:$0xff]
    %v1144 = vld [vmem:[#allocation5 + $0x21a0] sm:$0xff]
    %v1145 = vld [vmem:[#allocation5 + $0x21a8] sm:$0xff]
    %v1146 = vld [vmem:[#allocation5 + $0x21b0] sm:$0xff]
    %v1147 = vld [vmem:[#allocation5 + $0x21b8] sm:$0xff]
    %v1148 = vld [vmem:[#allocation5 + $0x21c0] sm:$0xff]
    %v1149 = vld [vmem:[#allocation5 + $0x21c8] sm:$0xff]
    %v1150 = vld [vmem:[#allocation5 + $0x21d0] sm:$0xff]
    %v1151 = vld [vmem:[#allocation5 + $0x21d8] sm:$0xff]
    %v1152 = vld [vmem:[#allocation5 + $0x21e0] sm:$0xff]
    %v1153 = vld [vmem:[#allocation5 + $0x21e8] sm:$0xff]
    %v1154 = vld [vmem:[#allocation5 + $0x21f0] sm:$0xff]
    %v1155 = vld [vmem:[#allocation5 + $0x21f8] sm:$0xff]
    %v1156 = vld [vmem:[#allocation5 + $0x2200] sm:$0xff]
    %v1157 = vld [vmem:[#allocation5 + $0x2208] sm:$0xff]
    %v1158 = vld [vmem:[#allocation5 + $0x2210] sm:$0xff]
    %v1159 = vld [vmem:[#allocation5 + $0x2218] sm:$0xff]
    %v1160 = vld [vmem:[#allocation5 + $0x2220] sm:$0xff]
    %v1161 = vld [vmem:[#allocation5 + $0x2228] sm:$0xff]
    %v1162 = vld [vmem:[#allocation5 + $0x2230] sm:$0xff]
    %v1163 = vld [vmem:[#allocation5 + $0x2238] sm:$0xff]
    %v1164 = vld [vmem:[#allocation5 + $0x2240] sm:$0xff]
    %v1165 = vld [vmem:[#allocation5 + $0x2248] sm:$0xff]
    %v1166 = vld [vmem:[#allocation5 + $0x2250] sm:$0xff]
    %v1167 = vld [vmem:[#allocation5 + $0x2258] sm:$0xff]
    %v1168 = vld [vmem:[#allocation5 + $0x2260] sm:$0xff]
    %v1169 = vld [vmem:[#allocation5 + $0x2268] sm:$0xff]
    %v1170 = vld [vmem:[#allocation5 + $0x2270] sm:$0xff]
    %v1171 = vld [vmem:[#allocation5 + $0x2278] sm:$0xff]
    %v1172 = vld [vmem:[#allocation5 + $0x2280] sm:$0xff]
    %v1173 = vld [vmem:[#allocation5 + $0x2288] sm:$0xff]
    %v1174 = vld [vmem:[#allocation5 + $0x2290] sm:$0xff]
    %v1175 = vld [vmem:[#allocation5 + $0x2298] sm:$0xff]
    %v1176 = vld [vmem:[#allocation5 + $0x22a0] sm:$0xff]
    %v1177 = vld [vmem:[#allocation5 + $0x22a8] sm:$0xff]
    %v1178 = vld [vmem:[#allocation5 + $0x22b0] sm:$0xff]
    %v1179 = vld [vmem:[#allocation5 + $0x22b8] sm:$0xff]
    %v1180 = vld [vmem:[#allocation5 + $0x22c0] sm:$0xff]
    %v1181 = vld [vmem:[#allocation5 + $0x22c8] sm:$0xff]
    %v1182 = vld [vmem:[#allocation5 + $0x22d0] sm:$0xff]
    %v1183 = vld [vmem:[#allocation5 + $0x22d8] sm:$0xff]
    %v1184 = vld [vmem:[#allocation5 + $0x22e0] sm:$0xff]
    %v1185 = vld [vmem:[#allocation5 + $0x22e8] sm:$0xff]
    %v1186 = vld [vmem:[#allocation5 + $0x22f0] sm:$0xff]
    %v1187 = vld [vmem:[#allocation5 + $0x22f8] sm:$0xff]
    %v1188 = vld [vmem:[#allocation5 + $0x2300] sm:$0xff]
    %v1189 = vld [vmem:[#allocation5 + $0x2308] sm:$0xff]
    %v1190 = vld [vmem:[#allocation5 + $0x2310] sm:$0xff]
    %v1191 = vld [vmem:[#allocation5 + $0x2318] sm:$0xff]
    %v1192 = vld [vmem:[#allocation5 + $0x2320] sm:$0xff]
    %v1193 = vld [vmem:[#allocation5 + $0x2328] sm:$0xff]
    %v1194 = vld [vmem:[#allocation5 + $0x2330] sm:$0xff]
    %v1195 = vld [vmem:[#allocation5 + $0x2338] sm:$0xff]
    %v1196 = vld [vmem:[#allocation5 + $0x2340] sm:$0xff]
    %v1197 = vld [vmem:[#allocation5 + $0x2348] sm:$0xff]
    %v1198 = vld [vmem:[#allocation5 + $0x2350] sm:$0xff]
    %v1199 = vld [vmem:[#allocation5 + $0x2358] sm:$0xff]
    %v1200 = vld [vmem:[#allocation5 + $0x2360] sm:$0xff]
    %v1201 = vld [vmem:[#allocation5 + $0x2368] sm:$0xff]
    %v1202 = vld [vmem:[#allocation5 + $0x2370] sm:$0xff]
    %v1203 = vld [vmem:[#allocation5 + $0x2378] sm:$0xff]
    %v1204 = vld [vmem:[#allocation5 + $0x2380] sm:$0xff]
    %v1205 = vld [vmem:[#allocation5 + $0x2388] sm:$0xff]
    %v1206 = vld [vmem:[#allocation5 + $0x2390] sm:$0xff]
    %v1207 = vld [vmem:[#allocation5 + $0x2398] sm:$0xff]
    %v1208 = vld [vmem:[#allocation5 + $0x23a0] sm:$0xff]
    %v1209 = vld [vmem:[#allocation5 + $0x23a8] sm:$0xff]
    %v1210 = vld [vmem:[#allocation5 + $0x23b0] sm:$0xff]
    %v1211 = vld [vmem:[#allocation5 + $0x23b8] sm:$0xff]
    %v1212 = vld [vmem:[#allocation5 + $0x23c0] sm:$0xff]
    %v1213 = vld [vmem:[#allocation5 + $0x23c8] sm:$0xff]
    %v1214 = vld [vmem:[#allocation5 + $0x23d0] sm:$0xff]
    %v1215 = vld [vmem:[#allocation5 + $0x23d8] sm:$0xff]
    %v1216 = vld [vmem:[#allocation5 + $0x23e0] sm:$0xff]
    %v1217 = vld [vmem:[#allocation5 + $0x23e8] sm:$0xff]
    %v1218 = vld [vmem:[#allocation5 + $0x23f0] sm:$0xff]
    %v1219 = vld [vmem:[#allocation5 + $0x23f8] sm:$0xff]
    %v1220 = vld [vmem:[#allocation5 + $0x2400] sm:$0xff]
    %v1221 = vld [vmem:[#allocation5 + $0x2408] sm:$0xff]
    %v1222 = vld [vmem:[#allocation5 + $0x2410] sm:$0xff]
    %v1223 = vld [vmem:[#allocation5 + $0x2418] sm:$0xff]
    %v1224 = vld [vmem:[#allocation5 + $0x2420] sm:$0xff]
    %v1225 = vld [vmem:[#allocation5 + $0x2428] sm:$0xff]
    %v1226 = vld [vmem:[#allocation5 + $0x2430] sm:$0xff]
    %v1227 = vld [vmem:[#allocation5 + $0x2438] sm:$0xff]
    %v1228 = vld [vmem:[#allocation5 + $0x2440] sm:$0xff]
    %v1229 = vld [vmem:[#allocation5 + $0x2448] sm:$0xff]
    %v1230 = vld [vmem:[#allocation5 + $0x2450] sm:$0xff]
    %v1231 = vld [vmem:[#allocation5 + $0x2458] sm:$0xff]
    %v1232 = vld [vmem:[#allocation5 + $0x2460] sm:$0xff]
    %v1233 = vld [vmem:[#allocation5 + $0x2468] sm:$0xff]
    %v1234 = vld [vmem:[#allocation5 + $0x2470] sm:$0xff]
    %v1235 = vld [vmem:[#allocation5 + $0x2478] sm:$0xff]
    %v1236 = vld [vmem:[#allocation5 + $0x2480] sm:$0xff]
    %v1237 = vld [vmem:[#allocation5 + $0x2488] sm:$0xff]
    %v1238 = vld [vmem:[#allocation5 + $0x2490] sm:$0xff]
    %v1239 = vld [vmem:[#allocation5 + $0x2498] sm:$0xff]
    %v1240 = vld [vmem:[#allocation5 + $0x24a0] sm:$0xff]
    %v1241 = vld [vmem:[#allocation5 + $0x24a8] sm:$0xff]
    %v1242 = vld [vmem:[#allocation5 + $0x24b0] sm:$0xff]
    %v1243 = vld [vmem:[#allocation5 + $0x24b8] sm:$0xff]
    %v1244 = vld [vmem:[#allocation5 + $0x24c0] sm:$0xff]
    %v1245 = vld [vmem:[#allocation5 + $0x24c8] sm:$0xff]
    %v1246 = vld [vmem:[#allocation5 + $0x24d0] sm:$0xff]
    %v1247 = vld [vmem:[#allocation5 + $0x24d8] sm:$0xff]
    %v1248 = vld [vmem:[#allocation5 + $0x24e0] sm:$0xff]
    %v1249 = vld [vmem:[#allocation5 + $0x24e8] sm:$0xff]
    %v1250 = vld [vmem:[#allocation5 + $0x24f0] sm:$0xff]
    %v1251 = vld [vmem:[#allocation5 + $0x24f8] sm:$0xff]
    %v1252 = vld [vmem:[#allocation5 + $0x2500] sm:$0xff]
    %v1253 = vld [vmem:[#allocation5 + $0x2508] sm:$0xff]
    %v1254 = vld [vmem:[#allocation5 + $0x2510] sm:$0xff]
    %v1255 = vld [vmem:[#allocation5 + $0x2518] sm:$0xff]
    %v1256 = vld [vmem:[#allocation5 + $0x2520] sm:$0xff]
    %v1257 = vld [vmem:[#allocation5 + $0x2528] sm:$0xff]
    %v1258 = vld [vmem:[#allocation5 + $0x2530] sm:$0xff]
    %v1259 = vld [vmem:[#allocation5 + $0x2538] sm:$0xff]
    %v1260 = vld [vmem:[#allocation5 + $0x2540] sm:$0xff]
    %v1261 = vld [vmem:[#allocation5 + $0x2548] sm:$0xff]
    %v1262 = vld [vmem:[#allocation5 + $0x2550] sm:$0xff]
    %v1263 = vld [vmem:[#allocation5 + $0x2558] sm:$0xff]
    %v1264 = vld [vmem:[#allocation5 + $0x2560] sm:$0xff]
    %v1265 = vld [vmem:[#allocation5 + $0x2568] sm:$0xff]
    %v1266 = vld [vmem:[#allocation5 + $0x2570] sm:$0xff]
    %v1267 = vld [vmem:[#allocation5 + $0x2578] sm:$0xff]
    %v1268 = vld [vmem:[#allocation5 + $0x2580] sm:$0xff]
    %v1269 = vld [vmem:[#allocation5 + $0x2588] sm:$0xff]
    %v1270 = vld [vmem:[#allocation5 + $0x2590] sm:$0xff]
    %v1271 = vld [vmem:[#allocation5 + $0x2598] sm:$0xff]
    %v1272 = vld [vmem:[#allocation5 + $0x25a0] sm:$0xff]
    %v1273 = vld [vmem:[#allocation5 + $0x25a8] sm:$0xff]
    %v1274 = vld [vmem:[#allocation5 + $0x25b0] sm:$0xff]
    %v1275 = vld [vmem:[#allocation5 + $0x25b8] sm:$0xff]
    %v1276 = vld [vmem:[#allocation5 + $0x25c0] sm:$0xff]
    %v1277 = vld [vmem:[#allocation5 + $0x25c8] sm:$0xff]
    %v1278 = vld [vmem:[#allocation5 + $0x25d0] sm:$0xff]
    %v1279 = vld [vmem:[#allocation5 + $0x25d8] sm:$0xff]
    %v1280 = vld [vmem:[#allocation5 + $0x25e0] sm:$0xff]
    %v1281 = vld [vmem:[#allocation5 + $0x25e8] sm:$0xff]
    %v1282 = vld [vmem:[#allocation5 + $0x25f0] sm:$0xff]
    %v1283 = vld [vmem:[#allocation5 + $0x25f8] sm:$0xff]
    %v1284 = vld [vmem:[#allocation5 + $0x2600] sm:$0xff]
    %v1285 = vld [vmem:[#allocation5 + $0x2608] sm:$0xff]
    %v1286 = vld [vmem:[#allocation5 + $0x2610] sm:$0xff]
    %v1287 = vld [vmem:[#allocation5 + $0x2618] sm:$0xff]
    %v1288 = vld [vmem:[#allocation5 + $0x2620] sm:$0xff]
    %v1289 = vld [vmem:[#allocation5 + $0x2628] sm:$0xff]
    %v1290 = vld [vmem:[#allocation5 + $0x2630] sm:$0xff]
    %v1291 = vld [vmem:[#allocation5 + $0x2638] sm:$0xff]
    %v1292 = vld [vmem:[#allocation5 + $0x2640] sm:$0xff]
    %v1293 = vld [vmem:[#allocation5 + $0x2648] sm:$0xff]
    %v1294 = vld [vmem:[#allocation5 + $0x2650] sm:$0xff]
    %v1295 = vld [vmem:[#allocation5 + $0x2658] sm:$0xff]
    %v1296 = vld [vmem:[#allocation5 + $0x2660] sm:$0xff]
    %v1297 = vld [vmem:[#allocation5 + $0x2668] sm:$0xff]
    %v1298 = vld [vmem:[#allocation5 + $0x2670] sm:$0xff]
    %v1299 = vld [vmem:[#allocation5 + $0x2678] sm:$0xff]
    %v1300 = vld [vmem:[#allocation5 + $0x2680] sm:$0xff]
    %v1301 = vld [vmem:[#allocation5 + $0x2688] sm:$0xff]
    %v1302 = vld [vmem:[#allocation5 + $0x2690] sm:$0xff]
    %v1303 = vld [vmem:[#allocation5 + $0x2698] sm:$0xff]
    %v1304 = vld [vmem:[#allocation5 + $0x26a0] sm:$0xff]
    %v1305 = vld [vmem:[#allocation5 + $0x26a8] sm:$0xff]
    %v1306 = vld [vmem:[#allocation5 + $0x26b0] sm:$0xff]
    %v1307 = vld [vmem:[#allocation5 + $0x26b8] sm:$0xff]
    %v1308 = vld [vmem:[#allocation5 + $0x26c0] sm:$0xff]
    %v1309 = vld [vmem:[#allocation5 + $0x26c8] sm:$0xff]
    %v1310 = vld [vmem:[#allocation5 + $0x26d0] sm:$0xff]
    %v1311 = vld [vmem:[#allocation5 + $0x26d8] sm:$0xff]
    %v1312 = vld [vmem:[#allocation5 + $0x26e0] sm:$0xff]
    %v1313 = vld [vmem:[#allocation5 + $0x26e8] sm:$0xff]
    %v1314 = vld [vmem:[#allocation5 + $0x26f0] sm:$0xff]
    %v1315 = vld [vmem:[#allocation5 + $0x26f8] sm:$0xff]
    %v1316 = vld [vmem:[#allocation5 + $0x2700] sm:$0xff]
    %v1317 = vld [vmem:[#allocation5 + $0x2708] sm:$0xff]
    %v1318 = vld [vmem:[#allocation5 + $0x2710] sm:$0xff]
    %v1319 = vld [vmem:[#allocation5 + $0x2718] sm:$0xff]
    %v1320 = vld [vmem:[#allocation5 + $0x2720] sm:$0xff]
    %v1321 = vld [vmem:[#allocation5 + $0x2728] sm:$0xff]
    %v1322 = vld [vmem:[#allocation5 + $0x2730] sm:$0xff]
    %v1323 = vld [vmem:[#allocation5 + $0x2738] sm:$0xff]
    %v1324 = vld [vmem:[#allocation5 + $0x2740] sm:$0xff]
    %v1325 = vld [vmem:[#allocation5 + $0x2748] sm:$0xff]
    %v1326 = vld [vmem:[#allocation5 + $0x2750] sm:$0xff]
    %v1327 = vld [vmem:[#allocation5 + $0x2758] sm:$0xff]
    %v1328 = vld [vmem:[#allocation5 + $0x2760] sm:$0xff]
    %v1329 = vld [vmem:[#allocation5 + $0x2768] sm:$0xff]
    %v1330 = vld [vmem:[#allocation5 + $0x2770] sm:$0xff]
    %v1331 = vld [vmem:[#allocation5 + $0x2778] sm:$0xff]
    %v1332 = vld [vmem:[#allocation5 + $0x2780] sm:$0xff]
    %v1333 = vld [vmem:[#allocation5 + $0x2788] sm:$0xff]
    %v1334 = vld [vmem:[#allocation5 + $0x2790] sm:$0xff]
    %v1335 = vld [vmem:[#allocation5 + $0x2798] sm:$0xff]
    %v1336 = vld [vmem:[#allocation5 + $0x27a0] sm:$0xff]
    %v1337 = vld [vmem:[#allocation5 + $0x27a8] sm:$0xff]
    %v1338 = vld [vmem:[#allocation5 + $0x27b0] sm:$0xff]
    %v1339 = vld [vmem:[#allocation5 + $0x27b8] sm:$0xff]
    %v1340 = vld [vmem:[#allocation5 + $0x27c0] sm:$0xff]
    %v1341 = vld [vmem:[#allocation5 + $0x27c8] sm:$0xff]
    %v1342 = vld [vmem:[#allocation5 + $0x27d0] sm:$0xff]
    %v1343 = vld [vmem:[#allocation5 + $0x27d8] sm:$0xff]
    %v1344 = vld [vmem:[#allocation5 + $0x27e0] sm:$0xff]
    %v1345 = vld [vmem:[#allocation5 + $0x27e8] sm:$0xff]
    %v1346 = vld [vmem:[#allocation5 + $0x27f0] sm:$0xff]
    %v1347 = vld [vmem:[#allocation5 + $0x27f8] sm:$0xff]
    %v1348 = vld [vmem:[#allocation5 + $0x2800] sm:$0xff]
    %v1349 = vld [vmem:[#allocation5 + $0x2808] sm:$0xff]
    %v1350 = vld [vmem:[#allocation5 + $0x2810] sm:$0xff]
    %v1351 = vld [vmem:[#allocation5 + $0x2818] sm:$0xff]
    %v1352 = vld [vmem:[#allocation5 + $0x2820] sm:$0xff]
    %v1353 = vld [vmem:[#allocation5 + $0x2828] sm:$0xff]
    %v1354 = vld [vmem:[#allocation5 + $0x2830] sm:$0xff]
    %v1355 = vld [vmem:[#allocation5 + $0x2838] sm:$0xff]
    %v1356 = vld [vmem:[#allocation5 + $0x2840] sm:$0xff]
    %v1357 = vld [vmem:[#allocation5 + $0x2848] sm:$0xff]
    %v1358 = vld [vmem:[#allocation5 + $0x2850] sm:$0xff]
    %v1359 = vld [vmem:[#allocation5 + $0x2858] sm:$0xff]
    %v1360 = vld [vmem:[#allocation5 + $0x2860] sm:$0xff]
    %v1361 = vld [vmem:[#allocation5 + $0x2868] sm:$0xff]
    %v1362 = vld [vmem:[#allocation5 + $0x2870] sm:$0xff]
    %v1363 = vld [vmem:[#allocation5 + $0x2878] sm:$0xff]
    %v1364 = vld [vmem:[#allocation5 + $0x2880] sm:$0xff]
    %v1365 = vld [vmem:[#allocation5 + $0x2888] sm:$0xff]
    %v1366 = vld [vmem:[#allocation5 + $0x2890] sm:$0xff]
    %v1367 = vld [vmem:[#allocation5 + $0x2898] sm:$0xff]
    %v1368 = vld [vmem:[#allocation5 + $0x28a0] sm:$0xff]
    %v1369 = vld [vmem:[#allocation5 + $0x28a8] sm:$0xff]
    %v1370 = vld [vmem:[#allocation5 + $0x28b0] sm:$0xff]
    %v1371 = vld [vmem:[#allocation5 + $0x28b8] sm:$0xff]
    %v1372 = vld [vmem:[#allocation5 + $0x28c0] sm:$0xff]
    %v1373 = vld [vmem:[#allocation5 + $0x28c8] sm:$0xff]
    %v1374 = vld [vmem:[#allocation5 + $0x28d0] sm:$0xff]
    %v1375 = vld [vmem:[#allocation5 + $0x28d8] sm:$0xff]
    %v1376 = vld [vmem:[#allocation5 + $0x28e0] sm:$0xff]
    %v1377 = vld [vmem:[#allocation5 + $0x28e8] sm:$0xff]
    %v1378 = vld [vmem:[#allocation5 + $0x28f0] sm:$0xff]
    %v1379 = vld [vmem:[#allocation5 + $0x28f8] sm:$0xff]
    %v1380 = vld [vmem:[#allocation5 + $0x2900] sm:$0xff]
    %v1381 = vld [vmem:[#allocation5 + $0x2908] sm:$0xff]
    %v1382 = vld [vmem:[#allocation5 + $0x2910] sm:$0xff]
    %v1383 = vld [vmem:[#allocation5 + $0x2918] sm:$0xff]
    %v1384 = vld [vmem:[#allocation5 + $0x2920] sm:$0xff]
    %v1385 = vld [vmem:[#allocation5 + $0x2928] sm:$0xff]
    %v1386 = vld [vmem:[#allocation5 + $0x2930] sm:$0xff]
    %v1387 = vld [vmem:[#allocation5 + $0x2938] sm:$0xff]
    %v1388 = vld [vmem:[#allocation5 + $0x2940] sm:$0xff]
    %v1389 = vld [vmem:[#allocation5 + $0x2948] sm:$0xff]
    %v1390 = vld [vmem:[#allocation5 + $0x2950] sm:$0xff]
    %v1391 = vld [vmem:[#allocation5 + $0x2958] sm:$0xff]
    %v1392 = vld [vmem:[#allocation5 + $0x2960] sm:$0xff]
    %v1393 = vld [vmem:[#allocation5 + $0x2968] sm:$0xff]
    %v1394 = vld [vmem:[#allocation5 + $0x2970] sm:$0xff]
    %v1395 = vld [vmem:[#allocation5 + $0x2978] sm:$0xff]
    %v1396 = vld [vmem:[#allocation5 + $0x2980] sm:$0xff]
    %v1397 = vld [vmem:[#allocation5 + $0x2988] sm:$0xff]
    %v1398 = vld [vmem:[#allocation5 + $0x2990] sm:$0xff]
    %v1399 = vld [vmem:[#allocation5 + $0x2998] sm:$0xff]
    %v1400 = vld [vmem:[#allocation5 + $0x29a0] sm:$0xff]
    %v1401 = vld [vmem:[#allocation5 + $0x29a8] sm:$0xff]
    %v1402 = vld [vmem:[#allocation5 + $0x29b0] sm:$0xff]
    %v1403 = vld [vmem:[#allocation5 + $0x29b8] sm:$0xff]
    %v1404 = vld [vmem:[#allocation5 + $0x29c0] sm:$0xff]
    %v1405 = vld [vmem:[#allocation5 + $0x29c8] sm:$0xff]
    %v1406 = vld [vmem:[#allocation5 + $0x29d0] sm:$0xff]
    %v1407 = vld [vmem:[#allocation5 + $0x29d8] sm:$0xff]
    %v1408 = vld [vmem:[#allocation5 + $0x29e0] sm:$0xff]
    %v1409 = vld [vmem:[#allocation5 + $0x29e8] sm:$0xff]
    %v1410 = vld [vmem:[#allocation5 + $0x29f0] sm:$0xff]
    %v1411 = vld [vmem:[#allocation5 + $0x29f8] sm:$0xff]
    %v1412 = vld [vmem:[#allocation5 + $0x2a00] sm:$0xff]
    %v1413 = vld [vmem:[#allocation5 + $0x2a08] sm:$0xff]
    %v1414 = vld [vmem:[#allocation5 + $0x2a10] sm:$0xff]
    %v1415 = vld [vmem:[#allocation5 + $0x2a18] sm:$0xff]
    %v1416 = vld [vmem:[#allocation5 + $0x2a20] sm:$0xff]
    %v1417 = vld [vmem:[#allocation5 + $0x2a28] sm:$0xff]
    %v1418 = vld [vmem:[#allocation5 + $0x2a30] sm:$0xff]
    %v1419 = vld [vmem:[#allocation5 + $0x2a38] sm:$0xff]
    %v1420 = vld [vmem:[#allocation5 + $0x2a40] sm:$0xff]
    %v1421 = vld [vmem:[#allocation5 + $0x2a48] sm:$0xff]
    %v1422 = vld [vmem:[#allocation5 + $0x2a50] sm:$0xff]
    %v1423 = vld [vmem:[#allocation5 + $0x2a58] sm:$0xff]
    %v1424 = vld [vmem:[#allocation5 + $0x2a60] sm:$0xff]
    %v1425 = vld [vmem:[#allocation5 + $0x2a68] sm:$0xff]
    %v1426 = vld [vmem:[#allocation5 + $0x2a70] sm:$0xff]
    %v1427 = vld [vmem:[#allocation5 + $0x2a78] sm:$0xff]
    %v1428 = vld [vmem:[#allocation5 + $0x2a80] sm:$0xff]
    %v1429 = vld [vmem:[#allocation5 + $0x2a88] sm:$0xff]
    %v1430 = vld [vmem:[#allocation5 + $0x2a90] sm:$0xff]
    %v1431 = vld [vmem:[#allocation5 + $0x2a98] sm:$0xff]
    %v1432 = vld [vmem:[#allocation5 + $0x2aa0] sm:$0xff]
    %v1433 = vld [vmem:[#allocation5 + $0x2aa8] sm:$0xff]
    %v1434 = vld [vmem:[#allocation5 + $0x2ab0] sm:$0xff]
    %v1435 = vld [vmem:[#allocation5 + $0x2ab8] sm:$0xff]
    %v1436 = vld [vmem:[#allocation5 + $0x2ac0] sm:$0xff]
    %v1437 = vld [vmem:[#allocation5 + $0x2ac8] sm:$0xff]
    %v1438 = vld [vmem:[#allocation5 + $0x2ad0] sm:$0xff]
    %v1439 = vld [vmem:[#allocation5 + $0x2ad8] sm:$0xff]
    %v1440 = vld [vmem:[#allocation5 + $0x2ae0] sm:$0xff]
    %v1441 = vld [vmem:[#allocation5 + $0x2ae8] sm:$0xff]
    %v1442 = vld [vmem:[#allocation5 + $0x2af0] sm:$0xff]
    %v1443 = vld [vmem:[#allocation5 + $0x2af8] sm:$0xff]
    %v1444 = vld [vmem:[#allocation5 + $0x2b00] sm:$0xff]
    %v1445 = vld [vmem:[#allocation5 + $0x2b08] sm:$0xff]
    %v1446 = vld [vmem:[#allocation5 + $0x2b10] sm:$0xff]
    %v1447 = vld [vmem:[#allocation5 + $0x2b18] sm:$0xff]
    %v1448 = vld [vmem:[#allocation5 + $0x2b20] sm:$0xff]
    %v1449 = vld [vmem:[#allocation5 + $0x2b28] sm:$0xff]
    %v1450 = vld [vmem:[#allocation5 + $0x2b30] sm:$0xff]
    %v1451 = vld [vmem:[#allocation5 + $0x2b38] sm:$0xff]
    %v1452 = vld [vmem:[#allocation5 + $0x2b40] sm:$0xff]
    %v1453 = vld [vmem:[#allocation5 + $0x2b48] sm:$0xff]
    %v1454 = vld [vmem:[#allocation5 + $0x2b50] sm:$0xff]
    %v1455 = vld [vmem:[#allocation5 + $0x2b58] sm:$0xff]
    %v1456 = vld [vmem:[#allocation5 + $0x2b60] sm:$0xff]
    %v1457 = vld [vmem:[#allocation5 + $0x2b68] sm:$0xff]
    %v1458 = vld [vmem:[#allocation5 + $0x2b70] sm:$0xff]
    %v1459 = vld [vmem:[#allocation5 + $0x2b78] sm:$0xff]
    %v1460 = vld [vmem:[#allocation5 + $0x2b80] sm:$0xff]
    %v1461 = vld [vmem:[#allocation5 + $0x2b88] sm:$0xff]
    %v1462 = vld [vmem:[#allocation5 + $0x2b90] sm:$0xff]
    %v1463 = vld [vmem:[#allocation5 + $0x2b98] sm:$0xff]
    %v1464 = vld [vmem:[#allocation5 + $0x2ba0] sm:$0xff]
    %v1465 = vld [vmem:[#allocation5 + $0x2ba8] sm:$0xff]
    %v1466 = vld [vmem:[#allocation5 + $0x2bb0] sm:$0xff]
    %v1467 = vld [vmem:[#allocation5 + $0x2bb8] sm:$0xff]
    %v1468 = vld [vmem:[#allocation5 + $0x2bc0] sm:$0xff]
    %v1469 = vld [vmem:[#allocation5 + $0x2bc8] sm:$0xff]
    %v1470 = vld [vmem:[#allocation5 + $0x2bd0] sm:$0xff]
    %v1471 = vld [vmem:[#allocation5 + $0x2bd8] sm:$0xff]
    %v1472 = vld [vmem:[#allocation5 + $0x2be0] sm:$0xff]
    %v1473 = vld [vmem:[#allocation5 + $0x2be8] sm:$0xff]
    %v1474 = vld [vmem:[#allocation5 + $0x2bf0] sm:$0xff]
    %v1475 = vld [vmem:[#allocation5 + $0x2bf8] sm:$0xff]
    %v1476 = vld [vmem:[#allocation5 + $0x2c00] sm:$0xff]
    %v1477 = vld [vmem:[#allocation5 + $0x2c08] sm:$0xff]
    %v1478 = vld [vmem:[#allocation5 + $0x2c10] sm:$0xff]
    %v1479 = vld [vmem:[#allocation5 + $0x2c18] sm:$0xff]
    %v1480 = vld [vmem:[#allocation5 + $0x2c20] sm:$0xff]
    %v1481 = vld [vmem:[#allocation5 + $0x2c28] sm:$0xff]
    %v1482 = vld [vmem:[#allocation5 + $0x2c30] sm:$0xff]
    %v1483 = vld [vmem:[#allocation5 + $0x2c38] sm:$0xff]
    %v1484 = vld [vmem:[#allocation5 + $0x2c40] sm:$0xff]
    %v1485 = vld [vmem:[#allocation5 + $0x2c48] sm:$0xff]
    %v1486 = vld [vmem:[#allocation5 + $0x2c50] sm:$0xff]
    %v1487 = vld [vmem:[#allocation5 + $0x2c58] sm:$0xff]
    %v1488 = vld [vmem:[#allocation5 + $0x2c60] sm:$0xff]
    %v1489 = vld [vmem:[#allocation5 + $0x2c68] sm:$0xff]
    %v1490 = vld [vmem:[#allocation5 + $0x2c70] sm:$0xff]
    %v1491 = vld [vmem:[#allocation5 + $0x2c78] sm:$0xff]
    %v1492 = vld [vmem:[#allocation5 + $0x2c80] sm:$0xff]
    %v1493 = vld [vmem:[#allocation5 + $0x2c88] sm:$0xff]
    %v1494 = vld [vmem:[#allocation5 + $0x2c90] sm:$0xff]
    %v1495 = vld [vmem:[#allocation5 + $0x2c98] sm:$0xff]
    %v1496 = vld [vmem:[#allocation5 + $0x2ca0] sm:$0xff]
    %v1497 = vld [vmem:[#allocation5 + $0x2ca8] sm:$0xff]
    %v1498 = vld [vmem:[#allocation5 + $0x2cb0] sm:$0xff]
    %v1499 = vld [vmem:[#allocation5 + $0x2cb8] sm:$0xff]
    %v1500 = vld [vmem:[#allocation5 + $0x2cc0] sm:$0xff]
    %v1501 = vld [vmem:[#allocation5 + $0x2cc8] sm:$0xff]
    %v1502 = vld [vmem:[#allocation5 + $0x2cd0] sm:$0xff]
    %v1503 = vld [vmem:[#allocation5 + $0x2cd8] sm:$0xff]
    %v1504 = vld [vmem:[#allocation5 + $0x2ce0] sm:$0xff]
    %v1505 = vld [vmem:[#allocation5 + $0x2ce8] sm:$0xff]
    %v1506 = vld [vmem:[#allocation5 + $0x2cf0] sm:$0xff]
    %v1507 = vld [vmem:[#allocation5 + $0x2cf8] sm:$0xff]
    %v1508 = vld [vmem:[#allocation5 + $0x2d00] sm:$0xff]
    %v1509 = vld [vmem:[#allocation5 + $0x2d08] sm:$0xff]
    %v1510 = vld [vmem:[#allocation5 + $0x2d10] sm:$0xff]
    %v1511 = vld [vmem:[#allocation5 + $0x2d18] sm:$0xff]
    %v1512 = vld [vmem:[#allocation5 + $0x2d20] sm:$0xff]
    %v1513 = vld [vmem:[#allocation5 + $0x2d28] sm:$0xff]
    %v1514 = vld [vmem:[#allocation5 + $0x2d30] sm:$0xff]
    %v1515 = vld [vmem:[#allocation5 + $0x2d38] sm:$0xff]
    %v1516 = vld [vmem:[#allocation5 + $0x2d40] sm:$0xff]
    %v1517 = vld [vmem:[#allocation5 + $0x2d48] sm:$0xff]
    %v1518 = vld [vmem:[#allocation5 + $0x2d50] sm:$0xff]
    %v1519 = vld [vmem:[#allocation5 + $0x2d58] sm:$0xff]
    %v1520 = vld [vmem:[#allocation5 + $0x2d60] sm:$0xff]
    %v1521 = vld [vmem:[#allocation5 + $0x2d68] sm:$0xff]
    %v1522 = vld [vmem:[#allocation5 + $0x2d70] sm:$0xff]
    %v1523 = vld [vmem:[#allocation5 + $0x2d78] sm:$0xff]
    %v1524 = vld [vmem:[#allocation5 + $0x2d80] sm:$0xff]
    %v1525 = vld [vmem:[#allocation5 + $0x2d88] sm:$0xff]
    %v1526 = vld [vmem:[#allocation5 + $0x2d90] sm:$0xff]
    %v1527 = vld [vmem:[#allocation5 + $0x2d98] sm:$0xff]
    %v1528 = vld [vmem:[#allocation5 + $0x2da0] sm:$0xff]
    %v1529 = vld [vmem:[#allocation5 + $0x2da8] sm:$0xff]
    %v1530 = vld [vmem:[#allocation5 + $0x2db0] sm:$0xff]
    %v1531 = vld [vmem:[#allocation5 + $0x2db8] sm:$0xff]
    %v1532 = vld [vmem:[#allocation5 + $0x2dc0] sm:$0xff]
    %v1533 = vld [vmem:[#allocation5 + $0x2dc8] sm:$0xff]
    %v1534 = vld [vmem:[#allocation5 + $0x2dd0] sm:$0xff]
    %v1535 = vld [vmem:[#allocation5 + $0x2dd8] sm:$0xff]
    %v1536 = vld [vmem:[#allocation5 + $0x2de0] sm:$0xff]
    %v1537 = vld [vmem:[#allocation5 + $0x2de8] sm:$0xff]
    %v1538 = vld [vmem:[#allocation5 + $0x2df0] sm:$0xff]
    %v1539 = vld [vmem:[#allocation5 + $0x2df8] sm:$0xff]
    %v1540 = vld [vmem:[#allocation5 + $0x2e00] sm:$0xff]
    %v1541 = vld [vmem:[#allocation5 + $0x2e08] sm:$0xff]
    %v1542 = vld [vmem:[#allocation5 + $0x2e10] sm:$0xff]
    %v1543 = vld [vmem:[#allocation5 + $0x2e18] sm:$0xff]
    %v1544 = vld [vmem:[#allocation5 + $0x2e20] sm:$0xff]
    %v1545 = vld [vmem:[#allocation5 + $0x2e28] sm:$0xff]
    %v1546 = vld [vmem:[#allocation5 + $0x2e30] sm:$0xff]
    %v1547 = vld [vmem:[#allocation5 + $0x2e38] sm:$0xff]
    %v1548 = vld [vmem:[#allocation5 + $0x2e40] sm:$0xff]
    %v1549 = vld [vmem:[#allocation5 + $0x2e48] sm:$0xff]
    %v1550 = vld [vmem:[#allocation5 + $0x2e50] sm:$0xff]
    %v1551 = vld [vmem:[#allocation5 + $0x2e58] sm:$0xff]
    %v1552 = vld [vmem:[#allocation5 + $0x2e60] sm:$0xff]
    %v1553 = vld [vmem:[#allocation5 + $0x2e68] sm:$0xff]
    %v1554 = vld [vmem:[#allocation5 + $0x2e70] sm:$0xff]
    %v1555 = vld [vmem:[#allocation5 + $0x2e78] sm:$0xff]
    %v1556 = vld [vmem:[#allocation5 + $0x2e80] sm:$0xff]
    %v1557 = vld [vmem:[#allocation5 + $0x2e88] sm:$0xff]
    %v1558 = vld [vmem:[#allocation5 + $0x2e90] sm:$0xff]
    %v1559 = vld [vmem:[#allocation5 + $0x2e98] sm:$0xff]
    %v1560 = vld [vmem:[#allocation5 + $0x2ea0] sm:$0xff]
    %v1561 = vld [vmem:[#allocation5 + $0x2ea8] sm:$0xff]
    %v1562 = vld [vmem:[#allocation5 + $0x2eb0] sm:$0xff]
    %v1563 = vld [vmem:[#allocation5 + $0x2eb8] sm:$0xff]
    %v1564 = vld [vmem:[#allocation5 + $0x2ec0] sm:$0xff]
    %v1565 = vld [vmem:[#allocation5 + $0x2ec8] sm:$0xff]
    %v1566 = vld [vmem:[#allocation5 + $0x2ed0] sm:$0xff]
    %v1567 = vld [vmem:[#allocation5 + $0x2ed8] sm:$0xff]
    %v1568 = vld [vmem:[#allocation5 + $0x2ee0] sm:$0xff]
    %v1569 = vld [vmem:[#allocation5 + $0x2ee8] sm:$0xff]
    %v1570 = vld [vmem:[#allocation5 + $0x2ef0] sm:$0xff]
    %v1571 = vld [vmem:[#allocation5 + $0x2ef8] sm:$0xff]
    %v1572 = vld [vmem:[#allocation5 + $0x2f00] sm:$0xff]
    %v1573 = vld [vmem:[#allocation5 + $0x2f08] sm:$0xff]
    %v1574 = vld [vmem:[#allocation5 + $0x2f10] sm:$0xff]
    %v1575 = vld [vmem:[#allocation5 + $0x2f18] sm:$0xff]
    %v1576 = vld [vmem:[#allocation5 + $0x2f20] sm:$0xff]
    %v1577 = vld [vmem:[#allocation5 + $0x2f28] sm:$0xff]
    %v1578 = vld [vmem:[#allocation5 + $0x2f30] sm:$0xff]
    %v1579 = vld [vmem:[#allocation5 + $0x2f38] sm:$0xff]
    %v1580 = vld [vmem:[#allocation5 + $0x2f40] sm:$0xff]
    %v1581 = vld [vmem:[#allocation5 + $0x2f48] sm:$0xff]
    %v1582 = vld [vmem:[#allocation5 + $0x2f50] sm:$0xff]
    %v1583 = vld [vmem:[#allocation5 + $0x2f58] sm:$0xff]
    %v1584 = vld [vmem:[#allocation5 + $0x2f60] sm:$0xff]
    %v1585 = vld [vmem:[#allocation5 + $0x2f68] sm:$0xff]
    %v1586 = vld [vmem:[#allocation5 + $0x2f70] sm:$0xff]
    %v1587 = vld [vmem:[#allocation5 + $0x2f78] sm:$0xff]
    %v1588 = vld [vmem:[#allocation5 + $0x2f80] sm:$0xff]
    %v1589 = vld [vmem:[#allocation5 + $0x2f88] sm:$0xff]
    %v1590 = vld [vmem:[#allocation5 + $0x2f90] sm:$0xff]
    %v1591 = vld [vmem:[#allocation5 + $0x2f98] sm:$0xff]
    %v1592 = vld [vmem:[#allocation5 + $0x2fa0] sm:$0xff]
    %v1593 = vld [vmem:[#allocation5 + $0x2fa8] sm:$0xff]
    %v1594 = vld [vmem:[#allocation5 + $0x2fb0] sm:$0xff]
    %v1595 = vld [vmem:[#allocation5 + $0x2fb8] sm:$0xff]
    %v1596 = vld [vmem:[#allocation5 + $0x2fc0] sm:$0xff]
    %v1597 = vld [vmem:[#allocation5 + $0x2fc8] sm:$0xff]
    %v1598 = vld [vmem:[#allocation5 + $0x2fd0] sm:$0xff]
    %v1599 = vld [vmem:[#allocation5 + $0x2fd8] sm:$0xff]
    %v1600 = vld [vmem:[#allocation5 + $0x2fe0] sm:$0xff]
    %v1601 = vld [vmem:[#allocation5 + $0x2fe8] sm:$0xff]
    %v1602 = vld [vmem:[#allocation5 + $0x2ff0] sm:$0xff]
    %v1603 = vld [vmem:[#allocation5 + $0x2ff8] sm:$0xff]
    %v1604 = vld [vmem:[#allocation7] sm:$0xff]
    %v1605 = vld [vmem:[#allocation7 + $0x8] sm:$0xff]
    %v1606 = vld [vmem:[#allocation7 + $0x10] sm:$0xff]
    %v1610 = vlaneseq
    %v1611 = vshrl.u32 %v1610, 7
    %v1612 = vsub.s32 0, %v1611
    %v1613 = vrot.slane %v1604, %v1612
    %v1614 = vlaneseq
    %v1615 = vshrl.u32 %v1614, 7
    %v1616 = vsub.s32 1, %v1615
    %v1617 = vrot.slane %v1604, %v1616
    %v1618 = vlaneseq
    %v1619 = vshrl.u32 %v1618, 7
    %v1620 = vsub.s32 2, %v1619
    %v1621 = vrot.slane %v1604, %v1620
    %v1622 = vlaneseq
    %v1623 = vshrl.u32 %v1622, 7
    %v1624 = vsub.s32 3, %v1623
    %v1625 = vrot.slane %v1604, %v1624
    %v1626 = vlaneseq
    %v1627 = vshrl.u32 %v1626, 7
    %v1628 = vsub.s32 4, %v1627
    %v1629 = vrot.slane %v1604, %v1628
    %v1630 = vlaneseq
    %v1631 = vshrl.u32 %v1630, 7
    %v1632 = vsub.s32 5, %v1631
    %v1633 = vrot.slane %v1604, %v1632
    %v1634 = vlaneseq
    %v1635 = vshrl.u32 %v1634, 7
    %v1636 = vsub.s32 6, %v1635
    %v1637 = vrot.slane %v1604, %v1636
    %v1638 = vlaneseq
    %v1639 = vshrl.u32 %v1638, 7
    %v1640 = vsub.s32 7, %v1639
    %v1641 = vrot.slane %v1604, %v1640
    %v1642 = vlaneseq
    %v1643 = vshrl.u32 %v1642, 7
    %v1644 = vsub.s32 0, %v1643
    %v1645 = vrot.slane %v1605, %v1644
    %v1646 = vlaneseq
    %v1647 = vshrl.u32 %v1646, 7
    %v1648 = vsub.s32 1, %v1647
    %v1649 = vrot.slane %v1605, %v1648
    %v1650 = vlaneseq
    %v1651 = vshrl.u32 %v1650, 7
    %v1652 = vsub.s32 2, %v1651
    %v1653 = vrot.slane %v1605, %v1652
    %v1654 = vlaneseq
    %v1655 = vshrl.u32 %v1654, 7
    %v1656 = vsub.s32 3, %v1655
    %v1657 = vrot.slane %v1605, %v1656
    %v1658 = vlaneseq
    %v1659 = vshrl.u32 %v1658, 7
    %v1660 = vsub.s32 4, %v1659
    %v1661 = vrot.slane %v1605, %v1660
    %v1662 = vlaneseq
    %v1663 = vshrl.u32 %v1662, 7
    %v1664 = vsub.s32 5, %v1663
    %v1665 = vrot.slane %v1605, %v1664
    %v1666 = vlaneseq
    %v1667 = vshrl.u32 %v1666, 7
    %v1668 = vsub.s32 6, %v1667
    %v1669 = vrot.slane %v1605, %v1668
    %v1670 = vlaneseq
    %v1671 = vshrl.u32 %v1670, 7
    %v1672 = vsub.s32 7, %v1671
    %v1673 = vrot.slane %v1605, %v1672
    %v1674 = vlaneseq
    %v1675 = vshrl.u32 %v1674, 7
    %v1676 = vsub.s32 0, %v1675
    %v1677 = vrot.slane %v1606, %v1676
    %v1678 = vlaneseq
    %v1679 = vshrl.u32 %v1678, 7
    %v1680 = vsub.s32 1, %v1679
    %v1681 = vrot.slane %v1606, %v1680
    %v1682 = vlaneseq
    %v1683 = vshrl.u32 %v1682, 7
    %v1684 = vsub.s32 2, %v1683
    %v1685 = vrot.slane %v1606, %v1684
    %v1686 = vlaneseq
    %v1687 = vshrl.u32 %v1686, 7
    %v1688 = vsub.s32 3, %v1687
    %v1689 = vrot.slane %v1606, %v1688
    %v1690 = vlaneseq
    %v1691 = vshrl.u32 %v1690, 7
    %v1692 = vsub.s32 4, %v1691
    %v1693 = vrot.slane %v1606, %v1692
    %v1694 = vlaneseq
    %v1695 = vshrl.u32 %v1694, 7
    %v1696 = vsub.s32 5, %v1695
    %v1697 = vrot.slane %v1606, %v1696
    %v1698 = vlaneseq
    %v1699 = vshrl.u32 %v1698, 7
    %v1700 = vsub.s32 6, %v1699
    %v1701 = vrot.slane %v1606, %v1700
    %v1702 = vlaneseq
    %v1703 = vshrl.u32 %v1702, 7
    %v1704 = vsub.s32 7, %v1703
    %v1705 = vrot.slane %v1606, %v1704
    %v3266 = vunpack.c.l.b16 %v68
    %v3267 = vunpack.c.h.b16 %v68
    %v3268 = vunpack.c.l.b16 %v69
    %v3269 = vunpack.c.h.b16 %v69
    %v3270 = vunpack.c.l.b16 %v70
    %v3271 = vunpack.c.h.b16 %v70
    %v3272 = vunpack.c.l.b16 %v71
    %v3273 = vunpack.c.h.b16 %v71
    %v3274 = vunpack.c.l.b16 %v72
    %v3275 = vunpack.c.h.b16 %v72
    %v3276 = vunpack.c.l.b16 %v73
    %v3277 = vunpack.c.h.b16 %v73
    %v3278 = vunpack.c.l.b16 %v74
    %v3279 = vunpack.c.h.b16 %v74
    %v3280 = vunpack.c.l.b16 %v75
    %v3281 = vunpack.c.h.b16 %v75
    %v3282 = vunpack.c.l.b16 %v76
    %v3283 = vunpack.c.h.b16 %v76
    %v3284 = vunpack.c.l.b16 %v77
    %v3285 = vunpack.c.h.b16 %v77
    %v3286 = vunpack.c.l.b16 %v78
    %v3287 = vunpack.c.h.b16 %v78
    %v3288 = vunpack.c.l.b16 %v79
    %v3289 = vunpack.c.h.b16 %v79
    %v3290 = vunpack.c.l.b16 %v80
    %v3291 = vunpack.c.h.b16 %v80
    %v3292 = vunpack.c.l.b16 %v81
    %v3293 = vunpack.c.h.b16 %v81
    %v3294 = vunpack.c.l.b16 %v82
    %v3295 = vunpack.c.h.b16 %v82
    %v3296 = vunpack.c.l.b16 %v83
    %v3297 = vunpack.c.h.b16 %v83
    %v3298 = vunpack.c.l.b16 %v84
    %v3299 = vunpack.c.h.b16 %v84
    %v3300 = vunpack.c.l.b16 %v85
    %v3301 = vunpack.c.h.b16 %v85
    %v3302 = vunpack.c.l.b16 %v86
    %v3303 = vunpack.c.h.b16 %v86
    %v3304 = vunpack.c.l.b16 %v87
    %v3305 = vunpack.c.h.b16 %v87
    %v3306 = vunpack.c.l.b16 %v88
    %v3307 = vunpack.c.h.b16 %v88
    %v3308 = vunpack.c.l.b16 %v89
    %v3309 = vunpack.c.h.b16 %v89
    %v3310 = vunpack.c.l.b16 %v90
    %v3311 = vunpack.c.h.b16 %v90
    %v3312 = vunpack.c.l.b16 %v91
    %v3313 = vunpack.c.h.b16 %v91
    %v3314 = vunpack.c.l.b16 %v92
    %v3315 = vunpack.c.h.b16 %v92
    %v3316 = vunpack.c.l.b16 %v93
    %v3317 = vunpack.c.h.b16 %v93
    %v3318 = vunpack.c.l.b16 %v94
    %v3319 = vunpack.c.h.b16 %v94
    %v3320 = vunpack.c.l.b16 %v95
    %v3321 = vunpack.c.h.b16 %v95
    %v3322 = vunpack.c.l.b16 %v96
    %v3323 = vunpack.c.h.b16 %v96
    %v3324 = vunpack.c.l.b16 %v97
    %v3325 = vunpack.c.h.b16 %v97
    %v3326 = vunpack.c.l.b16 %v98
    %v3327 = vunpack.c.h.b16 %v98
    %v3328 = vunpack.c.l.b16 %v99
    %v3329 = vunpack.c.h.b16 %v99
    %v3330 = vunpack.c.l.b16 %v100
    %v3331 = vunpack.c.h.b16 %v100
    %v3332 = vunpack.c.l.b16 %v101
    %v3333 = vunpack.c.h.b16 %v101
    %v3334 = vunpack.c.l.b16 %v102
    %v3335 = vunpack.c.h.b16 %v102
    %v3336 = vunpack.c.l.b16 %v103
    %v3337 = vunpack.c.h.b16 %v103
    %v3338 = vunpack.c.l.b16 %v104
    %v3339 = vunpack.c.h.b16 %v104
    %v3340 = vunpack.c.l.b16 %v105
    %v3341 = vunpack.c.h.b16 %v105
    %v3342 = vunpack.c.l.b16 %v106
    %v3343 = vunpack.c.h.b16 %v106
    %v3344 = vunpack.c.l.b16 %v107
    %v3345 = vunpack.c.h.b16 %v107
    %v3346 = vunpack.c.l.b16 %v108
    %v3347 = vunpack.c.h.b16 %v108
    %v3348 = vunpack.c.l.b16 %v109
    %v3349 = vunpack.c.h.b16 %v109
    %v3350 = vunpack.c.l.b16 %v110
    %v3351 = vunpack.c.h.b16 %v110
    %v3352 = vunpack.c.l.b16 %v111
    %v3353 = vunpack.c.h.b16 %v111
    %v3354 = vunpack.c.l.b16 %v112
    %v3355 = vunpack.c.h.b16 %v112
    %v3356 = vunpack.c.l.b16 %v113
    %v3357 = vunpack.c.h.b16 %v113
    %v3358 = vunpack.c.l.b16 %v114
    %v3359 = vunpack.c.h.b16 %v114
    %v3360 = vunpack.c.l.b16 %v115
    %v3361 = vunpack.c.h.b16 %v115
    %v3362 = vunpack.c.l.b16 %v116
    %v3363 = vunpack.c.h.b16 %v116
    %v3364 = vunpack.c.l.b16 %v117
    %v3365 = vunpack.c.h.b16 %v117
    %v3366 = vunpack.c.l.b16 %v118
    %v3367 = vunpack.c.h.b16 %v118
    %v3368 = vunpack.c.l.b16 %v119
    %v3369 = vunpack.c.h.b16 %v119
    %v3370 = vunpack.c.l.b16 %v120
    %v3371 = vunpack.c.h.b16 %v120
    %v3372 = vunpack.c.l.b16 %v121
    %v3373 = vunpack.c.h.b16 %v121
    %v3374 = vunpack.c.l.b16 %v122
    %v3375 = vunpack.c.h.b16 %v122
    %v3376 = vunpack.c.l.b16 %v123
    %v3377 = vunpack.c.h.b16 %v123
    %v3378 = vunpack.c.l.b16 %v124
    %v3379 = vunpack.c.h.b16 %v124
    %v3380 = vunpack.c.l.b16 %v125
    %v3381 = vunpack.c.h.b16 %v125
    %v3382 = vunpack.c.l.b16 %v126
    %v3383 = vunpack.c.h.b16 %v126
    %v3384 = vunpack.c.l.b16 %v127
    %v3385 = vunpack.c.h.b16 %v127
    %v3386 = vunpack.c.l.b16 %v128
    %v3387 = vunpack.c.h.b16 %v128
    %v3388 = vunpack.c.l.b16 %v129
    %v3389 = vunpack.c.h.b16 %v129
    %v3390 = vunpack.c.l.b16 %v130
    %v3391 = vunpack.c.h.b16 %v130
    %v3392 = vunpack.c.l.b16 %v131
    %v3393 = vunpack.c.h.b16 %v131
    %v3394 = vunpack.c.l.b16 %v132
    %v3395 = vunpack.c.h.b16 %v132
    %v3396 = vunpack.c.l.b16 %v133
    %v3397 = vunpack.c.h.b16 %v133
    %v3398 = vunpack.c.l.b16 %v134
    %v3399 = vunpack.c.h.b16 %v134
    %v3400 = vunpack.c.l.b16 %v135
    %v3401 = vunpack.c.h.b16 %v135
    %v3402 = vunpack.c.l.b16 %v136
    %v3403 = vunpack.c.h.b16 %v136
    %v3404 = vunpack.c.l.b16 %v137
    %v3405 = vunpack.c.h.b16 %v137
    %v3406 = vunpack.c.l.b16 %v138
    %v3407 = vunpack.c.h.b16 %v138
    %v3408 = vunpack.c.l.b16 %v139
    %v3409 = vunpack.c.h.b16 %v139
    %v3410 = vunpack.c.l.b16 %v140
    %v3411 = vunpack.c.h.b16 %v140
    %v3412 = vunpack.c.l.b16 %v141
    %v3413 = vunpack.c.h.b16 %v141
    %v3414 = vunpack.c.l.b16 %v142
    %v3415 = vunpack.c.h.b16 %v142
    %v3416 = vunpack.c.l.b16 %v143
    %v3417 = vunpack.c.h.b16 %v143
    %v3418 = vunpack.c.l.b16 %v144
    %v3419 = vunpack.c.h.b16 %v144
    %v3420 = vunpack.c.l.b16 %v145
    %v3421 = vunpack.c.h.b16 %v145
    %v3422 = vunpack.c.l.b16 %v146
    %v3423 = vunpack.c.h.b16 %v146
    %v3424 = vunpack.c.l.b16 %v147
    %v3425 = vunpack.c.h.b16 %v147
    %v3426 = vunpack.c.l.b16 %v148
    %v3427 = vunpack.c.h.b16 %v148
    %v3428 = vunpack.c.l.b16 %v149
    %v3429 = vunpack.c.h.b16 %v149
    %v3430 = vunpack.c.l.b16 %v150
    %v3431 = vunpack.c.h.b16 %v150
    %v3432 = vunpack.c.l.b16 %v151
    %v3433 = vunpack.c.h.b16 %v151
    %v3434 = vunpack.c.l.b16 %v152
    %v3435 = vunpack.c.h.b16 %v152
    %v3436 = vunpack.c.l.b16 %v153
    %v3437 = vunpack.c.h.b16 %v153
    %v3438 = vunpack.c.l.b16 %v154
    %v3439 = vunpack.c.h.b16 %v154
    %v3440 = vunpack.c.l.b16 %v155
    %v3441 = vunpack.c.h.b16 %v155
    %v3442 = vunpack.c.l.b16 %v156
    %v3443 = vunpack.c.h.b16 %v156
    %v3444 = vunpack.c.l.b16 %v157
    %v3445 = vunpack.c.h.b16 %v157
    %v3446 = vunpack.c.l.b16 %v158
    %v3447 = vunpack.c.h.b16 %v158
    %v3448 = vunpack.c.l.b16 %v159
    %v3449 = vunpack.c.h.b16 %v159
    %v3450 = vunpack.c.l.b16 %v160
    %v3451 = vunpack.c.h.b16 %v160
    %v3452 = vunpack.c.l.b16 %v161
    %v3453 = vunpack.c.h.b16 %v161
    %v3454 = vunpack.c.l.b16 %v162
    %v3455 = vunpack.c.h.b16 %v162
    %v3456 = vunpack.c.l.b16 %v163
    %v3457 = vunpack.c.h.b16 %v163
    %v3458 = vunpack.c.l.b16 %v164
    %v3459 = vunpack.c.h.b16 %v164
    %v3460 = vunpack.c.l.b16 %v165
    %v3461 = vunpack.c.h.b16 %v165
    %v3462 = vunpack.c.l.b16 %v166
    %v3463 = vunpack.c.h.b16 %v166
    %v3464 = vunpack.c.l.b16 %v167
    %v3465 = vunpack.c.h.b16 %v167
    %v3466 = vunpack.c.l.b16 %v168
    %v3467 = vunpack.c.h.b16 %v168
    %v3468 = vunpack.c.l.b16 %v169
    %v3469 = vunpack.c.h.b16 %v169
    %v3470 = vunpack.c.l.b16 %v170
    %v3471 = vunpack.c.h.b16 %v170
    %v3472 = vunpack.c.l.b16 %v171
    %v3473 = vunpack.c.h.b16 %v171
    %v3474 = vunpack.c.l.b16 %v172
    %v3475 = vunpack.c.h.b16 %v172
    %v3476 = vunpack.c.l.b16 %v173
    %v3477 = vunpack.c.h.b16 %v173
    %v3478 = vunpack.c.l.b16 %v174
    %v3479 = vunpack.c.h.b16 %v174
    %v3480 = vunpack.c.l.b16 %v175
    %v3481 = vunpack.c.h.b16 %v175
    %v3482 = vunpack.c.l.b16 %v176
    %v3483 = vunpack.c.h.b16 %v176
    %v3484 = vunpack.c.l.b16 %v177
    %v3485 = vunpack.c.h.b16 %v177
    %v3486 = vunpack.c.l.b16 %v178
    %v3487 = vunpack.c.h.b16 %v178
    %v3488 = vunpack.c.l.b16 %v179
    %v3489 = vunpack.c.h.b16 %v179
    %v3490 = vunpack.c.l.b16 %v180
    %v3491 = vunpack.c.h.b16 %v180
    %v3492 = vunpack.c.l.b16 %v181
    %v3493 = vunpack.c.h.b16 %v181
    %v3494 = vunpack.c.l.b16 %v182
    %v3495 = vunpack.c.h.b16 %v182
    %v3496 = vunpack.c.l.b16 %v183
    %v3497 = vunpack.c.h.b16 %v183
    %v3498 = vunpack.c.l.b16 %v184
    %v3499 = vunpack.c.h.b16 %v184
    %v3500 = vunpack.c.l.b16 %v185
    %v3501 = vunpack.c.h.b16 %v185
    %v3502 = vunpack.c.l.b16 %v186
    %v3503 = vunpack.c.h.b16 %v186
    %v3504 = vunpack.c.l.b16 %v187
    %v3505 = vunpack.c.h.b16 %v187
    %v3506 = vunpack.c.l.b16 %v188
    %v3507 = vunpack.c.h.b16 %v188
    %v3508 = vunpack.c.l.b16 %v189
    %v3509 = vunpack.c.h.b16 %v189
    %v3510 = vunpack.c.l.b16 %v190
    %v3511 = vunpack.c.h.b16 %v190
    %v3512 = vunpack.c.l.b16 %v191
    %v3513 = vunpack.c.h.b16 %v191
    %v3514 = vunpack.c.l.b16 %v192
    %v3515 = vunpack.c.h.b16 %v192
    %v3516 = vunpack.c.l.b16 %v193
    %v3517 = vunpack.c.h.b16 %v193
    %v3518 = vunpack.c.l.b16 %v194
    %v3519 = vunpack.c.h.b16 %v194
    %v3520 = vunpack.c.l.b16 %v195
    %v3521 = vunpack.c.h.b16 %v195
    %v3522 = vunpack.c.l.b16 %v196
    %v3523 = vunpack.c.h.b16 %v196
    %v3524 = vunpack.c.l.b16 %v197
    %v3525 = vunpack.c.h.b16 %v197
    %v3526 = vunpack.c.l.b16 %v198
    %v3527 = vunpack.c.h.b16 %v198
    %v3528 = vunpack.c.l.b16 %v199
    %v3529 = vunpack.c.h.b16 %v199
    %v3530 = vunpack.c.l.b16 %v200
    %v3531 = vunpack.c.h.b16 %v200
    %v3532 = vunpack.c.l.b16 %v201
    %v3533 = vunpack.c.h.b16 %v201
    %v3534 = vunpack.c.l.b16 %v202
    %v3535 = vunpack.c.h.b16 %v202
    %v3536 = vunpack.c.l.b16 %v203
    %v3537 = vunpack.c.h.b16 %v203
    %v3538 = vunpack.c.l.b16 %v204
    %v3539 = vunpack.c.h.b16 %v204
    %v3540 = vunpack.c.l.b16 %v205
    %v3541 = vunpack.c.h.b16 %v205
    %v3542 = vunpack.c.l.b16 %v206
    %v3543 = vunpack.c.h.b16 %v206
    %v3544 = vunpack.c.l.b16 %v207
    %v3545 = vunpack.c.h.b16 %v207
    %v3546 = vunpack.c.l.b16 %v208
    %v3547 = vunpack.c.h.b16 %v208
    %v3548 = vunpack.c.l.b16 %v209
    %v3549 = vunpack.c.h.b16 %v209
    %v3550 = vunpack.c.l.b16 %v210
    %v3551 = vunpack.c.h.b16 %v210
    %v3552 = vunpack.c.l.b16 %v211
    %v3553 = vunpack.c.h.b16 %v211
    %v3554 = vunpack.c.l.b16 %v212
    %v3555 = vunpack.c.h.b16 %v212
    %v3556 = vunpack.c.l.b16 %v213
    %v3557 = vunpack.c.h.b16 %v213
    %v3558 = vunpack.c.l.b16 %v214
    %v3559 = vunpack.c.h.b16 %v214
    %v3560 = vunpack.c.l.b16 %v215
    %v3561 = vunpack.c.h.b16 %v215
    %v3562 = vunpack.c.l.b16 %v216
    %v3563 = vunpack.c.h.b16 %v216
    %v3564 = vunpack.c.l.b16 %v217
    %v3565 = vunpack.c.h.b16 %v217
    %v3566 = vunpack.c.l.b16 %v218
    %v3567 = vunpack.c.h.b16 %v218
    %v3568 = vunpack.c.l.b16 %v219
    %v3569 = vunpack.c.h.b16 %v219
    %v3570 = vunpack.c.l.b16 %v220
    %v3571 = vunpack.c.h.b16 %v220
    %v3572 = vunpack.c.l.b16 %v221
    %v3573 = vunpack.c.h.b16 %v221
    %v3574 = vunpack.c.l.b16 %v222
    %v3575 = vunpack.c.h.b16 %v222
    %v3576 = vunpack.c.l.b16 %v223
    %v3577 = vunpack.c.h.b16 %v223
    %v3578 = vunpack.c.l.b16 %v224
    %v3579 = vunpack.c.h.b16 %v224
    %v3580 = vunpack.c.l.b16 %v225
    %v3581 = vunpack.c.h.b16 %v225
    %v3582 = vunpack.c.l.b16 %v226
    %v3583 = vunpack.c.h.b16 %v226
    %v3584 = vunpack.c.l.b16 %v227
    %v3585 = vunpack.c.h.b16 %v227
    %v3586 = vunpack.c.l.b16 %v228
    %v3587 = vunpack.c.h.b16 %v228
    %v3588 = vunpack.c.l.b16 %v229
    %v3589 = vunpack.c.h.b16 %v229
    %v3590 = vunpack.c.l.b16 %v230
    %v3591 = vunpack.c.h.b16 %v230
    %v3592 = vunpack.c.l.b16 %v231
    %v3593 = vunpack.c.h.b16 %v231
    %v3594 = vunpack.c.l.b16 %v232
    %v3595 = vunpack.c.h.b16 %v232
    %v3596 = vunpack.c.l.b16 %v233
    %v3597 = vunpack.c.h.b16 %v233
    %v3598 = vunpack.c.l.b16 %v234
    %v3599 = vunpack.c.h.b16 %v234
    %v3600 = vunpack.c.l.b16 %v235
    %v3601 = vunpack.c.h.b16 %v235
    %v3602 = vunpack.c.l.b16 %v236
    %v3603 = vunpack.c.h.b16 %v236
    %v3604 = vunpack.c.l.b16 %v237
    %v3605 = vunpack.c.h.b16 %v237
    %v3606 = vunpack.c.l.b16 %v238
    %v3607 = vunpack.c.h.b16 %v238
    %v3608 = vunpack.c.l.b16 %v239
    %v3609 = vunpack.c.h.b16 %v239
    %v3610 = vunpack.c.l.b16 %v240
    %v3611 = vunpack.c.h.b16 %v240
    %v3612 = vunpack.c.l.b16 %v241
    %v3613 = vunpack.c.h.b16 %v241
    %v3614 = vunpack.c.l.b16 %v242
    %v3615 = vunpack.c.h.b16 %v242
    %v3616 = vunpack.c.l.b16 %v243
    %v3617 = vunpack.c.h.b16 %v243
    %v3618 = vunpack.c.l.b16 %v244
    %v3619 = vunpack.c.h.b16 %v244
    %v3620 = vunpack.c.l.b16 %v245
    %v3621 = vunpack.c.h.b16 %v245
    %v3622 = vunpack.c.l.b16 %v246
    %v3623 = vunpack.c.h.b16 %v246
    %v3624 = vunpack.c.l.b16 %v247
    %v3625 = vunpack.c.h.b16 %v247
    %v3626 = vunpack.c.l.b16 %v248
    %v3627 = vunpack.c.h.b16 %v248
    %v3628 = vunpack.c.l.b16 %v249
    %v3629 = vunpack.c.h.b16 %v249
    %v3630 = vunpack.c.l.b16 %v250
    %v3631 = vunpack.c.h.b16 %v250
    %v3632 = vunpack.c.l.b16 %v251
    %v3633 = vunpack.c.h.b16 %v251
    %v3634 = vunpack.c.l.b16 %v252
    %v3635 = vunpack.c.h.b16 %v252
    %v3636 = vunpack.c.l.b16 %v253
    %v3637 = vunpack.c.h.b16 %v253
    %v3638 = vunpack.c.l.b16 %v254
    %v3639 = vunpack.c.h.b16 %v254
    %v3640 = vunpack.c.l.b16 %v255
    %v3641 = vunpack.c.h.b16 %v255
    %v3642 = vunpack.c.l.b16 %v256
    %v3643 = vunpack.c.h.b16 %v256
    %v3644 = vunpack.c.l.b16 %v257
    %v3645 = vunpack.c.h.b16 %v257
    %v3646 = vunpack.c.l.b16 %v258
    %v3647 = vunpack.c.h.b16 %v258
    %v3648 = vunpack.c.l.b16 %v259
    %v3649 = vunpack.c.h.b16 %v259
    %v3650 = vunpack.c.l.b16 %v260
    %v3651 = vunpack.c.h.b16 %v260
    %v3652 = vunpack.c.l.b16 %v261
    %v3653 = vunpack.c.h.b16 %v261
    %v3654 = vunpack.c.l.b16 %v262
    %v3655 = vunpack.c.h.b16 %v262
    %v3656 = vunpack.c.l.b16 %v263
    %v3657 = vunpack.c.h.b16 %v263
    %v3658 = vunpack.c.l.b16 %v264
    %v3659 = vunpack.c.h.b16 %v264
    %v3660 = vunpack.c.l.b16 %v265
    %v3661 = vunpack.c.h.b16 %v265
    %v3662 = vunpack.c.l.b16 %v266
    %v3663 = vunpack.c.h.b16 %v266
    %v3664 = vunpack.c.l.b16 %v267
    %v3665 = vunpack.c.h.b16 %v267
    %v3666 = vunpack.c.l.b16 %v268
    %v3667 = vunpack.c.h.b16 %v268
    %v3668 = vunpack.c.l.b16 %v269
    %v3669 = vunpack.c.h.b16 %v269
    %v3670 = vunpack.c.l.b16 %v270
    %v3671 = vunpack.c.h.b16 %v270
    %v3672 = vunpack.c.l.b16 %v271
    %v3673 = vunpack.c.h.b16 %v271
    %v3674 = vunpack.c.l.b16 %v272
    %v3675 = vunpack.c.h.b16 %v272
    %v3676 = vunpack.c.l.b16 %v273
    %v3677 = vunpack.c.h.b16 %v273
    %v3678 = vunpack.c.l.b16 %v274
    %v3679 = vunpack.c.h.b16 %v274
    %v3680 = vunpack.c.l.b16 %v275
    %v3681 = vunpack.c.h.b16 %v275
    %v3682 = vunpack.c.l.b16 %v276
    %v3683 = vunpack.c.h.b16 %v276
    %v3684 = vunpack.c.l.b16 %v277
    %v3685 = vunpack.c.h.b16 %v277
    %v3686 = vunpack.c.l.b16 %v278
    %v3687 = vunpack.c.h.b16 %v278
    %v3688 = vunpack.c.l.b16 %v279
    %v3689 = vunpack.c.h.b16 %v279
    %v3690 = vunpack.c.l.b16 %v280
    %v3691 = vunpack.c.h.b16 %v280
    %v3692 = vunpack.c.l.b16 %v281
    %v3693 = vunpack.c.h.b16 %v281
    %v3694 = vunpack.c.l.b16 %v282
    %v3695 = vunpack.c.h.b16 %v282
    %v3696 = vunpack.c.l.b16 %v283
    %v3697 = vunpack.c.h.b16 %v283
    %v3698 = vunpack.c.l.b16 %v284
    %v3699 = vunpack.c.h.b16 %v284
    %v3700 = vunpack.c.l.b16 %v285
    %v3701 = vunpack.c.h.b16 %v285
    %v3702 = vunpack.c.l.b16 %v286
    %v3703 = vunpack.c.h.b16 %v286
    %v3704 = vunpack.c.l.b16 %v287
    %v3705 = vunpack.c.h.b16 %v287
    %v3706 = vunpack.c.l.b16 %v288
    %v3707 = vunpack.c.h.b16 %v288
    %v3708 = vunpack.c.l.b16 %v289
    %v3709 = vunpack.c.h.b16 %v289
    %v3710 = vunpack.c.l.b16 %v290
    %v3711 = vunpack.c.h.b16 %v290
    %v3712 = vunpack.c.l.b16 %v291
    %v3713 = vunpack.c.h.b16 %v291
    %v3714 = vunpack.c.l.b16 %v292
    %v3715 = vunpack.c.h.b16 %v292
    %v3716 = vunpack.c.l.b16 %v293
    %v3717 = vunpack.c.h.b16 %v293
    %v3718 = vunpack.c.l.b16 %v294
    %v3719 = vunpack.c.h.b16 %v294
    %v3720 = vunpack.c.l.b16 %v295
    %v3721 = vunpack.c.h.b16 %v295
    %v3722 = vunpack.c.l.b16 %v296
    %v3723 = vunpack.c.h.b16 %v296
    %v3724 = vunpack.c.l.b16 %v297
    %v3725 = vunpack.c.h.b16 %v297
    %v3726 = vunpack.c.l.b16 %v298
    %v3727 = vunpack.c.h.b16 %v298
    %v3728 = vunpack.c.l.b16 %v299
    %v3729 = vunpack.c.h.b16 %v299
    %v3730 = vunpack.c.l.b16 %v300
    %v3731 = vunpack.c.h.b16 %v300
    %v3732 = vunpack.c.l.b16 %v301
    %v3733 = vunpack.c.h.b16 %v301
    %v3734 = vunpack.c.l.b16 %v302
    %v3735 = vunpack.c.h.b16 %v302
    %v3736 = vunpack.c.l.b16 %v303
    %v3737 = vunpack.c.h.b16 %v303
    %v3738 = vunpack.c.l.b16 %v304
    %v3739 = vunpack.c.h.b16 %v304
    %v3740 = vunpack.c.l.b16 %v305
    %v3741 = vunpack.c.h.b16 %v305
    %v3742 = vunpack.c.l.b16 %v306
    %v3743 = vunpack.c.h.b16 %v306
    %v3744 = vunpack.c.l.b16 %v307
    %v3745 = vunpack.c.h.b16 %v307
    %v3746 = vunpack.c.l.b16 %v308
    %v3747 = vunpack.c.h.b16 %v308
    %v3748 = vunpack.c.l.b16 %v309
    %v3749 = vunpack.c.h.b16 %v309
    %v3750 = vunpack.c.l.b16 %v310
    %v3751 = vunpack.c.h.b16 %v310
    %v3752 = vunpack.c.l.b16 %v311
    %v3753 = vunpack.c.h.b16 %v311
    %v3754 = vunpack.c.l.b16 %v312
    %v3755 = vunpack.c.h.b16 %v312
    %v3756 = vunpack.c.l.b16 %v313
    %v3757 = vunpack.c.h.b16 %v313
    %v3758 = vunpack.c.l.b16 %v314
    %v3759 = vunpack.c.h.b16 %v314
    %v3760 = vunpack.c.l.b16 %v315
    %v3761 = vunpack.c.h.b16 %v315
    %v3762 = vunpack.c.l.b16 %v316
    %v3763 = vunpack.c.h.b16 %v316
    %v3764 = vunpack.c.l.b16 %v317
    %v3765 = vunpack.c.h.b16 %v317
    %v3766 = vunpack.c.l.b16 %v318
    %v3767 = vunpack.c.h.b16 %v318
    %v3768 = vunpack.c.l.b16 %v319
    %v3769 = vunpack.c.h.b16 %v319
    %v3770 = vunpack.c.l.b16 %v320
    %v3771 = vunpack.c.h.b16 %v320
    %v3772 = vunpack.c.l.b16 %v321
    %v3773 = vunpack.c.h.b16 %v321
    %v3774 = vunpack.c.l.b16 %v322
    %v3775 = vunpack.c.h.b16 %v322
    %v3776 = vunpack.c.l.b16 %v323
    %v3777 = vunpack.c.h.b16 %v323
    %v3778 = vunpack.c.l.b16 %v324
    %v3779 = vunpack.c.h.b16 %v324
    %v3780 = vunpack.c.l.b16 %v325
    %v3781 = vunpack.c.h.b16 %v325
    %v3782 = vunpack.c.l.b16 %v326
    %v3783 = vunpack.c.h.b16 %v326
    %v3784 = vunpack.c.l.b16 %v327
    %v3785 = vunpack.c.h.b16 %v327
    %v3786 = vunpack.c.l.b16 %v328
    %v3787 = vunpack.c.h.b16 %v328
    %v3788 = vunpack.c.l.b16 %v329
    %v3789 = vunpack.c.h.b16 %v329
    %v3790 = vunpack.c.l.b16 %v330
    %v3791 = vunpack.c.h.b16 %v330
    %v3792 = vunpack.c.l.b16 %v331
    %v3793 = vunpack.c.h.b16 %v331
    %v3794 = vunpack.c.l.b16 %v332
    %v3795 = vunpack.c.h.b16 %v332
    %v3796 = vunpack.c.l.b16 %v333
    %v3797 = vunpack.c.h.b16 %v333
    %v3798 = vunpack.c.l.b16 %v334
    %v3799 = vunpack.c.h.b16 %v334
    %v3800 = vunpack.c.l.b16 %v335
    %v3801 = vunpack.c.h.b16 %v335
    %v3802 = vunpack.c.l.b16 %v336
    %v3803 = vunpack.c.h.b16 %v336
    %v3804 = vunpack.c.l.b16 %v337
    %v3805 = vunpack.c.h.b16 %v337
    %v3806 = vunpack.c.l.b16 %v338
    %v3807 = vunpack.c.h.b16 %v338
    %v3808 = vunpack.c.l.b16 %v339
    %v3809 = vunpack.c.h.b16 %v339
    %v3810 = vunpack.c.l.b16 %v340
    %v3811 = vunpack.c.h.b16 %v340
    %v3812 = vunpack.c.l.b16 %v341
    %v3813 = vunpack.c.h.b16 %v341
    %v3814 = vunpack.c.l.b16 %v342
    %v3815 = vunpack.c.h.b16 %v342
    %v3816 = vunpack.c.l.b16 %v343
    %v3817 = vunpack.c.h.b16 %v343
    %v3818 = vunpack.c.l.b16 %v344
    %v3819 = vunpack.c.h.b16 %v344
    %v3820 = vunpack.c.l.b16 %v345
    %v3821 = vunpack.c.h.b16 %v345
    %v3822 = vunpack.c.l.b16 %v346
    %v3823 = vunpack.c.h.b16 %v346
    %v3824 = vunpack.c.l.b16 %v347
    %v3825 = vunpack.c.h.b16 %v347
    %v3826 = vunpack.c.l.b16 %v348
    %v3827 = vunpack.c.h.b16 %v348
    %v3828 = vunpack.c.l.b16 %v349
    %v3829 = vunpack.c.h.b16 %v349
    %v3830 = vunpack.c.l.b16 %v350
    %v3831 = vunpack.c.h.b16 %v350
    %v3832 = vunpack.c.l.b16 %v351
    %v3833 = vunpack.c.h.b16 %v351
    %v3834 = vunpack.c.l.b16 %v352
    %v3835 = vunpack.c.h.b16 %v352
    %v3836 = vunpack.c.l.b16 %v353
    %v3837 = vunpack.c.h.b16 %v353
    %v3838 = vunpack.c.l.b16 %v354
    %v3839 = vunpack.c.h.b16 %v354
    %v3840 = vunpack.c.l.b16 %v355
    %v3841 = vunpack.c.h.b16 %v355
    %v3842 = vunpack.c.l.b16 %v356
    %v3843 = vunpack.c.h.b16 %v356
    %v3844 = vunpack.c.l.b16 %v357
    %v3845 = vunpack.c.h.b16 %v357
    %v3846 = vunpack.c.l.b16 %v358
    %v3847 = vunpack.c.h.b16 %v358
    %v3848 = vunpack.c.l.b16 %v359
    %v3849 = vunpack.c.h.b16 %v359
    %v3850 = vunpack.c.l.b16 %v360
    %v3851 = vunpack.c.h.b16 %v360
    %v3852 = vunpack.c.l.b16 %v361
    %v3853 = vunpack.c.h.b16 %v361
    %v3854 = vunpack.c.l.b16 %v362
    %v3855 = vunpack.c.h.b16 %v362
    %v3856 = vunpack.c.l.b16 %v363
    %v3857 = vunpack.c.h.b16 %v363
    %v3858 = vunpack.c.l.b16 %v364
    %v3859 = vunpack.c.h.b16 %v364
    %v3860 = vunpack.c.l.b16 %v365
    %v3861 = vunpack.c.h.b16 %v365
    %v3862 = vunpack.c.l.b16 %v366
    %v3863 = vunpack.c.h.b16 %v366
    %v3864 = vunpack.c.l.b16 %v367
    %v3865 = vunpack.c.h.b16 %v367
    %v3866 = vunpack.c.l.b16 %v368
    %v3867 = vunpack.c.h.b16 %v368
    %v3868 = vunpack.c.l.b16 %v369
    %v3869 = vunpack.c.h.b16 %v369
    %v3870 = vunpack.c.l.b16 %v370
    %v3871 = vunpack.c.h.b16 %v370
    %v3872 = vunpack.c.l.b16 %v371
    %v3873 = vunpack.c.h.b16 %v371
    %v3874 = vunpack.c.l.b16 %v372
    %v3875 = vunpack.c.h.b16 %v372
    %v3876 = vunpack.c.l.b16 %v373
    %v3877 = vunpack.c.h.b16 %v373
    %v3878 = vunpack.c.l.b16 %v374
    %v3879 = vunpack.c.h.b16 %v374
    %v3880 = vunpack.c.l.b16 %v375
    %v3881 = vunpack.c.h.b16 %v375
    %v3882 = vunpack.c.l.b16 %v376
    %v3883 = vunpack.c.h.b16 %v376
    %v3884 = vunpack.c.l.b16 %v377
    %v3885 = vunpack.c.h.b16 %v377
    %v3886 = vunpack.c.l.b16 %v378
    %v3887 = vunpack.c.h.b16 %v378
    %v3888 = vunpack.c.l.b16 %v379
    %v3889 = vunpack.c.h.b16 %v379
    %v3890 = vunpack.c.l.b16 %v380
    %v3891 = vunpack.c.h.b16 %v380
    %v3892 = vunpack.c.l.b16 %v381
    %v3893 = vunpack.c.h.b16 %v381
    %v3894 = vunpack.c.l.b16 %v382
    %v3895 = vunpack.c.h.b16 %v382
    %v3896 = vunpack.c.l.b16 %v383
    %v3897 = vunpack.c.h.b16 %v383
    %v3898 = vunpack.c.l.b16 %v384
    %v3899 = vunpack.c.h.b16 %v384
    %v3900 = vunpack.c.l.b16 %v385
    %v3901 = vunpack.c.h.b16 %v385
    %v3902 = vunpack.c.l.b16 %v386
    %v3903 = vunpack.c.h.b16 %v386
    %v3904 = vunpack.c.l.b16 %v387
    %v3905 = vunpack.c.h.b16 %v387
    %v3906 = vunpack.c.l.b16 %v388
    %v3907 = vunpack.c.h.b16 %v388
    %v3908 = vunpack.c.l.b16 %v389
    %v3909 = vunpack.c.h.b16 %v389
    %v3910 = vunpack.c.l.b16 %v390
    %v3911 = vunpack.c.h.b16 %v390
    %v3912 = vunpack.c.l.b16 %v391
    %v3913 = vunpack.c.h.b16 %v391
    %v3914 = vunpack.c.l.b16 %v392
    %v3915 = vunpack.c.h.b16 %v392
    %v3916 = vunpack.c.l.b16 %v393
    %v3917 = vunpack.c.h.b16 %v393
    %v3918 = vunpack.c.l.b16 %v394
    %v3919 = vunpack.c.h.b16 %v394
    %v3920 = vunpack.c.l.b16 %v395
    %v3921 = vunpack.c.h.b16 %v395
    %v3922 = vunpack.c.l.b16 %v396
    %v3923 = vunpack.c.h.b16 %v396
    %v3924 = vunpack.c.l.b16 %v397
    %v3925 = vunpack.c.h.b16 %v397
    %v3926 = vunpack.c.l.b16 %v398
    %v3927 = vunpack.c.h.b16 %v398
    %v3928 = vunpack.c.l.b16 %v399
    %v3929 = vunpack.c.h.b16 %v399
    %v3930 = vunpack.c.l.b16 %v400
    %v3931 = vunpack.c.h.b16 %v400
    %v3932 = vunpack.c.l.b16 %v401
    %v3933 = vunpack.c.h.b16 %v401
    %v3934 = vunpack.c.l.b16 %v402
    %v3935 = vunpack.c.h.b16 %v402
    %v3936 = vunpack.c.l.b16 %v403
    %v3937 = vunpack.c.h.b16 %v403
    %v3938 = vunpack.c.l.b16 %v404
    %v3939 = vunpack.c.h.b16 %v404
    %v3940 = vunpack.c.l.b16 %v405
    %v3941 = vunpack.c.h.b16 %v405
    %v3942 = vunpack.c.l.b16 %v406
    %v3943 = vunpack.c.h.b16 %v406
    %v3944 = vunpack.c.l.b16 %v407
    %v3945 = vunpack.c.h.b16 %v407
    %v3946 = vunpack.c.l.b16 %v408
    %v3947 = vunpack.c.h.b16 %v408
    %v3948 = vunpack.c.l.b16 %v409
    %v3949 = vunpack.c.h.b16 %v409
    %v3950 = vunpack.c.l.b16 %v410
    %v3951 = vunpack.c.h.b16 %v410
    %v3952 = vunpack.c.l.b16 %v411
    %v3953 = vunpack.c.h.b16 %v411
    %v3954 = vunpack.c.l.b16 %v412
    %v3955 = vunpack.c.h.b16 %v412
    %v3956 = vunpack.c.l.b16 %v413
    %v3957 = vunpack.c.h.b16 %v413
    %v3958 = vunpack.c.l.b16 %v414
    %v3959 = vunpack.c.h.b16 %v414
    %v3960 = vunpack.c.l.b16 %v415
    %v3961 = vunpack.c.h.b16 %v415
    %v3962 = vunpack.c.l.b16 %v416
    %v3963 = vunpack.c.h.b16 %v416
    %v3964 = vunpack.c.l.b16 %v417
    %v3965 = vunpack.c.h.b16 %v417
    %v3966 = vunpack.c.l.b16 %v418
    %v3967 = vunpack.c.h.b16 %v418
    %v3968 = vunpack.c.l.b16 %v419
    %v3969 = vunpack.c.h.b16 %v419
    %v3970 = vunpack.c.l.b16 %v420
    %v3971 = vunpack.c.h.b16 %v420
    %v3972 = vunpack.c.l.b16 %v421
    %v3973 = vunpack.c.h.b16 %v421
    %v3974 = vunpack.c.l.b16 %v422
    %v3975 = vunpack.c.h.b16 %v422
    %v3976 = vunpack.c.l.b16 %v423
    %v3977 = vunpack.c.h.b16 %v423
    %v3978 = vunpack.c.l.b16 %v424
    %v3979 = vunpack.c.h.b16 %v424
    %v3980 = vunpack.c.l.b16 %v425
    %v3981 = vunpack.c.h.b16 %v425
    %v3982 = vunpack.c.l.b16 %v426
    %v3983 = vunpack.c.h.b16 %v426
    %v3984 = vunpack.c.l.b16 %v427
    %v3985 = vunpack.c.h.b16 %v427
    %v3986 = vunpack.c.l.b16 %v428
    %v3987 = vunpack.c.h.b16 %v428
    %v3988 = vunpack.c.l.b16 %v429
    %v3989 = vunpack.c.h.b16 %v429
    %v3990 = vunpack.c.l.b16 %v430
    %v3991 = vunpack.c.h.b16 %v430
    %v3992 = vunpack.c.l.b16 %v431
    %v3993 = vunpack.c.h.b16 %v431
    %v3994 = vunpack.c.l.b16 %v432
    %v3995 = vunpack.c.h.b16 %v432
    %v3996 = vunpack.c.l.b16 %v433
    %v3997 = vunpack.c.h.b16 %v433
    %v3998 = vunpack.c.l.b16 %v434
    %v3999 = vunpack.c.h.b16 %v434
    %v4000 = vunpack.c.l.b16 %v435
    %v4001 = vunpack.c.h.b16 %v435
    %v4002 = vunpack.c.l.b16 %v436
    %v4003 = vunpack.c.h.b16 %v436
    %v4004 = vunpack.c.l.b16 %v437
    %v4005 = vunpack.c.h.b16 %v437
    %v4006 = vunpack.c.l.b16 %v438
    %v4007 = vunpack.c.h.b16 %v438
    %v4008 = vunpack.c.l.b16 %v439
    %v4009 = vunpack.c.h.b16 %v439
    %v4010 = vunpack.c.l.b16 %v440
    %v4011 = vunpack.c.h.b16 %v440
    %v4012 = vunpack.c.l.b16 %v441
    %v4013 = vunpack.c.h.b16 %v441
    %v4014 = vunpack.c.l.b16 %v442
    %v4015 = vunpack.c.h.b16 %v442
    %v4016 = vunpack.c.l.b16 %v443
    %v4017 = vunpack.c.h.b16 %v443
    %v4018 = vunpack.c.l.b16 %v444
    %v4019 = vunpack.c.h.b16 %v444
    %v4020 = vunpack.c.l.b16 %v445
    %v4021 = vunpack.c.h.b16 %v445
    %v4022 = vunpack.c.l.b16 %v446
    %v4023 = vunpack.c.h.b16 %v446
    %v4024 = vunpack.c.l.b16 %v447
    %v4025 = vunpack.c.h.b16 %v447
    %v4026 = vunpack.c.l.b16 %v448
    %v4027 = vunpack.c.h.b16 %v448
    %v4028 = vunpack.c.l.b16 %v449
    %v4029 = vunpack.c.h.b16 %v449
    %v4030 = vunpack.c.l.b16 %v450
    %v4031 = vunpack.c.h.b16 %v450
    %v4032 = vunpack.c.l.b16 %v451
    %v4033 = vunpack.c.h.b16 %v451
    %v4034 = vunpack.c.l.b16 %v452
    %v4035 = vunpack.c.h.b16 %v452
    %v4036 = vunpack.c.l.b16 %v453
    %v4037 = vunpack.c.h.b16 %v453
    %v4038 = vunpack.c.l.b16 %v454
    %v4039 = vunpack.c.h.b16 %v454
    %v4040 = vunpack.c.l.b16 %v455
    %v4041 = vunpack.c.h.b16 %v455
    %v4042 = vunpack.c.l.b16 %v456
    %v4043 = vunpack.c.h.b16 %v456
    %v4044 = vunpack.c.l.b16 %v457
    %v4045 = vunpack.c.h.b16 %v457
    %v4046 = vunpack.c.l.b16 %v458
    %v4047 = vunpack.c.h.b16 %v458
    %v4048 = vunpack.c.l.b16 %v459
    %v4049 = vunpack.c.h.b16 %v459
    %v4050 = vunpack.c.l.b16 %v460
    %v4051 = vunpack.c.h.b16 %v460
    %v4052 = vunpack.c.l.b16 %v461
    %v4053 = vunpack.c.h.b16 %v461
    %v4054 = vunpack.c.l.b16 %v462
    %v4055 = vunpack.c.h.b16 %v462
    %v4056 = vunpack.c.l.b16 %v463
    %v4057 = vunpack.c.h.b16 %v463
    %v4058 = vunpack.c.l.b16 %v464
    %v4059 = vunpack.c.h.b16 %v464
    %v4060 = vunpack.c.l.b16 %v465
    %v4061 = vunpack.c.h.b16 %v465
    %v4062 = vunpack.c.l.b16 %v466
    %v4063 = vunpack.c.h.b16 %v466
    %v4064 = vunpack.c.l.b16 %v467
    %v4065 = vunpack.c.h.b16 %v467
    %v4066 = vunpack.c.l.b16 %v468
    %v4067 = vunpack.c.h.b16 %v468
    %v4068 = vunpack.c.l.b16 %v469
    %v4069 = vunpack.c.h.b16 %v469
    %v4070 = vunpack.c.l.b16 %v470
    %v4071 = vunpack.c.h.b16 %v470
    %v4072 = vunpack.c.l.b16 %v471
    %v4073 = vunpack.c.h.b16 %v471
    %v4074 = vunpack.c.l.b16 %v472
    %v4075 = vunpack.c.h.b16 %v472
    %v4076 = vunpack.c.l.b16 %v473
    %v4077 = vunpack.c.h.b16 %v473
    %v4078 = vunpack.c.l.b16 %v474
    %v4079 = vunpack.c.h.b16 %v474
    %v4080 = vunpack.c.l.b16 %v475
    %v4081 = vunpack.c.h.b16 %v475
    %v4082 = vunpack.c.l.b16 %v476
    %v4083 = vunpack.c.h.b16 %v476
    %v4084 = vunpack.c.l.b16 %v477
    %v4085 = vunpack.c.h.b16 %v477
    %v4086 = vunpack.c.l.b16 %v478
    %v4087 = vunpack.c.h.b16 %v478
    %v4088 = vunpack.c.l.b16 %v479
    %v4089 = vunpack.c.h.b16 %v479
    %v4090 = vunpack.c.l.b16 %v480
    %v4091 = vunpack.c.h.b16 %v480
    %v4092 = vunpack.c.l.b16 %v481
    %v4093 = vunpack.c.h.b16 %v481
    %v4094 = vunpack.c.l.b16 %v482
    %v4095 = vunpack.c.h.b16 %v482
    %v4096 = vunpack.c.l.b16 %v483
    %v4097 = vunpack.c.h.b16 %v483
    %v4098 = vunpack.c.l.b16 %v484
    %v4099 = vunpack.c.h.b16 %v484
    %v4100 = vunpack.c.l.b16 %v485
    %v4101 = vunpack.c.h.b16 %v485
    %v4102 = vunpack.c.l.b16 %v486
    %v4103 = vunpack.c.h.b16 %v486
    %v4104 = vunpack.c.l.b16 %v487
    %v4105 = vunpack.c.h.b16 %v487
    %v4106 = vunpack.c.l.b16 %v488
    %v4107 = vunpack.c.h.b16 %v488
    %v4108 = vunpack.c.l.b16 %v489
    %v4109 = vunpack.c.h.b16 %v489
    %v4110 = vunpack.c.l.b16 %v490
    %v4111 = vunpack.c.h.b16 %v490
    %v4112 = vunpack.c.l.b16 %v491
    %v4113 = vunpack.c.h.b16 %v491
    %v4114 = vunpack.c.l.b16 %v492
    %v4115 = vunpack.c.h.b16 %v492
    %v4116 = vunpack.c.l.b16 %v493
    %v4117 = vunpack.c.h.b16 %v493
    %v4118 = vunpack.c.l.b16 %v494
    %v4119 = vunpack.c.h.b16 %v494
    %v4120 = vunpack.c.l.b16 %v495
    %v4121 = vunpack.c.h.b16 %v495
    %v4122 = vunpack.c.l.b16 %v496
    %v4123 = vunpack.c.h.b16 %v496
    %v4124 = vunpack.c.l.b16 %v497
    %v4125 = vunpack.c.h.b16 %v497
    %v4126 = vunpack.c.l.b16 %v498
    %v4127 = vunpack.c.h.b16 %v498
    %v4128 = vunpack.c.l.b16 %v499
    %v4129 = vunpack.c.h.b16 %v499
    %v4130 = vunpack.c.l.b16 %v500
    %v4131 = vunpack.c.h.b16 %v500
    %v4132 = vunpack.c.l.b16 %v501
    %v4133 = vunpack.c.h.b16 %v501
    %v4134 = vunpack.c.l.b16 %v502
    %v4135 = vunpack.c.h.b16 %v502
    %v4136 = vunpack.c.l.b16 %v503
    %v4137 = vunpack.c.h.b16 %v503
    %v4138 = vunpack.c.l.b16 %v504
    %v4139 = vunpack.c.h.b16 %v504
    %v4140 = vunpack.c.l.b16 %v505
    %v4141 = vunpack.c.h.b16 %v505
    %v4142 = vunpack.c.l.b16 %v506
    %v4143 = vunpack.c.h.b16 %v506
    %v4144 = vunpack.c.l.b16 %v507
    %v4145 = vunpack.c.h.b16 %v507
    %v4146 = vunpack.c.l.b16 %v508
    %v4147 = vunpack.c.h.b16 %v508
    %v4148 = vunpack.c.l.b16 %v509
    %v4149 = vunpack.c.h.b16 %v509
    %v4150 = vunpack.c.l.b16 %v510
    %v4151 = vunpack.c.h.b16 %v510
    %v4152 = vunpack.c.l.b16 %v511
    %v4153 = vunpack.c.h.b16 %v511
    %v4154 = vunpack.c.l.b16 %v512
    %v4155 = vunpack.c.h.b16 %v512
    %v4156 = vunpack.c.l.b16 %v513
    %v4157 = vunpack.c.h.b16 %v513
    %v4158 = vunpack.c.l.b16 %v514
    %v4159 = vunpack.c.h.b16 %v514
    %v4160 = vunpack.c.l.b16 %v515
    %v4161 = vunpack.c.h.b16 %v515
    %v4162 = vunpack.c.l.b16 %v516
    %v4163 = vunpack.c.h.b16 %v516
    %v4164 = vunpack.c.l.b16 %v517
    %v4165 = vunpack.c.h.b16 %v517
    %v4166 = vunpack.c.l.b16 %v518
    %v4167 = vunpack.c.h.b16 %v518
    %v4168 = vunpack.c.l.b16 %v519
    %v4169 = vunpack.c.h.b16 %v519
    %v4170 = vunpack.c.l.b16 %v520
    %v4171 = vunpack.c.h.b16 %v520
    %v4172 = vunpack.c.l.b16 %v521
    %v4173 = vunpack.c.h.b16 %v521
    %v4174 = vunpack.c.l.b16 %v522
    %v4175 = vunpack.c.h.b16 %v522
    %v4176 = vunpack.c.l.b16 %v523
    %v4177 = vunpack.c.h.b16 %v523
    %v4178 = vunpack.c.l.b16 %v524
    %v4179 = vunpack.c.h.b16 %v524
    %v4180 = vunpack.c.l.b16 %v525
    %v4181 = vunpack.c.h.b16 %v525
    %v4182 = vunpack.c.l.b16 %v526
    %v4183 = vunpack.c.h.b16 %v526
    %v4184 = vunpack.c.l.b16 %v527
    %v4185 = vunpack.c.h.b16 %v527
    %v4186 = vunpack.c.l.b16 %v528
    %v4187 = vunpack.c.h.b16 %v528
    %v4188 = vunpack.c.l.b16 %v529
    %v4189 = vunpack.c.h.b16 %v529
    %v4190 = vunpack.c.l.b16 %v530
    %v4191 = vunpack.c.h.b16 %v530
    %v4192 = vunpack.c.l.b16 %v531
    %v4193 = vunpack.c.h.b16 %v531
    %v4194 = vunpack.c.l.b16 %v532
    %v4195 = vunpack.c.h.b16 %v532
    %v4196 = vunpack.c.l.b16 %v533
    %v4197 = vunpack.c.h.b16 %v533
    %v4198 = vunpack.c.l.b16 %v534
    %v4199 = vunpack.c.h.b16 %v534
    %v4200 = vunpack.c.l.b16 %v535
    %v4201 = vunpack.c.h.b16 %v535
    %v4202 = vunpack.c.l.b16 %v536
    %v4203 = vunpack.c.h.b16 %v536
    %v4204 = vunpack.c.l.b16 %v537
    %v4205 = vunpack.c.h.b16 %v537
    %v4206 = vunpack.c.l.b16 %v538
    %v4207 = vunpack.c.h.b16 %v538
    %v4208 = vunpack.c.l.b16 %v539
    %v4209 = vunpack.c.h.b16 %v539
    %v4210 = vunpack.c.l.b16 %v540
    %v4211 = vunpack.c.h.b16 %v540
    %v4212 = vunpack.c.l.b16 %v541
    %v4213 = vunpack.c.h.b16 %v541
    %v4214 = vunpack.c.l.b16 %v542
    %v4215 = vunpack.c.h.b16 %v542
    %v4216 = vunpack.c.l.b16 %v543
    %v4217 = vunpack.c.h.b16 %v543
    %v4218 = vunpack.c.l.b16 %v544
    %v4219 = vunpack.c.h.b16 %v544
    %v4220 = vunpack.c.l.b16 %v545
    %v4221 = vunpack.c.h.b16 %v545
    %v4222 = vunpack.c.l.b16 %v546
    %v4223 = vunpack.c.h.b16 %v546
    %v4224 = vunpack.c.l.b16 %v547
    %v4225 = vunpack.c.h.b16 %v547
    %v4226 = vunpack.c.l.b16 %v548
    %v4227 = vunpack.c.h.b16 %v548
    %v4228 = vunpack.c.l.b16 %v549
    %v4229 = vunpack.c.h.b16 %v549
    %v4230 = vunpack.c.l.b16 %v550
    %v4231 = vunpack.c.h.b16 %v550
    %v4232 = vunpack.c.l.b16 %v551
    %v4233 = vunpack.c.h.b16 %v551
    %v4234 = vunpack.c.l.b16 %v552
    %v4235 = vunpack.c.h.b16 %v552
    %v4236 = vunpack.c.l.b16 %v553
    %v4237 = vunpack.c.h.b16 %v553
    %v4238 = vunpack.c.l.b16 %v554
    %v4239 = vunpack.c.h.b16 %v554
    %v4240 = vunpack.c.l.b16 %v555
    %v4241 = vunpack.c.h.b16 %v555
    %v4242 = vunpack.c.l.b16 %v556
    %v4243 = vunpack.c.h.b16 %v556
    %v4244 = vunpack.c.l.b16 %v557
    %v4245 = vunpack.c.h.b16 %v557
    %v4246 = vunpack.c.l.b16 %v558
    %v4247 = vunpack.c.h.b16 %v558
    %v4248 = vunpack.c.l.b16 %v559
    %v4249 = vunpack.c.h.b16 %v559
    %v4250 = vunpack.c.l.b16 %v560
    %v4251 = vunpack.c.h.b16 %v560
    %v4252 = vunpack.c.l.b16 %v561
    %v4253 = vunpack.c.h.b16 %v561
    %v4254 = vunpack.c.l.b16 %v562
    %v4255 = vunpack.c.h.b16 %v562
    %v4256 = vunpack.c.l.b16 %v563
    %v4257 = vunpack.c.h.b16 %v563
    %v4258 = vunpack.c.l.b16 %v564
    %v4259 = vunpack.c.h.b16 %v564
    %v4260 = vunpack.c.l.b16 %v565
    %v4261 = vunpack.c.h.b16 %v565
    %v4262 = vunpack.c.l.b16 %v566
    %v4263 = vunpack.c.h.b16 %v566
    %v4264 = vunpack.c.l.b16 %v567
    %v4265 = vunpack.c.h.b16 %v567
    %v4266 = vunpack.c.l.b16 %v568
    %v4267 = vunpack.c.h.b16 %v568
    %v4268 = vunpack.c.l.b16 %v569
    %v4269 = vunpack.c.h.b16 %v569
    %v4270 = vunpack.c.l.b16 %v570
    %v4271 = vunpack.c.h.b16 %v570
    %v4272 = vunpack.c.l.b16 %v571
    %v4273 = vunpack.c.h.b16 %v571
    %v4274 = vunpack.c.l.b16 %v572
    %v4275 = vunpack.c.h.b16 %v572
    %v4276 = vunpack.c.l.b16 %v573
    %v4277 = vunpack.c.h.b16 %v573
    %v4278 = vunpack.c.l.b16 %v574
    %v4279 = vunpack.c.h.b16 %v574
    %v4280 = vunpack.c.l.b16 %v575
    %v4281 = vunpack.c.h.b16 %v575
    %v4282 = vunpack.c.l.b16 %v576
    %v4283 = vunpack.c.h.b16 %v576
    %v4284 = vunpack.c.l.b16 %v577
    %v4285 = vunpack.c.h.b16 %v577
    %v4286 = vunpack.c.l.b16 %v578
    %v4287 = vunpack.c.h.b16 %v578
    %v4288 = vunpack.c.l.b16 %v579
    %v4289 = vunpack.c.h.b16 %v579
    %v4290 = vunpack.c.l.b16 %v580
    %v4291 = vunpack.c.h.b16 %v580
    %v4292 = vunpack.c.l.b16 %v581
    %v4293 = vunpack.c.h.b16 %v581
    %v4294 = vunpack.c.l.b16 %v582
    %v4295 = vunpack.c.h.b16 %v582
    %v4296 = vunpack.c.l.b16 %v583
    %v4297 = vunpack.c.h.b16 %v583
    %v4298 = vunpack.c.l.b16 %v584
    %v4299 = vunpack.c.h.b16 %v584
    %v4300 = vunpack.c.l.b16 %v585
    %v4301 = vunpack.c.h.b16 %v585
    %v4302 = vunpack.c.l.b16 %v586
    %v4303 = vunpack.c.h.b16 %v586
    %v4304 = vunpack.c.l.b16 %v587
    %v4305 = vunpack.c.h.b16 %v587
    %v4306 = vunpack.c.l.b16 %v588
    %v4307 = vunpack.c.h.b16 %v588
    %v4308 = vunpack.c.l.b16 %v589
    %v4309 = vunpack.c.h.b16 %v589
    %v4310 = vunpack.c.l.b16 %v590
    %v4311 = vunpack.c.h.b16 %v590
    %v4312 = vunpack.c.l.b16 %v591
    %v4313 = vunpack.c.h.b16 %v591
    %v4314 = vunpack.c.l.b16 %v592
    %v4315 = vunpack.c.h.b16 %v592
    %v4316 = vunpack.c.l.b16 %v593
    %v4317 = vunpack.c.h.b16 %v593
    %v4318 = vunpack.c.l.b16 %v594
    %v4319 = vunpack.c.h.b16 %v594
    %v4320 = vunpack.c.l.b16 %v595
    %v4321 = vunpack.c.h.b16 %v595
    %v4322 = vunpack.c.l.b16 %v596
    %v4323 = vunpack.c.h.b16 %v596
    %v4324 = vunpack.c.l.b16 %v597
    %v4325 = vunpack.c.h.b16 %v597
    %v4326 = vunpack.c.l.b16 %v598
    %v4327 = vunpack.c.h.b16 %v598
    %v4328 = vunpack.c.l.b16 %v599
    %v4329 = vunpack.c.h.b16 %v599
    %v4330 = vunpack.c.l.b16 %v600
    %v4331 = vunpack.c.h.b16 %v600
    %v4332 = vunpack.c.l.b16 %v601
    %v4333 = vunpack.c.h.b16 %v601
    %v4334 = vunpack.c.l.b16 %v602
    %v4335 = vunpack.c.h.b16 %v602
    %v4336 = vunpack.c.l.b16 %v603
    %v4337 = vunpack.c.h.b16 %v603
    %v4338 = vunpack.c.l.b16 %v604
    %v4339 = vunpack.c.h.b16 %v604
    %v4340 = vunpack.c.l.b16 %v605
    %v4341 = vunpack.c.h.b16 %v605
    %v4342 = vunpack.c.l.b16 %v606
    %v4343 = vunpack.c.h.b16 %v606
    %v4344 = vunpack.c.l.b16 %v607
    %v4345 = vunpack.c.h.b16 %v607
    %v4346 = vunpack.c.l.b16 %v608
    %v4347 = vunpack.c.h.b16 %v608
    %v4348 = vunpack.c.l.b16 %v609
    %v4349 = vunpack.c.h.b16 %v609
    %v4350 = vunpack.c.l.b16 %v610
    %v4351 = vunpack.c.h.b16 %v610
    %v4352 = vunpack.c.l.b16 %v611
    %v4353 = vunpack.c.h.b16 %v611
    %v4354 = vunpack.c.l.b16 %v612
    %v4355 = vunpack.c.h.b16 %v612
    %v4356 = vunpack.c.l.b16 %v613
    %v4357 = vunpack.c.h.b16 %v613
    %v4358 = vunpack.c.l.b16 %v614
    %v4359 = vunpack.c.h.b16 %v614
    %v4360 = vunpack.c.l.b16 %v615
    %v4361 = vunpack.c.h.b16 %v615
    %v4362 = vunpack.c.l.b16 %v616
    %v4363 = vunpack.c.h.b16 %v616
    %v4364 = vunpack.c.l.b16 %v617
    %v4365 = vunpack.c.h.b16 %v617
    %v4366 = vunpack.c.l.b16 %v618
    %v4367 = vunpack.c.h.b16 %v618
    %v4368 = vunpack.c.l.b16 %v619
    %v4369 = vunpack.c.h.b16 %v619
    %v4370 = vunpack.c.l.b16 %v620
    %v4371 = vunpack.c.h.b16 %v620
    %v4372 = vunpack.c.l.b16 %v621
    %v4373 = vunpack.c.h.b16 %v621
    %v4374 = vunpack.c.l.b16 %v622
    %v4375 = vunpack.c.h.b16 %v622
    %v4376 = vunpack.c.l.b16 %v623
    %v4377 = vunpack.c.h.b16 %v623
    %v4378 = vunpack.c.l.b16 %v624
    %v4379 = vunpack.c.h.b16 %v624
    %v4380 = vunpack.c.l.b16 %v625
    %v4381 = vunpack.c.h.b16 %v625
    %v4382 = vunpack.c.l.b16 %v626
    %v4383 = vunpack.c.h.b16 %v626
    %v4384 = vunpack.c.l.b16 %v627
    %v4385 = vunpack.c.h.b16 %v627
    %v4386 = vunpack.c.l.b16 %v628
    %v4387 = vunpack.c.h.b16 %v628
    %v4388 = vunpack.c.l.b16 %v629
    %v4389 = vunpack.c.h.b16 %v629
    %v4390 = vunpack.c.l.b16 %v630
    %v4391 = vunpack.c.h.b16 %v630
    %v4392 = vunpack.c.l.b16 %v631
    %v4393 = vunpack.c.h.b16 %v631
    %v4394 = vunpack.c.l.b16 %v632
    %v4395 = vunpack.c.h.b16 %v632
    %v4396 = vunpack.c.l.b16 %v633
    %v4397 = vunpack.c.h.b16 %v633
    %v4398 = vunpack.c.l.b16 %v634
    %v4399 = vunpack.c.h.b16 %v634
    %v4400 = vunpack.c.l.b16 %v635
    %v4401 = vunpack.c.h.b16 %v635
    %v4402 = vunpack.c.l.b16 %v636
    %v4403 = vunpack.c.h.b16 %v636
    %v4404 = vunpack.c.l.b16 %v637
    %v4405 = vunpack.c.h.b16 %v637
    %v4406 = vunpack.c.l.b16 %v638
    %v4407 = vunpack.c.h.b16 %v638
    %v4408 = vunpack.c.l.b16 %v639
    %v4409 = vunpack.c.h.b16 %v639
    %v4410 = vunpack.c.l.b16 %v640
    %v4411 = vunpack.c.h.b16 %v640
    %v4412 = vunpack.c.l.b16 %v641
    %v4413 = vunpack.c.h.b16 %v641
    %v4414 = vunpack.c.l.b16 %v642
    %v4415 = vunpack.c.h.b16 %v642
    %v4416 = vunpack.c.l.b16 %v643
    %v4417 = vunpack.c.h.b16 %v643
    %v4418 = vunpack.c.l.b16 %v644
    %v4419 = vunpack.c.h.b16 %v644
    %v4420 = vunpack.c.l.b16 %v645
    %v4421 = vunpack.c.h.b16 %v645
    %v4422 = vunpack.c.l.b16 %v646
    %v4423 = vunpack.c.h.b16 %v646
    %v4424 = vunpack.c.l.b16 %v647
    %v4425 = vunpack.c.h.b16 %v647
    %v4426 = vunpack.c.l.b16 %v648
    %v4427 = vunpack.c.h.b16 %v648
    %v4428 = vunpack.c.l.b16 %v649
    %v4429 = vunpack.c.h.b16 %v649
    %v4430 = vunpack.c.l.b16 %v650
    %v4431 = vunpack.c.h.b16 %v650
    %v4432 = vunpack.c.l.b16 %v651
    %v4433 = vunpack.c.h.b16 %v651
    %v4434 = vunpack.c.l.b16 %v652
    %v4435 = vunpack.c.h.b16 %v652
    %v4436 = vunpack.c.l.b16 %v653
    %v4437 = vunpack.c.h.b16 %v653
    %v4438 = vunpack.c.l.b16 %v654
    %v4439 = vunpack.c.h.b16 %v654
    %v4440 = vunpack.c.l.b16 %v655
    %v4441 = vunpack.c.h.b16 %v655
    %v4442 = vunpack.c.l.b16 %v656
    %v4443 = vunpack.c.h.b16 %v656
    %v4444 = vunpack.c.l.b16 %v657
    %v4445 = vunpack.c.h.b16 %v657
    %v4446 = vunpack.c.l.b16 %v658
    %v4447 = vunpack.c.h.b16 %v658
    %v4448 = vunpack.c.l.b16 %v659
    %v4449 = vunpack.c.h.b16 %v659
    %v4450 = vunpack.c.l.b16 %v660
    %v4451 = vunpack.c.h.b16 %v660
    %v4452 = vunpack.c.l.b16 %v661
    %v4453 = vunpack.c.h.b16 %v661
    %v4454 = vunpack.c.l.b16 %v662
    %v4455 = vunpack.c.h.b16 %v662
    %v4456 = vunpack.c.l.b16 %v663
    %v4457 = vunpack.c.h.b16 %v663
    %v4458 = vunpack.c.l.b16 %v664
    %v4459 = vunpack.c.h.b16 %v664
    %v4460 = vunpack.c.l.b16 %v665
    %v4461 = vunpack.c.h.b16 %v665
    %v4462 = vunpack.c.l.b16 %v666
    %v4463 = vunpack.c.h.b16 %v666
    %v4464 = vunpack.c.l.b16 %v667
    %v4465 = vunpack.c.h.b16 %v667
    %v4466 = vunpack.c.l.b16 %v668
    %v4467 = vunpack.c.h.b16 %v668
    %v4468 = vunpack.c.l.b16 %v669
    %v4469 = vunpack.c.h.b16 %v669
    %v4470 = vunpack.c.l.b16 %v670
    %v4471 = vunpack.c.h.b16 %v670
    %v4472 = vunpack.c.l.b16 %v671
    %v4473 = vunpack.c.h.b16 %v671
    %v4474 = vunpack.c.l.b16 %v672
    %v4475 = vunpack.c.h.b16 %v672
    %v4476 = vunpack.c.l.b16 %v673
    %v4477 = vunpack.c.h.b16 %v673
    %v4478 = vunpack.c.l.b16 %v674
    %v4479 = vunpack.c.h.b16 %v674
    %v4480 = vunpack.c.l.b16 %v675
    %v4481 = vunpack.c.h.b16 %v675
    %v4482 = vunpack.c.l.b16 %v676
    %v4483 = vunpack.c.h.b16 %v676
    %v4484 = vunpack.c.l.b16 %v677
    %v4485 = vunpack.c.h.b16 %v677
    %v4486 = vunpack.c.l.b16 %v678
    %v4487 = vunpack.c.h.b16 %v678
    %v4488 = vunpack.c.l.b16 %v679
    %v4489 = vunpack.c.h.b16 %v679
    %v4490 = vunpack.c.l.b16 %v680
    %v4491 = vunpack.c.h.b16 %v680
    %v4492 = vunpack.c.l.b16 %v681
    %v4493 = vunpack.c.h.b16 %v681
    %v4494 = vunpack.c.l.b16 %v682
    %v4495 = vunpack.c.h.b16 %v682
    %v4496 = vunpack.c.l.b16 %v683
    %v4497 = vunpack.c.h.b16 %v683
    %v4498 = vunpack.c.l.b16 %v684
    %v4499 = vunpack.c.h.b16 %v684
    %v4500 = vunpack.c.l.b16 %v685
    %v4501 = vunpack.c.h.b16 %v685
    %v4502 = vunpack.c.l.b16 %v686
    %v4503 = vunpack.c.h.b16 %v686
    %v4504 = vunpack.c.l.b16 %v687
    %v4505 = vunpack.c.h.b16 %v687
    %v4506 = vunpack.c.l.b16 %v688
    %v4507 = vunpack.c.h.b16 %v688
    %v4508 = vunpack.c.l.b16 %v689
    %v4509 = vunpack.c.h.b16 %v689
    %v4510 = vunpack.c.l.b16 %v690
    %v4511 = vunpack.c.h.b16 %v690
    %v4512 = vunpack.c.l.b16 %v691
    %v4513 = vunpack.c.h.b16 %v691
    %v4514 = vunpack.c.l.b16 %v692
    %v4515 = vunpack.c.h.b16 %v692
    %v4516 = vunpack.c.l.b16 %v693
    %v4517 = vunpack.c.h.b16 %v693
    %v4518 = vunpack.c.l.b16 %v694
    %v4519 = vunpack.c.h.b16 %v694
    %v4520 = vunpack.c.l.b16 %v695
    %v4521 = vunpack.c.h.b16 %v695
    %v4522 = vunpack.c.l.b16 %v696
    %v4523 = vunpack.c.h.b16 %v696
    %v4524 = vunpack.c.l.b16 %v697
    %v4525 = vunpack.c.h.b16 %v697
    %v4526 = vunpack.c.l.b16 %v698
    %v4527 = vunpack.c.h.b16 %v698
    %v4528 = vunpack.c.l.b16 %v699
    %v4529 = vunpack.c.h.b16 %v699
    %v4530 = vunpack.c.l.b16 %v700
    %v4531 = vunpack.c.h.b16 %v700
    %v4532 = vunpack.c.l.b16 %v701
    %v4533 = vunpack.c.h.b16 %v701
    %v4534 = vunpack.c.l.b16 %v702
    %v4535 = vunpack.c.h.b16 %v702
    %v4536 = vunpack.c.l.b16 %v703
    %v4537 = vunpack.c.h.b16 %v703
    %v4538 = vunpack.c.l.b16 %v704
    %v4539 = vunpack.c.h.b16 %v704
    %v4540 = vunpack.c.l.b16 %v705
    %v4541 = vunpack.c.h.b16 %v705
    %v4542 = vunpack.c.l.b16 %v706
    %v4543 = vunpack.c.h.b16 %v706
    %v4544 = vunpack.c.l.b16 %v707
    %v4545 = vunpack.c.h.b16 %v707
    %v4546 = vunpack.c.l.b16 %v708
    %v4547 = vunpack.c.h.b16 %v708
    %v4548 = vunpack.c.l.b16 %v709
    %v4549 = vunpack.c.h.b16 %v709
    %v4550 = vunpack.c.l.b16 %v710
    %v4551 = vunpack.c.h.b16 %v710
    %v4552 = vunpack.c.l.b16 %v711
    %v4553 = vunpack.c.h.b16 %v711
    %v4554 = vunpack.c.l.b16 %v712
    %v4555 = vunpack.c.h.b16 %v712
    %v4556 = vunpack.c.l.b16 %v713
    %v4557 = vunpack.c.h.b16 %v713
    %v4558 = vunpack.c.l.b16 %v714
    %v4559 = vunpack.c.h.b16 %v714
    %v4560 = vunpack.c.l.b16 %v715
    %v4561 = vunpack.c.h.b16 %v715
    %v4562 = vunpack.c.l.b16 %v716
    %v4563 = vunpack.c.h.b16 %v716
    %v4564 = vunpack.c.l.b16 %v717
    %v4565 = vunpack.c.h.b16 %v717
    %v4566 = vunpack.c.l.b16 %v718
    %v4567 = vunpack.c.h.b16 %v718
    %v4568 = vunpack.c.l.b16 %v719
    %v4569 = vunpack.c.h.b16 %v719
    %v4570 = vunpack.c.l.b16 %v720
    %v4571 = vunpack.c.h.b16 %v720
    %v4572 = vunpack.c.l.b16 %v721
    %v4573 = vunpack.c.h.b16 %v721
    %v4574 = vunpack.c.l.b16 %v722
    %v4575 = vunpack.c.h.b16 %v722
    %v4576 = vunpack.c.l.b16 %v723
    %v4577 = vunpack.c.h.b16 %v723
    %v4578 = vunpack.c.l.b16 %v724
    %v4579 = vunpack.c.h.b16 %v724
    %v4580 = vunpack.c.l.b16 %v725
    %v4581 = vunpack.c.h.b16 %v725
    %v4582 = vunpack.c.l.b16 %v726
    %v4583 = vunpack.c.h.b16 %v726
    %v4584 = vunpack.c.l.b16 %v727
    %v4585 = vunpack.c.h.b16 %v727
    %v4586 = vunpack.c.l.b16 %v728
    %v4587 = vunpack.c.h.b16 %v728
    %v4588 = vunpack.c.l.b16 %v729
    %v4589 = vunpack.c.h.b16 %v729
    %v4590 = vunpack.c.l.b16 %v730
    %v4591 = vunpack.c.h.b16 %v730
    %v4592 = vunpack.c.l.b16 %v731
    %v4593 = vunpack.c.h.b16 %v731
    %v4594 = vunpack.c.l.b16 %v732
    %v4595 = vunpack.c.h.b16 %v732
    %v4596 = vunpack.c.l.b16 %v733
    %v4597 = vunpack.c.h.b16 %v733
    %v4598 = vunpack.c.l.b16 %v734
    %v4599 = vunpack.c.h.b16 %v734
    %v4600 = vunpack.c.l.b16 %v735
    %v4601 = vunpack.c.h.b16 %v735
    %v4602 = vunpack.c.l.b16 %v736
    %v4603 = vunpack.c.h.b16 %v736
    %v4604 = vunpack.c.l.b16 %v737
    %v4605 = vunpack.c.h.b16 %v737
    %v4606 = vunpack.c.l.b16 %v738
    %v4607 = vunpack.c.h.b16 %v738
    %v4608 = vunpack.c.l.b16 %v739
    %v4609 = vunpack.c.h.b16 %v739
    %v4610 = vunpack.c.l.b16 %v740
    %v4611 = vunpack.c.h.b16 %v740
    %v4612 = vunpack.c.l.b16 %v741
    %v4613 = vunpack.c.h.b16 %v741
    %v4614 = vunpack.c.l.b16 %v742
    %v4615 = vunpack.c.h.b16 %v742
    %v4616 = vunpack.c.l.b16 %v743
    %v4617 = vunpack.c.h.b16 %v743
    %v4618 = vunpack.c.l.b16 %v744
    %v4619 = vunpack.c.h.b16 %v744
    %v4620 = vunpack.c.l.b16 %v745
    %v4621 = vunpack.c.h.b16 %v745
    %v4622 = vunpack.c.l.b16 %v746
    %v4623 = vunpack.c.h.b16 %v746
    %v4624 = vunpack.c.l.b16 %v747
    %v4625 = vunpack.c.h.b16 %v747
    %v4626 = vunpack.c.l.b16 %v748
    %v4627 = vunpack.c.h.b16 %v748
    %v4628 = vunpack.c.l.b16 %v749
    %v4629 = vunpack.c.h.b16 %v749
    %v4630 = vunpack.c.l.b16 %v750
    %v4631 = vunpack.c.h.b16 %v750
    %v4632 = vunpack.c.l.b16 %v751
    %v4633 = vunpack.c.h.b16 %v751
    %v4634 = vunpack.c.l.b16 %v752
    %v4635 = vunpack.c.h.b16 %v752
    %v4636 = vunpack.c.l.b16 %v753
    %v4637 = vunpack.c.h.b16 %v753
    %v4638 = vunpack.c.l.b16 %v754
    %v4639 = vunpack.c.h.b16 %v754
    %v4640 = vunpack.c.l.b16 %v755
    %v4641 = vunpack.c.h.b16 %v755
    %v4642 = vunpack.c.l.b16 %v756
    %v4643 = vunpack.c.h.b16 %v756
    %v4644 = vunpack.c.l.b16 %v757
    %v4645 = vunpack.c.h.b16 %v757
    %v4646 = vunpack.c.l.b16 %v758
    %v4647 = vunpack.c.h.b16 %v758
    %v4648 = vunpack.c.l.b16 %v759
    %v4649 = vunpack.c.h.b16 %v759
    %v4650 = vunpack.c.l.b16 %v760
    %v4651 = vunpack.c.h.b16 %v760
    %v4652 = vunpack.c.l.b16 %v761
    %v4653 = vunpack.c.h.b16 %v761
    %v4654 = vunpack.c.l.b16 %v762
    %v4655 = vunpack.c.h.b16 %v762
    %v4656 = vunpack.c.l.b16 %v763
    %v4657 = vunpack.c.h.b16 %v763
    %v4658 = vunpack.c.l.b16 %v764
    %v4659 = vunpack.c.h.b16 %v764
    %v4660 = vunpack.c.l.b16 %v765
    %v4661 = vunpack.c.h.b16 %v765
    %v4662 = vunpack.c.l.b16 %v766
    %v4663 = vunpack.c.h.b16 %v766
    %v4664 = vunpack.c.l.b16 %v767
    %v4665 = vunpack.c.h.b16 %v767
    %v4666 = vunpack.c.l.b16 %v768
    %v4667 = vunpack.c.h.b16 %v768
    %v4668 = vunpack.c.l.b16 %v769
    %v4669 = vunpack.c.h.b16 %v769
    %v4670 = vunpack.c.l.b16 %v770
    %v4671 = vunpack.c.h.b16 %v770
    %v4672 = vunpack.c.l.b16 %v771
    %v4673 = vunpack.c.h.b16 %v771
    %v4674 = vunpack.c.l.b16 %v772
    %v4675 = vunpack.c.h.b16 %v772
    %v4676 = vunpack.c.l.b16 %v773
    %v4677 = vunpack.c.h.b16 %v773
    %v4678 = vunpack.c.l.b16 %v774
    %v4679 = vunpack.c.h.b16 %v774
    %v4680 = vunpack.c.l.b16 %v775
    %v4681 = vunpack.c.h.b16 %v775
    %v4682 = vunpack.c.l.b16 %v776
    %v4683 = vunpack.c.h.b16 %v776
    %v4684 = vunpack.c.l.b16 %v777
    %v4685 = vunpack.c.h.b16 %v777
    %v4686 = vunpack.c.l.b16 %v778
    %v4687 = vunpack.c.h.b16 %v778
    %v4688 = vunpack.c.l.b16 %v779
    %v4689 = vunpack.c.h.b16 %v779
    %v4690 = vunpack.c.l.b16 %v780
    %v4691 = vunpack.c.h.b16 %v780
    %v4692 = vunpack.c.l.b16 %v781
    %v4693 = vunpack.c.h.b16 %v781
    %v4694 = vunpack.c.l.b16 %v782
    %v4695 = vunpack.c.h.b16 %v782
    %v4696 = vunpack.c.l.b16 %v783
    %v4697 = vunpack.c.h.b16 %v783
    %v4698 = vunpack.c.l.b16 %v784
    %v4699 = vunpack.c.h.b16 %v784
    %v4700 = vunpack.c.l.b16 %v785
    %v4701 = vunpack.c.h.b16 %v785
    %v4702 = vunpack.c.l.b16 %v786
    %v4703 = vunpack.c.h.b16 %v786
    %v4704 = vunpack.c.l.b16 %v787
    %v4705 = vunpack.c.h.b16 %v787
    %v4706 = vunpack.c.l.b16 %v788
    %v4707 = vunpack.c.h.b16 %v788
    %v4708 = vunpack.c.l.b16 %v789
    %v4709 = vunpack.c.h.b16 %v789
    %v4710 = vunpack.c.l.b16 %v790
    %v4711 = vunpack.c.h.b16 %v790
    %v4712 = vunpack.c.l.b16 %v791
    %v4713 = vunpack.c.h.b16 %v791
    %v4714 = vunpack.c.l.b16 %v792
    %v4715 = vunpack.c.h.b16 %v792
    %v4716 = vunpack.c.l.b16 %v793
    %v4717 = vunpack.c.h.b16 %v793
    %v4718 = vunpack.c.l.b16 %v794
    %v4719 = vunpack.c.h.b16 %v794
    %v4720 = vunpack.c.l.b16 %v795
    %v4721 = vunpack.c.h.b16 %v795
    %v4722 = vunpack.c.l.b16 %v796
    %v4723 = vunpack.c.h.b16 %v796
    %v4724 = vunpack.c.l.b16 %v797
    %v4725 = vunpack.c.h.b16 %v797
    %v4726 = vunpack.c.l.b16 %v798
    %v4727 = vunpack.c.h.b16 %v798
    %v4728 = vunpack.c.l.b16 %v799
    %v4729 = vunpack.c.h.b16 %v799
    %v4730 = vunpack.c.l.b16 %v800
    %v4731 = vunpack.c.h.b16 %v800
    %v4732 = vunpack.c.l.b16 %v801
    %v4733 = vunpack.c.h.b16 %v801
    %v4734 = vunpack.c.l.b16 %v802
    %v4735 = vunpack.c.h.b16 %v802
    %v4736 = vunpack.c.l.b16 %v803
    %v4737 = vunpack.c.h.b16 %v803
    %v4738 = vunpack.c.l.b16 %v804
    %v4739 = vunpack.c.h.b16 %v804
    %v4740 = vunpack.c.l.b16 %v805
    %v4741 = vunpack.c.h.b16 %v805
    %v4742 = vunpack.c.l.b16 %v806
    %v4743 = vunpack.c.h.b16 %v806
    %v4744 = vunpack.c.l.b16 %v807
    %v4745 = vunpack.c.h.b16 %v807
    %v4746 = vunpack.c.l.b16 %v808
    %v4747 = vunpack.c.h.b16 %v808
    %v4748 = vunpack.c.l.b16 %v809
    %v4749 = vunpack.c.h.b16 %v809
    %v4750 = vunpack.c.l.b16 %v810
    %v4751 = vunpack.c.h.b16 %v810
    %v4752 = vunpack.c.l.b16 %v811
    %v4753 = vunpack.c.h.b16 %v811
    %v4754 = vunpack.c.l.b16 %v812
    %v4755 = vunpack.c.h.b16 %v812
    %v4756 = vunpack.c.l.b16 %v813
    %v4757 = vunpack.c.h.b16 %v813
    %v4758 = vunpack.c.l.b16 %v814
    %v4759 = vunpack.c.h.b16 %v814
    %v4760 = vunpack.c.l.b16 %v815
    %v4761 = vunpack.c.h.b16 %v815
    %v4762 = vunpack.c.l.b16 %v816
    %v4763 = vunpack.c.h.b16 %v816
    %v4764 = vunpack.c.l.b16 %v817
    %v4765 = vunpack.c.h.b16 %v817
    %v4766 = vunpack.c.l.b16 %v818
    %v4767 = vunpack.c.h.b16 %v818
    %v4768 = vunpack.c.l.b16 %v819
    %v4769 = vunpack.c.h.b16 %v819
    %v4770 = vunpack.c.l.b16 %v820
    %v4771 = vunpack.c.h.b16 %v820
    %v4772 = vunpack.c.l.b16 %v821
    %v4773 = vunpack.c.h.b16 %v821
    %v4774 = vunpack.c.l.b16 %v822
    %v4775 = vunpack.c.h.b16 %v822
    %v4776 = vunpack.c.l.b16 %v823
    %v4777 = vunpack.c.h.b16 %v823
    %v4778 = vunpack.c.l.b16 %v824
    %v4779 = vunpack.c.h.b16 %v824
    %v4780 = vunpack.c.l.b16 %v825
    %v4781 = vunpack.c.h.b16 %v825
    %v4782 = vunpack.c.l.b16 %v826
    %v4783 = vunpack.c.h.b16 %v826
    %v4784 = vunpack.c.l.b16 %v827
    %v4785 = vunpack.c.h.b16 %v827
    %v4786 = vunpack.c.l.b16 %v828
    %v4787 = vunpack.c.h.b16 %v828
    %v4788 = vunpack.c.l.b16 %v829
    %v4789 = vunpack.c.h.b16 %v829
    %v4790 = vunpack.c.l.b16 %v830
    %v4791 = vunpack.c.h.b16 %v830
    %v4792 = vunpack.c.l.b16 %v831
    %v4793 = vunpack.c.h.b16 %v831
    %v4794 = vunpack.c.l.b16 %v832
    %v4795 = vunpack.c.h.b16 %v832
    %v4796 = vunpack.c.l.b16 %v833
    %v4797 = vunpack.c.h.b16 %v833
    %v4798 = vunpack.c.l.b16 %v834
    %v4799 = vunpack.c.h.b16 %v834
    %v4800 = vunpack.c.l.b16 %v835
    %v4801 = vunpack.c.h.b16 %v835
    %v4802 = vunpack.c.l.b16 %v836
    %v4803 = vunpack.c.h.b16 %v836
    %v4804 = vunpack.c.l.b16 %v837
    %v4805 = vunpack.c.h.b16 %v837
    %v4806 = vunpack.c.l.b16 %v838
    %v4807 = vunpack.c.h.b16 %v838
    %v4808 = vunpack.c.l.b16 %v839
    %v4809 = vunpack.c.h.b16 %v839
    %v4810 = vunpack.c.l.b16 %v840
    %v4811 = vunpack.c.h.b16 %v840
    %v4812 = vunpack.c.l.b16 %v841
    %v4813 = vunpack.c.h.b16 %v841
    %v4814 = vunpack.c.l.b16 %v842
    %v4815 = vunpack.c.h.b16 %v842
    %v4816 = vunpack.c.l.b16 %v843
    %v4817 = vunpack.c.h.b16 %v843
    %v4818 = vunpack.c.l.b16 %v844
    %v4819 = vunpack.c.h.b16 %v844
    %v4820 = vunpack.c.l.b16 %v845
    %v4821 = vunpack.c.h.b16 %v845
    %v4822 = vunpack.c.l.b16 %v846
    %v4823 = vunpack.c.h.b16 %v846
    %v4824 = vunpack.c.l.b16 %v847
    %v4825 = vunpack.c.h.b16 %v847
    %v4826 = vunpack.c.l.b16 %v848
    %v4827 = vunpack.c.h.b16 %v848
    %v4828 = vunpack.c.l.b16 %v849
    %v4829 = vunpack.c.h.b16 %v849
    %v4830 = vunpack.c.l.b16 %v850
    %v4831 = vunpack.c.h.b16 %v850
    %v4832 = vunpack.c.l.b16 %v851
    %v4833 = vunpack.c.h.b16 %v851
    %v4834 = vunpack.c.l.b16 %v852
    %v4835 = vunpack.c.h.b16 %v852
    %v4836 = vunpack.c.l.b16 %v853
    %v4837 = vunpack.c.h.b16 %v853
    %v4838 = vunpack.c.l.b16 %v854
    %v4839 = vunpack.c.h.b16 %v854
    %v4840 = vunpack.c.l.b16 %v855
    %v4841 = vunpack.c.h.b16 %v855
    %v4842 = vunpack.c.l.b16 %v856
    %v4843 = vunpack.c.h.b16 %v856
    %v4844 = vunpack.c.l.b16 %v857
    %v4845 = vunpack.c.h.b16 %v857
    %v4846 = vunpack.c.l.b16 %v858
    %v4847 = vunpack.c.h.b16 %v858
    %v4848 = vunpack.c.l.b16 %v859
    %v4849 = vunpack.c.h.b16 %v859
    %v4850 = vunpack.c.l.b16 %v860
    %v4851 = vunpack.c.h.b16 %v860
    %v4852 = vunpack.c.l.b16 %v861
    %v4853 = vunpack.c.h.b16 %v861
    %v4854 = vunpack.c.l.b16 %v862
    %v4855 = vunpack.c.h.b16 %v862
    %v4856 = vunpack.c.l.b16 %v863
    %v4857 = vunpack.c.h.b16 %v863
    %v4858 = vunpack.c.l.b16 %v864
    %v4859 = vunpack.c.h.b16 %v864
    %v4860 = vunpack.c.l.b16 %v865
    %v4861 = vunpack.c.h.b16 %v865
    %v4862 = vunpack.c.l.b16 %v866
    %v4863 = vunpack.c.h.b16 %v866
    %v4864 = vunpack.c.l.b16 %v867
    %v4865 = vunpack.c.h.b16 %v867
    %v4866 = vunpack.c.l.b16 %v868
    %v4867 = vunpack.c.h.b16 %v868
    %v4868 = vunpack.c.l.b16 %v869
    %v4869 = vunpack.c.h.b16 %v869
    %v4870 = vunpack.c.l.b16 %v870
    %v4871 = vunpack.c.h.b16 %v870
    %v4872 = vunpack.c.l.b16 %v871
    %v4873 = vunpack.c.h.b16 %v871
    %v4874 = vunpack.c.l.b16 %v872
    %v4875 = vunpack.c.h.b16 %v872
    %v4876 = vunpack.c.l.b16 %v873
    %v4877 = vunpack.c.h.b16 %v873
    %v4878 = vunpack.c.l.b16 %v874
    %v4879 = vunpack.c.h.b16 %v874
    %v4880 = vunpack.c.l.b16 %v875
    %v4881 = vunpack.c.h.b16 %v875
    %v4882 = vunpack.c.l.b16 %v876
    %v4883 = vunpack.c.h.b16 %v876
    %v4884 = vunpack.c.l.b16 %v877
    %v4885 = vunpack.c.h.b16 %v877
    %v4886 = vunpack.c.l.b16 %v878
    %v4887 = vunpack.c.h.b16 %v878
    %v4888 = vunpack.c.l.b16 %v879
    %v4889 = vunpack.c.h.b16 %v879
    %v4890 = vunpack.c.l.b16 %v880
    %v4891 = vunpack.c.h.b16 %v880
    %v4892 = vunpack.c.l.b16 %v881
    %v4893 = vunpack.c.h.b16 %v881
    %v4894 = vunpack.c.l.b16 %v882
    %v4895 = vunpack.c.h.b16 %v882
    %v4896 = vunpack.c.l.b16 %v883
    %v4897 = vunpack.c.h.b16 %v883
    %v4898 = vunpack.c.l.b16 %v884
    %v4899 = vunpack.c.h.b16 %v884
    %v4900 = vunpack.c.l.b16 %v885
    %v4901 = vunpack.c.h.b16 %v885
    %v4902 = vunpack.c.l.b16 %v886
    %v4903 = vunpack.c.h.b16 %v886
    %v4904 = vunpack.c.l.b16 %v887
    %v4905 = vunpack.c.h.b16 %v887
    %v4906 = vunpack.c.l.b16 %v888
    %v4907 = vunpack.c.h.b16 %v888
    %v4908 = vunpack.c.l.b16 %v889
    %v4909 = vunpack.c.h.b16 %v889
    %v4910 = vunpack.c.l.b16 %v890
    %v4911 = vunpack.c.h.b16 %v890
    %v4912 = vunpack.c.l.b16 %v891
    %v4913 = vunpack.c.h.b16 %v891
    %v4914 = vunpack.c.l.b16 %v892
    %v4915 = vunpack.c.h.b16 %v892
    %v4916 = vunpack.c.l.b16 %v893
    %v4917 = vunpack.c.h.b16 %v893
    %v4918 = vunpack.c.l.b16 %v894
    %v4919 = vunpack.c.h.b16 %v894
    %v4920 = vunpack.c.l.b16 %v895
    %v4921 = vunpack.c.h.b16 %v895
    %v4922 = vunpack.c.l.b16 %v896
    %v4923 = vunpack.c.h.b16 %v896
    %v4924 = vunpack.c.l.b16 %v897
    %v4925 = vunpack.c.h.b16 %v897
    %v4926 = vunpack.c.l.b16 %v898
    %v4927 = vunpack.c.h.b16 %v898
    %v4928 = vunpack.c.l.b16 %v899
    %v4929 = vunpack.c.h.b16 %v899
    %v4930 = vunpack.c.l.b16 %v900
    %v4931 = vunpack.c.h.b16 %v900
    %v4932 = vunpack.c.l.b16 %v901
    %v4933 = vunpack.c.h.b16 %v901
    %v4934 = vunpack.c.l.b16 %v902
    %v4935 = vunpack.c.h.b16 %v902
    %v4936 = vunpack.c.l.b16 %v903
    %v4937 = vunpack.c.h.b16 %v903
    %v4938 = vunpack.c.l.b16 %v904
    %v4939 = vunpack.c.h.b16 %v904
    %v4940 = vunpack.c.l.b16 %v905
    %v4941 = vunpack.c.h.b16 %v905
    %v4942 = vunpack.c.l.b16 %v906
    %v4943 = vunpack.c.h.b16 %v906
    %v4944 = vunpack.c.l.b16 %v907
    %v4945 = vunpack.c.h.b16 %v907
    %v4946 = vunpack.c.l.b16 %v908
    %v4947 = vunpack.c.h.b16 %v908
    %v4948 = vunpack.c.l.b16 %v909
    %v4949 = vunpack.c.h.b16 %v909
    %v4950 = vunpack.c.l.b16 %v910
    %v4951 = vunpack.c.h.b16 %v910
    %v4952 = vunpack.c.l.b16 %v911
    %v4953 = vunpack.c.h.b16 %v911
    %v4954 = vunpack.c.l.b16 %v912
    %v4955 = vunpack.c.h.b16 %v912
    %v4956 = vunpack.c.l.b16 %v913
    %v4957 = vunpack.c.h.b16 %v913
    %v4958 = vunpack.c.l.b16 %v914
    %v4959 = vunpack.c.h.b16 %v914
    %v4960 = vunpack.c.l.b16 %v915
    %v4961 = vunpack.c.h.b16 %v915
    %v4962 = vunpack.c.l.b16 %v916
    %v4963 = vunpack.c.h.b16 %v916
    %v4964 = vunpack.c.l.b16 %v917
    %v4965 = vunpack.c.h.b16 %v917
    %v4966 = vunpack.c.l.b16 %v918
    %v4967 = vunpack.c.h.b16 %v918
    %v4968 = vunpack.c.l.b16 %v919
    %v4969 = vunpack.c.h.b16 %v919
    %v4970 = vunpack.c.l.b16 %v920
    %v4971 = vunpack.c.h.b16 %v920
    %v4972 = vunpack.c.l.b16 %v921
    %v4973 = vunpack.c.h.b16 %v921
    %v4974 = vunpack.c.l.b16 %v922
    %v4975 = vunpack.c.h.b16 %v922
    %v4976 = vunpack.c.l.b16 %v923
    %v4977 = vunpack.c.h.b16 %v923
    %v4978 = vunpack.c.l.b16 %v924
    %v4979 = vunpack.c.h.b16 %v924
    %v4980 = vunpack.c.l.b16 %v925
    %v4981 = vunpack.c.h.b16 %v925
    %v4982 = vunpack.c.l.b16 %v926
    %v4983 = vunpack.c.h.b16 %v926
    %v4984 = vunpack.c.l.b16 %v927
    %v4985 = vunpack.c.h.b16 %v927
    %v4986 = vunpack.c.l.b16 %v928
    %v4987 = vunpack.c.h.b16 %v928
    %v4988 = vunpack.c.l.b16 %v929
    %v4989 = vunpack.c.h.b16 %v929
    %v4990 = vunpack.c.l.b16 %v930
    %v4991 = vunpack.c.h.b16 %v930
    %v4992 = vunpack.c.l.b16 %v931
    %v4993 = vunpack.c.h.b16 %v931
    %v4994 = vunpack.c.l.b16 %v932
    %v4995 = vunpack.c.h.b16 %v932
    %v4996 = vunpack.c.l.b16 %v933
    %v4997 = vunpack.c.h.b16 %v933
    %v4998 = vunpack.c.l.b16 %v934
    %v4999 = vunpack.c.h.b16 %v934
    %v5000 = vunpack.c.l.b16 %v935
    %v5001 = vunpack.c.h.b16 %v935
    %v5002 = vunpack.c.l.b16 %v936
    %v5003 = vunpack.c.h.b16 %v936
    %v5004 = vunpack.c.l.b16 %v937
    %v5005 = vunpack.c.h.b16 %v937
    %v5006 = vunpack.c.l.b16 %v938
    %v5007 = vunpack.c.h.b16 %v938
    %v5008 = vunpack.c.l.b16 %v939
    %v5009 = vunpack.c.h.b16 %v939
    %v5010 = vunpack.c.l.b16 %v940
    %v5011 = vunpack.c.h.b16 %v940
    %v5012 = vunpack.c.l.b16 %v941
    %v5013 = vunpack.c.h.b16 %v941
    %v5014 = vunpack.c.l.b16 %v942
    %v5015 = vunpack.c.h.b16 %v942
    %v5016 = vunpack.c.l.b16 %v943
    %v5017 = vunpack.c.h.b16 %v943
    %v5018 = vunpack.c.l.b16 %v944
    %v5019 = vunpack.c.h.b16 %v944
    %v5020 = vunpack.c.l.b16 %v945
    %v5021 = vunpack.c.h.b16 %v945
    %v5022 = vunpack.c.l.b16 %v946
    %v5023 = vunpack.c.h.b16 %v946
    %v5024 = vunpack.c.l.b16 %v947
    %v5025 = vunpack.c.h.b16 %v947
    %v5026 = vunpack.c.l.b16 %v948
    %v5027 = vunpack.c.h.b16 %v948
    %v5028 = vunpack.c.l.b16 %v949
    %v5029 = vunpack.c.h.b16 %v949
    %v5030 = vunpack.c.l.b16 %v950
    %v5031 = vunpack.c.h.b16 %v950
    %v5032 = vunpack.c.l.b16 %v951
    %v5033 = vunpack.c.h.b16 %v951
    %v5034 = vunpack.c.l.b16 %v952
    %v5035 = vunpack.c.h.b16 %v952
    %v5036 = vunpack.c.l.b16 %v953
    %v5037 = vunpack.c.h.b16 %v953
    %v5038 = vunpack.c.l.b16 %v954
    %v5039 = vunpack.c.h.b16 %v954
    %v5040 = vunpack.c.l.b16 %v955
    %v5041 = vunpack.c.h.b16 %v955
    %v5042 = vunpack.c.l.b16 %v956
    %v5043 = vunpack.c.h.b16 %v956
    %v5044 = vunpack.c.l.b16 %v957
    %v5045 = vunpack.c.h.b16 %v957
    %v5046 = vunpack.c.l.b16 %v958
    %v5047 = vunpack.c.h.b16 %v958
    %v5048 = vunpack.c.l.b16 %v959
    %v5049 = vunpack.c.h.b16 %v959
    %v5050 = vunpack.c.l.b16 %v960
    %v5051 = vunpack.c.h.b16 %v960
    %v5052 = vunpack.c.l.b16 %v961
    %v5053 = vunpack.c.h.b16 %v961
    %v5054 = vunpack.c.l.b16 %v962
    %v5055 = vunpack.c.h.b16 %v962
    %v5056 = vunpack.c.l.b16 %v963
    %v5057 = vunpack.c.h.b16 %v963
    %v5058 = vunpack.c.l.b16 %v964
    %v5059 = vunpack.c.h.b16 %v964
    %v5060 = vunpack.c.l.b16 %v965
    %v5061 = vunpack.c.h.b16 %v965
    %v5062 = vunpack.c.l.b16 %v966
    %v5063 = vunpack.c.h.b16 %v966
    %v5064 = vunpack.c.l.b16 %v967
    %v5065 = vunpack.c.h.b16 %v967
    %v5066 = vunpack.c.l.b16 %v968
    %v5067 = vunpack.c.h.b16 %v968
    %v5068 = vunpack.c.l.b16 %v969
    %v5069 = vunpack.c.h.b16 %v969
    %v5070 = vunpack.c.l.b16 %v970
    %v5071 = vunpack.c.h.b16 %v970
    %v5072 = vunpack.c.l.b16 %v971
    %v5073 = vunpack.c.h.b16 %v971
    %v5074 = vunpack.c.l.b16 %v972
    %v5075 = vunpack.c.h.b16 %v972
    %v5076 = vunpack.c.l.b16 %v973
    %v5077 = vunpack.c.h.b16 %v973
    %v5078 = vunpack.c.l.b16 %v974
    %v5079 = vunpack.c.h.b16 %v974
    %v5080 = vunpack.c.l.b16 %v975
    %v5081 = vunpack.c.h.b16 %v975
    %v5082 = vunpack.c.l.b16 %v976
    %v5083 = vunpack.c.h.b16 %v976
    %v5084 = vunpack.c.l.b16 %v977
    %v5085 = vunpack.c.h.b16 %v977
    %v5086 = vunpack.c.l.b16 %v978
    %v5087 = vunpack.c.h.b16 %v978
    %v5088 = vunpack.c.l.b16 %v979
    %v5089 = vunpack.c.h.b16 %v979
    %v5090 = vunpack.c.l.b16 %v980
    %v5091 = vunpack.c.h.b16 %v980
    %v5092 = vunpack.c.l.b16 %v981
    %v5093 = vunpack.c.h.b16 %v981
    %v5094 = vunpack.c.l.b16 %v982
    %v5095 = vunpack.c.h.b16 %v982
    %v5096 = vunpack.c.l.b16 %v983
    %v5097 = vunpack.c.h.b16 %v983
    %v5098 = vunpack.c.l.b16 %v984
    %v5099 = vunpack.c.h.b16 %v984
    %v5100 = vunpack.c.l.b16 %v985
    %v5101 = vunpack.c.h.b16 %v985
    %v5102 = vunpack.c.l.b16 %v986
    %v5103 = vunpack.c.h.b16 %v986
    %v5104 = vunpack.c.l.b16 %v987
    %v5105 = vunpack.c.h.b16 %v987
    %v5106 = vunpack.c.l.b16 %v988
    %v5107 = vunpack.c.h.b16 %v988
    %v5108 = vunpack.c.l.b16 %v989
    %v5109 = vunpack.c.h.b16 %v989
    %v5110 = vunpack.c.l.b16 %v990
    %v5111 = vunpack.c.h.b16 %v990
    %v5112 = vunpack.c.l.b16 %v991
    %v5113 = vunpack.c.h.b16 %v991
    %v5114 = vunpack.c.l.b16 %v992
    %v5115 = vunpack.c.h.b16 %v992
    %v5116 = vunpack.c.l.b16 %v993
    %v5117 = vunpack.c.h.b16 %v993
    %v5118 = vunpack.c.l.b16 %v994
    %v5119 = vunpack.c.h.b16 %v994
    %v5120 = vunpack.c.l.b16 %v995
    %v5121 = vunpack.c.h.b16 %v995
    %v5122 = vunpack.c.l.b16 %v996
    %v5123 = vunpack.c.h.b16 %v996
    %v5124 = vunpack.c.l.b16 %v997
    %v5125 = vunpack.c.h.b16 %v997
    %v5126 = vunpack.c.l.b16 %v998
    %v5127 = vunpack.c.h.b16 %v998
    %v5128 = vunpack.c.l.b16 %v999
    %v5129 = vunpack.c.h.b16 %v999
    %v5130 = vunpack.c.l.b16 %v1000
    %v5131 = vunpack.c.h.b16 %v1000
    %v5132 = vunpack.c.l.b16 %v1001
    %v5133 = vunpack.c.h.b16 %v1001
    %v5134 = vunpack.c.l.b16 %v1002
    %v5135 = vunpack.c.h.b16 %v1002
    %v5136 = vunpack.c.l.b16 %v1003
    %v5137 = vunpack.c.h.b16 %v1003
    %v5138 = vunpack.c.l.b16 %v1004
    %v5139 = vunpack.c.h.b16 %v1004
    %v5140 = vunpack.c.l.b16 %v1005
    %v5141 = vunpack.c.h.b16 %v1005
    %v5142 = vunpack.c.l.b16 %v1006
    %v5143 = vunpack.c.h.b16 %v1006
    %v5144 = vunpack.c.l.b16 %v1007
    %v5145 = vunpack.c.h.b16 %v1007
    %v5146 = vunpack.c.l.b16 %v1008
    %v5147 = vunpack.c.h.b16 %v1008
    %v5148 = vunpack.c.l.b16 %v1009
    %v5149 = vunpack.c.h.b16 %v1009
    %v5150 = vunpack.c.l.b16 %v1010
    %v5151 = vunpack.c.h.b16 %v1010
    %v5152 = vunpack.c.l.b16 %v1011
    %v5153 = vunpack.c.h.b16 %v1011
    %v5154 = vunpack.c.l.b16 %v1012
    %v5155 = vunpack.c.h.b16 %v1012
    %v5156 = vunpack.c.l.b16 %v1013
    %v5157 = vunpack.c.h.b16 %v1013
    %v5158 = vunpack.c.l.b16 %v1014
    %v5159 = vunpack.c.h.b16 %v1014
    %v5160 = vunpack.c.l.b16 %v1015
    %v5161 = vunpack.c.h.b16 %v1015
    %v5162 = vunpack.c.l.b16 %v1016
    %v5163 = vunpack.c.h.b16 %v1016
    %v5164 = vunpack.c.l.b16 %v1017
    %v5165 = vunpack.c.h.b16 %v1017
    %v5166 = vunpack.c.l.b16 %v1018
    %v5167 = vunpack.c.h.b16 %v1018
    %v5168 = vunpack.c.l.b16 %v1019
    %v5169 = vunpack.c.h.b16 %v1019
    %v5170 = vunpack.c.l.b16 %v1020
    %v5171 = vunpack.c.h.b16 %v1020
    %v5172 = vunpack.c.l.b16 %v1021
    %v5173 = vunpack.c.h.b16 %v1021
    %v5174 = vunpack.c.l.b16 %v1022
    %v5175 = vunpack.c.h.b16 %v1022
    %v5176 = vunpack.c.l.b16 %v1023
    %v5177 = vunpack.c.h.b16 %v1023
    %v5178 = vunpack.c.l.b16 %v1024
    %v5179 = vunpack.c.h.b16 %v1024
    %v5180 = vunpack.c.l.b16 %v1025
    %v5181 = vunpack.c.h.b16 %v1025
    %v5182 = vunpack.c.l.b16 %v1026
    %v5183 = vunpack.c.h.b16 %v1026
    %v5184 = vunpack.c.l.b16 %v1027
    %v5185 = vunpack.c.h.b16 %v1027
    %v5186 = vunpack.c.l.b16 %v1028
    %v5187 = vunpack.c.h.b16 %v1028
    %v5188 = vunpack.c.l.b16 %v1029
    %v5189 = vunpack.c.h.b16 %v1029
    %v5190 = vunpack.c.l.b16 %v1030
    %v5191 = vunpack.c.h.b16 %v1030
    %v5192 = vunpack.c.l.b16 %v1031
    %v5193 = vunpack.c.h.b16 %v1031
    %v5194 = vunpack.c.l.b16 %v1032
    %v5195 = vunpack.c.h.b16 %v1032
    %v5196 = vunpack.c.l.b16 %v1033
    %v5197 = vunpack.c.h.b16 %v1033
    %v5198 = vunpack.c.l.b16 %v1034
    %v5199 = vunpack.c.h.b16 %v1034
    %v5200 = vunpack.c.l.b16 %v1035
    %v5201 = vunpack.c.h.b16 %v1035
    %v5202 = vunpack.c.l.b16 %v1036
    %v5203 = vunpack.c.h.b16 %v1036
    %v5204 = vunpack.c.l.b16 %v1037
    %v5205 = vunpack.c.h.b16 %v1037
    %v5206 = vunpack.c.l.b16 %v1038
    %v5207 = vunpack.c.h.b16 %v1038
    %v5208 = vunpack.c.l.b16 %v1039
    %v5209 = vunpack.c.h.b16 %v1039
    %v5210 = vunpack.c.l.b16 %v1040
    %v5211 = vunpack.c.h.b16 %v1040
    %v5212 = vunpack.c.l.b16 %v1041
    %v5213 = vunpack.c.h.b16 %v1041
    %v5214 = vunpack.c.l.b16 %v1042
    %v5215 = vunpack.c.h.b16 %v1042
    %v5216 = vunpack.c.l.b16 %v1043
    %v5217 = vunpack.c.h.b16 %v1043
    %v5218 = vunpack.c.l.b16 %v1044
    %v5219 = vunpack.c.h.b16 %v1044
    %v5220 = vunpack.c.l.b16 %v1045
    %v5221 = vunpack.c.h.b16 %v1045
    %v5222 = vunpack.c.l.b16 %v1046
    %v5223 = vunpack.c.h.b16 %v1046
    %v5224 = vunpack.c.l.b16 %v1047
    %v5225 = vunpack.c.h.b16 %v1047
    %v5226 = vunpack.c.l.b16 %v1048
    %v5227 = vunpack.c.h.b16 %v1048
    %v5228 = vunpack.c.l.b16 %v1049
    %v5229 = vunpack.c.h.b16 %v1049
    %v5230 = vunpack.c.l.b16 %v1050
    %v5231 = vunpack.c.h.b16 %v1050
    %v5232 = vunpack.c.l.b16 %v1051
    %v5233 = vunpack.c.h.b16 %v1051
    %v5234 = vunpack.c.l.b16 %v1052
    %v5235 = vunpack.c.h.b16 %v1052
    %v5236 = vunpack.c.l.b16 %v1053
    %v5237 = vunpack.c.h.b16 %v1053
    %v5238 = vunpack.c.l.b16 %v1054
    %v5239 = vunpack.c.h.b16 %v1054
    %v5240 = vunpack.c.l.b16 %v1055
    %v5241 = vunpack.c.h.b16 %v1055
    %v5242 = vunpack.c.l.b16 %v1056
    %v5243 = vunpack.c.h.b16 %v1056
    %v5244 = vunpack.c.l.b16 %v1057
    %v5245 = vunpack.c.h.b16 %v1057
    %v5246 = vunpack.c.l.b16 %v1058
    %v5247 = vunpack.c.h.b16 %v1058
    %v5248 = vunpack.c.l.b16 %v1059
    %v5249 = vunpack.c.h.b16 %v1059
    %v5250 = vunpack.c.l.b16 %v1060
    %v5251 = vunpack.c.h.b16 %v1060
    %v5252 = vunpack.c.l.b16 %v1061
    %v5253 = vunpack.c.h.b16 %v1061
    %v5254 = vunpack.c.l.b16 %v1062
    %v5255 = vunpack.c.h.b16 %v1062
    %v5256 = vunpack.c.l.b16 %v1063
    %v5257 = vunpack.c.h.b16 %v1063
    %v5258 = vunpack.c.l.b16 %v1064
    %v5259 = vunpack.c.h.b16 %v1064
    %v5260 = vunpack.c.l.b16 %v1065
    %v5261 = vunpack.c.h.b16 %v1065
    %v5262 = vunpack.c.l.b16 %v1066
    %v5263 = vunpack.c.h.b16 %v1066
    %v5264 = vunpack.c.l.b16 %v1067
    %v5265 = vunpack.c.h.b16 %v1067
    %v5266 = vunpack.c.l.b16 %v1068
    %v5267 = vunpack.c.h.b16 %v1068
    %v5268 = vunpack.c.l.b16 %v1069
    %v5269 = vunpack.c.h.b16 %v1069
    %v5270 = vunpack.c.l.b16 %v1070
    %v5271 = vunpack.c.h.b16 %v1070
    %v5272 = vunpack.c.l.b16 %v1071
    %v5273 = vunpack.c.h.b16 %v1071
    %v5274 = vunpack.c.l.b16 %v1072
    %v5275 = vunpack.c.h.b16 %v1072
    %v5276 = vunpack.c.l.b16 %v1073
    %v5277 = vunpack.c.h.b16 %v1073
    %v5278 = vunpack.c.l.b16 %v1074
    %v5279 = vunpack.c.h.b16 %v1074
    %v5280 = vunpack.c.l.b16 %v1075
    %v5281 = vunpack.c.h.b16 %v1075
    %v5282 = vunpack.c.l.b16 %v1076
    %v5283 = vunpack.c.h.b16 %v1076
    %v5284 = vunpack.c.l.b16 %v1077
    %v5285 = vunpack.c.h.b16 %v1077
    %v5286 = vunpack.c.l.b16 %v1078
    %v5287 = vunpack.c.h.b16 %v1078
    %v5288 = vunpack.c.l.b16 %v1079
    %v5289 = vunpack.c.h.b16 %v1079
    %v5290 = vunpack.c.l.b16 %v1080
    %v5291 = vunpack.c.h.b16 %v1080
    %v5292 = vunpack.c.l.b16 %v1081
    %v5293 = vunpack.c.h.b16 %v1081
    %v5294 = vunpack.c.l.b16 %v1082
    %v5295 = vunpack.c.h.b16 %v1082
    %v5296 = vunpack.c.l.b16 %v1083
    %v5297 = vunpack.c.h.b16 %v1083
    %v5298 = vunpack.c.l.b16 %v1084
    %v5299 = vunpack.c.h.b16 %v1084
    %v5300 = vunpack.c.l.b16 %v1085
    %v5301 = vunpack.c.h.b16 %v1085
    %v5302 = vunpack.c.l.b16 %v1086
    %v5303 = vunpack.c.h.b16 %v1086
    %v5304 = vunpack.c.l.b16 %v1087
    %v5305 = vunpack.c.h.b16 %v1087
    %v5306 = vunpack.c.l.b16 %v1088
    %v5307 = vunpack.c.h.b16 %v1088
    %v5308 = vunpack.c.l.b16 %v1089
    %v5309 = vunpack.c.h.b16 %v1089
    %v5310 = vunpack.c.l.b16 %v1090
    %v5311 = vunpack.c.h.b16 %v1090
    %v5312 = vunpack.c.l.b16 %v1091
    %v5313 = vunpack.c.h.b16 %v1091
    %v5314 = vunpack.c.l.b16 %v1092
    %v5315 = vunpack.c.h.b16 %v1092
    %v5316 = vunpack.c.l.b16 %v1093
    %v5317 = vunpack.c.h.b16 %v1093
    %v5318 = vunpack.c.l.b16 %v1094
    %v5319 = vunpack.c.h.b16 %v1094
    %v5320 = vunpack.c.l.b16 %v1095
    %v5321 = vunpack.c.h.b16 %v1095
    %v5322 = vunpack.c.l.b16 %v1096
    %v5323 = vunpack.c.h.b16 %v1096
    %v5324 = vunpack.c.l.b16 %v1097
    %v5325 = vunpack.c.h.b16 %v1097
    %v5326 = vunpack.c.l.b16 %v1098
    %v5327 = vunpack.c.h.b16 %v1098
    %v5328 = vunpack.c.l.b16 %v1099
    %v5329 = vunpack.c.h.b16 %v1099
    %v5330 = vunpack.c.l.b16 %v1100
    %v5331 = vunpack.c.h.b16 %v1100
    %v5332 = vunpack.c.l.b16 %v1101
    %v5333 = vunpack.c.h.b16 %v1101
    %v5334 = vunpack.c.l.b16 %v1102
    %v5335 = vunpack.c.h.b16 %v1102
    %v5336 = vunpack.c.l.b16 %v1103
    %v5337 = vunpack.c.h.b16 %v1103
    %v5338 = vunpack.c.l.b16 %v1104
    %v5339 = vunpack.c.h.b16 %v1104
    %v5340 = vunpack.c.l.b16 %v1105
    %v5341 = vunpack.c.h.b16 %v1105
    %v5342 = vunpack.c.l.b16 %v1106
    %v5343 = vunpack.c.h.b16 %v1106
    %v5344 = vunpack.c.l.b16 %v1107
    %v5345 = vunpack.c.h.b16 %v1107
    %v5346 = vunpack.c.l.b16 %v1108
    %v5347 = vunpack.c.h.b16 %v1108
    %v5348 = vunpack.c.l.b16 %v1109
    %v5349 = vunpack.c.h.b16 %v1109
    %v5350 = vunpack.c.l.b16 %v1110
    %v5351 = vunpack.c.h.b16 %v1110
    %v5352 = vunpack.c.l.b16 %v1111
    %v5353 = vunpack.c.h.b16 %v1111
    %v5354 = vunpack.c.l.b16 %v1112
    %v5355 = vunpack.c.h.b16 %v1112
    %v5356 = vunpack.c.l.b16 %v1113
    %v5357 = vunpack.c.h.b16 %v1113
    %v5358 = vunpack.c.l.b16 %v1114
    %v5359 = vunpack.c.h.b16 %v1114
    %v5360 = vunpack.c.l.b16 %v1115
    %v5361 = vunpack.c.h.b16 %v1115
    %v5362 = vunpack.c.l.b16 %v1116
    %v5363 = vunpack.c.h.b16 %v1116
    %v5364 = vunpack.c.l.b16 %v1117
    %v5365 = vunpack.c.h.b16 %v1117
    %v5366 = vunpack.c.l.b16 %v1118
    %v5367 = vunpack.c.h.b16 %v1118
    %v5368 = vunpack.c.l.b16 %v1119
    %v5369 = vunpack.c.h.b16 %v1119
    %v5370 = vunpack.c.l.b16 %v1120
    %v5371 = vunpack.c.h.b16 %v1120
    %v5372 = vunpack.c.l.b16 %v1121
    %v5373 = vunpack.c.h.b16 %v1121
    %v5374 = vunpack.c.l.b16 %v1122
    %v5375 = vunpack.c.h.b16 %v1122
    %v5376 = vunpack.c.l.b16 %v1123
    %v5377 = vunpack.c.h.b16 %v1123
    %v5378 = vunpack.c.l.b16 %v1124
    %v5379 = vunpack.c.h.b16 %v1124
    %v5380 = vunpack.c.l.b16 %v1125
    %v5381 = vunpack.c.h.b16 %v1125
    %v5382 = vunpack.c.l.b16 %v1126
    %v5383 = vunpack.c.h.b16 %v1126
    %v5384 = vunpack.c.l.b16 %v1127
    %v5385 = vunpack.c.h.b16 %v1127
    %v5386 = vunpack.c.l.b16 %v1128
    %v5387 = vunpack.c.h.b16 %v1128
    %v5388 = vunpack.c.l.b16 %v1129
    %v5389 = vunpack.c.h.b16 %v1129
    %v5390 = vunpack.c.l.b16 %v1130
    %v5391 = vunpack.c.h.b16 %v1130
    %v5392 = vunpack.c.l.b16 %v1131
    %v5393 = vunpack.c.h.b16 %v1131
    %v5394 = vunpack.c.l.b16 %v1132
    %v5395 = vunpack.c.h.b16 %v1132
    %v5396 = vunpack.c.l.b16 %v1133
    %v5397 = vunpack.c.h.b16 %v1133
    %v5398 = vunpack.c.l.b16 %v1134
    %v5399 = vunpack.c.h.b16 %v1134
    %v5400 = vunpack.c.l.b16 %v1135
    %v5401 = vunpack.c.h.b16 %v1135
    %v5402 = vunpack.c.l.b16 %v1136
    %v5403 = vunpack.c.h.b16 %v1136
    %v5404 = vunpack.c.l.b16 %v1137
    %v5405 = vunpack.c.h.b16 %v1137
    %v5406 = vunpack.c.l.b16 %v1138
    %v5407 = vunpack.c.h.b16 %v1138
    %v5408 = vunpack.c.l.b16 %v1139
    %v5409 = vunpack.c.h.b16 %v1139
    %v5410 = vunpack.c.l.b16 %v1140
    %v5411 = vunpack.c.h.b16 %v1140
    %v5412 = vunpack.c.l.b16 %v1141
    %v5413 = vunpack.c.h.b16 %v1141
    %v5414 = vunpack.c.l.b16 %v1142
    %v5415 = vunpack.c.h.b16 %v1142
    %v5416 = vunpack.c.l.b16 %v1143
    %v5417 = vunpack.c.h.b16 %v1143
    %v5418 = vunpack.c.l.b16 %v1144
    %v5419 = vunpack.c.h.b16 %v1144
    %v5420 = vunpack.c.l.b16 %v1145
    %v5421 = vunpack.c.h.b16 %v1145
    %v5422 = vunpack.c.l.b16 %v1146
    %v5423 = vunpack.c.h.b16 %v1146
    %v5424 = vunpack.c.l.b16 %v1147
    %v5425 = vunpack.c.h.b16 %v1147
    %v5426 = vunpack.c.l.b16 %v1148
    %v5427 = vunpack.c.h.b16 %v1148
    %v5428 = vunpack.c.l.b16 %v1149
    %v5429 = vunpack.c.h.b16 %v1149
    %v5430 = vunpack.c.l.b16 %v1150
    %v5431 = vunpack.c.h.b16 %v1150
    %v5432 = vunpack.c.l.b16 %v1151
    %v5433 = vunpack.c.h.b16 %v1151
    %v5434 = vunpack.c.l.b16 %v1152
    %v5435 = vunpack.c.h.b16 %v1152
    %v5436 = vunpack.c.l.b16 %v1153
    %v5437 = vunpack.c.h.b16 %v1153
    %v5438 = vunpack.c.l.b16 %v1154
    %v5439 = vunpack.c.h.b16 %v1154
    %v5440 = vunpack.c.l.b16 %v1155
    %v5441 = vunpack.c.h.b16 %v1155
    %v5442 = vunpack.c.l.b16 %v1156
    %v5443 = vunpack.c.h.b16 %v1156
    %v5444 = vunpack.c.l.b16 %v1157
    %v5445 = vunpack.c.h.b16 %v1157
    %v5446 = vunpack.c.l.b16 %v1158
    %v5447 = vunpack.c.h.b16 %v1158
    %v5448 = vunpack.c.l.b16 %v1159
    %v5449 = vunpack.c.h.b16 %v1159
    %v5450 = vunpack.c.l.b16 %v1160
    %v5451 = vunpack.c.h.b16 %v1160
    %v5452 = vunpack.c.l.b16 %v1161
    %v5453 = vunpack.c.h.b16 %v1161
    %v5454 = vunpack.c.l.b16 %v1162
    %v5455 = vunpack.c.h.b16 %v1162
    %v5456 = vunpack.c.l.b16 %v1163
    %v5457 = vunpack.c.h.b16 %v1163
    %v5458 = vunpack.c.l.b16 %v1164
    %v5459 = vunpack.c.h.b16 %v1164
    %v5460 = vunpack.c.l.b16 %v1165
    %v5461 = vunpack.c.h.b16 %v1165
    %v5462 = vunpack.c.l.b16 %v1166
    %v5463 = vunpack.c.h.b16 %v1166
    %v5464 = vunpack.c.l.b16 %v1167
    %v5465 = vunpack.c.h.b16 %v1167
    %v5466 = vunpack.c.l.b16 %v1168
    %v5467 = vunpack.c.h.b16 %v1168
    %v5468 = vunpack.c.l.b16 %v1169
    %v5469 = vunpack.c.h.b16 %v1169
    %v5470 = vunpack.c.l.b16 %v1170
    %v5471 = vunpack.c.h.b16 %v1170
    %v5472 = vunpack.c.l.b16 %v1171
    %v5473 = vunpack.c.h.b16 %v1171
    %v5474 = vunpack.c.l.b16 %v1172
    %v5475 = vunpack.c.h.b16 %v1172
    %v5476 = vunpack.c.l.b16 %v1173
    %v5477 = vunpack.c.h.b16 %v1173
    %v5478 = vunpack.c.l.b16 %v1174
    %v5479 = vunpack.c.h.b16 %v1174
    %v5480 = vunpack.c.l.b16 %v1175
    %v5481 = vunpack.c.h.b16 %v1175
    %v5482 = vunpack.c.l.b16 %v1176
    %v5483 = vunpack.c.h.b16 %v1176
    %v5484 = vunpack.c.l.b16 %v1177
    %v5485 = vunpack.c.h.b16 %v1177
    %v5486 = vunpack.c.l.b16 %v1178
    %v5487 = vunpack.c.h.b16 %v1178
    %v5488 = vunpack.c.l.b16 %v1179
    %v5489 = vunpack.c.h.b16 %v1179
    %v5490 = vunpack.c.l.b16 %v1180
    %v5491 = vunpack.c.h.b16 %v1180
    %v5492 = vunpack.c.l.b16 %v1181
    %v5493 = vunpack.c.h.b16 %v1181
    %v5494 = vunpack.c.l.b16 %v1182
    %v5495 = vunpack.c.h.b16 %v1182
    %v5496 = vunpack.c.l.b16 %v1183
    %v5497 = vunpack.c.h.b16 %v1183
    %v5498 = vunpack.c.l.b16 %v1184
    %v5499 = vunpack.c.h.b16 %v1184
    %v5500 = vunpack.c.l.b16 %v1185
    %v5501 = vunpack.c.h.b16 %v1185
    %v5502 = vunpack.c.l.b16 %v1186
    %v5503 = vunpack.c.h.b16 %v1186
    %v5504 = vunpack.c.l.b16 %v1187
    %v5505 = vunpack.c.h.b16 %v1187
    %v5506 = vunpack.c.l.b16 %v1188
    %v5507 = vunpack.c.h.b16 %v1188
    %v5508 = vunpack.c.l.b16 %v1189
    %v5509 = vunpack.c.h.b16 %v1189
    %v5510 = vunpack.c.l.b16 %v1190
    %v5511 = vunpack.c.h.b16 %v1190
    %v5512 = vunpack.c.l.b16 %v1191
    %v5513 = vunpack.c.h.b16 %v1191
    %v5514 = vunpack.c.l.b16 %v1192
    %v5515 = vunpack.c.h.b16 %v1192
    %v5516 = vunpack.c.l.b16 %v1193
    %v5517 = vunpack.c.h.b16 %v1193
    %v5518 = vunpack.c.l.b16 %v1194
    %v5519 = vunpack.c.h.b16 %v1194
    %v5520 = vunpack.c.l.b16 %v1195
    %v5521 = vunpack.c.h.b16 %v1195
    %v5522 = vunpack.c.l.b16 %v1196
    %v5523 = vunpack.c.h.b16 %v1196
    %v5524 = vunpack.c.l.b16 %v1197
    %v5525 = vunpack.c.h.b16 %v1197
    %v5526 = vunpack.c.l.b16 %v1198
    %v5527 = vunpack.c.h.b16 %v1198
    %v5528 = vunpack.c.l.b16 %v1199
    %v5529 = vunpack.c.h.b16 %v1199
    %v5530 = vunpack.c.l.b16 %v1200
    %v5531 = vunpack.c.h.b16 %v1200
    %v5532 = vunpack.c.l.b16 %v1201
    %v5533 = vunpack.c.h.b16 %v1201
    %v5534 = vunpack.c.l.b16 %v1202
    %v5535 = vunpack.c.h.b16 %v1202
    %v5536 = vunpack.c.l.b16 %v1203
    %v5537 = vunpack.c.h.b16 %v1203
    %v5538 = vunpack.c.l.b16 %v1204
    %v5539 = vunpack.c.h.b16 %v1204
    %v5540 = vunpack.c.l.b16 %v1205
    %v5541 = vunpack.c.h.b16 %v1205
    %v5542 = vunpack.c.l.b16 %v1206
    %v5543 = vunpack.c.h.b16 %v1206
    %v5544 = vunpack.c.l.b16 %v1207
    %v5545 = vunpack.c.h.b16 %v1207
    %v5546 = vunpack.c.l.b16 %v1208
    %v5547 = vunpack.c.h.b16 %v1208
    %v5548 = vunpack.c.l.b16 %v1209
    %v5549 = vunpack.c.h.b16 %v1209
    %v5550 = vunpack.c.l.b16 %v1210
    %v5551 = vunpack.c.h.b16 %v1210
    %v5552 = vunpack.c.l.b16 %v1211
    %v5553 = vunpack.c.h.b16 %v1211
    %v5554 = vunpack.c.l.b16 %v1212
    %v5555 = vunpack.c.h.b16 %v1212
    %v5556 = vunpack.c.l.b16 %v1213
    %v5557 = vunpack.c.h.b16 %v1213
    %v5558 = vunpack.c.l.b16 %v1214
    %v5559 = vunpack.c.h.b16 %v1214
    %v5560 = vunpack.c.l.b16 %v1215
    %v5561 = vunpack.c.h.b16 %v1215
    %v5562 = vunpack.c.l.b16 %v1216
    %v5563 = vunpack.c.h.b16 %v1216
    %v5564 = vunpack.c.l.b16 %v1217
    %v5565 = vunpack.c.h.b16 %v1217
    %v5566 = vunpack.c.l.b16 %v1218
    %v5567 = vunpack.c.h.b16 %v1218
    %v5568 = vunpack.c.l.b16 %v1219
    %v5569 = vunpack.c.h.b16 %v1219
    %v5570 = vunpack.c.l.b16 %v1220
    %v5571 = vunpack.c.h.b16 %v1220
    %v5572 = vunpack.c.l.b16 %v1221
    %v5573 = vunpack.c.h.b16 %v1221
    %v5574 = vunpack.c.l.b16 %v1222
    %v5575 = vunpack.c.h.b16 %v1222
    %v5576 = vunpack.c.l.b16 %v1223
    %v5577 = vunpack.c.h.b16 %v1223
    %v5578 = vunpack.c.l.b16 %v1224
    %v5579 = vunpack.c.h.b16 %v1224
    %v5580 = vunpack.c.l.b16 %v1225
    %v5581 = vunpack.c.h.b16 %v1225
    %v5582 = vunpack.c.l.b16 %v1226
    %v5583 = vunpack.c.h.b16 %v1226
    %v5584 = vunpack.c.l.b16 %v1227
    %v5585 = vunpack.c.h.b16 %v1227
    %v5586 = vunpack.c.l.b16 %v1228
    %v5587 = vunpack.c.h.b16 %v1228
    %v5588 = vunpack.c.l.b16 %v1229
    %v5589 = vunpack.c.h.b16 %v1229
    %v5590 = vunpack.c.l.b16 %v1230
    %v5591 = vunpack.c.h.b16 %v1230
    %v5592 = vunpack.c.l.b16 %v1231
    %v5593 = vunpack.c.h.b16 %v1231
    %v5594 = vunpack.c.l.b16 %v1232
    %v5595 = vunpack.c.h.b16 %v1232
    %v5596 = vunpack.c.l.b16 %v1233
    %v5597 = vunpack.c.h.b16 %v1233
    %v5598 = vunpack.c.l.b16 %v1234
    %v5599 = vunpack.c.h.b16 %v1234
    %v5600 = vunpack.c.l.b16 %v1235
    %v5601 = vunpack.c.h.b16 %v1235
    %v5602 = vunpack.c.l.b16 %v1236
    %v5603 = vunpack.c.h.b16 %v1236
    %v5604 = vunpack.c.l.b16 %v1237
    %v5605 = vunpack.c.h.b16 %v1237
    %v5606 = vunpack.c.l.b16 %v1238
    %v5607 = vunpack.c.h.b16 %v1238
    %v5608 = vunpack.c.l.b16 %v1239
    %v5609 = vunpack.c.h.b16 %v1239
    %v5610 = vunpack.c.l.b16 %v1240
    %v5611 = vunpack.c.h.b16 %v1240
    %v5612 = vunpack.c.l.b16 %v1241
    %v5613 = vunpack.c.h.b16 %v1241
    %v5614 = vunpack.c.l.b16 %v1242
    %v5615 = vunpack.c.h.b16 %v1242
    %v5616 = vunpack.c.l.b16 %v1243
    %v5617 = vunpack.c.h.b16 %v1243
    %v5618 = vunpack.c.l.b16 %v1244
    %v5619 = vunpack.c.h.b16 %v1244
    %v5620 = vunpack.c.l.b16 %v1245
    %v5621 = vunpack.c.h.b16 %v1245
    %v5622 = vunpack.c.l.b16 %v1246
    %v5623 = vunpack.c.h.b16 %v1246
    %v5624 = vunpack.c.l.b16 %v1247
    %v5625 = vunpack.c.h.b16 %v1247
    %v5626 = vunpack.c.l.b16 %v1248
    %v5627 = vunpack.c.h.b16 %v1248
    %v5628 = vunpack.c.l.b16 %v1249
    %v5629 = vunpack.c.h.b16 %v1249
    %v5630 = vunpack.c.l.b16 %v1250
    %v5631 = vunpack.c.h.b16 %v1250
    %v5632 = vunpack.c.l.b16 %v1251
    %v5633 = vunpack.c.h.b16 %v1251
    %v5634 = vunpack.c.l.b16 %v1252
    %v5635 = vunpack.c.h.b16 %v1252
    %v5636 = vunpack.c.l.b16 %v1253
    %v5637 = vunpack.c.h.b16 %v1253
    %v5638 = vunpack.c.l.b16 %v1254
    %v5639 = vunpack.c.h.b16 %v1254
    %v5640 = vunpack.c.l.b16 %v1255
    %v5641 = vunpack.c.h.b16 %v1255
    %v5642 = vunpack.c.l.b16 %v1256
    %v5643 = vunpack.c.h.b16 %v1256
    %v5644 = vunpack.c.l.b16 %v1257
    %v5645 = vunpack.c.h.b16 %v1257
    %v5646 = vunpack.c.l.b16 %v1258
    %v5647 = vunpack.c.h.b16 %v1258
    %v5648 = vunpack.c.l.b16 %v1259
    %v5649 = vunpack.c.h.b16 %v1259
    %v5650 = vunpack.c.l.b16 %v1260
    %v5651 = vunpack.c.h.b16 %v1260
    %v5652 = vunpack.c.l.b16 %v1261
    %v5653 = vunpack.c.h.b16 %v1261
    %v5654 = vunpack.c.l.b16 %v1262
    %v5655 = vunpack.c.h.b16 %v1262
    %v5656 = vunpack.c.l.b16 %v1263
    %v5657 = vunpack.c.h.b16 %v1263
    %v5658 = vunpack.c.l.b16 %v1264
    %v5659 = vunpack.c.h.b16 %v1264
    %v5660 = vunpack.c.l.b16 %v1265
    %v5661 = vunpack.c.h.b16 %v1265
    %v5662 = vunpack.c.l.b16 %v1266
    %v5663 = vunpack.c.h.b16 %v1266
    %v5664 = vunpack.c.l.b16 %v1267
    %v5665 = vunpack.c.h.b16 %v1267
    %v5666 = vunpack.c.l.b16 %v1268
    %v5667 = vunpack.c.h.b16 %v1268
    %v5668 = vunpack.c.l.b16 %v1269
    %v5669 = vunpack.c.h.b16 %v1269
    %v5670 = vunpack.c.l.b16 %v1270
    %v5671 = vunpack.c.h.b16 %v1270
    %v5672 = vunpack.c.l.b16 %v1271
    %v5673 = vunpack.c.h.b16 %v1271
    %v5674 = vunpack.c.l.b16 %v1272
    %v5675 = vunpack.c.h.b16 %v1272
    %v5676 = vunpack.c.l.b16 %v1273
    %v5677 = vunpack.c.h.b16 %v1273
    %v5678 = vunpack.c.l.b16 %v1274
    %v5679 = vunpack.c.h.b16 %v1274
    %v5680 = vunpack.c.l.b16 %v1275
    %v5681 = vunpack.c.h.b16 %v1275
    %v5682 = vunpack.c.l.b16 %v1276
    %v5683 = vunpack.c.h.b16 %v1276
    %v5684 = vunpack.c.l.b16 %v1277
    %v5685 = vunpack.c.h.b16 %v1277
    %v5686 = vunpack.c.l.b16 %v1278
    %v5687 = vunpack.c.h.b16 %v1278
    %v5688 = vunpack.c.l.b16 %v1279
    %v5689 = vunpack.c.h.b16 %v1279
    %v5690 = vunpack.c.l.b16 %v1280
    %v5691 = vunpack.c.h.b16 %v1280
    %v5692 = vunpack.c.l.b16 %v1281
    %v5693 = vunpack.c.h.b16 %v1281
    %v5694 = vunpack.c.l.b16 %v1282
    %v5695 = vunpack.c.h.b16 %v1282
    %v5696 = vunpack.c.l.b16 %v1283
    %v5697 = vunpack.c.h.b16 %v1283
    %v5698 = vunpack.c.l.b16 %v1284
    %v5699 = vunpack.c.h.b16 %v1284
    %v5700 = vunpack.c.l.b16 %v1285
    %v5701 = vunpack.c.h.b16 %v1285
    %v5702 = vunpack.c.l.b16 %v1286
    %v5703 = vunpack.c.h.b16 %v1286
    %v5704 = vunpack.c.l.b16 %v1287
    %v5705 = vunpack.c.h.b16 %v1287
    %v5706 = vunpack.c.l.b16 %v1288
    %v5707 = vunpack.c.h.b16 %v1288
    %v5708 = vunpack.c.l.b16 %v1289
    %v5709 = vunpack.c.h.b16 %v1289
    %v5710 = vunpack.c.l.b16 %v1290
    %v5711 = vunpack.c.h.b16 %v1290
    %v5712 = vunpack.c.l.b16 %v1291
    %v5713 = vunpack.c.h.b16 %v1291
    %v5714 = vunpack.c.l.b16 %v1292
    %v5715 = vunpack.c.h.b16 %v1292
    %v5716 = vunpack.c.l.b16 %v1293
    %v5717 = vunpack.c.h.b16 %v1293
    %v5718 = vunpack.c.l.b16 %v1294
    %v5719 = vunpack.c.h.b16 %v1294
    %v5720 = vunpack.c.l.b16 %v1295
    %v5721 = vunpack.c.h.b16 %v1295
    %v5722 = vunpack.c.l.b16 %v1296
    %v5723 = vunpack.c.h.b16 %v1296
    %v5724 = vunpack.c.l.b16 %v1297
    %v5725 = vunpack.c.h.b16 %v1297
    %v5726 = vunpack.c.l.b16 %v1298
    %v5727 = vunpack.c.h.b16 %v1298
    %v5728 = vunpack.c.l.b16 %v1299
    %v5729 = vunpack.c.h.b16 %v1299
    %v5730 = vunpack.c.l.b16 %v1300
    %v5731 = vunpack.c.h.b16 %v1300
    %v5732 = vunpack.c.l.b16 %v1301
    %v5733 = vunpack.c.h.b16 %v1301
    %v5734 = vunpack.c.l.b16 %v1302
    %v5735 = vunpack.c.h.b16 %v1302
    %v5736 = vunpack.c.l.b16 %v1303
    %v5737 = vunpack.c.h.b16 %v1303
    %v5738 = vunpack.c.l.b16 %v1304
    %v5739 = vunpack.c.h.b16 %v1304
    %v5740 = vunpack.c.l.b16 %v1305
    %v5741 = vunpack.c.h.b16 %v1305
    %v5742 = vunpack.c.l.b16 %v1306
    %v5743 = vunpack.c.h.b16 %v1306
    %v5744 = vunpack.c.l.b16 %v1307
    %v5745 = vunpack.c.h.b16 %v1307
    %v5746 = vunpack.c.l.b16 %v1308
    %v5747 = vunpack.c.h.b16 %v1308
    %v5748 = vunpack.c.l.b16 %v1309
    %v5749 = vunpack.c.h.b16 %v1309
    %v5750 = vunpack.c.l.b16 %v1310
    %v5751 = vunpack.c.h.b16 %v1310
    %v5752 = vunpack.c.l.b16 %v1311
    %v5753 = vunpack.c.h.b16 %v1311
    %v5754 = vunpack.c.l.b16 %v1312
    %v5755 = vunpack.c.h.b16 %v1312
    %v5756 = vunpack.c.l.b16 %v1313
    %v5757 = vunpack.c.h.b16 %v1313
    %v5758 = vunpack.c.l.b16 %v1314
    %v5759 = vunpack.c.h.b16 %v1314
    %v5760 = vunpack.c.l.b16 %v1315
    %v5761 = vunpack.c.h.b16 %v1315
    %v5762 = vunpack.c.l.b16 %v1316
    %v5763 = vunpack.c.h.b16 %v1316
    %v5764 = vunpack.c.l.b16 %v1317
    %v5765 = vunpack.c.h.b16 %v1317
    %v5766 = vunpack.c.l.b16 %v1318
    %v5767 = vunpack.c.h.b16 %v1318
    %v5768 = vunpack.c.l.b16 %v1319
    %v5769 = vunpack.c.h.b16 %v1319
    %v5770 = vunpack.c.l.b16 %v1320
    %v5771 = vunpack.c.h.b16 %v1320
    %v5772 = vunpack.c.l.b16 %v1321
    %v5773 = vunpack.c.h.b16 %v1321
    %v5774 = vunpack.c.l.b16 %v1322
    %v5775 = vunpack.c.h.b16 %v1322
    %v5776 = vunpack.c.l.b16 %v1323
    %v5777 = vunpack.c.h.b16 %v1323
    %v5778 = vunpack.c.l.b16 %v1324
    %v5779 = vunpack.c.h.b16 %v1324
    %v5780 = vunpack.c.l.b16 %v1325
    %v5781 = vunpack.c.h.b16 %v1325
    %v5782 = vunpack.c.l.b16 %v1326
    %v5783 = vunpack.c.h.b16 %v1326
    %v5784 = vunpack.c.l.b16 %v1327
    %v5785 = vunpack.c.h.b16 %v1327
    %v5786 = vunpack.c.l.b16 %v1328
    %v5787 = vunpack.c.h.b16 %v1328
    %v5788 = vunpack.c.l.b16 %v1329
    %v5789 = vunpack.c.h.b16 %v1329
    %v5790 = vunpack.c.l.b16 %v1330
    %v5791 = vunpack.c.h.b16 %v1330
    %v5792 = vunpack.c.l.b16 %v1331
    %v5793 = vunpack.c.h.b16 %v1331
    %v5794 = vunpack.c.l.b16 %v1332
    %v5795 = vunpack.c.h.b16 %v1332
    %v5796 = vunpack.c.l.b16 %v1333
    %v5797 = vunpack.c.h.b16 %v1333
    %v5798 = vunpack.c.l.b16 %v1334
    %v5799 = vunpack.c.h.b16 %v1334
    %v5800 = vunpack.c.l.b16 %v1335
    %v5801 = vunpack.c.h.b16 %v1335
    %v5802 = vunpack.c.l.b16 %v1336
    %v5803 = vunpack.c.h.b16 %v1336
    %v5804 = vunpack.c.l.b16 %v1337
    %v5805 = vunpack.c.h.b16 %v1337
    %v5806 = vunpack.c.l.b16 %v1338
    %v5807 = vunpack.c.h.b16 %v1338
    %v5808 = vunpack.c.l.b16 %v1339
    %v5809 = vunpack.c.h.b16 %v1339
    %v5810 = vunpack.c.l.b16 %v1340
    %v5811 = vunpack.c.h.b16 %v1340
    %v5812 = vunpack.c.l.b16 %v1341
    %v5813 = vunpack.c.h.b16 %v1341
    %v5814 = vunpack.c.l.b16 %v1342
    %v5815 = vunpack.c.h.b16 %v1342
    %v5816 = vunpack.c.l.b16 %v1343
    %v5817 = vunpack.c.h.b16 %v1343
    %v5818 = vunpack.c.l.b16 %v1344
    %v5819 = vunpack.c.h.b16 %v1344
    %v5820 = vunpack.c.l.b16 %v1345
    %v5821 = vunpack.c.h.b16 %v1345
    %v5822 = vunpack.c.l.b16 %v1346
    %v5823 = vunpack.c.h.b16 %v1346
    %v5824 = vunpack.c.l.b16 %v1347
    %v5825 = vunpack.c.h.b16 %v1347
    %v5826 = vunpack.c.l.b16 %v1348
    %v5827 = vunpack.c.h.b16 %v1348
    %v5828 = vunpack.c.l.b16 %v1349
    %v5829 = vunpack.c.h.b16 %v1349
    %v5830 = vunpack.c.l.b16 %v1350
    %v5831 = vunpack.c.h.b16 %v1350
    %v5832 = vunpack.c.l.b16 %v1351
    %v5833 = vunpack.c.h.b16 %v1351
    %v5834 = vunpack.c.l.b16 %v1352
    %v5835 = vunpack.c.h.b16 %v1352
    %v5836 = vunpack.c.l.b16 %v1353
    %v5837 = vunpack.c.h.b16 %v1353
    %v5838 = vunpack.c.l.b16 %v1354
    %v5839 = vunpack.c.h.b16 %v1354
    %v5840 = vunpack.c.l.b16 %v1355
    %v5841 = vunpack.c.h.b16 %v1355
    %v5842 = vunpack.c.l.b16 %v1356
    %v5843 = vunpack.c.h.b16 %v1356
    %v5844 = vunpack.c.l.b16 %v1357
    %v5845 = vunpack.c.h.b16 %v1357
    %v5846 = vunpack.c.l.b16 %v1358
    %v5847 = vunpack.c.h.b16 %v1358
    %v5848 = vunpack.c.l.b16 %v1359
    %v5849 = vunpack.c.h.b16 %v1359
    %v5850 = vunpack.c.l.b16 %v1360
    %v5851 = vunpack.c.h.b16 %v1360
    %v5852 = vunpack.c.l.b16 %v1361
    %v5853 = vunpack.c.h.b16 %v1361
    %v5854 = vunpack.c.l.b16 %v1362
    %v5855 = vunpack.c.h.b16 %v1362
    %v5856 = vunpack.c.l.b16 %v1363
    %v5857 = vunpack.c.h.b16 %v1363
    %v5858 = vunpack.c.l.b16 %v1364
    %v5859 = vunpack.c.h.b16 %v1364
    %v5860 = vunpack.c.l.b16 %v1365
    %v5861 = vunpack.c.h.b16 %v1365
    %v5862 = vunpack.c.l.b16 %v1366
    %v5863 = vunpack.c.h.b16 %v1366
    %v5864 = vunpack.c.l.b16 %v1367
    %v5865 = vunpack.c.h.b16 %v1367
    %v5866 = vunpack.c.l.b16 %v1368
    %v5867 = vunpack.c.h.b16 %v1368
    %v5868 = vunpack.c.l.b16 %v1369
    %v5869 = vunpack.c.h.b16 %v1369
    %v5870 = vunpack.c.l.b16 %v1370
    %v5871 = vunpack.c.h.b16 %v1370
    %v5872 = vunpack.c.l.b16 %v1371
    %v5873 = vunpack.c.h.b16 %v1371
    %v5874 = vunpack.c.l.b16 %v1372
    %v5875 = vunpack.c.h.b16 %v1372
    %v5876 = vunpack.c.l.b16 %v1373
    %v5877 = vunpack.c.h.b16 %v1373
    %v5878 = vunpack.c.l.b16 %v1374
    %v5879 = vunpack.c.h.b16 %v1374
    %v5880 = vunpack.c.l.b16 %v1375
    %v5881 = vunpack.c.h.b16 %v1375
    %v5882 = vunpack.c.l.b16 %v1376
    %v5883 = vunpack.c.h.b16 %v1376
    %v5884 = vunpack.c.l.b16 %v1377
    %v5885 = vunpack.c.h.b16 %v1377
    %v5886 = vunpack.c.l.b16 %v1378
    %v5887 = vunpack.c.h.b16 %v1378
    %v5888 = vunpack.c.l.b16 %v1379
    %v5889 = vunpack.c.h.b16 %v1379
    %v5890 = vunpack.c.l.b16 %v1380
    %v5891 = vunpack.c.h.b16 %v1380
    %v5892 = vunpack.c.l.b16 %v1381
    %v5893 = vunpack.c.h.b16 %v1381
    %v5894 = vunpack.c.l.b16 %v1382
    %v5895 = vunpack.c.h.b16 %v1382
    %v5896 = vunpack.c.l.b16 %v1383
    %v5897 = vunpack.c.h.b16 %v1383
    %v5898 = vunpack.c.l.b16 %v1384
    %v5899 = vunpack.c.h.b16 %v1384
    %v5900 = vunpack.c.l.b16 %v1385
    %v5901 = vunpack.c.h.b16 %v1385
    %v5902 = vunpack.c.l.b16 %v1386
    %v5903 = vunpack.c.h.b16 %v1386
    %v5904 = vunpack.c.l.b16 %v1387
    %v5905 = vunpack.c.h.b16 %v1387
    %v5906 = vunpack.c.l.b16 %v1388
    %v5907 = vunpack.c.h.b16 %v1388
    %v5908 = vunpack.c.l.b16 %v1389
    %v5909 = vunpack.c.h.b16 %v1389
    %v5910 = vunpack.c.l.b16 %v1390
    %v5911 = vunpack.c.h.b16 %v1390
    %v5912 = vunpack.c.l.b16 %v1391
    %v5913 = vunpack.c.h.b16 %v1391
    %v5914 = vunpack.c.l.b16 %v1392
    %v5915 = vunpack.c.h.b16 %v1392
    %v5916 = vunpack.c.l.b16 %v1393
    %v5917 = vunpack.c.h.b16 %v1393
    %v5918 = vunpack.c.l.b16 %v1394
    %v5919 = vunpack.c.h.b16 %v1394
    %v5920 = vunpack.c.l.b16 %v1395
    %v5921 = vunpack.c.h.b16 %v1395
    %v5922 = vunpack.c.l.b16 %v1396
    %v5923 = vunpack.c.h.b16 %v1396
    %v5924 = vunpack.c.l.b16 %v1397
    %v5925 = vunpack.c.h.b16 %v1397
    %v5926 = vunpack.c.l.b16 %v1398
    %v5927 = vunpack.c.h.b16 %v1398
    %v5928 = vunpack.c.l.b16 %v1399
    %v5929 = vunpack.c.h.b16 %v1399
    %v5930 = vunpack.c.l.b16 %v1400
    %v5931 = vunpack.c.h.b16 %v1400
    %v5932 = vunpack.c.l.b16 %v1401
    %v5933 = vunpack.c.h.b16 %v1401
    %v5934 = vunpack.c.l.b16 %v1402
    %v5935 = vunpack.c.h.b16 %v1402
    %v5936 = vunpack.c.l.b16 %v1403
    %v5937 = vunpack.c.h.b16 %v1403
    %v5938 = vunpack.c.l.b16 %v1404
    %v5939 = vunpack.c.h.b16 %v1404
    %v5940 = vunpack.c.l.b16 %v1405
    %v5941 = vunpack.c.h.b16 %v1405
    %v5942 = vunpack.c.l.b16 %v1406
    %v5943 = vunpack.c.h.b16 %v1406
    %v5944 = vunpack.c.l.b16 %v1407
    %v5945 = vunpack.c.h.b16 %v1407
    %v5946 = vunpack.c.l.b16 %v1408
    %v5947 = vunpack.c.h.b16 %v1408
    %v5948 = vunpack.c.l.b16 %v1409
    %v5949 = vunpack.c.h.b16 %v1409
    %v5950 = vunpack.c.l.b16 %v1410
    %v5951 = vunpack.c.h.b16 %v1410
    %v5952 = vunpack.c.l.b16 %v1411
    %v5953 = vunpack.c.h.b16 %v1411
    %v5954 = vunpack.c.l.b16 %v1412
    %v5955 = vunpack.c.h.b16 %v1412
    %v5956 = vunpack.c.l.b16 %v1413
    %v5957 = vunpack.c.h.b16 %v1413
    %v5958 = vunpack.c.l.b16 %v1414
    %v5959 = vunpack.c.h.b16 %v1414
    %v5960 = vunpack.c.l.b16 %v1415
    %v5961 = vunpack.c.h.b16 %v1415
    %v5962 = vunpack.c.l.b16 %v1416
    %v5963 = vunpack.c.h.b16 %v1416
    %v5964 = vunpack.c.l.b16 %v1417
    %v5965 = vunpack.c.h.b16 %v1417
    %v5966 = vunpack.c.l.b16 %v1418
    %v5967 = vunpack.c.h.b16 %v1418
    %v5968 = vunpack.c.l.b16 %v1419
    %v5969 = vunpack.c.h.b16 %v1419
    %v5970 = vunpack.c.l.b16 %v1420
    %v5971 = vunpack.c.h.b16 %v1420
    %v5972 = vunpack.c.l.b16 %v1421
    %v5973 = vunpack.c.h.b16 %v1421
    %v5974 = vunpack.c.l.b16 %v1422
    %v5975 = vunpack.c.h.b16 %v1422
    %v5976 = vunpack.c.l.b16 %v1423
    %v5977 = vunpack.c.h.b16 %v1423
    %v5978 = vunpack.c.l.b16 %v1424
    %v5979 = vunpack.c.h.b16 %v1424
    %v5980 = vunpack.c.l.b16 %v1425
    %v5981 = vunpack.c.h.b16 %v1425
    %v5982 = vunpack.c.l.b16 %v1426
    %v5983 = vunpack.c.h.b16 %v1426
    %v5984 = vunpack.c.l.b16 %v1427
    %v5985 = vunpack.c.h.b16 %v1427
    %v5986 = vunpack.c.l.b16 %v1428
    %v5987 = vunpack.c.h.b16 %v1428
    %v5988 = vunpack.c.l.b16 %v1429
    %v5989 = vunpack.c.h.b16 %v1429
    %v5990 = vunpack.c.l.b16 %v1430
    %v5991 = vunpack.c.h.b16 %v1430
    %v5992 = vunpack.c.l.b16 %v1431
    %v5993 = vunpack.c.h.b16 %v1431
    %v5994 = vunpack.c.l.b16 %v1432
    %v5995 = vunpack.c.h.b16 %v1432
    %v5996 = vunpack.c.l.b16 %v1433
    %v5997 = vunpack.c.h.b16 %v1433
    %v5998 = vunpack.c.l.b16 %v1434
    %v5999 = vunpack.c.h.b16 %v1434
    %v6000 = vunpack.c.l.b16 %v1435
    %v6001 = vunpack.c.h.b16 %v1435
    %v6002 = vunpack.c.l.b16 %v1436
    %v6003 = vunpack.c.h.b16 %v1436
    %v6004 = vunpack.c.l.b16 %v1437
    %v6005 = vunpack.c.h.b16 %v1437
    %v6006 = vunpack.c.l.b16 %v1438
    %v6007 = vunpack.c.h.b16 %v1438
    %v6008 = vunpack.c.l.b16 %v1439
    %v6009 = vunpack.c.h.b16 %v1439
    %v6010 = vunpack.c.l.b16 %v1440
    %v6011 = vunpack.c.h.b16 %v1440
    %v6012 = vunpack.c.l.b16 %v1441
    %v6013 = vunpack.c.h.b16 %v1441
    %v6014 = vunpack.c.l.b16 %v1442
    %v6015 = vunpack.c.h.b16 %v1442
    %v6016 = vunpack.c.l.b16 %v1443
    %v6017 = vunpack.c.h.b16 %v1443
    %v6018 = vunpack.c.l.b16 %v1444
    %v6019 = vunpack.c.h.b16 %v1444
    %v6020 = vunpack.c.l.b16 %v1445
    %v6021 = vunpack.c.h.b16 %v1445
    %v6022 = vunpack.c.l.b16 %v1446
    %v6023 = vunpack.c.h.b16 %v1446
    %v6024 = vunpack.c.l.b16 %v1447
    %v6025 = vunpack.c.h.b16 %v1447
    %v6026 = vunpack.c.l.b16 %v1448
    %v6027 = vunpack.c.h.b16 %v1448
    %v6028 = vunpack.c.l.b16 %v1449
    %v6029 = vunpack.c.h.b16 %v1449
    %v6030 = vunpack.c.l.b16 %v1450
    %v6031 = vunpack.c.h.b16 %v1450
    %v6032 = vunpack.c.l.b16 %v1451
    %v6033 = vunpack.c.h.b16 %v1451
    %v6034 = vunpack.c.l.b16 %v1452
    %v6035 = vunpack.c.h.b16 %v1452
    %v6036 = vunpack.c.l.b16 %v1453
    %v6037 = vunpack.c.h.b16 %v1453
    %v6038 = vunpack.c.l.b16 %v1454
    %v6039 = vunpack.c.h.b16 %v1454
    %v6040 = vunpack.c.l.b16 %v1455
    %v6041 = vunpack.c.h.b16 %v1455
    %v6042 = vunpack.c.l.b16 %v1456
    %v6043 = vunpack.c.h.b16 %v1456
    %v6044 = vunpack.c.l.b16 %v1457
    %v6045 = vunpack.c.h.b16 %v1457
    %v6046 = vunpack.c.l.b16 %v1458
    %v6047 = vunpack.c.h.b16 %v1458
    %v6048 = vunpack.c.l.b16 %v1459
    %v6049 = vunpack.c.h.b16 %v1459
    %v6050 = vunpack.c.l.b16 %v1460
    %v6051 = vunpack.c.h.b16 %v1460
    %v6052 = vunpack.c.l.b16 %v1461
    %v6053 = vunpack.c.h.b16 %v1461
    %v6054 = vunpack.c.l.b16 %v1462
    %v6055 = vunpack.c.h.b16 %v1462
    %v6056 = vunpack.c.l.b16 %v1463
    %v6057 = vunpack.c.h.b16 %v1463
    %v6058 = vunpack.c.l.b16 %v1464
    %v6059 = vunpack.c.h.b16 %v1464
    %v6060 = vunpack.c.l.b16 %v1465
    %v6061 = vunpack.c.h.b16 %v1465
    %v6062 = vunpack.c.l.b16 %v1466
    %v6063 = vunpack.c.h.b16 %v1466
    %v6064 = vunpack.c.l.b16 %v1467
    %v6065 = vunpack.c.h.b16 %v1467
    %v6066 = vunpack.c.l.b16 %v1468
    %v6067 = vunpack.c.h.b16 %v1468
    %v6068 = vunpack.c.l.b16 %v1469
    %v6069 = vunpack.c.h.b16 %v1469
    %v6070 = vunpack.c.l.b16 %v1470
    %v6071 = vunpack.c.h.b16 %v1470
    %v6072 = vunpack.c.l.b16 %v1471
    %v6073 = vunpack.c.h.b16 %v1471
    %v6074 = vunpack.c.l.b16 %v1472
    %v6075 = vunpack.c.h.b16 %v1472
    %v6076 = vunpack.c.l.b16 %v1473
    %v6077 = vunpack.c.h.b16 %v1473
    %v6078 = vunpack.c.l.b16 %v1474
    %v6079 = vunpack.c.h.b16 %v1474
    %v6080 = vunpack.c.l.b16 %v1475
    %v6081 = vunpack.c.h.b16 %v1475
    %v6082 = vunpack.c.l.b16 %v1476
    %v6083 = vunpack.c.h.b16 %v1476
    %v6084 = vunpack.c.l.b16 %v1477
    %v6085 = vunpack.c.h.b16 %v1477
    %v6086 = vunpack.c.l.b16 %v1478
    %v6087 = vunpack.c.h.b16 %v1478
    %v6088 = vunpack.c.l.b16 %v1479
    %v6089 = vunpack.c.h.b16 %v1479
    %v6090 = vunpack.c.l.b16 %v1480
    %v6091 = vunpack.c.h.b16 %v1480
    %v6092 = vunpack.c.l.b16 %v1481
    %v6093 = vunpack.c.h.b16 %v1481
    %v6094 = vunpack.c.l.b16 %v1482
    %v6095 = vunpack.c.h.b16 %v1482
    %v6096 = vunpack.c.l.b16 %v1483
    %v6097 = vunpack.c.h.b16 %v1483
    %v6098 = vunpack.c.l.b16 %v1484
    %v6099 = vunpack.c.h.b16 %v1484
    %v6100 = vunpack.c.l.b16 %v1485
    %v6101 = vunpack.c.h.b16 %v1485
    %v6102 = vunpack.c.l.b16 %v1486
    %v6103 = vunpack.c.h.b16 %v1486
    %v6104 = vunpack.c.l.b16 %v1487
    %v6105 = vunpack.c.h.b16 %v1487
    %v6106 = vunpack.c.l.b16 %v1488
    %v6107 = vunpack.c.h.b16 %v1488
    %v6108 = vunpack.c.l.b16 %v1489
    %v6109 = vunpack.c.h.b16 %v1489
    %v6110 = vunpack.c.l.b16 %v1490
    %v6111 = vunpack.c.h.b16 %v1490
    %v6112 = vunpack.c.l.b16 %v1491
    %v6113 = vunpack.c.h.b16 %v1491
    %v6114 = vunpack.c.l.b16 %v1492
    %v6115 = vunpack.c.h.b16 %v1492
    %v6116 = vunpack.c.l.b16 %v1493
    %v6117 = vunpack.c.h.b16 %v1493
    %v6118 = vunpack.c.l.b16 %v1494
    %v6119 = vunpack.c.h.b16 %v1494
    %v6120 = vunpack.c.l.b16 %v1495
    %v6121 = vunpack.c.h.b16 %v1495
    %v6122 = vunpack.c.l.b16 %v1496
    %v6123 = vunpack.c.h.b16 %v1496
    %v6124 = vunpack.c.l.b16 %v1497
    %v6125 = vunpack.c.h.b16 %v1497
    %v6126 = vunpack.c.l.b16 %v1498
    %v6127 = vunpack.c.h.b16 %v1498
    %v6128 = vunpack.c.l.b16 %v1499
    %v6129 = vunpack.c.h.b16 %v1499
    %v6130 = vunpack.c.l.b16 %v1500
    %v6131 = vunpack.c.h.b16 %v1500
    %v6132 = vunpack.c.l.b16 %v1501
    %v6133 = vunpack.c.h.b16 %v1501
    %v6134 = vunpack.c.l.b16 %v1502
    %v6135 = vunpack.c.h.b16 %v1502
    %v6136 = vunpack.c.l.b16 %v1503
    %v6137 = vunpack.c.h.b16 %v1503
    %v6138 = vunpack.c.l.b16 %v1504
    %v6139 = vunpack.c.h.b16 %v1504
    %v6140 = vunpack.c.l.b16 %v1505
    %v6141 = vunpack.c.h.b16 %v1505
    %v6142 = vunpack.c.l.b16 %v1506
    %v6143 = vunpack.c.h.b16 %v1506
    %v6144 = vunpack.c.l.b16 %v1507
    %v6145 = vunpack.c.h.b16 %v1507
    %v6146 = vunpack.c.l.b16 %v1508
    %v6147 = vunpack.c.h.b16 %v1508
    %v6148 = vunpack.c.l.b16 %v1509
    %v6149 = vunpack.c.h.b16 %v1509
    %v6150 = vunpack.c.l.b16 %v1510
    %v6151 = vunpack.c.h.b16 %v1510
    %v6152 = vunpack.c.l.b16 %v1511
    %v6153 = vunpack.c.h.b16 %v1511
    %v6154 = vunpack.c.l.b16 %v1512
    %v6155 = vunpack.c.h.b16 %v1512
    %v6156 = vunpack.c.l.b16 %v1513
    %v6157 = vunpack.c.h.b16 %v1513
    %v6158 = vunpack.c.l.b16 %v1514
    %v6159 = vunpack.c.h.b16 %v1514
    %v6160 = vunpack.c.l.b16 %v1515
    %v6161 = vunpack.c.h.b16 %v1515
    %v6162 = vunpack.c.l.b16 %v1516
    %v6163 = vunpack.c.h.b16 %v1516
    %v6164 = vunpack.c.l.b16 %v1517
    %v6165 = vunpack.c.h.b16 %v1517
    %v6166 = vunpack.c.l.b16 %v1518
    %v6167 = vunpack.c.h.b16 %v1518
    %v6168 = vunpack.c.l.b16 %v1519
    %v6169 = vunpack.c.h.b16 %v1519
    %v6170 = vunpack.c.l.b16 %v1520
    %v6171 = vunpack.c.h.b16 %v1520
    %v6172 = vunpack.c.l.b16 %v1521
    %v6173 = vunpack.c.h.b16 %v1521
    %v6174 = vunpack.c.l.b16 %v1522
    %v6175 = vunpack.c.h.b16 %v1522
    %v6176 = vunpack.c.l.b16 %v1523
    %v6177 = vunpack.c.h.b16 %v1523
    %v6178 = vunpack.c.l.b16 %v1524
    %v6179 = vunpack.c.h.b16 %v1524
    %v6180 = vunpack.c.l.b16 %v1525
    %v6181 = vunpack.c.h.b16 %v1525
    %v6182 = vunpack.c.l.b16 %v1526
    %v6183 = vunpack.c.h.b16 %v1526
    %v6184 = vunpack.c.l.b16 %v1527
    %v6185 = vunpack.c.h.b16 %v1527
    %v6186 = vunpack.c.l.b16 %v1528
    %v6187 = vunpack.c.h.b16 %v1528
    %v6188 = vunpack.c.l.b16 %v1529
    %v6189 = vunpack.c.h.b16 %v1529
    %v6190 = vunpack.c.l.b16 %v1530
    %v6191 = vunpack.c.h.b16 %v1530
    %v6192 = vunpack.c.l.b16 %v1531
    %v6193 = vunpack.c.h.b16 %v1531
    %v6194 = vunpack.c.l.b16 %v1532
    %v6195 = vunpack.c.h.b16 %v1532
    %v6196 = vunpack.c.l.b16 %v1533
    %v6197 = vunpack.c.h.b16 %v1533
    %v6198 = vunpack.c.l.b16 %v1534
    %v6199 = vunpack.c.h.b16 %v1534
    %v6200 = vunpack.c.l.b16 %v1535
    %v6201 = vunpack.c.h.b16 %v1535
    %v6202 = vunpack.c.l.b16 %v1536
    %v6203 = vunpack.c.h.b16 %v1536
    %v6204 = vunpack.c.l.b16 %v1537
    %v6205 = vunpack.c.h.b16 %v1537
    %v6206 = vunpack.c.l.b16 %v1538
    %v6207 = vunpack.c.h.b16 %v1538
    %v6208 = vunpack.c.l.b16 %v1539
    %v6209 = vunpack.c.h.b16 %v1539
    %v6210 = vunpack.c.l.b16 %v1540
    %v6211 = vunpack.c.h.b16 %v1540
    %v6212 = vunpack.c.l.b16 %v1541
    %v6213 = vunpack.c.h.b16 %v1541
    %v6214 = vunpack.c.l.b16 %v1542
    %v6215 = vunpack.c.h.b16 %v1542
    %v6216 = vunpack.c.l.b16 %v1543
    %v6217 = vunpack.c.h.b16 %v1543
    %v6218 = vunpack.c.l.b16 %v1544
    %v6219 = vunpack.c.h.b16 %v1544
    %v6220 = vunpack.c.l.b16 %v1545
    %v6221 = vunpack.c.h.b16 %v1545
    %v6222 = vunpack.c.l.b16 %v1546
    %v6223 = vunpack.c.h.b16 %v1546
    %v6224 = vunpack.c.l.b16 %v1547
    %v6225 = vunpack.c.h.b16 %v1547
    %v6226 = vunpack.c.l.b16 %v1548
    %v6227 = vunpack.c.h.b16 %v1548
    %v6228 = vunpack.c.l.b16 %v1549
    %v6229 = vunpack.c.h.b16 %v1549
    %v6230 = vunpack.c.l.b16 %v1550
    %v6231 = vunpack.c.h.b16 %v1550
    %v6232 = vunpack.c.l.b16 %v1551
    %v6233 = vunpack.c.h.b16 %v1551
    %v6234 = vunpack.c.l.b16 %v1552
    %v6235 = vunpack.c.h.b16 %v1552
    %v6236 = vunpack.c.l.b16 %v1553
    %v6237 = vunpack.c.h.b16 %v1553
    %v6238 = vunpack.c.l.b16 %v1554
    %v6239 = vunpack.c.h.b16 %v1554
    %v6240 = vunpack.c.l.b16 %v1555
    %v6241 = vunpack.c.h.b16 %v1555
    %v6242 = vunpack.c.l.b16 %v1556
    %v6243 = vunpack.c.h.b16 %v1556
    %v6244 = vunpack.c.l.b16 %v1557
    %v6245 = vunpack.c.h.b16 %v1557
    %v6246 = vunpack.c.l.b16 %v1558
    %v6247 = vunpack.c.h.b16 %v1558
    %v6248 = vunpack.c.l.b16 %v1559
    %v6249 = vunpack.c.h.b16 %v1559
    %v6250 = vunpack.c.l.b16 %v1560
    %v6251 = vunpack.c.h.b16 %v1560
    %v6252 = vunpack.c.l.b16 %v1561
    %v6253 = vunpack.c.h.b16 %v1561
    %v6254 = vunpack.c.l.b16 %v1562
    %v6255 = vunpack.c.h.b16 %v1562
    %v6256 = vunpack.c.l.b16 %v1563
    %v6257 = vunpack.c.h.b16 %v1563
    %v6258 = vunpack.c.l.b16 %v1564
    %v6259 = vunpack.c.h.b16 %v1564
    %v6260 = vunpack.c.l.b16 %v1565
    %v6261 = vunpack.c.h.b16 %v1565
    %v6262 = vunpack.c.l.b16 %v1566
    %v6263 = vunpack.c.h.b16 %v1566
    %v6264 = vunpack.c.l.b16 %v1567
    %v6265 = vunpack.c.h.b16 %v1567
    %v6266 = vunpack.c.l.b16 %v1568
    %v6267 = vunpack.c.h.b16 %v1568
    %v6268 = vunpack.c.l.b16 %v1569
    %v6269 = vunpack.c.h.b16 %v1569
    %v6270 = vunpack.c.l.b16 %v1570
    %v6271 = vunpack.c.h.b16 %v1570
    %v6272 = vunpack.c.l.b16 %v1571
    %v6273 = vunpack.c.h.b16 %v1571
    %v6274 = vunpack.c.l.b16 %v1572
    %v6275 = vunpack.c.h.b16 %v1572
    %v6276 = vunpack.c.l.b16 %v1573
    %v6277 = vunpack.c.h.b16 %v1573
    %v6278 = vunpack.c.l.b16 %v1574
    %v6279 = vunpack.c.h.b16 %v1574
    %v6280 = vunpack.c.l.b16 %v1575
    %v6281 = vunpack.c.h.b16 %v1575
    %v6282 = vunpack.c.l.b16 %v1576
    %v6283 = vunpack.c.h.b16 %v1576
    %v6284 = vunpack.c.l.b16 %v1577
    %v6285 = vunpack.c.h.b16 %v1577
    %v6286 = vunpack.c.l.b16 %v1578
    %v6287 = vunpack.c.h.b16 %v1578
    %v6288 = vunpack.c.l.b16 %v1579
    %v6289 = vunpack.c.h.b16 %v1579
    %v6290 = vunpack.c.l.b16 %v1580
    %v6291 = vunpack.c.h.b16 %v1580
    %v6292 = vunpack.c.l.b16 %v1581
    %v6293 = vunpack.c.h.b16 %v1581
    %v6294 = vunpack.c.l.b16 %v1582
    %v6295 = vunpack.c.h.b16 %v1582
    %v6296 = vunpack.c.l.b16 %v1583
    %v6297 = vunpack.c.h.b16 %v1583
    %v6298 = vunpack.c.l.b16 %v1584
    %v6299 = vunpack.c.h.b16 %v1584
    %v6300 = vunpack.c.l.b16 %v1585
    %v6301 = vunpack.c.h.b16 %v1585
    %v6302 = vunpack.c.l.b16 %v1586
    %v6303 = vunpack.c.h.b16 %v1586
    %v6304 = vunpack.c.l.b16 %v1587
    %v6305 = vunpack.c.h.b16 %v1587
    %v6306 = vunpack.c.l.b16 %v1588
    %v6307 = vunpack.c.h.b16 %v1588
    %v6308 = vunpack.c.l.b16 %v1589
    %v6309 = vunpack.c.h.b16 %v1589
    %v6310 = vunpack.c.l.b16 %v1590
    %v6311 = vunpack.c.h.b16 %v1590
    %v6312 = vunpack.c.l.b16 %v1591
    %v6313 = vunpack.c.h.b16 %v1591
    %v6314 = vunpack.c.l.b16 %v1592
    %v6315 = vunpack.c.h.b16 %v1592
    %v6316 = vunpack.c.l.b16 %v1593
    %v6317 = vunpack.c.h.b16 %v1593
    %v6318 = vunpack.c.l.b16 %v1594
    %v6319 = vunpack.c.h.b16 %v1594
    %v6320 = vunpack.c.l.b16 %v1595
    %v6321 = vunpack.c.h.b16 %v1595
    %v6322 = vunpack.c.l.b16 %v1596
    %v6323 = vunpack.c.h.b16 %v1596
    %v6324 = vunpack.c.l.b16 %v1597
    %v6325 = vunpack.c.h.b16 %v1597
    %v6326 = vunpack.c.l.b16 %v1598
    %v6327 = vunpack.c.h.b16 %v1598
    %v6328 = vunpack.c.l.b16 %v1599
    %v6329 = vunpack.c.h.b16 %v1599
    %v6330 = vunpack.c.l.b16 %v1600
    %v6331 = vunpack.c.h.b16 %v1600
    %v6332 = vunpack.c.l.b16 %v1601
    %v6333 = vunpack.c.h.b16 %v1601
    %v6334 = vunpack.c.l.b16 %v1602
    %v6335 = vunpack.c.h.b16 %v1602
    %v6336 = vunpack.c.l.b16 %v1603
    %v6337 = vunpack.c.h.b16 %v1603
    %v6338 = vpack.c.b16 %v3290, %v3266
    %v6339 = vpack.c.b16 %v3291, %v3267
    %v6340 = vpack.c.b16 %v3292, %v3268
    %v6341 = vpack.c.b16 %v3293, %v3269
    %v6342 = vpack.c.b16 %v3294, %v3270
    %v6343 = vpack.c.b16 %v3295, %v3271
    %v6344 = vpack.c.b16 %v3296, %v3272
    %v6345 = vpack.c.b16 %v3297, %v3273
    %v6346 = vpack.c.b16 %v3298, %v3274
    %v6347 = vpack.c.b16 %v3299, %v3275
    %v6348 = vpack.c.b16 %v3300, %v3276
    %v6349 = vpack.c.b16 %v3301, %v3277
    %v6350 = vpack.c.b16 %v3302, %v3278
    %v6351 = vpack.c.b16 %v3303, %v3279
    %v6352 = vpack.c.b16 %v3304, %v3280
    %v6353 = vpack.c.b16 %v3305, %v3281
    %v6354 = vpack.c.b16 %v3306, %v3282
    %v6355 = vpack.c.b16 %v3307, %v3283
    %v6356 = vpack.c.b16 %v3308, %v3284
    %v6357 = vpack.c.b16 %v3309, %v3285
    %v6358 = vpack.c.b16 %v3310, %v3286
    %v6359 = vpack.c.b16 %v3311, %v3287
    %v6360 = vpack.c.b16 %v3312, %v3288
    %v6361 = vpack.c.b16 %v3313, %v3289
    %v6362 = vpack.c.b16 %v3338, %v3314
    %v6363 = vpack.c.b16 %v3339, %v3315
    %v6364 = vpack.c.b16 %v3340, %v3316
    %v6365 = vpack.c.b16 %v3341, %v3317
    %v6366 = vpack.c.b16 %v3342, %v3318
    %v6367 = vpack.c.b16 %v3343, %v3319
    %v6368 = vpack.c.b16 %v3344, %v3320
    %v6369 = vpack.c.b16 %v3345, %v3321
    %v6370 = vpack.c.b16 %v3346, %v3322
    %v6371 = vpack.c.b16 %v3347, %v3323
    %v6372 = vpack.c.b16 %v3348, %v3324
    %v6373 = vpack.c.b16 %v3349, %v3325
    %v6374 = vpack.c.b16 %v3350, %v3326
    %v6375 = vpack.c.b16 %v3351, %v3327
    %v6376 = vpack.c.b16 %v3352, %v3328
    %v6377 = vpack.c.b16 %v3353, %v3329
    %v6378 = vpack.c.b16 %v3354, %v3330
    %v6379 = vpack.c.b16 %v3355, %v3331
    %v6380 = vpack.c.b16 %v3356, %v3332
    %v6381 = vpack.c.b16 %v3357, %v3333
    %v6382 = vpack.c.b16 %v3358, %v3334
    %v6383 = vpack.c.b16 %v3359, %v3335
    %v6384 = vpack.c.b16 %v3360, %v3336
    %v6385 = vpack.c.b16 %v3361, %v3337
    %v6386 = vpack.c.b16 %v3386, %v3362
    %v6387 = vpack.c.b16 %v3387, %v3363
    %v6388 = vpack.c.b16 %v3388, %v3364
    %v6389 = vpack.c.b16 %v3389, %v3365
    %v6390 = vpack.c.b16 %v3390, %v3366
    %v6391 = vpack.c.b16 %v3391, %v3367
    %v6392 = vpack.c.b16 %v3392, %v3368
    %v6393 = vpack.c.b16 %v3393, %v3369
    %v6394 = vpack.c.b16 %v3394, %v3370
    %v6395 = vpack.c.b16 %v3395, %v3371
    %v6396 = vpack.c.b16 %v3396, %v3372
    %v6397 = vpack.c.b16 %v3397, %v3373
    %v6398 = vpack.c.b16 %v3398, %v3374
    %v6399 = vpack.c.b16 %v3399, %v3375
    %v6400 = vpack.c.b16 %v3400, %v3376
    %v6401 = vpack.c.b16 %v3401, %v3377
    %v6402 = vpack.c.b16 %v3402, %v3378
    %v6403 = vpack.c.b16 %v3403, %v3379
    %v6404 = vpack.c.b16 %v3404, %v3380
    %v6405 = vpack.c.b16 %v3405, %v3381
    %v6406 = vpack.c.b16 %v3406, %v3382
    %v6407 = vpack.c.b16 %v3407, %v3383
    %v6408 = vpack.c.b16 %v3408, %v3384
    %v6409 = vpack.c.b16 %v3409, %v3385
    %v6410 = vpack.c.b16 %v3434, %v3410
    %v6411 = vpack.c.b16 %v3435, %v3411
    %v6412 = vpack.c.b16 %v3436, %v3412
    %v6413 = vpack.c.b16 %v3437, %v3413
    %v6414 = vpack.c.b16 %v3438, %v3414
    %v6415 = vpack.c.b16 %v3439, %v3415
    %v6416 = vpack.c.b16 %v3440, %v3416
    %v6417 = vpack.c.b16 %v3441, %v3417
    %v6418 = vpack.c.b16 %v3442, %v3418
    %v6419 = vpack.c.b16 %v3443, %v3419
    %v6420 = vpack.c.b16 %v3444, %v3420
    %v6421 = vpack.c.b16 %v3445, %v3421
    %v6422 = vpack.c.b16 %v3446, %v3422
    %v6423 = vpack.c.b16 %v3447, %v3423
    %v6424 = vpack.c.b16 %v3448, %v3424
    %v6425 = vpack.c.b16 %v3449, %v3425
    %v6426 = vpack.c.b16 %v3450, %v3426
    %v6427 = vpack.c.b16 %v3451, %v3427
    %v6428 = vpack.c.b16 %v3452, %v3428
    %v6429 = vpack.c.b16 %v3453, %v3429
    %v6430 = vpack.c.b16 %v3454, %v3430
    %v6431 = vpack.c.b16 %v3455, %v3431
    %v6432 = vpack.c.b16 %v3456, %v3432
    %v6433 = vpack.c.b16 %v3457, %v3433
    %v6434 = vpack.c.b16 %v3482, %v3458
    %v6435 = vpack.c.b16 %v3483, %v3459
    %v6436 = vpack.c.b16 %v3484, %v3460
    %v6437 = vpack.c.b16 %v3485, %v3461
    %v6438 = vpack.c.b16 %v3486, %v3462
    %v6439 = vpack.c.b16 %v3487, %v3463
    %v6440 = vpack.c.b16 %v3488, %v3464
    %v6441 = vpack.c.b16 %v3489, %v3465
    %v6442 = vpack.c.b16 %v3490, %v3466
    %v6443 = vpack.c.b16 %v3491, %v3467
    %v6444 = vpack.c.b16 %v3492, %v3468
    %v6445 = vpack.c.b16 %v3493, %v3469
    %v6446 = vpack.c.b16 %v3494, %v3470
    %v6447 = vpack.c.b16 %v3495, %v3471
    %v6448 = vpack.c.b16 %v3496, %v3472
    %v6449 = vpack.c.b16 %v3497, %v3473
    %v6450 = vpack.c.b16 %v3498, %v3474
    %v6451 = vpack.c.b16 %v3499, %v3475
    %v6452 = vpack.c.b16 %v3500, %v3476
    %v6453 = vpack.c.b16 %v3501, %v3477
    %v6454 = vpack.c.b16 %v3502, %v3478
    %v6455 = vpack.c.b16 %v3503, %v3479
    %v6456 = vpack.c.b16 %v3504, %v3480
    %v6457 = vpack.c.b16 %v3505, %v3481
    %v6458 = vpack.c.b16 %v3530, %v3506
    %v6459 = vpack.c.b16 %v3531, %v3507
    %v6460 = vpack.c.b16 %v3532, %v3508
    %v6461 = vpack.c.b16 %v3533, %v3509
    %v6462 = vpack.c.b16 %v3534, %v3510
    %v6463 = vpack.c.b16 %v3535, %v3511
    %v6464 = vpack.c.b16 %v3536, %v3512
    %v6465 = vpack.c.b16 %v3537, %v3513
    %v6466 = vpack.c.b16 %v3538, %v3514
    %v6467 = vpack.c.b16 %v3539, %v3515
    %v6468 = vpack.c.b16 %v3540, %v3516
    %v6469 = vpack.c.b16 %v3541, %v3517
    %v6470 = vpack.c.b16 %v3542, %v3518
    %v6471 = vpack.c.b16 %v3543, %v3519
    %v6472 = vpack.c.b16 %v3544, %v3520
    %v6473 = vpack.c.b16 %v3545, %v3521
    %v6474 = vpack.c.b16 %v3546, %v3522
    %v6475 = vpack.c.b16 %v3547, %v3523
    %v6476 = vpack.c.b16 %v3548, %v3524
    %v6477 = vpack.c.b16 %v3549, %v3525
    %v6478 = vpack.c.b16 %v3550, %v3526
    %v6479 = vpack.c.b16 %v3551, %v3527
    %v6480 = vpack.c.b16 %v3552, %v3528
    %v6481 = vpack.c.b16 %v3553, %v3529
    %v6482 = vpack.c.b16 %v3578, %v3554
    %v6483 = vpack.c.b16 %v3579, %v3555
    %v6484 = vpack.c.b16 %v3580, %v3556
    %v6485 = vpack.c.b16 %v3581, %v3557
    %v6486 = vpack.c.b16 %v3582, %v3558
    %v6487 = vpack.c.b16 %v3583, %v3559
    %v6488 = vpack.c.b16 %v3584, %v3560
    %v6489 = vpack.c.b16 %v3585, %v3561
    %v6490 = vpack.c.b16 %v3586, %v3562
    %v6491 = vpack.c.b16 %v3587, %v3563
    %v6492 = vpack.c.b16 %v3588, %v3564
    %v6493 = vpack.c.b16 %v3589, %v3565
    %v6494 = vpack.c.b16 %v3590, %v3566
    %v6495 = vpack.c.b16 %v3591, %v3567
    %v6496 = vpack.c.b16 %v3592, %v3568
    %v6497 = vpack.c.b16 %v3593, %v3569
    %v6498 = vpack.c.b16 %v3594, %v3570
    %v6499 = vpack.c.b16 %v3595, %v3571
    %v6500 = vpack.c.b16 %v3596, %v3572
    %v6501 = vpack.c.b16 %v3597, %v3573
    %v6502 = vpack.c.b16 %v3598, %v3574
    %v6503 = vpack.c.b16 %v3599, %v3575
    %v6504 = vpack.c.b16 %v3600, %v3576
    %v6505 = vpack.c.b16 %v3601, %v3577
    %v6506 = vpack.c.b16 %v3626, %v3602
    %v6507 = vpack.c.b16 %v3627, %v3603
    %v6508 = vpack.c.b16 %v3628, %v3604
    %v6509 = vpack.c.b16 %v3629, %v3605
    %v6510 = vpack.c.b16 %v3630, %v3606
    %v6511 = vpack.c.b16 %v3631, %v3607
    %v6512 = vpack.c.b16 %v3632, %v3608
    %v6513 = vpack.c.b16 %v3633, %v3609
    %v6514 = vpack.c.b16 %v3634, %v3610
    %v6515 = vpack.c.b16 %v3635, %v3611
    %v6516 = vpack.c.b16 %v3636, %v3612
    %v6517 = vpack.c.b16 %v3637, %v3613
    %v6518 = vpack.c.b16 %v3638, %v3614
    %v6519 = vpack.c.b16 %v3639, %v3615
    %v6520 = vpack.c.b16 %v3640, %v3616
    %v6521 = vpack.c.b16 %v3641, %v3617
    %v6522 = vpack.c.b16 %v3642, %v3618
    %v6523 = vpack.c.b16 %v3643, %v3619
    %v6524 = vpack.c.b16 %v3644, %v3620
    %v6525 = vpack.c.b16 %v3645, %v3621
    %v6526 = vpack.c.b16 %v3646, %v3622
    %v6527 = vpack.c.b16 %v3647, %v3623
    %v6528 = vpack.c.b16 %v3648, %v3624
    %v6529 = vpack.c.b16 %v3649, %v3625
    %v6530 = vpack.c.b16 %v3674, %v3650
    %v6531 = vpack.c.b16 %v3675, %v3651
    %v6532 = vpack.c.b16 %v3676, %v3652
    %v6533 = vpack.c.b16 %v3677, %v3653
    %v6534 = vpack.c.b16 %v3678, %v3654
    %v6535 = vpack.c.b16 %v3679, %v3655
    %v6536 = vpack.c.b16 %v3680, %v3656
    %v6537 = vpack.c.b16 %v3681, %v3657
    %v6538 = vpack.c.b16 %v3682, %v3658
    %v6539 = vpack.c.b16 %v3683, %v3659
    %v6540 = vpack.c.b16 %v3684, %v3660
    %v6541 = vpack.c.b16 %v3685, %v3661
    %v6542 = vpack.c.b16 %v3686, %v3662
    %v6543 = vpack.c.b16 %v3687, %v3663
    %v6544 = vpack.c.b16 %v3688, %v3664
    %v6545 = vpack.c.b16 %v3689, %v3665
    %v6546 = vpack.c.b16 %v3690, %v3666
    %v6547 = vpack.c.b16 %v3691, %v3667
    %v6548 = vpack.c.b16 %v3692, %v3668
    %v6549 = vpack.c.b16 %v3693, %v3669
    %v6550 = vpack.c.b16 %v3694, %v3670
    %v6551 = vpack.c.b16 %v3695, %v3671
    %v6552 = vpack.c.b16 %v3696, %v3672
    %v6553 = vpack.c.b16 %v3697, %v3673
    %v6554 = vpack.c.b16 %v3722, %v3698
    %v6555 = vpack.c.b16 %v3723, %v3699
    %v6556 = vpack.c.b16 %v3724, %v3700
    %v6557 = vpack.c.b16 %v3725, %v3701
    %v6558 = vpack.c.b16 %v3726, %v3702
    %v6559 = vpack.c.b16 %v3727, %v3703
    %v6560 = vpack.c.b16 %v3728, %v3704
    %v6561 = vpack.c.b16 %v3729, %v3705
    %v6562 = vpack.c.b16 %v3730, %v3706
    %v6563 = vpack.c.b16 %v3731, %v3707
    %v6564 = vpack.c.b16 %v3732, %v3708
    %v6565 = vpack.c.b16 %v3733, %v3709
    %v6566 = vpack.c.b16 %v3734, %v3710
    %v6567 = vpack.c.b16 %v3735, %v3711
    %v6568 = vpack.c.b16 %v3736, %v3712
    %v6569 = vpack.c.b16 %v3737, %v3713
    %v6570 = vpack.c.b16 %v3738, %v3714
    %v6571 = vpack.c.b16 %v3739, %v3715
    %v6572 = vpack.c.b16 %v3740, %v3716
    %v6573 = vpack.c.b16 %v3741, %v3717
    %v6574 = vpack.c.b16 %v3742, %v3718
    %v6575 = vpack.c.b16 %v3743, %v3719
    %v6576 = vpack.c.b16 %v3744, %v3720
    %v6577 = vpack.c.b16 %v3745, %v3721
    %v6578 = vpack.c.b16 %v3770, %v3746
    %v6579 = vpack.c.b16 %v3771, %v3747
    %v6580 = vpack.c.b16 %v3772, %v3748
    %v6581 = vpack.c.b16 %v3773, %v3749
    %v6582 = vpack.c.b16 %v3774, %v3750
    %v6583 = vpack.c.b16 %v3775, %v3751
    %v6584 = vpack.c.b16 %v3776, %v3752
    %v6585 = vpack.c.b16 %v3777, %v3753
    %v6586 = vpack.c.b16 %v3778, %v3754
    %v6587 = vpack.c.b16 %v3779, %v3755
    %v6588 = vpack.c.b16 %v3780, %v3756
    %v6589 = vpack.c.b16 %v3781, %v3757
    %v6590 = vpack.c.b16 %v3782, %v3758
    %v6591 = vpack.c.b16 %v3783, %v3759
    %v6592 = vpack.c.b16 %v3784, %v3760
    %v6593 = vpack.c.b16 %v3785, %v3761
    %v6594 = vpack.c.b16 %v3786, %v3762
    %v6595 = vpack.c.b16 %v3787, %v3763
    %v6596 = vpack.c.b16 %v3788, %v3764
    %v6597 = vpack.c.b16 %v3789, %v3765
    %v6598 = vpack.c.b16 %v3790, %v3766
    %v6599 = vpack.c.b16 %v3791, %v3767
    %v6600 = vpack.c.b16 %v3792, %v3768
    %v6601 = vpack.c.b16 %v3793, %v3769
    %v6602 = vpack.c.b16 %v3818, %v3794
    %v6603 = vpack.c.b16 %v3819, %v3795
    %v6604 = vpack.c.b16 %v3820, %v3796
    %v6605 = vpack.c.b16 %v3821, %v3797
    %v6606 = vpack.c.b16 %v3822, %v3798
    %v6607 = vpack.c.b16 %v3823, %v3799
    %v6608 = vpack.c.b16 %v3824, %v3800
    %v6609 = vpack.c.b16 %v3825, %v3801
    %v6610 = vpack.c.b16 %v3826, %v3802
    %v6611 = vpack.c.b16 %v3827, %v3803
    %v6612 = vpack.c.b16 %v3828, %v3804
    %v6613 = vpack.c.b16 %v3829, %v3805
    %v6614 = vpack.c.b16 %v3830, %v3806
    %v6615 = vpack.c.b16 %v3831, %v3807
    %v6616 = vpack.c.b16 %v3832, %v3808
    %v6617 = vpack.c.b16 %v3833, %v3809
    %v6618 = vpack.c.b16 %v3834, %v3810
    %v6619 = vpack.c.b16 %v3835, %v3811
    %v6620 = vpack.c.b16 %v3836, %v3812
    %v6621 = vpack.c.b16 %v3837, %v3813
    %v6622 = vpack.c.b16 %v3838, %v3814
    %v6623 = vpack.c.b16 %v3839, %v3815
    %v6624 = vpack.c.b16 %v3840, %v3816
    %v6625 = vpack.c.b16 %v3841, %v3817
    %v6626 = vpack.c.b16 %v3866, %v3842
    %v6627 = vpack.c.b16 %v3867, %v3843
    %v6628 = vpack.c.b16 %v3868, %v3844
    %v6629 = vpack.c.b16 %v3869, %v3845
    %v6630 = vpack.c.b16 %v3870, %v3846
    %v6631 = vpack.c.b16 %v3871, %v3847
    %v6632 = vpack.c.b16 %v3872, %v3848
    %v6633 = vpack.c.b16 %v3873, %v3849
    %v6634 = vpack.c.b16 %v3874, %v3850
    %v6635 = vpack.c.b16 %v3875, %v3851
    %v6636 = vpack.c.b16 %v3876, %v3852
    %v6637 = vpack.c.b16 %v3877, %v3853
    %v6638 = vpack.c.b16 %v3878, %v3854
    %v6639 = vpack.c.b16 %v3879, %v3855
    %v6640 = vpack.c.b16 %v3880, %v3856
    %v6641 = vpack.c.b16 %v3881, %v3857
    %v6642 = vpack.c.b16 %v3882, %v3858
    %v6643 = vpack.c.b16 %v3883, %v3859
    %v6644 = vpack.c.b16 %v3884, %v3860
    %v6645 = vpack.c.b16 %v3885, %v3861
    %v6646 = vpack.c.b16 %v3886, %v3862
    %v6647 = vpack.c.b16 %v3887, %v3863
    %v6648 = vpack.c.b16 %v3888, %v3864
    %v6649 = vpack.c.b16 %v3889, %v3865
    %v6650 = vpack.c.b16 %v3914, %v3890
    %v6651 = vpack.c.b16 %v3915, %v3891
    %v6652 = vpack.c.b16 %v3916, %v3892
    %v6653 = vpack.c.b16 %v3917, %v3893
    %v6654 = vpack.c.b16 %v3918, %v3894
    %v6655 = vpack.c.b16 %v3919, %v3895
    %v6656 = vpack.c.b16 %v3920, %v3896
    %v6657 = vpack.c.b16 %v3921, %v3897
    %v6658 = vpack.c.b16 %v3922, %v3898
    %v6659 = vpack.c.b16 %v3923, %v3899
    %v6660 = vpack.c.b16 %v3924, %v3900
    %v6661 = vpack.c.b16 %v3925, %v3901
    %v6662 = vpack.c.b16 %v3926, %v3902
    %v6663 = vpack.c.b16 %v3927, %v3903
    %v6664 = vpack.c.b16 %v3928, %v3904
    %v6665 = vpack.c.b16 %v3929, %v3905
    %v6666 = vpack.c.b16 %v3930, %v3906
    %v6667 = vpack.c.b16 %v3931, %v3907
    %v6668 = vpack.c.b16 %v3932, %v3908
    %v6669 = vpack.c.b16 %v3933, %v3909
    %v6670 = vpack.c.b16 %v3934, %v3910
    %v6671 = vpack.c.b16 %v3935, %v3911
    %v6672 = vpack.c.b16 %v3936, %v3912
    %v6673 = vpack.c.b16 %v3937, %v3913
    %v6674 = vpack.c.b16 %v3962, %v3938
    %v6675 = vpack.c.b16 %v3963, %v3939
    %v6676 = vpack.c.b16 %v3964, %v3940
    %v6677 = vpack.c.b16 %v3965, %v3941
    %v6678 = vpack.c.b16 %v3966, %v3942
    %v6679 = vpack.c.b16 %v3967, %v3943
    %v6680 = vpack.c.b16 %v3968, %v3944
    %v6681 = vpack.c.b16 %v3969, %v3945
    %v6682 = vpack.c.b16 %v3970, %v3946
    %v6683 = vpack.c.b16 %v3971, %v3947
    %v6684 = vpack.c.b16 %v3972, %v3948
    %v6685 = vpack.c.b16 %v3973, %v3949
    %v6686 = vpack.c.b16 %v3974, %v3950
    %v6687 = vpack.c.b16 %v3975, %v3951
    %v6688 = vpack.c.b16 %v3976, %v3952
    %v6689 = vpack.c.b16 %v3977, %v3953
    %v6690 = vpack.c.b16 %v3978, %v3954
    %v6691 = vpack.c.b16 %v3979, %v3955
    %v6692 = vpack.c.b16 %v3980, %v3956
    %v6693 = vpack.c.b16 %v3981, %v3957
    %v6694 = vpack.c.b16 %v3982, %v3958
    %v6695 = vpack.c.b16 %v3983, %v3959
    %v6696 = vpack.c.b16 %v3984, %v3960
    %v6697 = vpack.c.b16 %v3985, %v3961
    %v6698 = vpack.c.b16 %v4010, %v3986
    %v6699 = vpack.c.b16 %v4011, %v3987
    %v6700 = vpack.c.b16 %v4012, %v3988
    %v6701 = vpack.c.b16 %v4013, %v3989
    %v6702 = vpack.c.b16 %v4014, %v3990
    %v6703 = vpack.c.b16 %v4015, %v3991
    %v6704 = vpack.c.b16 %v4016, %v3992
    %v6705 = vpack.c.b16 %v4017, %v3993
    %v6706 = vpack.c.b16 %v4018, %v3994
    %v6707 = vpack.c.b16 %v4019, %v3995
    %v6708 = vpack.c.b16 %v4020, %v3996
    %v6709 = vpack.c.b16 %v4021, %v3997
    %v6710 = vpack.c.b16 %v4022, %v3998
    %v6711 = vpack.c.b16 %v4023, %v3999
    %v6712 = vpack.c.b16 %v4024, %v4000
    %v6713 = vpack.c.b16 %v4025, %v4001
    %v6714 = vpack.c.b16 %v4026, %v4002
    %v6715 = vpack.c.b16 %v4027, %v4003
    %v6716 = vpack.c.b16 %v4028, %v4004
    %v6717 = vpack.c.b16 %v4029, %v4005
    %v6718 = vpack.c.b16 %v4030, %v4006
    %v6719 = vpack.c.b16 %v4031, %v4007
    %v6720 = vpack.c.b16 %v4032, %v4008
    %v6721 = vpack.c.b16 %v4033, %v4009
    %v6722 = vpack.c.b16 %v4058, %v4034
    %v6723 = vpack.c.b16 %v4059, %v4035
    %v6724 = vpack.c.b16 %v4060, %v4036
    %v6725 = vpack.c.b16 %v4061, %v4037
    %v6726 = vpack.c.b16 %v4062, %v4038
    %v6727 = vpack.c.b16 %v4063, %v4039
    %v6728 = vpack.c.b16 %v4064, %v4040
    %v6729 = vpack.c.b16 %v4065, %v4041
    %v6730 = vpack.c.b16 %v4066, %v4042
    %v6731 = vpack.c.b16 %v4067, %v4043
    %v6732 = vpack.c.b16 %v4068, %v4044
    %v6733 = vpack.c.b16 %v4069, %v4045
    %v6734 = vpack.c.b16 %v4070, %v4046
    %v6735 = vpack.c.b16 %v4071, %v4047
    %v6736 = vpack.c.b16 %v4072, %v4048
    %v6737 = vpack.c.b16 %v4073, %v4049
    %v6738 = vpack.c.b16 %v4074, %v4050
    %v6739 = vpack.c.b16 %v4075, %v4051
    %v6740 = vpack.c.b16 %v4076, %v4052
    %v6741 = vpack.c.b16 %v4077, %v4053
    %v6742 = vpack.c.b16 %v4078, %v4054
    %v6743 = vpack.c.b16 %v4079, %v4055
    %v6744 = vpack.c.b16 %v4080, %v4056
    %v6745 = vpack.c.b16 %v4081, %v4057
    %v6746 = vpack.c.b16 %v4106, %v4082
    %v6747 = vpack.c.b16 %v4107, %v4083
    %v6748 = vpack.c.b16 %v4108, %v4084
    %v6749 = vpack.c.b16 %v4109, %v4085
    %v6750 = vpack.c.b16 %v4110, %v4086
    %v6751 = vpack.c.b16 %v4111, %v4087
    %v6752 = vpack.c.b16 %v4112, %v4088
    %v6753 = vpack.c.b16 %v4113, %v4089
    %v6754 = vpack.c.b16 %v4114, %v4090
    %v6755 = vpack.c.b16 %v4115, %v4091
    %v6756 = vpack.c.b16 %v4116, %v4092
    %v6757 = vpack.c.b16 %v4117, %v4093
    %v6758 = vpack.c.b16 %v4118, %v4094
    %v6759 = vpack.c.b16 %v4119, %v4095
    %v6760 = vpack.c.b16 %v4120, %v4096
    %v6761 = vpack.c.b16 %v4121, %v4097
    %v6762 = vpack.c.b16 %v4122, %v4098
    %v6763 = vpack.c.b16 %v4123, %v4099
    %v6764 = vpack.c.b16 %v4124, %v4100
    %v6765 = vpack.c.b16 %v4125, %v4101
    %v6766 = vpack.c.b16 %v4126, %v4102
    %v6767 = vpack.c.b16 %v4127, %v4103
    %v6768 = vpack.c.b16 %v4128, %v4104
    %v6769 = vpack.c.b16 %v4129, %v4105
    %v6770 = vpack.c.b16 %v4154, %v4130
    %v6771 = vpack.c.b16 %v4155, %v4131
    %v6772 = vpack.c.b16 %v4156, %v4132
    %v6773 = vpack.c.b16 %v4157, %v4133
    %v6774 = vpack.c.b16 %v4158, %v4134
    %v6775 = vpack.c.b16 %v4159, %v4135
    %v6776 = vpack.c.b16 %v4160, %v4136
    %v6777 = vpack.c.b16 %v4161, %v4137
    %v6778 = vpack.c.b16 %v4162, %v4138
    %v6779 = vpack.c.b16 %v4163, %v4139
    %v6780 = vpack.c.b16 %v4164, %v4140
    %v6781 = vpack.c.b16 %v4165, %v4141
    %v6782 = vpack.c.b16 %v4166, %v4142
    %v6783 = vpack.c.b16 %v4167, %v4143
    %v6784 = vpack.c.b16 %v4168, %v4144
    %v6785 = vpack.c.b16 %v4169, %v4145
    %v6786 = vpack.c.b16 %v4170, %v4146
    %v6787 = vpack.c.b16 %v4171, %v4147
    %v6788 = vpack.c.b16 %v4172, %v4148
    %v6789 = vpack.c.b16 %v4173, %v4149
    %v6790 = vpack.c.b16 %v4174, %v4150
    %v6791 = vpack.c.b16 %v4175, %v4151
    %v6792 = vpack.c.b16 %v4176, %v4152
    %v6793 = vpack.c.b16 %v4177, %v4153
    %v6794 = vpack.c.b16 %v4202, %v4178
    %v6795 = vpack.c.b16 %v4203, %v4179
    %v6796 = vpack.c.b16 %v4204, %v4180
    %v6797 = vpack.c.b16 %v4205, %v4181
    %v6798 = vpack.c.b16 %v4206, %v4182
    %v6799 = vpack.c.b16 %v4207, %v4183
    %v6800 = vpack.c.b16 %v4208, %v4184
    %v6801 = vpack.c.b16 %v4209, %v4185
    %v6802 = vpack.c.b16 %v4210, %v4186
    %v6803 = vpack.c.b16 %v4211, %v4187
    %v6804 = vpack.c.b16 %v4212, %v4188
    %v6805 = vpack.c.b16 %v4213, %v4189
    %v6806 = vpack.c.b16 %v4214, %v4190
    %v6807 = vpack.c.b16 %v4215, %v4191
    %v6808 = vpack.c.b16 %v4216, %v4192
    %v6809 = vpack.c.b16 %v4217, %v4193
    %v6810 = vpack.c.b16 %v4218, %v4194
    %v6811 = vpack.c.b16 %v4219, %v4195
    %v6812 = vpack.c.b16 %v4220, %v4196
    %v6813 = vpack.c.b16 %v4221, %v4197
    %v6814 = vpack.c.b16 %v4222, %v4198
    %v6815 = vpack.c.b16 %v4223, %v4199
    %v6816 = vpack.c.b16 %v4224, %v4200
    %v6817 = vpack.c.b16 %v4225, %v4201
    %v6818 = vpack.c.b16 %v4250, %v4226
    %v6819 = vpack.c.b16 %v4251, %v4227
    %v6820 = vpack.c.b16 %v4252, %v4228
    %v6821 = vpack.c.b16 %v4253, %v4229
    %v6822 = vpack.c.b16 %v4254, %v4230
    %v6823 = vpack.c.b16 %v4255, %v4231
    %v6824 = vpack.c.b16 %v4256, %v4232
    %v6825 = vpack.c.b16 %v4257, %v4233
    %v6826 = vpack.c.b16 %v4258, %v4234
    %v6827 = vpack.c.b16 %v4259, %v4235
    %v6828 = vpack.c.b16 %v4260, %v4236
    %v6829 = vpack.c.b16 %v4261, %v4237
    %v6830 = vpack.c.b16 %v4262, %v4238
    %v6831 = vpack.c.b16 %v4263, %v4239
    %v6832 = vpack.c.b16 %v4264, %v4240
    %v6833 = vpack.c.b16 %v4265, %v4241
    %v6834 = vpack.c.b16 %v4266, %v4242
    %v6835 = vpack.c.b16 %v4267, %v4243
    %v6836 = vpack.c.b16 %v4268, %v4244
    %v6837 = vpack.c.b16 %v4269, %v4245
    %v6838 = vpack.c.b16 %v4270, %v4246
    %v6839 = vpack.c.b16 %v4271, %v4247
    %v6840 = vpack.c.b16 %v4272, %v4248
    %v6841 = vpack.c.b16 %v4273, %v4249
    %v6842 = vpack.c.b16 %v4298, %v4274
    %v6843 = vpack.c.b16 %v4299, %v4275
    %v6844 = vpack.c.b16 %v4300, %v4276
    %v6845 = vpack.c.b16 %v4301, %v4277
    %v6846 = vpack.c.b16 %v4302, %v4278
    %v6847 = vpack.c.b16 %v4303, %v4279
    %v6848 = vpack.c.b16 %v4304, %v4280
    %v6849 = vpack.c.b16 %v4305, %v4281
    %v6850 = vpack.c.b16 %v4306, %v4282
    %v6851 = vpack.c.b16 %v4307, %v4283
    %v6852 = vpack.c.b16 %v4308, %v4284
    %v6853 = vpack.c.b16 %v4309, %v4285
    %v6854 = vpack.c.b16 %v4310, %v4286
    %v6855 = vpack.c.b16 %v4311, %v4287
    %v6856 = vpack.c.b16 %v4312, %v4288
    %v6857 = vpack.c.b16 %v4313, %v4289
    %v6858 = vpack.c.b16 %v4314, %v4290
    %v6859 = vpack.c.b16 %v4315, %v4291
    %v6860 = vpack.c.b16 %v4316, %v4292
    %v6861 = vpack.c.b16 %v4317, %v4293
    %v6862 = vpack.c.b16 %v4318, %v4294
    %v6863 = vpack.c.b16 %v4319, %v4295
    %v6864 = vpack.c.b16 %v4320, %v4296
    %v6865 = vpack.c.b16 %v4321, %v4297
    %v6866 = vpack.c.b16 %v4346, %v4322
    %v6867 = vpack.c.b16 %v4347, %v4323
    %v6868 = vpack.c.b16 %v4348, %v4324
    %v6869 = vpack.c.b16 %v4349, %v4325
    %v6870 = vpack.c.b16 %v4350, %v4326
    %v6871 = vpack.c.b16 %v4351, %v4327
    %v6872 = vpack.c.b16 %v4352, %v4328
    %v6873 = vpack.c.b16 %v4353, %v4329
    %v6874 = vpack.c.b16 %v4354, %v4330
    %v6875 = vpack.c.b16 %v4355, %v4331
    %v6876 = vpack.c.b16 %v4356, %v4332
    %v6877 = vpack.c.b16 %v4357, %v4333
    %v6878 = vpack.c.b16 %v4358, %v4334
    %v6879 = vpack.c.b16 %v4359, %v4335
    %v6880 = vpack.c.b16 %v4360, %v4336
    %v6881 = vpack.c.b16 %v4361, %v4337
    %v6882 = vpack.c.b16 %v4362, %v4338
    %v6883 = vpack.c.b16 %v4363, %v4339
    %v6884 = vpack.c.b16 %v4364, %v4340
    %v6885 = vpack.c.b16 %v4365, %v4341
    %v6886 = vpack.c.b16 %v4366, %v4342
    %v6887 = vpack.c.b16 %v4367, %v4343
    %v6888 = vpack.c.b16 %v4368, %v4344
    %v6889 = vpack.c.b16 %v4369, %v4345
    %v6890 = vpack.c.b16 %v4394, %v4370
    %v6891 = vpack.c.b16 %v4395, %v4371
    %v6892 = vpack.c.b16 %v4396, %v4372
    %v6893 = vpack.c.b16 %v4397, %v4373
    %v6894 = vpack.c.b16 %v4398, %v4374
    %v6895 = vpack.c.b16 %v4399, %v4375
    %v6896 = vpack.c.b16 %v4400, %v4376
    %v6897 = vpack.c.b16 %v4401, %v4377
    %v6898 = vpack.c.b16 %v4402, %v4378
    %v6899 = vpack.c.b16 %v4403, %v4379
    %v6900 = vpack.c.b16 %v4404, %v4380
    %v6901 = vpack.c.b16 %v4405, %v4381
    %v6902 = vpack.c.b16 %v4406, %v4382
    %v6903 = vpack.c.b16 %v4407, %v4383
    %v6904 = vpack.c.b16 %v4408, %v4384
    %v6905 = vpack.c.b16 %v4409, %v4385
    %v6906 = vpack.c.b16 %v4410, %v4386
    %v6907 = vpack.c.b16 %v4411, %v4387
    %v6908 = vpack.c.b16 %v4412, %v4388
    %v6909 = vpack.c.b16 %v4413, %v4389
    %v6910 = vpack.c.b16 %v4414, %v4390
    %v6911 = vpack.c.b16 %v4415, %v4391
    %v6912 = vpack.c.b16 %v4416, %v4392
    %v6913 = vpack.c.b16 %v4417, %v4393
    %v6914 = vpack.c.b16 %v4442, %v4418
    %v6915 = vpack.c.b16 %v4443, %v4419
    %v6916 = vpack.c.b16 %v4444, %v4420
    %v6917 = vpack.c.b16 %v4445, %v4421
    %v6918 = vpack.c.b16 %v4446, %v4422
    %v6919 = vpack.c.b16 %v4447, %v4423
    %v6920 = vpack.c.b16 %v4448, %v4424
    %v6921 = vpack.c.b16 %v4449, %v4425
    %v6922 = vpack.c.b16 %v4450, %v4426
    %v6923 = vpack.c.b16 %v4451, %v4427
    %v6924 = vpack.c.b16 %v4452, %v4428
    %v6925 = vpack.c.b16 %v4453, %v4429
    %v6926 = vpack.c.b16 %v4454, %v4430
    %v6927 = vpack.c.b16 %v4455, %v4431
    %v6928 = vpack.c.b16 %v4456, %v4432
    %v6929 = vpack.c.b16 %v4457, %v4433
    %v6930 = vpack.c.b16 %v4458, %v4434
    %v6931 = vpack.c.b16 %v4459, %v4435
    %v6932 = vpack.c.b16 %v4460, %v4436
    %v6933 = vpack.c.b16 %v4461, %v4437
    %v6934 = vpack.c.b16 %v4462, %v4438
    %v6935 = vpack.c.b16 %v4463, %v4439
    %v6936 = vpack.c.b16 %v4464, %v4440
    %v6937 = vpack.c.b16 %v4465, %v4441
    %v6938 = vpack.c.b16 %v4490, %v4466
    %v6939 = vpack.c.b16 %v4491, %v4467
    %v6940 = vpack.c.b16 %v4492, %v4468
    %v6941 = vpack.c.b16 %v4493, %v4469
    %v6942 = vpack.c.b16 %v4494, %v4470
    %v6943 = vpack.c.b16 %v4495, %v4471
    %v6944 = vpack.c.b16 %v4496, %v4472
    %v6945 = vpack.c.b16 %v4497, %v4473
    %v6946 = vpack.c.b16 %v4498, %v4474
    %v6947 = vpack.c.b16 %v4499, %v4475
    %v6948 = vpack.c.b16 %v4500, %v4476
    %v6949 = vpack.c.b16 %v4501, %v4477
    %v6950 = vpack.c.b16 %v4502, %v4478
    %v6951 = vpack.c.b16 %v4503, %v4479
    %v6952 = vpack.c.b16 %v4504, %v4480
    %v6953 = vpack.c.b16 %v4505, %v4481
    %v6954 = vpack.c.b16 %v4506, %v4482
    %v6955 = vpack.c.b16 %v4507, %v4483
    %v6956 = vpack.c.b16 %v4508, %v4484
    %v6957 = vpack.c.b16 %v4509, %v4485
    %v6958 = vpack.c.b16 %v4510, %v4486
    %v6959 = vpack.c.b16 %v4511, %v4487
    %v6960 = vpack.c.b16 %v4512, %v4488
    %v6961 = vpack.c.b16 %v4513, %v4489
    %v6962 = vpack.c.b16 %v4538, %v4514
    %v6963 = vpack.c.b16 %v4539, %v4515
    %v6964 = vpack.c.b16 %v4540, %v4516
    %v6965 = vpack.c.b16 %v4541, %v4517
    %v6966 = vpack.c.b16 %v4542, %v4518
    %v6967 = vpack.c.b16 %v4543, %v4519
    %v6968 = vpack.c.b16 %v4544, %v4520
    %v6969 = vpack.c.b16 %v4545, %v4521
    %v6970 = vpack.c.b16 %v4546, %v4522
    %v6971 = vpack.c.b16 %v4547, %v4523
    %v6972 = vpack.c.b16 %v4548, %v4524
    %v6973 = vpack.c.b16 %v4549, %v4525
    %v6974 = vpack.c.b16 %v4550, %v4526
    %v6975 = vpack.c.b16 %v4551, %v4527
    %v6976 = vpack.c.b16 %v4552, %v4528
    %v6977 = vpack.c.b16 %v4553, %v4529
    %v6978 = vpack.c.b16 %v4554, %v4530
    %v6979 = vpack.c.b16 %v4555, %v4531
    %v6980 = vpack.c.b16 %v4556, %v4532
    %v6981 = vpack.c.b16 %v4557, %v4533
    %v6982 = vpack.c.b16 %v4558, %v4534
    %v6983 = vpack.c.b16 %v4559, %v4535
    %v6984 = vpack.c.b16 %v4560, %v4536
    %v6985 = vpack.c.b16 %v4561, %v4537
    %v6986 = vpack.c.b16 %v4586, %v4562
    %v6987 = vpack.c.b16 %v4587, %v4563
    %v6988 = vpack.c.b16 %v4588, %v4564
    %v6989 = vpack.c.b16 %v4589, %v4565
    %v6990 = vpack.c.b16 %v4590, %v4566
    %v6991 = vpack.c.b16 %v4591, %v4567
    %v6992 = vpack.c.b16 %v4592, %v4568
    %v6993 = vpack.c.b16 %v4593, %v4569
    %v6994 = vpack.c.b16 %v4594, %v4570
    %v6995 = vpack.c.b16 %v4595, %v4571
    %v6996 = vpack.c.b16 %v4596, %v4572
    %v6997 = vpack.c.b16 %v4597, %v4573
    %v6998 = vpack.c.b16 %v4598, %v4574
    %v6999 = vpack.c.b16 %v4599, %v4575
    %v7000 = vpack.c.b16 %v4600, %v4576
    %v7001 = vpack.c.b16 %v4601, %v4577
    %v7002 = vpack.c.b16 %v4602, %v4578
    %v7003 = vpack.c.b16 %v4603, %v4579
    %v7004 = vpack.c.b16 %v4604, %v4580
    %v7005 = vpack.c.b16 %v4605, %v4581
    %v7006 = vpack.c.b16 %v4606, %v4582
    %v7007 = vpack.c.b16 %v4607, %v4583
    %v7008 = vpack.c.b16 %v4608, %v4584
    %v7009 = vpack.c.b16 %v4609, %v4585
    %v7010 = vpack.c.b16 %v4634, %v4610
    %v7011 = vpack.c.b16 %v4635, %v4611
    %v7012 = vpack.c.b16 %v4636, %v4612
    %v7013 = vpack.c.b16 %v4637, %v4613
    %v7014 = vpack.c.b16 %v4638, %v4614
    %v7015 = vpack.c.b16 %v4639, %v4615
    %v7016 = vpack.c.b16 %v4640, %v4616
    %v7017 = vpack.c.b16 %v4641, %v4617
    %v7018 = vpack.c.b16 %v4642, %v4618
    %v7019 = vpack.c.b16 %v4643, %v4619
    %v7020 = vpack.c.b16 %v4644, %v4620
    %v7021 = vpack.c.b16 %v4645, %v4621
    %v7022 = vpack.c.b16 %v4646, %v4622
    %v7023 = vpack.c.b16 %v4647, %v4623
    %v7024 = vpack.c.b16 %v4648, %v4624
    %v7025 = vpack.c.b16 %v4649, %v4625
    %v7026 = vpack.c.b16 %v4650, %v4626
    %v7027 = vpack.c.b16 %v4651, %v4627
    %v7028 = vpack.c.b16 %v4652, %v4628
    %v7029 = vpack.c.b16 %v4653, %v4629
    %v7030 = vpack.c.b16 %v4654, %v4630
    %v7031 = vpack.c.b16 %v4655, %v4631
    %v7032 = vpack.c.b16 %v4656, %v4632
    %v7033 = vpack.c.b16 %v4657, %v4633
    %v7034 = vpack.c.b16 %v4682, %v4658
    %v7035 = vpack.c.b16 %v4683, %v4659
    %v7036 = vpack.c.b16 %v4684, %v4660
    %v7037 = vpack.c.b16 %v4685, %v4661
    %v7038 = vpack.c.b16 %v4686, %v4662
    %v7039 = vpack.c.b16 %v4687, %v4663
    %v7040 = vpack.c.b16 %v4688, %v4664
    %v7041 = vpack.c.b16 %v4689, %v4665
    %v7042 = vpack.c.b16 %v4690, %v4666
    %v7043 = vpack.c.b16 %v4691, %v4667
    %v7044 = vpack.c.b16 %v4692, %v4668
    %v7045 = vpack.c.b16 %v4693, %v4669
    %v7046 = vpack.c.b16 %v4694, %v4670
    %v7047 = vpack.c.b16 %v4695, %v4671
    %v7048 = vpack.c.b16 %v4696, %v4672
    %v7049 = vpack.c.b16 %v4697, %v4673
    %v7050 = vpack.c.b16 %v4698, %v4674
    %v7051 = vpack.c.b16 %v4699, %v4675
    %v7052 = vpack.c.b16 %v4700, %v4676
    %v7053 = vpack.c.b16 %v4701, %v4677
    %v7054 = vpack.c.b16 %v4702, %v4678
    %v7055 = vpack.c.b16 %v4703, %v4679
    %v7056 = vpack.c.b16 %v4704, %v4680
    %v7057 = vpack.c.b16 %v4705, %v4681
    %v7058 = vpack.c.b16 %v4730, %v4706
    %v7059 = vpack.c.b16 %v4731, %v4707
    %v7060 = vpack.c.b16 %v4732, %v4708
    %v7061 = vpack.c.b16 %v4733, %v4709
    %v7062 = vpack.c.b16 %v4734, %v4710
    %v7063 = vpack.c.b16 %v4735, %v4711
    %v7064 = vpack.c.b16 %v4736, %v4712
    %v7065 = vpack.c.b16 %v4737, %v4713
    %v7066 = vpack.c.b16 %v4738, %v4714
    %v7067 = vpack.c.b16 %v4739, %v4715
    %v7068 = vpack.c.b16 %v4740, %v4716
    %v7069 = vpack.c.b16 %v4741, %v4717
    %v7070 = vpack.c.b16 %v4742, %v4718
    %v7071 = vpack.c.b16 %v4743, %v4719
    %v7072 = vpack.c.b16 %v4744, %v4720
    %v7073 = vpack.c.b16 %v4745, %v4721
    %v7074 = vpack.c.b16 %v4746, %v4722
    %v7075 = vpack.c.b16 %v4747, %v4723
    %v7076 = vpack.c.b16 %v4748, %v4724
    %v7077 = vpack.c.b16 %v4749, %v4725
    %v7078 = vpack.c.b16 %v4750, %v4726
    %v7079 = vpack.c.b16 %v4751, %v4727
    %v7080 = vpack.c.b16 %v4752, %v4728
    %v7081 = vpack.c.b16 %v4753, %v4729
    %v7082 = vpack.c.b16 %v4778, %v4754
    %v7083 = vpack.c.b16 %v4779, %v4755
    %v7084 = vpack.c.b16 %v4780, %v4756
    %v7085 = vpack.c.b16 %v4781, %v4757
    %v7086 = vpack.c.b16 %v4782, %v4758
    %v7087 = vpack.c.b16 %v4783, %v4759
    %v7088 = vpack.c.b16 %v4784, %v4760
    %v7089 = vpack.c.b16 %v4785, %v4761
    %v7090 = vpack.c.b16 %v4786, %v4762
    %v7091 = vpack.c.b16 %v4787, %v4763
    %v7092 = vpack.c.b16 %v4788, %v4764
    %v7093 = vpack.c.b16 %v4789, %v4765
    %v7094 = vpack.c.b16 %v4790, %v4766
    %v7095 = vpack.c.b16 %v4791, %v4767
    %v7096 = vpack.c.b16 %v4792, %v4768
    %v7097 = vpack.c.b16 %v4793, %v4769
    %v7098 = vpack.c.b16 %v4794, %v4770
    %v7099 = vpack.c.b16 %v4795, %v4771
    %v7100 = vpack.c.b16 %v4796, %v4772
    %v7101 = vpack.c.b16 %v4797, %v4773
    %v7102 = vpack.c.b16 %v4798, %v4774
    %v7103 = vpack.c.b16 %v4799, %v4775
    %v7104 = vpack.c.b16 %v4800, %v4776
    %v7105 = vpack.c.b16 %v4801, %v4777
    %v7106 = vpack.c.b16 %v4826, %v4802
    %v7107 = vpack.c.b16 %v4827, %v4803
    %v7108 = vpack.c.b16 %v4828, %v4804
    %v7109 = vpack.c.b16 %v4829, %v4805
    %v7110 = vpack.c.b16 %v4830, %v4806
    %v7111 = vpack.c.b16 %v4831, %v4807
    %v7112 = vpack.c.b16 %v4832, %v4808
    %v7113 = vpack.c.b16 %v4833, %v4809
    %v7114 = vpack.c.b16 %v4834, %v4810
    %v7115 = vpack.c.b16 %v4835, %v4811
    %v7116 = vpack.c.b16 %v4836, %v4812
    %v7117 = vpack.c.b16 %v4837, %v4813
    %v7118 = vpack.c.b16 %v4838, %v4814
    %v7119 = vpack.c.b16 %v4839, %v4815
    %v7120 = vpack.c.b16 %v4840, %v4816
    %v7121 = vpack.c.b16 %v4841, %v4817
    %v7122 = vpack.c.b16 %v4842, %v4818
    %v7123 = vpack.c.b16 %v4843, %v4819
    %v7124 = vpack.c.b16 %v4844, %v4820
    %v7125 = vpack.c.b16 %v4845, %v4821
    %v7126 = vpack.c.b16 %v4846, %v4822
    %v7127 = vpack.c.b16 %v4847, %v4823
    %v7128 = vpack.c.b16 %v4848, %v4824
    %v7129 = vpack.c.b16 %v4849, %v4825
    %v7130 = vpack.c.b16 %v4874, %v4850
    %v7131 = vpack.c.b16 %v4875, %v4851
    %v7132 = vpack.c.b16 %v4876, %v4852
    %v7133 = vpack.c.b16 %v4877, %v4853
    %v7134 = vpack.c.b16 %v4878, %v4854
    %v7135 = vpack.c.b16 %v4879, %v4855
    %v7136 = vpack.c.b16 %v4880, %v4856
    %v7137 = vpack.c.b16 %v4881, %v4857
    %v7138 = vpack.c.b16 %v4882, %v4858
    %v7139 = vpack.c.b16 %v4883, %v4859
    %v7140 = vpack.c.b16 %v4884, %v4860
    %v7141 = vpack.c.b16 %v4885, %v4861
    %v7142 = vpack.c.b16 %v4886, %v4862
    %v7143 = vpack.c.b16 %v4887, %v4863
    %v7144 = vpack.c.b16 %v4888, %v4864
    %v7145 = vpack.c.b16 %v4889, %v4865
    %v7146 = vpack.c.b16 %v4890, %v4866
    %v7147 = vpack.c.b16 %v4891, %v4867
    %v7148 = vpack.c.b16 %v4892, %v4868
    %v7149 = vpack.c.b16 %v4893, %v4869
    %v7150 = vpack.c.b16 %v4894, %v4870
    %v7151 = vpack.c.b16 %v4895, %v4871
    %v7152 = vpack.c.b16 %v4896, %v4872
    %v7153 = vpack.c.b16 %v4897, %v4873
    %v7154 = vpack.c.b16 %v4922, %v4898
    %v7155 = vpack.c.b16 %v4923, %v4899
    %v7156 = vpack.c.b16 %v4924, %v4900
    %v7157 = vpack.c.b16 %v4925, %v4901
    %v7158 = vpack.c.b16 %v4926, %v4902
    %v7159 = vpack.c.b16 %v4927, %v4903
    %v7160 = vpack.c.b16 %v4928, %v4904
    %v7161 = vpack.c.b16 %v4929, %v4905
    %v7162 = vpack.c.b16 %v4930, %v4906
    %v7163 = vpack.c.b16 %v4931, %v4907
    %v7164 = vpack.c.b16 %v4932, %v4908
    %v7165 = vpack.c.b16 %v4933, %v4909
    %v7166 = vpack.c.b16 %v4934, %v4910
    %v7167 = vpack.c.b16 %v4935, %v4911
    %v7168 = vpack.c.b16 %v4936, %v4912
    %v7169 = vpack.c.b16 %v4937, %v4913
    %v7170 = vpack.c.b16 %v4938, %v4914
    %v7171 = vpack.c.b16 %v4939, %v4915
    %v7172 = vpack.c.b16 %v4940, %v4916
    %v7173 = vpack.c.b16 %v4941, %v4917
    %v7174 = vpack.c.b16 %v4942, %v4918
    %v7175 = vpack.c.b16 %v4943, %v4919
    %v7176 = vpack.c.b16 %v4944, %v4920
    %v7177 = vpack.c.b16 %v4945, %v4921
    %v7178 = vpack.c.b16 %v4970, %v4946
    %v7179 = vpack.c.b16 %v4971, %v4947
    %v7180 = vpack.c.b16 %v4972, %v4948
    %v7181 = vpack.c.b16 %v4973, %v4949
    %v7182 = vpack.c.b16 %v4974, %v4950
    %v7183 = vpack.c.b16 %v4975, %v4951
    %v7184 = vpack.c.b16 %v4976, %v4952
    %v7185 = vpack.c.b16 %v4977, %v4953
    %v7186 = vpack.c.b16 %v4978, %v4954
    %v7187 = vpack.c.b16 %v4979, %v4955
    %v7188 = vpack.c.b16 %v4980, %v4956
    %v7189 = vpack.c.b16 %v4981, %v4957
    %v7190 = vpack.c.b16 %v4982, %v4958
    %v7191 = vpack.c.b16 %v4983, %v4959
    %v7192 = vpack.c.b16 %v4984, %v4960
    %v7193 = vpack.c.b16 %v4985, %v4961
    %v7194 = vpack.c.b16 %v4986, %v4962
    %v7195 = vpack.c.b16 %v4987, %v4963
    %v7196 = vpack.c.b16 %v4988, %v4964
    %v7197 = vpack.c.b16 %v4989, %v4965
    %v7198 = vpack.c.b16 %v4990, %v4966
    %v7199 = vpack.c.b16 %v4991, %v4967
    %v7200 = vpack.c.b16 %v4992, %v4968
    %v7201 = vpack.c.b16 %v4993, %v4969
    %v7202 = vpack.c.b16 %v5018, %v4994
    %v7203 = vpack.c.b16 %v5019, %v4995
    %v7204 = vpack.c.b16 %v5020, %v4996
    %v7205 = vpack.c.b16 %v5021, %v4997
    %v7206 = vpack.c.b16 %v5022, %v4998
    %v7207 = vpack.c.b16 %v5023, %v4999
    %v7208 = vpack.c.b16 %v5024, %v5000
    %v7209 = vpack.c.b16 %v5025, %v5001
    %v7210 = vpack.c.b16 %v5026, %v5002
    %v7211 = vpack.c.b16 %v5027, %v5003
    %v7212 = vpack.c.b16 %v5028, %v5004
    %v7213 = vpack.c.b16 %v5029, %v5005
    %v7214 = vpack.c.b16 %v5030, %v5006
    %v7215 = vpack.c.b16 %v5031, %v5007
    %v7216 = vpack.c.b16 %v5032, %v5008
    %v7217 = vpack.c.b16 %v5033, %v5009
    %v7218 = vpack.c.b16 %v5034, %v5010
    %v7219 = vpack.c.b16 %v5035, %v5011
    %v7220 = vpack.c.b16 %v5036, %v5012
    %v7221 = vpack.c.b16 %v5037, %v5013
    %v7222 = vpack.c.b16 %v5038, %v5014
    %v7223 = vpack.c.b16 %v5039, %v5015
    %v7224 = vpack.c.b16 %v5040, %v5016
    %v7225 = vpack.c.b16 %v5041, %v5017
    %v7226 = vpack.c.b16 %v5066, %v5042
    %v7227 = vpack.c.b16 %v5067, %v5043
    %v7228 = vpack.c.b16 %v5068, %v5044
    %v7229 = vpack.c.b16 %v5069, %v5045
    %v7230 = vpack.c.b16 %v5070, %v5046
    %v7231 = vpack.c.b16 %v5071, %v5047
    %v7232 = vpack.c.b16 %v5072, %v5048
    %v7233 = vpack.c.b16 %v5073, %v5049
    %v7234 = vpack.c.b16 %v5074, %v5050
    %v7235 = vpack.c.b16 %v5075, %v5051
    %v7236 = vpack.c.b16 %v5076, %v5052
    %v7237 = vpack.c.b16 %v5077, %v5053
    %v7238 = vpack.c.b16 %v5078, %v5054
    %v7239 = vpack.c.b16 %v5079, %v5055
    %v7240 = vpack.c.b16 %v5080, %v5056
    %v7241 = vpack.c.b16 %v5081, %v5057
    %v7242 = vpack.c.b16 %v5082, %v5058
    %v7243 = vpack.c.b16 %v5083, %v5059
    %v7244 = vpack.c.b16 %v5084, %v5060
    %v7245 = vpack.c.b16 %v5085, %v5061
    %v7246 = vpack.c.b16 %v5086, %v5062
    %v7247 = vpack.c.b16 %v5087, %v5063
    %v7248 = vpack.c.b16 %v5088, %v5064
    %v7249 = vpack.c.b16 %v5089, %v5065
    %v7250 = vpack.c.b16 %v5114, %v5090
    %v7251 = vpack.c.b16 %v5115, %v5091
    %v7252 = vpack.c.b16 %v5116, %v5092
    %v7253 = vpack.c.b16 %v5117, %v5093
    %v7254 = vpack.c.b16 %v5118, %v5094
    %v7255 = vpack.c.b16 %v5119, %v5095
    %v7256 = vpack.c.b16 %v5120, %v5096
    %v7257 = vpack.c.b16 %v5121, %v5097
    %v7258 = vpack.c.b16 %v5122, %v5098
    %v7259 = vpack.c.b16 %v5123, %v5099
    %v7260 = vpack.c.b16 %v5124, %v5100
    %v7261 = vpack.c.b16 %v5125, %v5101
    %v7262 = vpack.c.b16 %v5126, %v5102
    %v7263 = vpack.c.b16 %v5127, %v5103
    %v7264 = vpack.c.b16 %v5128, %v5104
    %v7265 = vpack.c.b16 %v5129, %v5105
    %v7266 = vpack.c.b16 %v5130, %v5106
    %v7267 = vpack.c.b16 %v5131, %v5107
    %v7268 = vpack.c.b16 %v5132, %v5108
    %v7269 = vpack.c.b16 %v5133, %v5109
    %v7270 = vpack.c.b16 %v5134, %v5110
    %v7271 = vpack.c.b16 %v5135, %v5111
    %v7272 = vpack.c.b16 %v5136, %v5112
    %v7273 = vpack.c.b16 %v5137, %v5113
    %v7274 = vpack.c.b16 %v5162, %v5138
    %v7275 = vpack.c.b16 %v5163, %v5139
    %v7276 = vpack.c.b16 %v5164, %v5140
    %v7277 = vpack.c.b16 %v5165, %v5141
    %v7278 = vpack.c.b16 %v5166, %v5142
    %v7279 = vpack.c.b16 %v5167, %v5143
    %v7280 = vpack.c.b16 %v5168, %v5144
    %v7281 = vpack.c.b16 %v5169, %v5145
    %v7282 = vpack.c.b16 %v5170, %v5146
    %v7283 = vpack.c.b16 %v5171, %v5147
    %v7284 = vpack.c.b16 %v5172, %v5148
    %v7285 = vpack.c.b16 %v5173, %v5149
    %v7286 = vpack.c.b16 %v5174, %v5150
    %v7287 = vpack.c.b16 %v5175, %v5151
    %v7288 = vpack.c.b16 %v5176, %v5152
    %v7289 = vpack.c.b16 %v5177, %v5153
    %v7290 = vpack.c.b16 %v5178, %v5154
    %v7291 = vpack.c.b16 %v5179, %v5155
    %v7292 = vpack.c.b16 %v5180, %v5156
    %v7293 = vpack.c.b16 %v5181, %v5157
    %v7294 = vpack.c.b16 %v5182, %v5158
    %v7295 = vpack.c.b16 %v5183, %v5159
    %v7296 = vpack.c.b16 %v5184, %v5160
    %v7297 = vpack.c.b16 %v5185, %v5161
    %v7298 = vpack.c.b16 %v5210, %v5186
    %v7299 = vpack.c.b16 %v5211, %v5187
    %v7300 = vpack.c.b16 %v5212, %v5188
    %v7301 = vpack.c.b16 %v5213, %v5189
    %v7302 = vpack.c.b16 %v5214, %v5190
    %v7303 = vpack.c.b16 %v5215, %v5191
    %v7304 = vpack.c.b16 %v5216, %v5192
    %v7305 = vpack.c.b16 %v5217, %v5193
    %v7306 = vpack.c.b16 %v5218, %v5194
    %v7307 = vpack.c.b16 %v5219, %v5195
    %v7308 = vpack.c.b16 %v5220, %v5196
    %v7309 = vpack.c.b16 %v5221, %v5197
    %v7310 = vpack.c.b16 %v5222, %v5198
    %v7311 = vpack.c.b16 %v5223, %v5199
    %v7312 = vpack.c.b16 %v5224, %v5200
    %v7313 = vpack.c.b16 %v5225, %v5201
    %v7314 = vpack.c.b16 %v5226, %v5202
    %v7315 = vpack.c.b16 %v5227, %v5203
    %v7316 = vpack.c.b16 %v5228, %v5204
    %v7317 = vpack.c.b16 %v5229, %v5205
    %v7318 = vpack.c.b16 %v5230, %v5206
    %v7319 = vpack.c.b16 %v5231, %v5207
    %v7320 = vpack.c.b16 %v5232, %v5208
    %v7321 = vpack.c.b16 %v5233, %v5209
    %v7322 = vpack.c.b16 %v5258, %v5234
    %v7323 = vpack.c.b16 %v5259, %v5235
    %v7324 = vpack.c.b16 %v5260, %v5236
    %v7325 = vpack.c.b16 %v5261, %v5237
    %v7326 = vpack.c.b16 %v5262, %v5238
    %v7327 = vpack.c.b16 %v5263, %v5239
    %v7328 = vpack.c.b16 %v5264, %v5240
    %v7329 = vpack.c.b16 %v5265, %v5241
    %v7330 = vpack.c.b16 %v5266, %v5242
    %v7331 = vpack.c.b16 %v5267, %v5243
    %v7332 = vpack.c.b16 %v5268, %v5244
    %v7333 = vpack.c.b16 %v5269, %v5245
    %v7334 = vpack.c.b16 %v5270, %v5246
    %v7335 = vpack.c.b16 %v5271, %v5247
    %v7336 = vpack.c.b16 %v5272, %v5248
    %v7337 = vpack.c.b16 %v5273, %v5249
    %v7338 = vpack.c.b16 %v5274, %v5250
    %v7339 = vpack.c.b16 %v5275, %v5251
    %v7340 = vpack.c.b16 %v5276, %v5252
    %v7341 = vpack.c.b16 %v5277, %v5253
    %v7342 = vpack.c.b16 %v5278, %v5254
    %v7343 = vpack.c.b16 %v5279, %v5255
    %v7344 = vpack.c.b16 %v5280, %v5256
    %v7345 = vpack.c.b16 %v5281, %v5257
    %v7346 = vpack.c.b16 %v5306, %v5282
    %v7347 = vpack.c.b16 %v5307, %v5283
    %v7348 = vpack.c.b16 %v5308, %v5284
    %v7349 = vpack.c.b16 %v5309, %v5285
    %v7350 = vpack.c.b16 %v5310, %v5286
    %v7351 = vpack.c.b16 %v5311, %v5287
    %v7352 = vpack.c.b16 %v5312, %v5288
    %v7353 = vpack.c.b16 %v5313, %v5289
    %v7354 = vpack.c.b16 %v5314, %v5290
    %v7355 = vpack.c.b16 %v5315, %v5291
    %v7356 = vpack.c.b16 %v5316, %v5292
    %v7357 = vpack.c.b16 %v5317, %v5293
    %v7358 = vpack.c.b16 %v5318, %v5294
    %v7359 = vpack.c.b16 %v5319, %v5295
    %v7360 = vpack.c.b16 %v5320, %v5296
    %v7361 = vpack.c.b16 %v5321, %v5297
    %v7362 = vpack.c.b16 %v5322, %v5298
    %v7363 = vpack.c.b16 %v5323, %v5299
    %v7364 = vpack.c.b16 %v5324, %v5300
    %v7365 = vpack.c.b16 %v5325, %v5301
    %v7366 = vpack.c.b16 %v5326, %v5302
    %v7367 = vpack.c.b16 %v5327, %v5303
    %v7368 = vpack.c.b16 %v5328, %v5304
    %v7369 = vpack.c.b16 %v5329, %v5305
    %v7370 = vpack.c.b16 %v5354, %v5330
    %v7371 = vpack.c.b16 %v5355, %v5331
    %v7372 = vpack.c.b16 %v5356, %v5332
    %v7373 = vpack.c.b16 %v5357, %v5333
    %v7374 = vpack.c.b16 %v5358, %v5334
    %v7375 = vpack.c.b16 %v5359, %v5335
    %v7376 = vpack.c.b16 %v5360, %v5336
    %v7377 = vpack.c.b16 %v5361, %v5337
    %v7378 = vpack.c.b16 %v5362, %v5338
    %v7379 = vpack.c.b16 %v5363, %v5339
    %v7380 = vpack.c.b16 %v5364, %v5340
    %v7381 = vpack.c.b16 %v5365, %v5341
    %v7382 = vpack.c.b16 %v5366, %v5342
    %v7383 = vpack.c.b16 %v5367, %v5343
    %v7384 = vpack.c.b16 %v5368, %v5344
    %v7385 = vpack.c.b16 %v5369, %v5345
    %v7386 = vpack.c.b16 %v5370, %v5346
    %v7387 = vpack.c.b16 %v5371, %v5347
    %v7388 = vpack.c.b16 %v5372, %v5348
    %v7389 = vpack.c.b16 %v5373, %v5349
    %v7390 = vpack.c.b16 %v5374, %v5350
    %v7391 = vpack.c.b16 %v5375, %v5351
    %v7392 = vpack.c.b16 %v5376, %v5352
    %v7393 = vpack.c.b16 %v5377, %v5353
    %v7394 = vpack.c.b16 %v5402, %v5378
    %v7395 = vpack.c.b16 %v5403, %v5379
    %v7396 = vpack.c.b16 %v5404, %v5380
    %v7397 = vpack.c.b16 %v5405, %v5381
    %v7398 = vpack.c.b16 %v5406, %v5382
    %v7399 = vpack.c.b16 %v5407, %v5383
    %v7400 = vpack.c.b16 %v5408, %v5384
    %v7401 = vpack.c.b16 %v5409, %v5385
    %v7402 = vpack.c.b16 %v5410, %v5386
    %v7403 = vpack.c.b16 %v5411, %v5387
    %v7404 = vpack.c.b16 %v5412, %v5388
    %v7405 = vpack.c.b16 %v5413, %v5389
    %v7406 = vpack.c.b16 %v5414, %v5390
    %v7407 = vpack.c.b16 %v5415, %v5391
    %v7408 = vpack.c.b16 %v5416, %v5392
    %v7409 = vpack.c.b16 %v5417, %v5393
    %v7410 = vpack.c.b16 %v5418, %v5394
    %v7411 = vpack.c.b16 %v5419, %v5395
    %v7412 = vpack.c.b16 %v5420, %v5396
    %v7413 = vpack.c.b16 %v5421, %v5397
    %v7414 = vpack.c.b16 %v5422, %v5398
    %v7415 = vpack.c.b16 %v5423, %v5399
    %v7416 = vpack.c.b16 %v5424, %v5400
    %v7417 = vpack.c.b16 %v5425, %v5401
    %v7418 = vpack.c.b16 %v5450, %v5426
    %v7419 = vpack.c.b16 %v5451, %v5427
    %v7420 = vpack.c.b16 %v5452, %v5428
    %v7421 = vpack.c.b16 %v5453, %v5429
    %v7422 = vpack.c.b16 %v5454, %v5430
    %v7423 = vpack.c.b16 %v5455, %v5431
    %v7424 = vpack.c.b16 %v5456, %v5432
    %v7425 = vpack.c.b16 %v5457, %v5433
    %v7426 = vpack.c.b16 %v5458, %v5434
    %v7427 = vpack.c.b16 %v5459, %v5435
    %v7428 = vpack.c.b16 %v5460, %v5436
    %v7429 = vpack.c.b16 %v5461, %v5437
    %v7430 = vpack.c.b16 %v5462, %v5438
    %v7431 = vpack.c.b16 %v5463, %v5439
    %v7432 = vpack.c.b16 %v5464, %v5440
    %v7433 = vpack.c.b16 %v5465, %v5441
    %v7434 = vpack.c.b16 %v5466, %v5442
    %v7435 = vpack.c.b16 %v5467, %v5443
    %v7436 = vpack.c.b16 %v5468, %v5444
    %v7437 = vpack.c.b16 %v5469, %v5445
    %v7438 = vpack.c.b16 %v5470, %v5446
    %v7439 = vpack.c.b16 %v5471, %v5447
    %v7440 = vpack.c.b16 %v5472, %v5448
    %v7441 = vpack.c.b16 %v5473, %v5449
    %v7442 = vpack.c.b16 %v5498, %v5474
    %v7443 = vpack.c.b16 %v5499, %v5475
    %v7444 = vpack.c.b16 %v5500, %v5476
    %v7445 = vpack.c.b16 %v5501, %v5477
    %v7446 = vpack.c.b16 %v5502, %v5478
    %v7447 = vpack.c.b16 %v5503, %v5479
    %v7448 = vpack.c.b16 %v5504, %v5480
    %v7449 = vpack.c.b16 %v5505, %v5481
    %v7450 = vpack.c.b16 %v5506, %v5482
    %v7451 = vpack.c.b16 %v5507, %v5483
    %v7452 = vpack.c.b16 %v5508, %v5484
    %v7453 = vpack.c.b16 %v5509, %v5485
    %v7454 = vpack.c.b16 %v5510, %v5486
    %v7455 = vpack.c.b16 %v5511, %v5487
    %v7456 = vpack.c.b16 %v5512, %v5488
    %v7457 = vpack.c.b16 %v5513, %v5489
    %v7458 = vpack.c.b16 %v5514, %v5490
    %v7459 = vpack.c.b16 %v5515, %v5491
    %v7460 = vpack.c.b16 %v5516, %v5492
    %v7461 = vpack.c.b16 %v5517, %v5493
    %v7462 = vpack.c.b16 %v5518, %v5494
    %v7463 = vpack.c.b16 %v5519, %v5495
    %v7464 = vpack.c.b16 %v5520, %v5496
    %v7465 = vpack.c.b16 %v5521, %v5497
    %v7466 = vpack.c.b16 %v5546, %v5522
    %v7467 = vpack.c.b16 %v5547, %v5523
    %v7468 = vpack.c.b16 %v5548, %v5524
    %v7469 = vpack.c.b16 %v5549, %v5525
    %v7470 = vpack.c.b16 %v5550, %v5526
    %v7471 = vpack.c.b16 %v5551, %v5527
    %v7472 = vpack.c.b16 %v5552, %v5528
    %v7473 = vpack.c.b16 %v5553, %v5529
    %v7474 = vpack.c.b16 %v5554, %v5530
    %v7475 = vpack.c.b16 %v5555, %v5531
    %v7476 = vpack.c.b16 %v5556, %v5532
    %v7477 = vpack.c.b16 %v5557, %v5533
    %v7478 = vpack.c.b16 %v5558, %v5534
    %v7479 = vpack.c.b16 %v5559, %v5535
    %v7480 = vpack.c.b16 %v5560, %v5536
    %v7481 = vpack.c.b16 %v5561, %v5537
    %v7482 = vpack.c.b16 %v5562, %v5538
    %v7483 = vpack.c.b16 %v5563, %v5539
    %v7484 = vpack.c.b16 %v5564, %v5540
    %v7485 = vpack.c.b16 %v5565, %v5541
    %v7486 = vpack.c.b16 %v5566, %v5542
    %v7487 = vpack.c.b16 %v5567, %v5543
    %v7488 = vpack.c.b16 %v5568, %v5544
    %v7489 = vpack.c.b16 %v5569, %v5545
    %v7490 = vpack.c.b16 %v5594, %v5570
    %v7491 = vpack.c.b16 %v5595, %v5571
    %v7492 = vpack.c.b16 %v5596, %v5572
    %v7493 = vpack.c.b16 %v5597, %v5573
    %v7494 = vpack.c.b16 %v5598, %v5574
    %v7495 = vpack.c.b16 %v5599, %v5575
    %v7496 = vpack.c.b16 %v5600, %v5576
    %v7497 = vpack.c.b16 %v5601, %v5577
    %v7498 = vpack.c.b16 %v5602, %v5578
    %v7499 = vpack.c.b16 %v5603, %v5579
    %v7500 = vpack.c.b16 %v5604, %v5580
    %v7501 = vpack.c.b16 %v5605, %v5581
    %v7502 = vpack.c.b16 %v5606, %v5582
    %v7503 = vpack.c.b16 %v5607, %v5583
    %v7504 = vpack.c.b16 %v5608, %v5584
    %v7505 = vpack.c.b16 %v5609, %v5585
    %v7506 = vpack.c.b16 %v5610, %v5586
    %v7507 = vpack.c.b16 %v5611, %v5587
    %v7508 = vpack.c.b16 %v5612, %v5588
    %v7509 = vpack.c.b16 %v5613, %v5589
    %v7510 = vpack.c.b16 %v5614, %v5590
    %v7511 = vpack.c.b16 %v5615, %v5591
    %v7512 = vpack.c.b16 %v5616, %v5592
    %v7513 = vpack.c.b16 %v5617, %v5593
    %v7514 = vpack.c.b16 %v5642, %v5618
    %v7515 = vpack.c.b16 %v5643, %v5619
    %v7516 = vpack.c.b16 %v5644, %v5620
    %v7517 = vpack.c.b16 %v5645, %v5621
    %v7518 = vpack.c.b16 %v5646, %v5622
    %v7519 = vpack.c.b16 %v5647, %v5623
    %v7520 = vpack.c.b16 %v5648, %v5624
    %v7521 = vpack.c.b16 %v5649, %v5625
    %v7522 = vpack.c.b16 %v5650, %v5626
    %v7523 = vpack.c.b16 %v5651, %v5627
    %v7524 = vpack.c.b16 %v5652, %v5628
    %v7525 = vpack.c.b16 %v5653, %v5629
    %v7526 = vpack.c.b16 %v5654, %v5630
    %v7527 = vpack.c.b16 %v5655, %v5631
    %v7528 = vpack.c.b16 %v5656, %v5632
    %v7529 = vpack.c.b16 %v5657, %v5633
    %v7530 = vpack.c.b16 %v5658, %v5634
    %v7531 = vpack.c.b16 %v5659, %v5635
    %v7532 = vpack.c.b16 %v5660, %v5636
    %v7533 = vpack.c.b16 %v5661, %v5637
    %v7534 = vpack.c.b16 %v5662, %v5638
    %v7535 = vpack.c.b16 %v5663, %v5639
    %v7536 = vpack.c.b16 %v5664, %v5640
    %v7537 = vpack.c.b16 %v5665, %v5641
    %v7538 = vpack.c.b16 %v5690, %v5666
    %v7539 = vpack.c.b16 %v5691, %v5667
    %v7540 = vpack.c.b16 %v5692, %v5668
    %v7541 = vpack.c.b16 %v5693, %v5669
    %v7542 = vpack.c.b16 %v5694, %v5670
    %v7543 = vpack.c.b16 %v5695, %v5671
    %v7544 = vpack.c.b16 %v5696, %v5672
    %v7545 = vpack.c.b16 %v5697, %v5673
    %v7546 = vpack.c.b16 %v5698, %v5674
    %v7547 = vpack.c.b16 %v5699, %v5675
    %v7548 = vpack.c.b16 %v5700, %v5676
    %v7549 = vpack.c.b16 %v5701, %v5677
    %v7550 = vpack.c.b16 %v5702, %v5678
    %v7551 = vpack.c.b16 %v5703, %v5679
    %v7552 = vpack.c.b16 %v5704, %v5680
    %v7553 = vpack.c.b16 %v5705, %v5681
    %v7554 = vpack.c.b16 %v5706, %v5682
    %v7555 = vpack.c.b16 %v5707, %v5683
    %v7556 = vpack.c.b16 %v5708, %v5684
    %v7557 = vpack.c.b16 %v5709, %v5685
    %v7558 = vpack.c.b16 %v5710, %v5686
    %v7559 = vpack.c.b16 %v5711, %v5687
    %v7560 = vpack.c.b16 %v5712, %v5688
    %v7561 = vpack.c.b16 %v5713, %v5689
    %v7562 = vpack.c.b16 %v5738, %v5714
    %v7563 = vpack.c.b16 %v5739, %v5715
    %v7564 = vpack.c.b16 %v5740, %v5716
    %v7565 = vpack.c.b16 %v5741, %v5717
    %v7566 = vpack.c.b16 %v5742, %v5718
    %v7567 = vpack.c.b16 %v5743, %v5719
    %v7568 = vpack.c.b16 %v5744, %v5720
    %v7569 = vpack.c.b16 %v5745, %v5721
    %v7570 = vpack.c.b16 %v5746, %v5722
    %v7571 = vpack.c.b16 %v5747, %v5723
    %v7572 = vpack.c.b16 %v5748, %v5724
    %v7573 = vpack.c.b16 %v5749, %v5725
    %v7574 = vpack.c.b16 %v5750, %v5726
    %v7575 = vpack.c.b16 %v5751, %v5727
    %v7576 = vpack.c.b16 %v5752, %v5728
    %v7577 = vpack.c.b16 %v5753, %v5729
    %v7578 = vpack.c.b16 %v5754, %v5730
    %v7579 = vpack.c.b16 %v5755, %v5731
    %v7580 = vpack.c.b16 %v5756, %v5732
    %v7581 = vpack.c.b16 %v5757, %v5733
    %v7582 = vpack.c.b16 %v5758, %v5734
    %v7583 = vpack.c.b16 %v5759, %v5735
    %v7584 = vpack.c.b16 %v5760, %v5736
    %v7585 = vpack.c.b16 %v5761, %v5737
    %v7586 = vpack.c.b16 %v5786, %v5762
    %v7587 = vpack.c.b16 %v5787, %v5763
    %v7588 = vpack.c.b16 %v5788, %v5764
    %v7589 = vpack.c.b16 %v5789, %v5765
    %v7590 = vpack.c.b16 %v5790, %v5766
    %v7591 = vpack.c.b16 %v5791, %v5767
    %v7592 = vpack.c.b16 %v5792, %v5768
    %v7593 = vpack.c.b16 %v5793, %v5769
    %v7594 = vpack.c.b16 %v5794, %v5770
    %v7595 = vpack.c.b16 %v5795, %v5771
    %v7596 = vpack.c.b16 %v5796, %v5772
    %v7597 = vpack.c.b16 %v5797, %v5773
    %v7598 = vpack.c.b16 %v5798, %v5774
    %v7599 = vpack.c.b16 %v5799, %v5775
    %v7600 = vpack.c.b16 %v5800, %v5776
    %v7601 = vpack.c.b16 %v5801, %v5777
    %v7602 = vpack.c.b16 %v5802, %v5778
    %v7603 = vpack.c.b16 %v5803, %v5779
    %v7604 = vpack.c.b16 %v5804, %v5780
    %v7605 = vpack.c.b16 %v5805, %v5781
    %v7606 = vpack.c.b16 %v5806, %v5782
    %v7607 = vpack.c.b16 %v5807, %v5783
    %v7608 = vpack.c.b16 %v5808, %v5784
    %v7609 = vpack.c.b16 %v5809, %v5785
    %v7610 = vpack.c.b16 %v5834, %v5810
    %v7611 = vpack.c.b16 %v5835, %v5811
    %v7612 = vpack.c.b16 %v5836, %v5812
    %v7613 = vpack.c.b16 %v5837, %v5813
    %v7614 = vpack.c.b16 %v5838, %v5814
    %v7615 = vpack.c.b16 %v5839, %v5815
    %v7616 = vpack.c.b16 %v5840, %v5816
    %v7617 = vpack.c.b16 %v5841, %v5817
    %v7618 = vpack.c.b16 %v5842, %v5818
    %v7619 = vpack.c.b16 %v5843, %v5819
    %v7620 = vpack.c.b16 %v5844, %v5820
    %v7621 = vpack.c.b16 %v5845, %v5821
    %v7622 = vpack.c.b16 %v5846, %v5822
    %v7623 = vpack.c.b16 %v5847, %v5823
    %v7624 = vpack.c.b16 %v5848, %v5824
    %v7625 = vpack.c.b16 %v5849, %v5825
    %v7626 = vpack.c.b16 %v5850, %v5826
    %v7627 = vpack.c.b16 %v5851, %v5827
    %v7628 = vpack.c.b16 %v5852, %v5828
    %v7629 = vpack.c.b16 %v5853, %v5829
    %v7630 = vpack.c.b16 %v5854, %v5830
    %v7631 = vpack.c.b16 %v5855, %v5831
    %v7632 = vpack.c.b16 %v5856, %v5832
    %v7633 = vpack.c.b16 %v5857, %v5833
    %v7634 = vpack.c.b16 %v5882, %v5858
    %v7635 = vpack.c.b16 %v5883, %v5859
    %v7636 = vpack.c.b16 %v5884, %v5860
    %v7637 = vpack.c.b16 %v5885, %v5861
    %v7638 = vpack.c.b16 %v5886, %v5862
    %v7639 = vpack.c.b16 %v5887, %v5863
    %v7640 = vpack.c.b16 %v5888, %v5864
    %v7641 = vpack.c.b16 %v5889, %v5865
    %v7642 = vpack.c.b16 %v5890, %v5866
    %v7643 = vpack.c.b16 %v5891, %v5867
    %v7644 = vpack.c.b16 %v5892, %v5868
    %v7645 = vpack.c.b16 %v5893, %v5869
    %v7646 = vpack.c.b16 %v5894, %v5870
    %v7647 = vpack.c.b16 %v5895, %v5871
    %v7648 = vpack.c.b16 %v5896, %v5872
    %v7649 = vpack.c.b16 %v5897, %v5873
    %v7650 = vpack.c.b16 %v5898, %v5874
    %v7651 = vpack.c.b16 %v5899, %v5875
    %v7652 = vpack.c.b16 %v5900, %v5876
    %v7653 = vpack.c.b16 %v5901, %v5877
    %v7654 = vpack.c.b16 %v5902, %v5878
    %v7655 = vpack.c.b16 %v5903, %v5879
    %v7656 = vpack.c.b16 %v5904, %v5880
    %v7657 = vpack.c.b16 %v5905, %v5881
    %v7658 = vpack.c.b16 %v5930, %v5906
    %v7659 = vpack.c.b16 %v5931, %v5907
    %v7660 = vpack.c.b16 %v5932, %v5908
    %v7661 = vpack.c.b16 %v5933, %v5909
    %v7662 = vpack.c.b16 %v5934, %v5910
    %v7663 = vpack.c.b16 %v5935, %v5911
    %v7664 = vpack.c.b16 %v5936, %v5912
    %v7665 = vpack.c.b16 %v5937, %v5913
    %v7666 = vpack.c.b16 %v5938, %v5914
    %v7667 = vpack.c.b16 %v5939, %v5915
    %v7668 = vpack.c.b16 %v5940, %v5916
    %v7669 = vpack.c.b16 %v5941, %v5917
    %v7670 = vpack.c.b16 %v5942, %v5918
    %v7671 = vpack.c.b16 %v5943, %v5919
    %v7672 = vpack.c.b16 %v5944, %v5920
    %v7673 = vpack.c.b16 %v5945, %v5921
    %v7674 = vpack.c.b16 %v5946, %v5922
    %v7675 = vpack.c.b16 %v5947, %v5923
    %v7676 = vpack.c.b16 %v5948, %v5924
    %v7677 = vpack.c.b16 %v5949, %v5925
    %v7678 = vpack.c.b16 %v5950, %v5926
    %v7679 = vpack.c.b16 %v5951, %v5927
    %v7680 = vpack.c.b16 %v5952, %v5928
    %v7681 = vpack.c.b16 %v5953, %v5929
    %v7682 = vpack.c.b16 %v5978, %v5954
    %v7683 = vpack.c.b16 %v5979, %v5955
    %v7684 = vpack.c.b16 %v5980, %v5956
    %v7685 = vpack.c.b16 %v5981, %v5957
    %v7686 = vpack.c.b16 %v5982, %v5958
    %v7687 = vpack.c.b16 %v5983, %v5959
    %v7688 = vpack.c.b16 %v5984, %v5960
    %v7689 = vpack.c.b16 %v5985, %v5961
    %v7690 = vpack.c.b16 %v5986, %v5962
    %v7691 = vpack.c.b16 %v5987, %v5963
    %v7692 = vpack.c.b16 %v5988, %v5964
    %v7693 = vpack.c.b16 %v5989, %v5965
    %v7694 = vpack.c.b16 %v5990, %v5966
    %v7695 = vpack.c.b16 %v5991, %v5967
    %v7696 = vpack.c.b16 %v5992, %v5968
    %v7697 = vpack.c.b16 %v5993, %v5969
    %v7698 = vpack.c.b16 %v5994, %v5970
    %v7699 = vpack.c.b16 %v5995, %v5971
    %v7700 = vpack.c.b16 %v5996, %v5972
    %v7701 = vpack.c.b16 %v5997, %v5973
    %v7702 = vpack.c.b16 %v5998, %v5974
    %v7703 = vpack.c.b16 %v5999, %v5975
    %v7704 = vpack.c.b16 %v6000, %v5976
    %v7705 = vpack.c.b16 %v6001, %v5977
    %v7706 = vpack.c.b16 %v6026, %v6002
    %v7707 = vpack.c.b16 %v6027, %v6003
    %v7708 = vpack.c.b16 %v6028, %v6004
    %v7709 = vpack.c.b16 %v6029, %v6005
    %v7710 = vpack.c.b16 %v6030, %v6006
    %v7711 = vpack.c.b16 %v6031, %v6007
    %v7712 = vpack.c.b16 %v6032, %v6008
    %v7713 = vpack.c.b16 %v6033, %v6009
    %v7714 = vpack.c.b16 %v6034, %v6010
    %v7715 = vpack.c.b16 %v6035, %v6011
    %v7716 = vpack.c.b16 %v6036, %v6012
    %v7717 = vpack.c.b16 %v6037, %v6013
    %v7718 = vpack.c.b16 %v6038, %v6014
    %v7719 = vpack.c.b16 %v6039, %v6015
    %v7720 = vpack.c.b16 %v6040, %v6016
    %v7721 = vpack.c.b16 %v6041, %v6017
    %v7722 = vpack.c.b16 %v6042, %v6018
    %v7723 = vpack.c.b16 %v6043, %v6019
    %v7724 = vpack.c.b16 %v6044, %v6020
    %v7725 = vpack.c.b16 %v6045, %v6021
    %v7726 = vpack.c.b16 %v6046, %v6022
    %v7727 = vpack.c.b16 %v6047, %v6023
    %v7728 = vpack.c.b16 %v6048, %v6024
    %v7729 = vpack.c.b16 %v6049, %v6025
    %v7730 = vpack.c.b16 %v6074, %v6050
    %v7731 = vpack.c.b16 %v6075, %v6051
    %v7732 = vpack.c.b16 %v6076, %v6052
    %v7733 = vpack.c.b16 %v6077, %v6053
    %v7734 = vpack.c.b16 %v6078, %v6054
    %v7735 = vpack.c.b16 %v6079, %v6055
    %v7736 = vpack.c.b16 %v6080, %v6056
    %v7737 = vpack.c.b16 %v6081, %v6057
    %v7738 = vpack.c.b16 %v6082, %v6058
    %v7739 = vpack.c.b16 %v6083, %v6059
    %v7740 = vpack.c.b16 %v6084, %v6060
    %v7741 = vpack.c.b16 %v6085, %v6061
    %v7742 = vpack.c.b16 %v6086, %v6062
    %v7743 = vpack.c.b16 %v6087, %v6063
    %v7744 = vpack.c.b16 %v6088, %v6064
    %v7745 = vpack.c.b16 %v6089, %v6065
    %v7746 = vpack.c.b16 %v6090, %v6066
    %v7747 = vpack.c.b16 %v6091, %v6067
    %v7748 = vpack.c.b16 %v6092, %v6068
    %v7749 = vpack.c.b16 %v6093, %v6069
    %v7750 = vpack.c.b16 %v6094, %v6070
    %v7751 = vpack.c.b16 %v6095, %v6071
    %v7752 = vpack.c.b16 %v6096, %v6072
    %v7753 = vpack.c.b16 %v6097, %v6073
    %v7754 = vpack.c.b16 %v6122, %v6098
    %v7755 = vpack.c.b16 %v6123, %v6099
    %v7756 = vpack.c.b16 %v6124, %v6100
    %v7757 = vpack.c.b16 %v6125, %v6101
    %v7758 = vpack.c.b16 %v6126, %v6102
    %v7759 = vpack.c.b16 %v6127, %v6103
    %v7760 = vpack.c.b16 %v6128, %v6104
    %v7761 = vpack.c.b16 %v6129, %v6105
    %v7762 = vpack.c.b16 %v6130, %v6106
    %v7763 = vpack.c.b16 %v6131, %v6107
    %v7764 = vpack.c.b16 %v6132, %v6108
    %v7765 = vpack.c.b16 %v6133, %v6109
    %v7766 = vpack.c.b16 %v6134, %v6110
    %v7767 = vpack.c.b16 %v6135, %v6111
    %v7768 = vpack.c.b16 %v6136, %v6112
    %v7769 = vpack.c.b16 %v6137, %v6113
    %v7770 = vpack.c.b16 %v6138, %v6114
    %v7771 = vpack.c.b16 %v6139, %v6115
    %v7772 = vpack.c.b16 %v6140, %v6116
    %v7773 = vpack.c.b16 %v6141, %v6117
    %v7774 = vpack.c.b16 %v6142, %v6118
    %v7775 = vpack.c.b16 %v6143, %v6119
    %v7776 = vpack.c.b16 %v6144, %v6120
    %v7777 = vpack.c.b16 %v6145, %v6121
    %v7778 = vpack.c.b16 %v6170, %v6146
    %v7779 = vpack.c.b16 %v6171, %v6147
    %v7780 = vpack.c.b16 %v6172, %v6148
    %v7781 = vpack.c.b16 %v6173, %v6149
    %v7782 = vpack.c.b16 %v6174, %v6150
    %v7783 = vpack.c.b16 %v6175, %v6151
    %v7784 = vpack.c.b16 %v6176, %v6152
    %v7785 = vpack.c.b16 %v6177, %v6153
    %v7786 = vpack.c.b16 %v6178, %v6154
    %v7787 = vpack.c.b16 %v6179, %v6155
    %v7788 = vpack.c.b16 %v6180, %v6156
    %v7789 = vpack.c.b16 %v6181, %v6157
    %v7790 = vpack.c.b16 %v6182, %v6158
    %v7791 = vpack.c.b16 %v6183, %v6159
    %v7792 = vpack.c.b16 %v6184, %v6160
    %v7793 = vpack.c.b16 %v6185, %v6161
    %v7794 = vpack.c.b16 %v6186, %v6162
    %v7795 = vpack.c.b16 %v6187, %v6163
    %v7796 = vpack.c.b16 %v6188, %v6164
    %v7797 = vpack.c.b16 %v6189, %v6165
    %v7798 = vpack.c.b16 %v6190, %v6166
    %v7799 = vpack.c.b16 %v6191, %v6167
    %v7800 = vpack.c.b16 %v6192, %v6168
    %v7801 = vpack.c.b16 %v6193, %v6169
    %v7802 = vpack.c.b16 %v6218, %v6194
    %v7803 = vpack.c.b16 %v6219, %v6195
    %v7804 = vpack.c.b16 %v6220, %v6196
    %v7805 = vpack.c.b16 %v6221, %v6197
    %v7806 = vpack.c.b16 %v6222, %v6198
    %v7807 = vpack.c.b16 %v6223, %v6199
    %v7808 = vpack.c.b16 %v6224, %v6200
    %v7809 = vpack.c.b16 %v6225, %v6201
    %v7810 = vpack.c.b16 %v6226, %v6202
    %v7811 = vpack.c.b16 %v6227, %v6203
    %v7812 = vpack.c.b16 %v6228, %v6204
    %v7813 = vpack.c.b16 %v6229, %v6205
    %v7814 = vpack.c.b16 %v6230, %v6206
    %v7815 = vpack.c.b16 %v6231, %v6207
    %v7816 = vpack.c.b16 %v6232, %v6208
    %v7817 = vpack.c.b16 %v6233, %v6209
    %v7818 = vpack.c.b16 %v6234, %v6210
    %v7819 = vpack.c.b16 %v6235, %v6211
    %v7820 = vpack.c.b16 %v6236, %v6212
    %v7821 = vpack.c.b16 %v6237, %v6213
    %v7822 = vpack.c.b16 %v6238, %v6214
    %v7823 = vpack.c.b16 %v6239, %v6215
    %v7824 = vpack.c.b16 %v6240, %v6216
    %v7825 = vpack.c.b16 %v6241, %v6217
    %v7826 = vpack.c.b16 %v6266, %v6242
    %v7827 = vpack.c.b16 %v6267, %v6243
    %v7828 = vpack.c.b16 %v6268, %v6244
    %v7829 = vpack.c.b16 %v6269, %v6245
    %v7830 = vpack.c.b16 %v6270, %v6246
    %v7831 = vpack.c.b16 %v6271, %v6247
    %v7832 = vpack.c.b16 %v6272, %v6248
    %v7833 = vpack.c.b16 %v6273, %v6249
    %v7834 = vpack.c.b16 %v6274, %v6250
    %v7835 = vpack.c.b16 %v6275, %v6251
    %v7836 = vpack.c.b16 %v6276, %v6252
    %v7837 = vpack.c.b16 %v6277, %v6253
    %v7838 = vpack.c.b16 %v6278, %v6254
    %v7839 = vpack.c.b16 %v6279, %v6255
    %v7840 = vpack.c.b16 %v6280, %v6256
    %v7841 = vpack.c.b16 %v6281, %v6257
    %v7842 = vpack.c.b16 %v6282, %v6258
    %v7843 = vpack.c.b16 %v6283, %v6259
    %v7844 = vpack.c.b16 %v6284, %v6260
    %v7845 = vpack.c.b16 %v6285, %v6261
    %v7846 = vpack.c.b16 %v6286, %v6262
    %v7847 = vpack.c.b16 %v6287, %v6263
    %v7848 = vpack.c.b16 %v6288, %v6264
    %v7849 = vpack.c.b16 %v6289, %v6265
    %v7850 = vpack.c.b16 %v6314, %v6290
    %v7851 = vpack.c.b16 %v6315, %v6291
    %v7852 = vpack.c.b16 %v6316, %v6292
    %v7853 = vpack.c.b16 %v6317, %v6293
    %v7854 = vpack.c.b16 %v6318, %v6294
    %v7855 = vpack.c.b16 %v6319, %v6295
    %v7856 = vpack.c.b16 %v6320, %v6296
    %v7857 = vpack.c.b16 %v6321, %v6297
    %v7858 = vpack.c.b16 %v6322, %v6298
    %v7859 = vpack.c.b16 %v6323, %v6299
    %v7860 = vpack.c.b16 %v6324, %v6300
    %v7861 = vpack.c.b16 %v6325, %v6301
    %v7862 = vpack.c.b16 %v6326, %v6302
    %v7863 = vpack.c.b16 %v6327, %v6303
    %v7864 = vpack.c.b16 %v6328, %v6304
    %v7865 = vpack.c.b16 %v6329, %v6305
    %v7866 = vpack.c.b16 %v6330, %v6306
    %v7867 = vpack.c.b16 %v6331, %v6307
    %v7868 = vpack.c.b16 %v6332, %v6308
    %v7869 = vpack.c.b16 %v6333, %v6309
    %v7870 = vpack.c.b16 %v6334, %v6310
    %v7871 = vpack.c.b16 %v6335, %v6311
    %v7872 = vpack.c.b16 %v6336, %v6312
    %v7873 = vpack.c.b16 %v6337, %v6313
    %9410 = vmatprep.subr.bf16.mxu0 %v6507
    %9411 = vmatpush1.bf16.msra.mxu0 %v6506
    %9412 = vmatprep.subr.bf16.mxu0 %v6483
    %9413 = vmatpush1.bf16.msra.mxu0 %v6482
    %9414 = vmatprep.subr.bf16.mxu0 %v6459
    %9415 = vmatpush1.bf16.msra.mxu0 %v6458
    %9416 = vmatprep.subr.bf16.mxu0 %v6435
    %9417 = vmatpush1.bf16.msra.mxu0 %v6434
    %9418 = vmatprep.subr.bf16.mxu0 %v6411
    %9419 = vmatpush1.bf16.msra.mxu0 %v6410
    %9420 = vmatprep.subr.bf16.mxu0 %v6387
    %9421 = vmatpush1.bf16.msra.mxu0 %v6386
    %9422 = vmatprep.subr.bf16.mxu0 %v6363
    %9423 = vmatpush1.bf16.msra.mxu0 %v6362
    %9424 = vmatprep.subr.bf16.mxu0 %v6339
    %9425 = vmatpush1.bf16.msra.mxu0 %v6338
    %9426 = vmatprep.subr.bf16.mxu0 %v6699
    %9427 = vmatpush2.bf16.msra.mxu0 %v6698
    %9428 = vmatprep.subr.bf16.mxu0 %v6675
    %9429 = vmatpush2.bf16.msra.mxu0 %v6674
    %9430 = vmatprep.subr.bf16.mxu0 %v6651
    %9431 = vmatpush2.bf16.msra.mxu0 %v6650
    %9432 = vmatprep.subr.bf16.mxu0 %v6627
    %9433 = vmatpush2.bf16.msra.mxu0 %v6626
    %9434 = vmatprep.subr.bf16.mxu0 %v6603
    %9435 = vmatpush2.bf16.msra.mxu0 %v6602
    %9436 = vmatprep.subr.bf16.mxu0 %v6579
    %9437 = vmatpush2.bf16.msra.mxu0 %v6578
    %9438 = vmatprep.subr.bf16.mxu0 %v6555
    %9439 = vmatpush2.bf16.msra.mxu0 %v6554
    %9440 = vmatprep.subr.bf16.mxu0 %v6531
    %9441 = vmatpush2.bf16.msra.mxu0 %v6530
    %9442 = vmatprep.mubr.bf16.mxu0 %v61
    %9443 = vmatmul.mubr.bf16.gmra.mxu0 %v60
    %v9444 = vpop.f32.mrf.mxu0
    %v9445 = vadd.f32 %v1613, %v9444
    %v9446 = vpop.f32.mrf.mxu0
    %v9447 = vadd.f32 %v1617, %v9446
    %v9448 = vpop.f32.mrf.mxu0
    %v9449 = vpop.f32.mrf.mxu0
    %9450 = vdwg.mxu0
    %9451 = vmatprep.subr.bf16.mxu0 %v6891
    %9452 = vmatpush1.bf16.msra.mxu0 %v6890
    %9453 = vmatprep.subr.bf16.mxu0 %v6867
    %9454 = vmatpush1.bf16.msra.mxu0 %v6866
    %9455 = vmatprep.subr.bf16.mxu0 %v6843
    %9456 = vmatpush1.bf16.msra.mxu0 %v6842
    %9457 = vmatprep.subr.bf16.mxu0 %v6819
    %9458 = vmatpush1.bf16.msra.mxu0 %v6818
    %9459 = vmatprep.subr.bf16.mxu0 %v6795
    %9460 = vmatpush1.bf16.msra.mxu0 %v6794
    %9461 = vmatprep.subr.bf16.mxu0 %v6771
    %9462 = vmatpush1.bf16.msra.mxu0 %v6770
    %9463 = vmatprep.subr.bf16.mxu0 %v6747
    %9464 = vmatpush1.bf16.msra.mxu0 %v6746
    %9465 = vmatprep.subr.bf16.mxu0 %v6723
    %9466 = vmatpush1.bf16.msra.mxu0 %v6722
    %9467 = vmatprep.subr.bf16.mxu0 %v7083
    %9468 = vmatpush2.bf16.msra.mxu0 %v7082
    %9469 = vmatprep.subr.bf16.mxu0 %v7059
    %9470 = vmatpush2.bf16.msra.mxu0 %v7058
    %9471 = vmatprep.subr.bf16.mxu0 %v7035
    %9472 = vmatpush2.bf16.msra.mxu0 %v7034
    %9473 = vmatprep.subr.bf16.mxu0 %v7011
    %9474 = vmatpush2.bf16.msra.mxu0 %v7010
    %9475 = vmatprep.subr.bf16.mxu0 %v6987
    %9476 = vmatpush2.bf16.msra.mxu0 %v6986
    %9477 = vmatprep.subr.bf16.mxu0 %v6963
    %9478 = vmatpush2.bf16.msra.mxu0 %v6962
    %9479 = vmatprep.subr.bf16.mxu0 %v6939
    %9480 = vmatpush2.bf16.msra.mxu0 %v6938
    %9481 = vmatprep.subr.bf16.mxu0 %v6915
    %9482 = vmatpush2.bf16.msra.mxu0 %v6914
    %9483 = vmatprep.mubr.bf16.mxu0 %v63
    %9484 = vmatmul.mubr.bf16.gmra.mxu0 %v62
    %v9485 = vpop.f32.mrf.mxu0
    %v9486 = vadd.f32 %v9445, %v9485
    %v9487 = vpop.f32.mrf.mxu0
    %v9488 = vadd.f32 %v9447, %v9487
    %v9489 = vpop.f32.mrf.mxu0
    %v9490 = vpop.f32.mrf.mxu0
    %9491 = vdwg.mxu0
    %9492 = vmatprep.subr.bf16.mxu0 %v7275
    %9493 = vmatpush1.bf16.msra.mxu0 %v7274
    %9494 = vmatprep.subr.bf16.mxu0 %v7251
    %9495 = vmatpush1.bf16.msra.mxu0 %v7250
    %9496 = vmatprep.subr.bf16.mxu0 %v7227
    %9497 = vmatpush1.bf16.msra.mxu0 %v7226
    %9498 = vmatprep.subr.bf16.mxu0 %v7203
    %9499 = vmatpush1.bf16.msra.mxu0 %v7202
    %9500 = vmatprep.subr.bf16.mxu0 %v7179
    %9501 = vmatpush1.bf16.msra.mxu0 %v7178
    %9502 = vmatprep.subr.bf16.mxu0 %v7155
    %9503 = vmatpush1.bf16.msra.mxu0 %v7154
    %9504 = vmatprep.subr.bf16.mxu0 %v7131
    %9505 = vmatpush1.bf16.msra.mxu0 %v7130
    %9506 = vmatprep.subr.bf16.mxu0 %v7107
    %9507 = vmatpush1.bf16.msra.mxu0 %v7106
    %9508 = vmatprep.subr.bf16.mxu0 %v7467
    %9509 = vmatpush2.bf16.msra.mxu0 %v7466
    %9510 = vmatprep.subr.bf16.mxu0 %v7443
    %9511 = vmatpush2.bf16.msra.mxu0 %v7442
    %9512 = vmatprep.subr.bf16.mxu0 %v7419
    %9513 = vmatpush2.bf16.msra.mxu0 %v7418
    %9514 = vmatprep.subr.bf16.mxu0 %v7395
    %9515 = vmatpush2.bf16.msra.mxu0 %v7394
    %9516 = vmatprep.subr.bf16.mxu0 %v7371
    %9517 = vmatpush2.bf16.msra.mxu0 %v7370
    %9518 = vmatprep.subr.bf16.mxu0 %v7347
    %9519 = vmatpush2.bf16.msra.mxu0 %v7346
    %9520 = vmatprep.subr.bf16.mxu0 %v7323
    %9521 = vmatpush2.bf16.msra.mxu0 %v7322
    %9522 = vmatprep.subr.bf16.mxu0 %v7299
    %9523 = vmatpush2.bf16.msra.mxu0 %v7298
    %9524 = vmatprep.mubr.bf16.mxu0 %v65
    %9525 = vmatmul.mubr.bf16.gmra.mxu0 %v64
    %v9526 = vpop.f32.mrf.mxu0
    %v9527 = vadd.f32 %v9486, %v9526
    %v9528 = vpop.f32.mrf.mxu0
    %v9529 = vadd.f32 %v9488, %v9528
    %v9530 = vpop.f32.mrf.mxu0
    %v9531 = vpop.f32.mrf.mxu0
    %9532 = vdwg.mxu0
    %9533 = vmatprep.subr.bf16.mxu0 %v7659
    %9534 = vmatpush1.bf16.msra.mxu0 %v7658
    %9535 = vmatprep.subr.bf16.mxu0 %v7635
    %9536 = vmatpush1.bf16.msra.mxu0 %v7634
    %9537 = vmatprep.subr.bf16.mxu0 %v7611
    %9538 = vmatpush1.bf16.msra.mxu0 %v7610
    %9539 = vmatprep.subr.bf16.mxu0 %v7587
    %9540 = vmatpush1.bf16.msra.mxu0 %v7586
    %9541 = vmatprep.subr.bf16.mxu0 %v7563
    %9542 = vmatpush1.bf16.msra.mxu0 %v7562
    %9543 = vmatprep.subr.bf16.mxu0 %v7539
    %9544 = vmatpush1.bf16.msra.mxu0 %v7538
    %9545 = vmatprep.subr.bf16.mxu0 %v7515
    %9546 = vmatpush1.bf16.msra.mxu0 %v7514
    %9547 = vmatprep.subr.bf16.mxu0 %v7491
    %9548 = vmatpush1.bf16.msra.mxu0 %v7490
    %9549 = vmatprep.subr.bf16.mxu0 %v7851
    %9550 = vmatpush2.bf16.msra.mxu0 %v7850
    %9551 = vmatprep.subr.bf16.mxu0 %v7827
    %9552 = vmatpush2.bf16.msra.mxu0 %v7826
    %9553 = vmatprep.subr.bf16.mxu0 %v7803
    %9554 = vmatpush2.bf16.msra.mxu0 %v7802
    %9555 = vmatprep.subr.bf16.mxu0 %v7779
    %9556 = vmatpush2.bf16.msra.mxu0 %v7778
    %9557 = vmatprep.subr.bf16.mxu0 %v7755
    %9558 = vmatpush2.bf16.msra.mxu0 %v7754
    %9559 = vmatprep.subr.bf16.mxu0 %v7731
    %9560 = vmatpush2.bf16.msra.mxu0 %v7730
    %9561 = vmatprep.subr.bf16.mxu0 %v7707
    %9562 = vmatpush2.bf16.msra.mxu0 %v7706
    %9563 = vmatprep.subr.bf16.mxu0 %v7683
    %9564 = vmatpush2.bf16.msra.mxu0 %v7682
    %9565 = vmatprep.mubr.bf16.mxu0 %v67
    %9566 = vmatmul.mubr.bf16.gmra.mxu0 %v66
    %v9567 = vpop.f32.mrf.mxu0
    %v9568 = vadd.f32 %v9527, %v9567
    %v9569 = vpop.f32.mrf.mxu0
    %v9570 = vadd.f32 %v9529, %v9569
    %v9571 = vpop.f32.mrf.mxu0
    %v9572 = vpop.f32.mrf.mxu0
    %9573 = vdwg.mxu0
    %9574 = vmatprep.subr.bf16.mxu0 %v6509
    %9575 = vmatpush1.bf16.msra.mxu0 %v6508
    %9576 = vmatprep.subr.bf16.mxu0 %v6485
    %9577 = vmatpush1.bf16.msra.mxu0 %v6484
    %9578 = vmatprep.subr.bf16.mxu0 %v6461
    %9579 = vmatpush1.bf16.msra.mxu0 %v6460
    %9580 = vmatprep.subr.bf16.mxu0 %v6437
    %9581 = vmatpush1.bf16.msra.mxu0 %v6436
    %9582 = vmatprep.subr.bf16.mxu0 %v6413
    %9583 = vmatpush1.bf16.msra.mxu0 %v6412
    %9584 = vmatprep.subr.bf16.mxu0 %v6389
    %9585 = vmatpush1.bf16.msra.mxu0 %v6388
    %9586 = vmatprep.subr.bf16.mxu0 %v6365
    %9587 = vmatpush1.bf16.msra.mxu0 %v6364
    %9588 = vmatprep.subr.bf16.mxu0 %v6341
    %9589 = vmatpush1.bf16.msra.mxu0 %v6340
    %9590 = vmatprep.subr.bf16.mxu0 %v6701
    %9591 = vmatpush2.bf16.msra.mxu0 %v6700
    %9592 = vmatprep.subr.bf16.mxu0 %v6677
    %9593 = vmatpush2.bf16.msra.mxu0 %v6676
    %9594 = vmatprep.subr.bf16.mxu0 %v6653
    %9595 = vmatpush2.bf16.msra.mxu0 %v6652
    %9596 = vmatprep.subr.bf16.mxu0 %v6629
    %9597 = vmatpush2.bf16.msra.mxu0 %v6628
    %9598 = vmatprep.subr.bf16.mxu0 %v6605
    %9599 = vmatpush2.bf16.msra.mxu0 %v6604
    %9600 = vmatprep.subr.bf16.mxu0 %v6581
    %9601 = vmatpush2.bf16.msra.mxu0 %v6580
    %9602 = vmatprep.subr.bf16.mxu0 %v6557
    %9603 = vmatpush2.bf16.msra.mxu0 %v6556
    %9604 = vmatprep.subr.bf16.mxu0 %v6533
    %9605 = vmatpush2.bf16.msra.mxu0 %v6532
    %9606 = vmatprep.mubr.bf16.mxu0 %v61
    %9607 = vmatmul.mubr.bf16.gmra.mxu0 %v60
    %v9608 = vpop.f32.mrf.mxu0
    %v9609 = vadd.f32 %v1621, %v9608
    %v9610 = vpop.f32.mrf.mxu0
    %v9611 = vadd.f32 %v1625, %v9610
    %v9612 = vpop.f32.mrf.mxu0
    %v9613 = vpop.f32.mrf.mxu0
    %9614 = vdwg.mxu0
    %9615 = vmatprep.subr.bf16.mxu0 %v6893
    %9616 = vmatpush1.bf16.msra.mxu0 %v6892
    %9617 = vmatprep.subr.bf16.mxu0 %v6869
    %9618 = vmatpush1.bf16.msra.mxu0 %v6868
    %9619 = vmatprep.subr.bf16.mxu0 %v6845
    %9620 = vmatpush1.bf16.msra.mxu0 %v6844
    %9621 = vmatprep.subr.bf16.mxu0 %v6821
    %9622 = vmatpush1.bf16.msra.mxu0 %v6820
    %9623 = vmatprep.subr.bf16.mxu0 %v6797
    %9624 = vmatpush1.bf16.msra.mxu0 %v6796
    %9625 = vmatprep.subr.bf16.mxu0 %v6773
    %9626 = vmatpush1.bf16.msra.mxu0 %v6772
    %9627 = vmatprep.subr.bf16.mxu0 %v6749
    %9628 = vmatpush1.bf16.msra.mxu0 %v6748
    %9629 = vmatprep.subr.bf16.mxu0 %v6725
    %9630 = vmatpush1.bf16.msra.mxu0 %v6724
    %9631 = vmatprep.subr.bf16.mxu0 %v7085
    %9632 = vmatpush2.bf16.msra.mxu0 %v7084
    %9633 = vmatprep.subr.bf16.mxu0 %v7061
    %9634 = vmatpush2.bf16.msra.mxu0 %v7060
    %9635 = vmatprep.subr.bf16.mxu0 %v7037
    %9636 = vmatpush2.bf16.msra.mxu0 %v7036
    %9637 = vmatprep.subr.bf16.mxu0 %v7013
    %9638 = vmatpush2.bf16.msra.mxu0 %v7012
    %9639 = vmatprep.subr.bf16.mxu0 %v6989
    %9640 = vmatpush2.bf16.msra.mxu0 %v6988
    %9641 = vmatprep.subr.bf16.mxu0 %v6965
    %9642 = vmatpush2.bf16.msra.mxu0 %v6964
    %9643 = vmatprep.subr.bf16.mxu0 %v6941
    %9644 = vmatpush2.bf16.msra.mxu0 %v6940
    %9645 = vmatprep.subr.bf16.mxu0 %v6917
    %9646 = vmatpush2.bf16.msra.mxu0 %v6916
    %9647 = vmatprep.mubr.bf16.mxu0 %v63
    %9648 = vmatmul.mubr.bf16.gmra.mxu0 %v62
    %v9649 = vpop.f32.mrf.mxu0
    %v9650 = vadd.f32 %v9609, %v9649
    %v9651 = vpop.f32.mrf.mxu0
    %v9652 = vadd.f32 %v9611, %v9651
    %v9653 = vpop.f32.mrf.mxu0
    %v9654 = vpop.f32.mrf.mxu0
    %9655 = vdwg.mxu0
    %9656 = vmatprep.subr.bf16.mxu0 %v7277
    %9657 = vmatpush1.bf16.msra.mxu0 %v7276
    %9658 = vmatprep.subr.bf16.mxu0 %v7253
    %9659 = vmatpush1.bf16.msra.mxu0 %v7252
    %9660 = vmatprep.subr.bf16.mxu0 %v7229
    %9661 = vmatpush1.bf16.msra.mxu0 %v7228
    %9662 = vmatprep.subr.bf16.mxu0 %v7205
    %9663 = vmatpush1.bf16.msra.mxu0 %v7204
    %9664 = vmatprep.subr.bf16.mxu0 %v7181
    %9665 = vmatpush1.bf16.msra.mxu0 %v7180
    %9666 = vmatprep.subr.bf16.mxu0 %v7157
    %9667 = vmatpush1.bf16.msra.mxu0 %v7156
    %9668 = vmatprep.subr.bf16.mxu0 %v7133
    %9669 = vmatpush1.bf16.msra.mxu0 %v7132
    %9670 = vmatprep.subr.bf16.mxu0 %v7109
    %9671 = vmatpush1.bf16.msra.mxu0 %v7108
    %9672 = vmatprep.subr.bf16.mxu0 %v7469
    %9673 = vmatpush2.bf16.msra.mxu0 %v7468
    %9674 = vmatprep.subr.bf16.mxu0 %v7445
    %9675 = vmatpush2.bf16.msra.mxu0 %v7444
    %9676 = vmatprep.subr.bf16.mxu0 %v7421
    %9677 = vmatpush2.bf16.msra.mxu0 %v7420
    %9678 = vmatprep.subr.bf16.mxu0 %v7397
    %9679 = vmatpush2.bf16.msra.mxu0 %v7396
    %9680 = vmatprep.subr.bf16.mxu0 %v7373
    %9681 = vmatpush2.bf16.msra.mxu0 %v7372
    %9682 = vmatprep.subr.bf16.mxu0 %v7349
    %9683 = vmatpush2.bf16.msra.mxu0 %v7348
    %9684 = vmatprep.subr.bf16.mxu0 %v7325
    %9685 = vmatpush2.bf16.msra.mxu0 %v7324
    %9686 = vmatprep.subr.bf16.mxu0 %v7301
    %9687 = vmatpush2.bf16.msra.mxu0 %v7300
    %9688 = vmatprep.mubr.bf16.mxu0 %v65
    %9689 = vmatmul.mubr.bf16.gmra.mxu0 %v64
    %v9690 = vpop.f32.mrf.mxu0
    %v9691 = vadd.f32 %v9650, %v9690
    %v9692 = vpop.f32.mrf.mxu0
    %v9693 = vadd.f32 %v9652, %v9692
    %v9694 = vpop.f32.mrf.mxu0
    %v9695 = vpop.f32.mrf.mxu0
    %9696 = vdwg.mxu0
    %9697 = vmatprep.subr.bf16.mxu0 %v7661
    %9698 = vmatpush1.bf16.msra.mxu0 %v7660
    %9699 = vmatprep.subr.bf16.mxu0 %v7637
    %9700 = vmatpush1.bf16.msra.mxu0 %v7636
    %9701 = vmatprep.subr.bf16.mxu0 %v7613
    %9702 = vmatpush1.bf16.msra.mxu0 %v7612
    %9703 = vmatprep.subr.bf16.mxu0 %v7589
    %9704 = vmatpush1.bf16.msra.mxu0 %v7588
    %9705 = vmatprep.subr.bf16.mxu0 %v7565
    %9706 = vmatpush1.bf16.msra.mxu0 %v7564
    %9707 = vmatprep.subr.bf16.mxu0 %v7541
    %9708 = vmatpush1.bf16.msra.mxu0 %v7540
    %9709 = vmatprep.subr.bf16.mxu0 %v7517
    %9710 = vmatpush1.bf16.msra.mxu0 %v7516
    %9711 = vmatprep.subr.bf16.mxu0 %v7493
    %9712 = vmatpush1.bf16.msra.mxu0 %v7492
    %9713 = vmatprep.subr.bf16.mxu0 %v7853
    %9714 = vmatpush2.bf16.msra.mxu0 %v7852
    %9715 = vmatprep.subr.bf16.mxu0 %v7829
    %9716 = vmatpush2.bf16.msra.mxu0 %v7828
    %9717 = vmatprep.subr.bf16.mxu0 %v7805
    %9718 = vmatpush2.bf16.msra.mxu0 %v7804
    %9719 = vmatprep.subr.bf16.mxu0 %v7781
    %9720 = vmatpush2.bf16.msra.mxu0 %v7780
    %9721 = vmatprep.subr.bf16.mxu0 %v7757
    %9722 = vmatpush2.bf16.msra.mxu0 %v7756
    %9723 = vmatprep.subr.bf16.mxu0 %v7733
    %9724 = vmatpush2.bf16.msra.mxu0 %v7732
    %9725 = vmatprep.subr.bf16.mxu0 %v7709
    %9726 = vmatpush2.bf16.msra.mxu0 %v7708
    %9727 = vmatprep.subr.bf16.mxu0 %v7685
    %9728 = vmatpush2.bf16.msra.mxu0 %v7684
    %9729 = vmatprep.mubr.bf16.mxu0 %v67
    %9730 = vmatmul.mubr.bf16.gmra.mxu0 %v66
    %v9731 = vpop.f32.mrf.mxu0
    %v9732 = vadd.f32 %v9691, %v9731
    %v9733 = vpop.f32.mrf.mxu0
    %v9734 = vadd.f32 %v9693, %v9733
    %v9735 = vpop.f32.mrf.mxu0
    %v9736 = vpop.f32.mrf.mxu0
    %9737 = vdwg.mxu0
    %9738 = vmatprep.subr.bf16.mxu0 %v6511
    %9739 = vmatpush1.bf16.msra.mxu0 %v6510
    %9740 = vmatprep.subr.bf16.mxu0 %v6487
    %9741 = vmatpush1.bf16.msra.mxu0 %v6486
    %9742 = vmatprep.subr.bf16.mxu0 %v6463
    %9743 = vmatpush1.bf16.msra.mxu0 %v6462
    %9744 = vmatprep.subr.bf16.mxu0 %v6439
    %9745 = vmatpush1.bf16.msra.mxu0 %v6438
    %9746 = vmatprep.subr.bf16.mxu0 %v6415
    %9747 = vmatpush1.bf16.msra.mxu0 %v6414
    %9748 = vmatprep.subr.bf16.mxu0 %v6391
    %9749 = vmatpush1.bf16.msra.mxu0 %v6390
    %9750 = vmatprep.subr.bf16.mxu0 %v6367
    %9751 = vmatpush1.bf16.msra.mxu0 %v6366
    %9752 = vmatprep.subr.bf16.mxu0 %v6343
    %9753 = vmatpush1.bf16.msra.mxu0 %v6342
    %9754 = vmatprep.subr.bf16.mxu0 %v6703
    %9755 = vmatpush2.bf16.msra.mxu0 %v6702
    %9756 = vmatprep.subr.bf16.mxu0 %v6679
    %9757 = vmatpush2.bf16.msra.mxu0 %v6678
    %9758 = vmatprep.subr.bf16.mxu0 %v6655
    %9759 = vmatpush2.bf16.msra.mxu0 %v6654
    %9760 = vmatprep.subr.bf16.mxu0 %v6631
    %9761 = vmatpush2.bf16.msra.mxu0 %v6630
    %9762 = vmatprep.subr.bf16.mxu0 %v6607
    %9763 = vmatpush2.bf16.msra.mxu0 %v6606
    %9764 = vmatprep.subr.bf16.mxu0 %v6583
    %9765 = vmatpush2.bf16.msra.mxu0 %v6582
    %9766 = vmatprep.subr.bf16.mxu0 %v6559
    %9767 = vmatpush2.bf16.msra.mxu0 %v6558
    %9768 = vmatprep.subr.bf16.mxu0 %v6535
    %9769 = vmatpush2.bf16.msra.mxu0 %v6534
    %9770 = vmatprep.mubr.bf16.mxu0 %v61
    %9771 = vmatmul.mubr.bf16.gmra.mxu0 %v60
    %v9772 = vpop.f32.mrf.mxu0
    %v9773 = vadd.f32 %v1629, %v9772
    %v9774 = vpop.f32.mrf.mxu0
    %v9775 = vadd.f32 %v1633, %v9774
    %v9776 = vpop.f32.mrf.mxu0
    %v9777 = vpop.f32.mrf.mxu0
    %9778 = vdwg.mxu0
    %9779 = vmatprep.subr.bf16.mxu0 %v6895
    %9780 = vmatpush1.bf16.msra.mxu0 %v6894
    %9781 = vmatprep.subr.bf16.mxu0 %v6871
    %9782 = vmatpush1.bf16.msra.mxu0 %v6870
    %9783 = vmatprep.subr.bf16.mxu0 %v6847
    %9784 = vmatpush1.bf16.msra.mxu0 %v6846
    %9785 = vmatprep.subr.bf16.mxu0 %v6823
    %9786 = vmatpush1.bf16.msra.mxu0 %v6822
    %9787 = vmatprep.subr.bf16.mxu0 %v6799
    %9788 = vmatpush1.bf16.msra.mxu0 %v6798
    %9789 = vmatprep.subr.bf16.mxu0 %v6775
    %9790 = vmatpush1.bf16.msra.mxu0 %v6774
    %9791 = vmatprep.subr.bf16.mxu0 %v6751
    %9792 = vmatpush1.bf16.msra.mxu0 %v6750
    %9793 = vmatprep.subr.bf16.mxu0 %v6727
    %9794 = vmatpush1.bf16.msra.mxu0 %v6726
    %9795 = vmatprep.subr.bf16.mxu0 %v7087
    %9796 = vmatpush2.bf16.msra.mxu0 %v7086
    %9797 = vmatprep.subr.bf16.mxu0 %v7063
    %9798 = vmatpush2.bf16.msra.mxu0 %v7062
    %9799 = vmatprep.subr.bf16.mxu0 %v7039
    %9800 = vmatpush2.bf16.msra.mxu0 %v7038
    %9801 = vmatprep.subr.bf16.mxu0 %v7015
    %9802 = vmatpush2.bf16.msra.mxu0 %v7014
    %9803 = vmatprep.subr.bf16.mxu0 %v6991
    %9804 = vmatpush2.bf16.msra.mxu0 %v6990
    %9805 = vmatprep.subr.bf16.mxu0 %v6967
    %9806 = vmatpush2.bf16.msra.mxu0 %v6966
    %9807 = vmatprep.subr.bf16.mxu0 %v6943
    %9808 = vmatpush2.bf16.msra.mxu0 %v6942
    %9809 = vmatprep.subr.bf16.mxu0 %v6919
    %9810 = vmatpush2.bf16.msra.mxu0 %v6918
    %9811 = vmatprep.mubr.bf16.mxu0 %v63
    %9812 = vmatmul.mubr.bf16.gmra.mxu0 %v62
    %v9813 = vpop.f32.mrf.mxu0
    %v9814 = vadd.f32 %v9773, %v9813
    %v9815 = vpop.f32.mrf.mxu0
    %v9816 = vadd.f32 %v9775, %v9815
    %v9817 = vpop.f32.mrf.mxu0
    %v9818 = vpop.f32.mrf.mxu0
    %9819 = vdwg.mxu0
    %9820 = vmatprep.subr.bf16.mxu0 %v7279
    %9821 = vmatpush1.bf16.msra.mxu0 %v7278
    %9822 = vmatprep.subr.bf16.mxu0 %v7255
    %9823 = vmatpush1.bf16.msra.mxu0 %v7254
    %9824 = vmatprep.subr.bf16.mxu0 %v7231
    %9825 = vmatpush1.bf16.msra.mxu0 %v7230
    %9826 = vmatprep.subr.bf16.mxu0 %v7207
    %9827 = vmatpush1.bf16.msra.mxu0 %v7206
    %9828 = vmatprep.subr.bf16.mxu0 %v7183
    %9829 = vmatpush1.bf16.msra.mxu0 %v7182
    %9830 = vmatprep.subr.bf16.mxu0 %v7159
    %9831 = vmatpush1.bf16.msra.mxu0 %v7158
    %9832 = vmatprep.subr.bf16.mxu0 %v7135
    %9833 = vmatpush1.bf16.msra.mxu0 %v7134
    %9834 = vmatprep.subr.bf16.mxu0 %v7111
    %9835 = vmatpush1.bf16.msra.mxu0 %v7110
    %9836 = vmatprep.subr.bf16.mxu0 %v7471
    %9837 = vmatpush2.bf16.msra.mxu0 %v7470
    %9838 = vmatprep.subr.bf16.mxu0 %v7447
    %9839 = vmatpush2.bf16.msra.mxu0 %v7446
    %9840 = vmatprep.subr.bf16.mxu0 %v7423
    %9841 = vmatpush2.bf16.msra.mxu0 %v7422
    %9842 = vmatprep.subr.bf16.mxu0 %v7399
    %9843 = vmatpush2.bf16.msra.mxu0 %v7398
    %9844 = vmatprep.subr.bf16.mxu0 %v7375
    %9845 = vmatpush2.bf16.msra.mxu0 %v7374
    %9846 = vmatprep.subr.bf16.mxu0 %v7351
    %9847 = vmatpush2.bf16.msra.mxu0 %v7350
    %9848 = vmatprep.subr.bf16.mxu0 %v7327
    %9849 = vmatpush2.bf16.msra.mxu0 %v7326
    %9850 = vmatprep.subr.bf16.mxu0 %v7303
    %9851 = vmatpush2.bf16.msra.mxu0 %v7302
    %9852 = vmatprep.mubr.bf16.mxu0 %v65
    %9853 = vmatmul.mubr.bf16.gmra.mxu0 %v64
    %v9854 = vpop.f32.mrf.mxu0
    %v9855 = vadd.f32 %v9814, %v9854
    %v9856 = vpop.f32.mrf.mxu0
    %v9857 = vadd.f32 %v9816, %v9856
    %v9858 = vpop.f32.mrf.mxu0
    %v9859 = vpop.f32.mrf.mxu0
    %9860 = vdwg.mxu0
    %9861 = vmatprep.subr.bf16.mxu0 %v7663
    %9862 = vmatpush1.bf16.msra.mxu0 %v7662
    %9863 = vmatprep.subr.bf16.mxu0 %v7639
    %9864 = vmatpush1.bf16.msra.mxu0 %v7638
    %9865 = vmatprep.subr.bf16.mxu0 %v7615
    %9866 = vmatpush1.bf16.msra.mxu0 %v7614
    %9867 = vmatprep.subr.bf16.mxu0 %v7591
    %9868 = vmatpush1.bf16.msra.mxu0 %v7590
    %9869 = vmatprep.subr.bf16.mxu0 %v7567
    %9870 = vmatpush1.bf16.msra.mxu0 %v7566
    %9871 = vmatprep.subr.bf16.mxu0 %v7543
    %9872 = vmatpush1.bf16.msra.mxu0 %v7542
    %9873 = vmatprep.subr.bf16.mxu0 %v7519
    %9874 = vmatpush1.bf16.msra.mxu0 %v7518
    %9875 = vmatprep.subr.bf16.mxu0 %v7495
    %9876 = vmatpush1.bf16.msra.mxu0 %v7494
    %9877 = vmatprep.subr.bf16.mxu0 %v7855
    %9878 = vmatpush2.bf16.msra.mxu0 %v7854
    %9879 = vmatprep.subr.bf16.mxu0 %v7831
    %9880 = vmatpush2.bf16.msra.mxu0 %v7830
    %9881 = vmatprep.subr.bf16.mxu0 %v7807
    %9882 = vmatpush2.bf16.msra.mxu0 %v7806
    %9883 = vmatprep.subr.bf16.mxu0 %v7783
    %9884 = vmatpush2.bf16.msra.mxu0 %v7782
    %9885 = vmatprep.subr.bf16.mxu0 %v7759
    %9886 = vmatpush2.bf16.msra.mxu0 %v7758
    %9887 = vmatprep.subr.bf16.mxu0 %v7735
    %9888 = vmatpush2.bf16.msra.mxu0 %v7734
    %9889 = vmatprep.subr.bf16.mxu0 %v7711
    %9890 = vmatpush2.bf16.msra.mxu0 %v7710
    %9891 = vmatprep.subr.bf16.mxu0 %v7687
    %9892 = vmatpush2.bf16.msra.mxu0 %v7686
    %9893 = vmatprep.mubr.bf16.mxu0 %v67
    %9894 = vmatmul.mubr.bf16.gmra.mxu0 %v66
    %v9895 = vpop.f32.mrf.mxu0
    %v9896 = vadd.f32 %v9855, %v9895
    %v9897 = vpop.f32.mrf.mxu0
    %v9898 = vadd.f32 %v9857, %v9897
    %v9899 = vpop.f32.mrf.mxu0
    %v9900 = vpop.f32.mrf.mxu0
    %9901 = vdwg.mxu0
    %9902 = vmatprep.subr.bf16.mxu0 %v6513
    %9903 = vmatpush1.bf16.msra.mxu0 %v6512
    %9904 = vmatprep.subr.bf16.mxu0 %v6489
    %9905 = vmatpush1.bf16.msra.mxu0 %v6488
    %9906 = vmatprep.subr.bf16.mxu0 %v6465
    %9907 = vmatpush1.bf16.msra.mxu0 %v6464
    %9908 = vmatprep.subr.bf16.mxu0 %v6441
    %9909 = vmatpush1.bf16.msra.mxu0 %v6440
    %9910 = vmatprep.subr.bf16.mxu0 %v6417
    %9911 = vmatpush1.bf16.msra.mxu0 %v6416
    %9912 = vmatprep.subr.bf16.mxu0 %v6393
    %9913 = vmatpush1.bf16.msra.mxu0 %v6392
    %9914 = vmatprep.subr.bf16.mxu0 %v6369
    %9915 = vmatpush1.bf16.msra.mxu0 %v6368
    %9916 = vmatprep.subr.bf16.mxu0 %v6345
    %9917 = vmatpush1.bf16.msra.mxu0 %v6344
    %9918 = vmatprep.subr.bf16.mxu0 %v6705
    %9919 = vmatpush2.bf16.msra.mxu0 %v6704
    %9920 = vmatprep.subr.bf16.mxu0 %v6681
    %9921 = vmatpush2.bf16.msra.mxu0 %v6680
    %9922 = vmatprep.subr.bf16.mxu0 %v6657
    %9923 = vmatpush2.bf16.msra.mxu0 %v6656
    %9924 = vmatprep.subr.bf16.mxu0 %v6633
    %9925 = vmatpush2.bf16.msra.mxu0 %v6632
    %9926 = vmatprep.subr.bf16.mxu0 %v6609
    %9927 = vmatpush2.bf16.msra.mxu0 %v6608
    %9928 = vmatprep.subr.bf16.mxu0 %v6585
    %9929 = vmatpush2.bf16.msra.mxu0 %v6584
    %9930 = vmatprep.subr.bf16.mxu0 %v6561
    %9931 = vmatpush2.bf16.msra.mxu0 %v6560
    %9932 = vmatprep.subr.bf16.mxu0 %v6537
    %9933 = vmatpush2.bf16.msra.mxu0 %v6536
    %9934 = vmatprep.mubr.bf16.mxu0 %v61
    %9935 = vmatmul.mubr.bf16.gmra.mxu0 %v60
    %v9936 = vpop.f32.mrf.mxu0
    %v9937 = vadd.f32 %v1637, %v9936
    %v9938 = vpop.f32.mrf.mxu0
    %v9939 = vadd.f32 %v1641, %v9938
    %v9940 = vpop.f32.mrf.mxu0
    %v9941 = vpop.f32.mrf.mxu0
    %9942 = vdwg.mxu0
    %9943 = vmatprep.subr.bf16.mxu0 %v6897
    %9944 = vmatpush1.bf16.msra.mxu0 %v6896
    %9945 = vmatprep.subr.bf16.mxu0 %v6873
    %9946 = vmatpush1.bf16.msra.mxu0 %v6872
    %9947 = vmatprep.subr.bf16.mxu0 %v6849
    %9948 = vmatpush1.bf16.msra.mxu0 %v6848
    %9949 = vmatprep.subr.bf16.mxu0 %v6825
    %9950 = vmatpush1.bf16.msra.mxu0 %v6824
    %9951 = vmatprep.subr.bf16.mxu0 %v6801
    %9952 = vmatpush1.bf16.msra.mxu0 %v6800
    %9953 = vmatprep.subr.bf16.mxu0 %v6777
    %9954 = vmatpush1.bf16.msra.mxu0 %v6776
    %9955 = vmatprep.subr.bf16.mxu0 %v6753
    %9956 = vmatpush1.bf16.msra.mxu0 %v6752
    %9957 = vmatprep.subr.bf16.mxu0 %v6729
    %9958 = vmatpush1.bf16.msra.mxu0 %v6728
    %9959 = vmatprep.subr.bf16.mxu0 %v7089
    %9960 = vmatpush2.bf16.msra.mxu0 %v7088
    %9961 = vmatprep.subr.bf16.mxu0 %v7065
    %9962 = vmatpush2.bf16.msra.mxu0 %v7064
    %9963 = vmatprep.subr.bf16.mxu0 %v7041
    %9964 = vmatpush2.bf16.msra.mxu0 %v7040
    %9965 = vmatprep.subr.bf16.mxu0 %v7017
    %9966 = vmatpush2.bf16.msra.mxu0 %v7016
    %9967 = vmatprep.subr.bf16.mxu0 %v6993
    %9968 = vmatpush2.bf16.msra.mxu0 %v6992
    %9969 = vmatprep.subr.bf16.mxu0 %v6969
    %9970 = vmatpush2.bf16.msra.mxu0 %v6968
    %9971 = vmatprep.subr.bf16.mxu0 %v6945
    %9972 = vmatpush2.bf16.msra.mxu0 %v6944
    %9973 = vmatprep.subr.bf16.mxu0 %v6921
    %9974 = vmatpush2.bf16.msra.mxu0 %v6920
    %9975 = vmatprep.mubr.bf16.mxu0 %v63
    %9976 = vmatmul.mubr.bf16.gmra.mxu0 %v62
    %v9977 = vpop.f32.mrf.mxu0
    %v9978 = vadd.f32 %v9937, %v9977
    %v9979 = vpop.f32.mrf.mxu0
    %v9980 = vadd.f32 %v9939, %v9979
    %v9981 = vpop.f32.mrf.mxu0
    %v9982 = vpop.f32.mrf.mxu0
    %9983 = vdwg.mxu0
    %9984 = vmatprep.subr.bf16.mxu0 %v7281
    %9985 = vmatpush1.bf16.msra.mxu0 %v7280
    %9986 = vmatprep.subr.bf16.mxu0 %v7257
    %9987 = vmatpush1.bf16.msra.mxu0 %v7256
    %9988 = vmatprep.subr.bf16.mxu0 %v7233
    %9989 = vmatpush1.bf16.msra.mxu0 %v7232
    %9990 = vmatprep.subr.bf16.mxu0 %v7209
    %9991 = vmatpush1.bf16.msra.mxu0 %v7208
    %9992 = vmatprep.subr.bf16.mxu0 %v7185
    %9993 = vmatpush1.bf16.msra.mxu0 %v7184
    %9994 = vmatprep.subr.bf16.mxu0 %v7161
    %9995 = vmatpush1.bf16.msra.mxu0 %v7160
    %9996 = vmatprep.subr.bf16.mxu0 %v7137
    %9997 = vmatpush1.bf16.msra.mxu0 %v7136
    %9998 = vmatprep.subr.bf16.mxu0 %v7113
    %9999 = vmatpush1.bf16.msra.mxu0 %v7112
    %10000 = vmatprep.subr.bf16.mxu0 %v7473
    %10001 = vmatpush2.bf16.msra.mxu0 %v7472
    %10002 = vmatprep.subr.bf16.mxu0 %v7449
    %10003 = vmatpush2.bf16.msra.mxu0 %v7448
    %10004 = vmatprep.subr.bf16.mxu0 %v7425
    %10005 = vmatpush2.bf16.msra.mxu0 %v7424
    %10006 = vmatprep.subr.bf16.mxu0 %v7401
    %10007 = vmatpush2.bf16.msra.mxu0 %v7400
    %10008 = vmatprep.subr.bf16.mxu0 %v7377
    %10009 = vmatpush2.bf16.msra.mxu0 %v7376
    %10010 = vmatprep.subr.bf16.mxu0 %v7353
    %10011 = vmatpush2.bf16.msra.mxu0 %v7352
    %10012 = vmatprep.subr.bf16.mxu0 %v7329
    %10013 = vmatpush2.bf16.msra.mxu0 %v7328
    %10014 = vmatprep.subr.bf16.mxu0 %v7305
    %10015 = vmatpush2.bf16.msra.mxu0 %v7304
    %10016 = vmatprep.mubr.bf16.mxu0 %v65
    %10017 = vmatmul.mubr.bf16.gmra.mxu0 %v64
    %v10018 = vpop.f32.mrf.mxu0
    %v10019 = vadd.f32 %v9978, %v10018
    %v10020 = vpop.f32.mrf.mxu0
    %v10021 = vadd.f32 %v9980, %v10020
    %v10022 = vpop.f32.mrf.mxu0
    %v10023 = vpop.f32.mrf.mxu0
    %10024 = vdwg.mxu0
    %10025 = vmatprep.subr.bf16.mxu0 %v7665
    %10026 = vmatpush1.bf16.msra.mxu0 %v7664
    %10027 = vmatprep.subr.bf16.mxu0 %v7641
    %10028 = vmatpush1.bf16.msra.mxu0 %v7640
    %10029 = vmatprep.subr.bf16.mxu0 %v7617
    %10030 = vmatpush1.bf16.msra.mxu0 %v7616
    %10031 = vmatprep.subr.bf16.mxu0 %v7593
    %10032 = vmatpush1.bf16.msra.mxu0 %v7592
    %10033 = vmatprep.subr.bf16.mxu0 %v7569
    %10034 = vmatpush1.bf16.msra.mxu0 %v7568
    %10035 = vmatprep.subr.bf16.mxu0 %v7545
    %10036 = vmatpush1.bf16.msra.mxu0 %v7544
    %10037 = vmatprep.subr.bf16.mxu0 %v7521
    %10038 = vmatpush1.bf16.msra.mxu0 %v7520
    %10039 = vmatprep.subr.bf16.mxu0 %v7497
    %10040 = vmatpush1.bf16.msra.mxu0 %v7496
    %10041 = vmatprep.subr.bf16.mxu0 %v7857
    %10042 = vmatpush2.bf16.msra.mxu0 %v7856
    %10043 = vmatprep.subr.bf16.mxu0 %v7833
    %10044 = vmatpush2.bf16.msra.mxu0 %v7832
    %10045 = vmatprep.subr.bf16.mxu0 %v7809
    %10046 = vmatpush2.bf16.msra.mxu0 %v7808
    %10047 = vmatprep.subr.bf16.mxu0 %v7785
    %10048 = vmatpush2.bf16.msra.mxu0 %v7784
    %10049 = vmatprep.subr.bf16.mxu0 %v7761
    %10050 = vmatpush2.bf16.msra.mxu0 %v7760
    %10051 = vmatprep.subr.bf16.mxu0 %v7737
    %10052 = vmatpush2.bf16.msra.mxu0 %v7736
    %10053 = vmatprep.subr.bf16.mxu0 %v7713
    %10054 = vmatpush2.bf16.msra.mxu0 %v7712
    %10055 = vmatprep.subr.bf16.mxu0 %v7689
    %10056 = vmatpush2.bf16.msra.mxu0 %v7688
    %10057 = vmatprep.mubr.bf16.mxu0 %v67
    %10058 = vmatmul.mubr.bf16.gmra.mxu0 %v66
    %v10059 = vpop.f32.mrf.mxu0
    %v10060 = vadd.f32 %v10019, %v10059
    %v10061 = vpop.f32.mrf.mxu0
    %v10062 = vadd.f32 %v10021, %v10061
    %v10063 = vpop.f32.mrf.mxu0
    %v10064 = vpop.f32.mrf.mxu0
    %10065 = vdwg.mxu0
    %10066 = vmatprep.subr.bf16.mxu0 %v6515
    %10067 = vmatpush1.bf16.msra.mxu0 %v6514
    %10068 = vmatprep.subr.bf16.mxu0 %v6491
    %10069 = vmatpush1.bf16.msra.mxu0 %v6490
    %10070 = vmatprep.subr.bf16.mxu0 %v6467
    %10071 = vmatpush1.bf16.msra.mxu0 %v6466
    %10072 = vmatprep.subr.bf16.mxu0 %v6443
    %10073 = vmatpush1.bf16.msra.mxu0 %v6442
    %10074 = vmatprep.subr.bf16.mxu0 %v6419
    %10075 = vmatpush1.bf16.msra.mxu0 %v6418
    %10076 = vmatprep.subr.bf16.mxu0 %v6395
    %10077 = vmatpush1.bf16.msra.mxu0 %v6394
    %10078 = vmatprep.subr.bf16.mxu0 %v6371
    %10079 = vmatpush1.bf16.msra.mxu0 %v6370
    %10080 = vmatprep.subr.bf16.mxu0 %v6347
    %10081 = vmatpush1.bf16.msra.mxu0 %v6346
    %10082 = vmatprep.subr.bf16.mxu0 %v6707
    %10083 = vmatpush2.bf16.msra.mxu0 %v6706
    %10084 = vmatprep.subr.bf16.mxu0 %v6683
    %10085 = vmatpush2.bf16.msra.mxu0 %v6682
    %10086 = vmatprep.subr.bf16.mxu0 %v6659
    %10087 = vmatpush2.bf16.msra.mxu0 %v6658
    %10088 = vmatprep.subr.bf16.mxu0 %v6635
    %10089 = vmatpush2.bf16.msra.mxu0 %v6634
    %10090 = vmatprep.subr.bf16.mxu0 %v6611
    %10091 = vmatpush2.bf16.msra.mxu0 %v6610
    %10092 = vmatprep.subr.bf16.mxu0 %v6587
    %10093 = vmatpush2.bf16.msra.mxu0 %v6586
    %10094 = vmatprep.subr.bf16.mxu0 %v6563
    %10095 = vmatpush2.bf16.msra.mxu0 %v6562
    %10096 = vmatprep.subr.bf16.mxu0 %v6539
    %10097 = vmatpush2.bf16.msra.mxu0 %v6538
    %10098 = vmatprep.mubr.bf16.mxu0 %v61
    %10099 = vmatmul.mubr.bf16.gmra.mxu0 %v60
    %v10100 = vpop.f32.mrf.mxu0
    %v10101 = vadd.f32 %v1645, %v10100
    %v10102 = vpop.f32.mrf.mxu0
    %v10103 = vadd.f32 %v1649, %v10102
    %v10104 = vpop.f32.mrf.mxu0
    %v10105 = vpop.f32.mrf.mxu0
    %10106 = vdwg.mxu0
    %10107 = vmatprep.subr.bf16.mxu0 %v6899
    %10108 = vmatpush1.bf16.msra.mxu0 %v6898
    %10109 = vmatprep.subr.bf16.mxu0 %v6875
    %10110 = vmatpush1.bf16.msra.mxu0 %v6874
    %10111 = vmatprep.subr.bf16.mxu0 %v6851
    %10112 = vmatpush1.bf16.msra.mxu0 %v6850
    %10113 = vmatprep.subr.bf16.mxu0 %v6827
    %10114 = vmatpush1.bf16.msra.mxu0 %v6826
    %10115 = vmatprep.subr.bf16.mxu0 %v6803
    %10116 = vmatpush1.bf16.msra.mxu0 %v6802
    %10117 = vmatprep.subr.bf16.mxu0 %v6779
    %10118 = vmatpush1.bf16.msra.mxu0 %v6778
    %10119 = vmatprep.subr.bf16.mxu0 %v6755
    %10120 = vmatpush1.bf16.msra.mxu0 %v6754
    %10121 = vmatprep.subr.bf16.mxu0 %v6731
    %10122 = vmatpush1.bf16.msra.mxu0 %v6730
    %10123 = vmatprep.subr.bf16.mxu0 %v7091
    %10124 = vmatpush2.bf16.msra.mxu0 %v7090
    %10125 = vmatprep.subr.bf16.mxu0 %v7067
    %10126 = vmatpush2.bf16.msra.mxu0 %v7066
    %10127 = vmatprep.subr.bf16.mxu0 %v7043
    %10128 = vmatpush2.bf16.msra.mxu0 %v7042
    %10129 = vmatprep.subr.bf16.mxu0 %v7019
    %10130 = vmatpush2.bf16.msra.mxu0 %v7018
    %10131 = vmatprep.subr.bf16.mxu0 %v6995
    %10132 = vmatpush2.bf16.msra.mxu0 %v6994
    %10133 = vmatprep.subr.bf16.mxu0 %v6971
    %10134 = vmatpush2.bf16.msra.mxu0 %v6970
    %10135 = vmatprep.subr.bf16.mxu0 %v6947
    %10136 = vmatpush2.bf16.msra.mxu0 %v6946
    %10137 = vmatprep.subr.bf16.mxu0 %v6923
    %10138 = vmatpush2.bf16.msra.mxu0 %v6922
    %10139 = vmatprep.mubr.bf16.mxu0 %v63
    %10140 = vmatmul.mubr.bf16.gmra.mxu0 %v62
    %v10141 = vpop.f32.mrf.mxu0
    %v10142 = vadd.f32 %v10101, %v10141
    %v10143 = vpop.f32.mrf.mxu0
    %v10144 = vadd.f32 %v10103, %v10143
    %v10145 = vpop.f32.mrf.mxu0
    %v10146 = vpop.f32.mrf.mxu0
    %10147 = vdwg.mxu0
    %10148 = vmatprep.subr.bf16.mxu0 %v7283
    %10149 = vmatpush1.bf16.msra.mxu0 %v7282
    %10150 = vmatprep.subr.bf16.mxu0 %v7259
    %10151 = vmatpush1.bf16.msra.mxu0 %v7258
    %10152 = vmatprep.subr.bf16.mxu0 %v7235
    %10153 = vmatpush1.bf16.msra.mxu0 %v7234
    %10154 = vmatprep.subr.bf16.mxu0 %v7211
    %10155 = vmatpush1.bf16.msra.mxu0 %v7210
    %10156 = vmatprep.subr.bf16.mxu0 %v7187
    %10157 = vmatpush1.bf16.msra.mxu0 %v7186
    %10158 = vmatprep.subr.bf16.mxu0 %v7163
    %10159 = vmatpush1.bf16.msra.mxu0 %v7162
    %10160 = vmatprep.subr.bf16.mxu0 %v7139
    %10161 = vmatpush1.bf16.msra.mxu0 %v7138
    %10162 = vmatprep.subr.bf16.mxu0 %v7115
    %10163 = vmatpush1.bf16.msra.mxu0 %v7114
    %10164 = vmatprep.subr.bf16.mxu0 %v7475
    %10165 = vmatpush2.bf16.msra.mxu0 %v7474
    %10166 = vmatprep.subr.bf16.mxu0 %v7451
    %10167 = vmatpush2.bf16.msra.mxu0 %v7450
    %10168 = vmatprep.subr.bf16.mxu0 %v7427
    %10169 = vmatpush2.bf16.msra.mxu0 %v7426
    %10170 = vmatprep.subr.bf16.mxu0 %v7403
    %10171 = vmatpush2.bf16.msra.mxu0 %v7402
    %10172 = vmatprep.subr.bf16.mxu0 %v7379
    %10173 = vmatpush2.bf16.msra.mxu0 %v7378
    %10174 = vmatprep.subr.bf16.mxu0 %v7355
    %10175 = vmatpush2.bf16.msra.mxu0 %v7354
    %10176 = vmatprep.subr.bf16.mxu0 %v7331
    %10177 = vmatpush2.bf16.msra.mxu0 %v7330
    %10178 = vmatprep.subr.bf16.mxu0 %v7307
    %10179 = vmatpush2.bf16.msra.mxu0 %v7306
    %10180 = vmatprep.mubr.bf16.mxu0 %v65
    %10181 = vmatmul.mubr.bf16.gmra.mxu0 %v64
    %v10182 = vpop.f32.mrf.mxu0
    %v10183 = vadd.f32 %v10142, %v10182
    %v10184 = vpop.f32.mrf.mxu0
    %v10185 = vadd.f32 %v10144, %v10184
    %v10186 = vpop.f32.mrf.mxu0
    %v10187 = vpop.f32.mrf.mxu0
    %10188 = vdwg.mxu0
    %10189 = vmatprep.subr.bf16.mxu0 %v7667
    %10190 = vmatpush1.bf16.msra.mxu0 %v7666
    %10191 = vmatprep.subr.bf16.mxu0 %v7643
    %10192 = vmatpush1.bf16.msra.mxu0 %v7642
    %10193 = vmatprep.subr.bf16.mxu0 %v7619
    %10194 = vmatpush1.bf16.msra.mxu0 %v7618
    %10195 = vmatprep.subr.bf16.mxu0 %v7595
    %10196 = vmatpush1.bf16.msra.mxu0 %v7594
    %10197 = vmatprep.subr.bf16.mxu0 %v7571
    %10198 = vmatpush1.bf16.msra.mxu0 %v7570
    %10199 = vmatprep.subr.bf16.mxu0 %v7547
    %10200 = vmatpush1.bf16.msra.mxu0 %v7546
    %10201 = vmatprep.subr.bf16.mxu0 %v7523
    %10202 = vmatpush1.bf16.msra.mxu0 %v7522
    %10203 = vmatprep.subr.bf16.mxu0 %v7499
    %10204 = vmatpush1.bf16.msra.mxu0 %v7498
    %10205 = vmatprep.subr.bf16.mxu0 %v7859
    %10206 = vmatpush2.bf16.msra.mxu0 %v7858
    %10207 = vmatprep.subr.bf16.mxu0 %v7835
    %10208 = vmatpush2.bf16.msra.mxu0 %v7834
    %10209 = vmatprep.subr.bf16.mxu0 %v7811
    %10210 = vmatpush2.bf16.msra.mxu0 %v7810
    %10211 = vmatprep.subr.bf16.mxu0 %v7787
    %10212 = vmatpush2.bf16.msra.mxu0 %v7786
    %10213 = vmatprep.subr.bf16.mxu0 %v7763
    %10214 = vmatpush2.bf16.msra.mxu0 %v7762
    %10215 = vmatprep.subr.bf16.mxu0 %v7739
    %10216 = vmatpush2.bf16.msra.mxu0 %v7738
    %10217 = vmatprep.subr.bf16.mxu0 %v7715
    %10218 = vmatpush2.bf16.msra.mxu0 %v7714
    %10219 = vmatprep.subr.bf16.mxu0 %v7691
    %10220 = vmatpush2.bf16.msra.mxu0 %v7690
    %10221 = vmatprep.mubr.bf16.mxu0 %v67
    %10222 = vmatmul.mubr.bf16.gmra.mxu0 %v66
    %v10223 = vpop.f32.mrf.mxu0
    %v10224 = vadd.f32 %v10183, %v10223
    %v10225 = vpop.f32.mrf.mxu0
    %v10226 = vadd.f32 %v10185, %v10225
    %v10227 = vpop.f32.mrf.mxu0
    %v10228 = vpop.f32.mrf.mxu0
    %10229 = vdwg.mxu0
    %10230 = vmatprep.subr.bf16.mxu0 %v6517
    %10231 = vmatpush1.bf16.msra.mxu0 %v6516
    %10232 = vmatprep.subr.bf16.mxu0 %v6493
    %10233 = vmatpush1.bf16.msra.mxu0 %v6492
    %10234 = vmatprep.subr.bf16.mxu0 %v6469
    %10235 = vmatpush1.bf16.msra.mxu0 %v6468
    %10236 = vmatprep.subr.bf16.mxu0 %v6445
    %10237 = vmatpush1.bf16.msra.mxu0 %v6444
    %10238 = vmatprep.subr.bf16.mxu0 %v6421
    %10239 = vmatpush1.bf16.msra.mxu0 %v6420
    %10240 = vmatprep.subr.bf16.mxu0 %v6397
    %10241 = vmatpush1.bf16.msra.mxu0 %v6396
    %10242 = vmatprep.subr.bf16.mxu0 %v6373
    %10243 = vmatpush1.bf16.msra.mxu0 %v6372
    %10244 = vmatprep.subr.bf16.mxu0 %v6349
    %10245 = vmatpush1.bf16.msra.mxu0 %v6348
    %10246 = vmatprep.subr.bf16.mxu0 %v6709
    %10247 = vmatpush2.bf16.msra.mxu0 %v6708
    %10248 = vmatprep.subr.bf16.mxu0 %v6685
    %10249 = vmatpush2.bf16.msra.mxu0 %v6684
    %10250 = vmatprep.subr.bf16.mxu0 %v6661
    %10251 = vmatpush2.bf16.msra.mxu0 %v6660
    %10252 = vmatprep.subr.bf16.mxu0 %v6637
    %10253 = vmatpush2.bf16.msra.mxu0 %v6636
    %10254 = vmatprep.subr.bf16.mxu0 %v6613
    %10255 = vmatpush2.bf16.msra.mxu0 %v6612
    %10256 = vmatprep.subr.bf16.mxu0 %v6589
    %10257 = vmatpush2.bf16.msra.mxu0 %v6588
    %10258 = vmatprep.subr.bf16.mxu0 %v6565
    %10259 = vmatpush2.bf16.msra.mxu0 %v6564
    %10260 = vmatprep.subr.bf16.mxu0 %v6541
    %10261 = vmatpush2.bf16.msra.mxu0 %v6540
    %10262 = vmatprep.mubr.bf16.mxu0 %v61
    %10263 = vmatmul.mubr.bf16.gmra.mxu0 %v60
    %v10264 = vpop.f32.mrf.mxu0
    %v10265 = vadd.f32 %v1653, %v10264
    %v10266 = vpop.f32.mrf.mxu0
    %v10267 = vadd.f32 %v1657, %v10266
    %v10268 = vpop.f32.mrf.mxu0
    %v10269 = vpop.f32.mrf.mxu0
    %10270 = vdwg.mxu0
    %10271 = vmatprep.subr.bf16.mxu0 %v6901
    %10272 = vmatpush1.bf16.msra.mxu0 %v6900
    %10273 = vmatprep.subr.bf16.mxu0 %v6877
    %10274 = vmatpush1.bf16.msra.mxu0 %v6876
    %10275 = vmatprep.subr.bf16.mxu0 %v6853
    %10276 = vmatpush1.bf16.msra.mxu0 %v6852
    %10277 = vmatprep.subr.bf16.mxu0 %v6829
    %10278 = vmatpush1.bf16.msra.mxu0 %v6828
    %10279 = vmatprep.subr.bf16.mxu0 %v6805
    %10280 = vmatpush1.bf16.msra.mxu0 %v6804
    %10281 = vmatprep.subr.bf16.mxu0 %v6781
    %10282 = vmatpush1.bf16.msra.mxu0 %v6780
    %10283 = vmatprep.subr.bf16.mxu0 %v6757
    %10284 = vmatpush1.bf16.msra.mxu0 %v6756
    %10285 = vmatprep.subr.bf16.mxu0 %v6733
    %10286 = vmatpush1.bf16.msra.mxu0 %v6732
    %10287 = vmatprep.subr.bf16.mxu0 %v7093
    %10288 = vmatpush2.bf16.msra.mxu0 %v7092
    %10289 = vmatprep.subr.bf16.mxu0 %v7069
    %10290 = vmatpush2.bf16.msra.mxu0 %v7068
    %10291 = vmatprep.subr.bf16.mxu0 %v7045
    %10292 = vmatpush2.bf16.msra.mxu0 %v7044
    %10293 = vmatprep.subr.bf16.mxu0 %v7021
    %10294 = vmatpush2.bf16.msra.mxu0 %v7020
    %10295 = vmatprep.subr.bf16.mxu0 %v6997
    %10296 = vmatpush2.bf16.msra.mxu0 %v6996
    %10297 = vmatprep.subr.bf16.mxu0 %v6973
    %10298 = vmatpush2.bf16.msra.mxu0 %v6972
    %10299 = vmatprep.subr.bf16.mxu0 %v6949
    %10300 = vmatpush2.bf16.msra.mxu0 %v6948
    %10301 = vmatprep.subr.bf16.mxu0 %v6925
    %10302 = vmatpush2.bf16.msra.mxu0 %v6924
    %10303 = vmatprep.mubr.bf16.mxu0 %v63
    %10304 = vmatmul.mubr.bf16.gmra.mxu0 %v62
    %v10305 = vpop.f32.mrf.mxu0
    %v10306 = vadd.f32 %v10265, %v10305
    %v10307 = vpop.f32.mrf.mxu0
    %v10308 = vadd.f32 %v10267, %v10307
    %v10309 = vpop.f32.mrf.mxu0
    %v10310 = vpop.f32.mrf.mxu0
    %10311 = vdwg.mxu0
    %10312 = vmatprep.subr.bf16.mxu0 %v7285
    %10313 = vmatpush1.bf16.msra.mxu0 %v7284
    %10314 = vmatprep.subr.bf16.mxu0 %v7261
    %10315 = vmatpush1.bf16.msra.mxu0 %v7260
    %10316 = vmatprep.subr.bf16.mxu0 %v7237
    %10317 = vmatpush1.bf16.msra.mxu0 %v7236
    %10318 = vmatprep.subr.bf16.mxu0 %v7213
    %10319 = vmatpush1.bf16.msra.mxu0 %v7212
    %10320 = vmatprep.subr.bf16.mxu0 %v7189
    %10321 = vmatpush1.bf16.msra.mxu0 %v7188
    %10322 = vmatprep.subr.bf16.mxu0 %v7165
    %10323 = vmatpush1.bf16.msra.mxu0 %v7164
    %10324 = vmatprep.subr.bf16.mxu0 %v7141
    %10325 = vmatpush1.bf16.msra.mxu0 %v7140
    %10326 = vmatprep.subr.bf16.mxu0 %v7117
    %10327 = vmatpush1.bf16.msra.mxu0 %v7116
    %10328 = vmatprep.subr.bf16.mxu0 %v7477
    %10329 = vmatpush2.bf16.msra.mxu0 %v7476
    %10330 = vmatprep.subr.bf16.mxu0 %v7453
    %10331 = vmatpush2.bf16.msra.mxu0 %v7452
    %10332 = vmatprep.subr.bf16.mxu0 %v7429
    %10333 = vmatpush2.bf16.msra.mxu0 %v7428
    %10334 = vmatprep.subr.bf16.mxu0 %v7405
    %10335 = vmatpush2.bf16.msra.mxu0 %v7404
    %10336 = vmatprep.subr.bf16.mxu0 %v7381
    %10337 = vmatpush2.bf16.msra.mxu0 %v7380
    %10338 = vmatprep.subr.bf16.mxu0 %v7357
    %10339 = vmatpush2.bf16.msra.mxu0 %v7356
    %10340 = vmatprep.subr.bf16.mxu0 %v7333
    %10341 = vmatpush2.bf16.msra.mxu0 %v7332
    %10342 = vmatprep.subr.bf16.mxu0 %v7309
    %10343 = vmatpush2.bf16.msra.mxu0 %v7308
    %10344 = vmatprep.mubr.bf16.mxu0 %v65
    %10345 = vmatmul.mubr.bf16.gmra.mxu0 %v64
    %v10346 = vpop.f32.mrf.mxu0
    %v10347 = vadd.f32 %v10306, %v10346
    %v10348 = vpop.f32.mrf.mxu0
    %v10349 = vadd.f32 %v10308, %v10348
    %v10350 = vpop.f32.mrf.mxu0
    %v10351 = vpop.f32.mrf.mxu0
    %10352 = vdwg.mxu0
    %10353 = vmatprep.subr.bf16.mxu0 %v7669
    %10354 = vmatpush1.bf16.msra.mxu0 %v7668
    %10355 = vmatprep.subr.bf16.mxu0 %v7645
    %10356 = vmatpush1.bf16.msra.mxu0 %v7644
    %10357 = vmatprep.subr.bf16.mxu0 %v7621
    %10358 = vmatpush1.bf16.msra.mxu0 %v7620
    %10359 = vmatprep.subr.bf16.mxu0 %v7597
    %10360 = vmatpush1.bf16.msra.mxu0 %v7596
    %10361 = vmatprep.subr.bf16.mxu0 %v7573
    %10362 = vmatpush1.bf16.msra.mxu0 %v7572
    %10363 = vmatprep.subr.bf16.mxu0 %v7549
    %10364 = vmatpush1.bf16.msra.mxu0 %v7548
    %10365 = vmatprep.subr.bf16.mxu0 %v7525
    %10366 = vmatpush1.bf16.msra.mxu0 %v7524
    %10367 = vmatprep.subr.bf16.mxu0 %v7501
    %10368 = vmatpush1.bf16.msra.mxu0 %v7500
    %10369 = vmatprep.subr.bf16.mxu0 %v7861
    %10370 = vmatpush2.bf16.msra.mxu0 %v7860
    %10371 = vmatprep.subr.bf16.mxu0 %v7837
    %10372 = vmatpush2.bf16.msra.mxu0 %v7836
    %10373 = vmatprep.subr.bf16.mxu0 %v7813
    %10374 = vmatpush2.bf16.msra.mxu0 %v7812
    %10375 = vmatprep.subr.bf16.mxu0 %v7789
    %10376 = vmatpush2.bf16.msra.mxu0 %v7788
    %10377 = vmatprep.subr.bf16.mxu0 %v7765
    %10378 = vmatpush2.bf16.msra.mxu0 %v7764
    %10379 = vmatprep.subr.bf16.mxu0 %v7741
    %10380 = vmatpush2.bf16.msra.mxu0 %v7740
    %10381 = vmatprep.subr.bf16.mxu0 %v7717
    %10382 = vmatpush2.bf16.msra.mxu0 %v7716
    %10383 = vmatprep.subr.bf16.mxu0 %v7693
    %10384 = vmatpush2.bf16.msra.mxu0 %v7692
    %10385 = vmatprep.mubr.bf16.mxu0 %v67
    %10386 = vmatmul.mubr.bf16.gmra.mxu0 %v66
    %v10387 = vpop.f32.mrf.mxu0
    %v10388 = vadd.f32 %v10347, %v10387
    %v10389 = vpop.f32.mrf.mxu0
    %v10390 = vadd.f32 %v10349, %v10389
    %v10391 = vpop.f32.mrf.mxu0
    %v10392 = vpop.f32.mrf.mxu0
    %10393 = vdwg.mxu0
    %10394 = vmatprep.subr.bf16.mxu0 %v6519
    %10395 = vmatpush1.bf16.msra.mxu0 %v6518
    %10396 = vmatprep.subr.bf16.mxu0 %v6495
    %10397 = vmatpush1.bf16.msra.mxu0 %v6494
    %10398 = vmatprep.subr.bf16.mxu0 %v6471
    %10399 = vmatpush1.bf16.msra.mxu0 %v6470
    %10400 = vmatprep.subr.bf16.mxu0 %v6447
    %10401 = vmatpush1.bf16.msra.mxu0 %v6446
    %10402 = vmatprep.subr.bf16.mxu0 %v6423
    %10403 = vmatpush1.bf16.msra.mxu0 %v6422
    %10404 = vmatprep.subr.bf16.mxu0 %v6399
    %10405 = vmatpush1.bf16.msra.mxu0 %v6398
    %10406 = vmatprep.subr.bf16.mxu0 %v6375
    %10407 = vmatpush1.bf16.msra.mxu0 %v6374
    %10408 = vmatprep.subr.bf16.mxu0 %v6351
    %10409 = vmatpush1.bf16.msra.mxu0 %v6350
    %10410 = vmatprep.subr.bf16.mxu0 %v6711
    %10411 = vmatpush2.bf16.msra.mxu0 %v6710
    %10412 = vmatprep.subr.bf16.mxu0 %v6687
    %10413 = vmatpush2.bf16.msra.mxu0 %v6686
    %10414 = vmatprep.subr.bf16.mxu0 %v6663
    %10415 = vmatpush2.bf16.msra.mxu0 %v6662
    %10416 = vmatprep.subr.bf16.mxu0 %v6639
    %10417 = vmatpush2.bf16.msra.mxu0 %v6638
    %10418 = vmatprep.subr.bf16.mxu0 %v6615
    %10419 = vmatpush2.bf16.msra.mxu0 %v6614
    %10420 = vmatprep.subr.bf16.mxu0 %v6591
    %10421 = vmatpush2.bf16.msra.mxu0 %v6590
    %10422 = vmatprep.subr.bf16.mxu0 %v6567
    %10423 = vmatpush2.bf16.msra.mxu0 %v6566
    %10424 = vmatprep.subr.bf16.mxu0 %v6543
    %10425 = vmatpush2.bf16.msra.mxu0 %v6542
    %10426 = vmatprep.mubr.bf16.mxu0 %v61
    %10427 = vmatmul.mubr.bf16.gmra.mxu0 %v60
    %v10428 = vpop.f32.mrf.mxu0
    %v10429 = vadd.f32 %v1661, %v10428
    %v10430 = vpop.f32.mrf.mxu0
    %v10431 = vadd.f32 %v1665, %v10430
    %v10432 = vpop.f32.mrf.mxu0
    %v10433 = vpop.f32.mrf.mxu0
    %10434 = vdwg.mxu0
    %10435 = vmatprep.subr.bf16.mxu0 %v6903
    %10436 = vmatpush1.bf16.msra.mxu0 %v6902
    %10437 = vmatprep.subr.bf16.mxu0 %v6879
    %10438 = vmatpush1.bf16.msra.mxu0 %v6878
    %10439 = vmatprep.subr.bf16.mxu0 %v6855
    %10440 = vmatpush1.bf16.msra.mxu0 %v6854
    %10441 = vmatprep.subr.bf16.mxu0 %v6831
    %10442 = vmatpush1.bf16.msra.mxu0 %v6830
    %10443 = vmatprep.subr.bf16.mxu0 %v6807
    %10444 = vmatpush1.bf16.msra.mxu0 %v6806
    %10445 = vmatprep.subr.bf16.mxu0 %v6783
    %10446 = vmatpush1.bf16.msra.mxu0 %v6782
    %10447 = vmatprep.subr.bf16.mxu0 %v6759
    %10448 = vmatpush1.bf16.msra.mxu0 %v6758
    %10449 = vmatprep.subr.bf16.mxu0 %v6735
    %10450 = vmatpush1.bf16.msra.mxu0 %v6734
    %10451 = vmatprep.subr.bf16.mxu0 %v7095
    %10452 = vmatpush2.bf16.msra.mxu0 %v7094
    %10453 = vmatprep.subr.bf16.mxu0 %v7071
    %10454 = vmatpush2.bf16.msra.mxu0 %v7070
    %10455 = vmatprep.subr.bf16.mxu0 %v7047
    %10456 = vmatpush2.bf16.msra.mxu0 %v7046
    %10457 = vmatprep.subr.bf16.mxu0 %v7023
    %10458 = vmatpush2.bf16.msra.mxu0 %v7022
    %10459 = vmatprep.subr.bf16.mxu0 %v6999
    %10460 = vmatpush2.bf16.msra.mxu0 %v6998
    %10461 = vmatprep.subr.bf16.mxu0 %v6975
    %10462 = vmatpush2.bf16.msra.mxu0 %v6974
    %10463 = vmatprep.subr.bf16.mxu0 %v6951
    %10464 = vmatpush2.bf16.msra.mxu0 %v6950
    %10465 = vmatprep.subr.bf16.mxu0 %v6927
    %10466 = vmatpush2.bf16.msra.mxu0 %v6926
    %10467 = vmatprep.mubr.bf16.mxu0 %v63
    %10468 = vmatmul.mubr.bf16.gmra.mxu0 %v62
    %v10469 = vpop.f32.mrf.mxu0
    %v10470 = vadd.f32 %v10429, %v10469
    %v10471 = vpop.f32.mrf.mxu0
    %v10472 = vadd.f32 %v10431, %v10471
    %v10473 = vpop.f32.mrf.mxu0
    %v10474 = vpop.f32.mrf.mxu0
    %10475 = vdwg.mxu0
    %10476 = vmatprep.subr.bf16.mxu0 %v7287
    %10477 = vmatpush1.bf16.msra.mxu0 %v7286
    %10478 = vmatprep.subr.bf16.mxu0 %v7263
    %10479 = vmatpush1.bf16.msra.mxu0 %v7262
    %10480 = vmatprep.subr.bf16.mxu0 %v7239
    %10481 = vmatpush1.bf16.msra.mxu0 %v7238
    %10482 = vmatprep.subr.bf16.mxu0 %v7215
    %10483 = vmatpush1.bf16.msra.mxu0 %v7214
    %10484 = vmatprep.subr.bf16.mxu0 %v7191
    %10485 = vmatpush1.bf16.msra.mxu0 %v7190
    %10486 = vmatprep.subr.bf16.mxu0 %v7167
    %10487 = vmatpush1.bf16.msra.mxu0 %v7166
    %10488 = vmatprep.subr.bf16.mxu0 %v7143
    %10489 = vmatpush1.bf16.msra.mxu0 %v7142
    %10490 = vmatprep.subr.bf16.mxu0 %v7119
    %10491 = vmatpush1.bf16.msra.mxu0 %v7118
    %10492 = vmatprep.subr.bf16.mxu0 %v7479
    %10493 = vmatpush2.bf16.msra.mxu0 %v7478
    %10494 = vmatprep.subr.bf16.mxu0 %v7455
    %10495 = vmatpush2.bf16.msra.mxu0 %v7454
    %10496 = vmatprep.subr.bf16.mxu0 %v7431
    %10497 = vmatpush2.bf16.msra.mxu0 %v7430
    %10498 = vmatprep.subr.bf16.mxu0 %v7407
    %10499 = vmatpush2.bf16.msra.mxu0 %v7406
    %10500 = vmatprep.subr.bf16.mxu0 %v7383
    %10501 = vmatpush2.bf16.msra.mxu0 %v7382
    %10502 = vmatprep.subr.bf16.mxu0 %v7359
    %10503 = vmatpush2.bf16.msra.mxu0 %v7358
    %10504 = vmatprep.subr.bf16.mxu0 %v7335
    %10505 = vmatpush2.bf16.msra.mxu0 %v7334
    %10506 = vmatprep.subr.bf16.mxu0 %v7311
    %10507 = vmatpush2.bf16.msra.mxu0 %v7310
    %10508 = vmatprep.mubr.bf16.mxu0 %v65
    %10509 = vmatmul.mubr.bf16.gmra.mxu0 %v64
    %v10510 = vpop.f32.mrf.mxu0
    %v10511 = vadd.f32 %v10470, %v10510
    %v10512 = vpop.f32.mrf.mxu0
    %v10513 = vadd.f32 %v10472, %v10512
    %v10514 = vpop.f32.mrf.mxu0
    %v10515 = vpop.f32.mrf.mxu0
    %10516 = vdwg.mxu0
    %10517 = vmatprep.subr.bf16.mxu0 %v7671
    %10518 = vmatpush1.bf16.msra.mxu0 %v7670
    %10519 = vmatprep.subr.bf16.mxu0 %v7647
    %10520 = vmatpush1.bf16.msra.mxu0 %v7646
    %10521 = vmatprep.subr.bf16.mxu0 %v7623
    %10522 = vmatpush1.bf16.msra.mxu0 %v7622
    %10523 = vmatprep.subr.bf16.mxu0 %v7599
    %10524 = vmatpush1.bf16.msra.mxu0 %v7598
    %10525 = vmatprep.subr.bf16.mxu0 %v7575
    %10526 = vmatpush1.bf16.msra.mxu0 %v7574
    %10527 = vmatprep.subr.bf16.mxu0 %v7551
    %10528 = vmatpush1.bf16.msra.mxu0 %v7550
    %10529 = vmatprep.subr.bf16.mxu0 %v7527
    %10530 = vmatpush1.bf16.msra.mxu0 %v7526
    %10531 = vmatprep.subr.bf16.mxu0 %v7503
    %10532 = vmatpush1.bf16.msra.mxu0 %v7502
    %10533 = vmatprep.subr.bf16.mxu0 %v7863
    %10534 = vmatpush2.bf16.msra.mxu0 %v7862
    %10535 = vmatprep.subr.bf16.mxu0 %v7839
    %10536 = vmatpush2.bf16.msra.mxu0 %v7838
    %10537 = vmatprep.subr.bf16.mxu0 %v7815
    %10538 = vmatpush2.bf16.msra.mxu0 %v7814
    %10539 = vmatprep.subr.bf16.mxu0 %v7791
    %10540 = vmatpush2.bf16.msra.mxu0 %v7790
    %10541 = vmatprep.subr.bf16.mxu0 %v7767
    %10542 = vmatpush2.bf16.msra.mxu0 %v7766
    %10543 = vmatprep.subr.bf16.mxu0 %v7743
    %10544 = vmatpush2.bf16.msra.mxu0 %v7742
    %10545 = vmatprep.subr.bf16.mxu0 %v7719
    %10546 = vmatpush2.bf16.msra.mxu0 %v7718
    %10547 = vmatprep.subr.bf16.mxu0 %v7695
    %10548 = vmatpush2.bf16.msra.mxu0 %v7694
    %10549 = vmatprep.mubr.bf16.mxu0 %v67
    %10550 = vmatmul.mubr.bf16.gmra.mxu0 %v66
    %v10551 = vpop.f32.mrf.mxu0
    %v10552 = vadd.f32 %v10511, %v10551
    %v10553 = vpop.f32.mrf.mxu0
    %v10554 = vadd.f32 %v10513, %v10553
    %v10555 = vpop.f32.mrf.mxu0
    %v10556 = vpop.f32.mrf.mxu0
    %10557 = vdwg.mxu0
    %10558 = vmatprep.subr.bf16.mxu0 %v6521
    %10559 = vmatpush1.bf16.msra.mxu0 %v6520
    %10560 = vmatprep.subr.bf16.mxu0 %v6497
    %10561 = vmatpush1.bf16.msra.mxu0 %v6496
    %10562 = vmatprep.subr.bf16.mxu0 %v6473
    %10563 = vmatpush1.bf16.msra.mxu0 %v6472
    %10564 = vmatprep.subr.bf16.mxu0 %v6449
    %10565 = vmatpush1.bf16.msra.mxu0 %v6448
    %10566 = vmatprep.subr.bf16.mxu0 %v6425
    %10567 = vmatpush1.bf16.msra.mxu0 %v6424
    %10568 = vmatprep.subr.bf16.mxu0 %v6401
    %10569 = vmatpush1.bf16.msra.mxu0 %v6400
    %10570 = vmatprep.subr.bf16.mxu0 %v6377
    %10571 = vmatpush1.bf16.msra.mxu0 %v6376
    %10572 = vmatprep.subr.bf16.mxu0 %v6353
    %10573 = vmatpush1.bf16.msra.mxu0 %v6352
    %10574 = vmatprep.subr.bf16.mxu0 %v6713
    %10575 = vmatpush2.bf16.msra.mxu0 %v6712
    %10576 = vmatprep.subr.bf16.mxu0 %v6689
    %10577 = vmatpush2.bf16.msra.mxu0 %v6688
    %10578 = vmatprep.subr.bf16.mxu0 %v6665
    %10579 = vmatpush2.bf16.msra.mxu0 %v6664
    %10580 = vmatprep.subr.bf16.mxu0 %v6641
    %10581 = vmatpush2.bf16.msra.mxu0 %v6640
    %10582 = vmatprep.subr.bf16.mxu0 %v6617
    %10583 = vmatpush2.bf16.msra.mxu0 %v6616
    %10584 = vmatprep.subr.bf16.mxu0 %v6593
    %10585 = vmatpush2.bf16.msra.mxu0 %v6592
    %10586 = vmatprep.subr.bf16.mxu0 %v6569
    %10587 = vmatpush2.bf16.msra.mxu0 %v6568
    %10588 = vmatprep.subr.bf16.mxu0 %v6545
    %10589 = vmatpush2.bf16.msra.mxu0 %v6544
    %10590 = vmatprep.mubr.bf16.mxu0 %v61
    %10591 = vmatmul.mubr.bf16.gmra.mxu0 %v60
    %v10592 = vpop.f32.mrf.mxu0
    %v10593 = vadd.f32 %v1669, %v10592
    %v10594 = vpop.f32.mrf.mxu0
    %v10595 = vadd.f32 %v1673, %v10594
    %v10596 = vpop.f32.mrf.mxu0
    %v10597 = vpop.f32.mrf.mxu0
    %10598 = vdwg.mxu0
    %10599 = vmatprep.subr.bf16.mxu0 %v6905
    %10600 = vmatpush1.bf16.msra.mxu0 %v6904
    %10601 = vmatprep.subr.bf16.mxu0 %v6881
    %10602 = vmatpush1.bf16.msra.mxu0 %v6880
    %10603 = vmatprep.subr.bf16.mxu0 %v6857
    %10604 = vmatpush1.bf16.msra.mxu0 %v6856
    %10605 = vmatprep.subr.bf16.mxu0 %v6833
    %10606 = vmatpush1.bf16.msra.mxu0 %v6832
    %10607 = vmatprep.subr.bf16.mxu0 %v6809
    %10608 = vmatpush1.bf16.msra.mxu0 %v6808
    %10609 = vmatprep.subr.bf16.mxu0 %v6785
    %10610 = vmatpush1.bf16.msra.mxu0 %v6784
    %10611 = vmatprep.subr.bf16.mxu0 %v6761
    %10612 = vmatpush1.bf16.msra.mxu0 %v6760
    %10613 = vmatprep.subr.bf16.mxu0 %v6737
    %10614 = vmatpush1.bf16.msra.mxu0 %v6736
    %10615 = vmatprep.subr.bf16.mxu0 %v7097
    %10616 = vmatpush2.bf16.msra.mxu0 %v7096
    %10617 = vmatprep.subr.bf16.mxu0 %v7073
    %10618 = vmatpush2.bf16.msra.mxu0 %v7072
    %10619 = vmatprep.subr.bf16.mxu0 %v7049
    %10620 = vmatpush2.bf16.msra.mxu0 %v7048
    %10621 = vmatprep.subr.bf16.mxu0 %v7025
    %10622 = vmatpush2.bf16.msra.mxu0 %v7024
    %10623 = vmatprep.subr.bf16.mxu0 %v7001
    %10624 = vmatpush2.bf16.msra.mxu0 %v7000
    %10625 = vmatprep.subr.bf16.mxu0 %v6977
    %10626 = vmatpush2.bf16.msra.mxu0 %v6976
    %10627 = vmatprep.subr.bf16.mxu0 %v6953
    %10628 = vmatpush2.bf16.msra.mxu0 %v6952
    %10629 = vmatprep.subr.bf16.mxu0 %v6929
    %10630 = vmatpush2.bf16.msra.mxu0 %v6928
    %10631 = vmatprep.mubr.bf16.mxu0 %v63
    %10632 = vmatmul.mubr.bf16.gmra.mxu0 %v62
    %v10633 = vpop.f32.mrf.mxu0
    %v10634 = vadd.f32 %v10593, %v10633
    %v10635 = vpop.f32.mrf.mxu0
    %v10636 = vadd.f32 %v10595, %v10635
    %v10637 = vpop.f32.mrf.mxu0
    %v10638 = vpop.f32.mrf.mxu0
    %10639 = vdwg.mxu0
    %10640 = vmatprep.subr.bf16.mxu0 %v7289
    %10641 = vmatpush1.bf16.msra.mxu0 %v7288
    %10642 = vmatprep.subr.bf16.mxu0 %v7265
    %10643 = vmatpush1.bf16.msra.mxu0 %v7264
    %10644 = vmatprep.subr.bf16.mxu0 %v7241
    %10645 = vmatpush1.bf16.msra.mxu0 %v7240
    %10646 = vmatprep.subr.bf16.mxu0 %v7217
    %10647 = vmatpush1.bf16.msra.mxu0 %v7216
    %10648 = vmatprep.subr.bf16.mxu0 %v7193
    %10649 = vmatpush1.bf16.msra.mxu0 %v7192
    %10650 = vmatprep.subr.bf16.mxu0 %v7169
    %10651 = vmatpush1.bf16.msra.mxu0 %v7168
    %10652 = vmatprep.subr.bf16.mxu0 %v7145
    %10653 = vmatpush1.bf16.msra.mxu0 %v7144
    %10654 = vmatprep.subr.bf16.mxu0 %v7121
    %10655 = vmatpush1.bf16.msra.mxu0 %v7120
    %10656 = vmatprep.subr.bf16.mxu0 %v7481
    %10657 = vmatpush2.bf16.msra.mxu0 %v7480
    %10658 = vmatprep.subr.bf16.mxu0 %v7457
    %10659 = vmatpush2.bf16.msra.mxu0 %v7456
    %10660 = vmatprep.subr.bf16.mxu0 %v7433
    %10661 = vmatpush2.bf16.msra.mxu0 %v7432
    %10662 = vmatprep.subr.bf16.mxu0 %v7409
    %10663 = vmatpush2.bf16.msra.mxu0 %v7408
    %10664 = vmatprep.subr.bf16.mxu0 %v7385
    %10665 = vmatpush2.bf16.msra.mxu0 %v7384
    %10666 = vmatprep.subr.bf16.mxu0 %v7361
    %10667 = vmatpush2.bf16.msra.mxu0 %v7360
    %10668 = vmatprep.subr.bf16.mxu0 %v7337
    %10669 = vmatpush2.bf16.msra.mxu0 %v7336
    %10670 = vmatprep.subr.bf16.mxu0 %v7313
    %10671 = vmatpush2.bf16.msra.mxu0 %v7312
    %10672 = vmatprep.mubr.bf16.mxu0 %v65
    %10673 = vmatmul.mubr.bf16.gmra.mxu0 %v64
    %v10674 = vpop.f32.mrf.mxu0
    %v10675 = vadd.f32 %v10634, %v10674
    %v10676 = vpop.f32.mrf.mxu0
    %v10677 = vadd.f32 %v10636, %v10676
    %v10678 = vpop.f32.mrf.mxu0
    %v10679 = vpop.f32.mrf.mxu0
    %10680 = vdwg.mxu0
    %10681 = vmatprep.subr.bf16.mxu0 %v7673
    %10682 = vmatpush1.bf16.msra.mxu0 %v7672
    %10683 = vmatprep.subr.bf16.mxu0 %v7649
    %10684 = vmatpush1.bf16.msra.mxu0 %v7648
    %10685 = vmatprep.subr.bf16.mxu0 %v7625
    %10686 = vmatpush1.bf16.msra.mxu0 %v7624
    %10687 = vmatprep.subr.bf16.mxu0 %v7601
    %10688 = vmatpush1.bf16.msra.mxu0 %v7600
    %10689 = vmatprep.subr.bf16.mxu0 %v7577
    %10690 = vmatpush1.bf16.msra.mxu0 %v7576
    %10691 = vmatprep.subr.bf16.mxu0 %v7553
    %10692 = vmatpush1.bf16.msra.mxu0 %v7552
    %10693 = vmatprep.subr.bf16.mxu0 %v7529
    %10694 = vmatpush1.bf16.msra.mxu0 %v7528
    %10695 = vmatprep.subr.bf16.mxu0 %v7505
    %10696 = vmatpush1.bf16.msra.mxu0 %v7504
    %10697 = vmatprep.subr.bf16.mxu0 %v7865
    %10698 = vmatpush2.bf16.msra.mxu0 %v7864
    %10699 = vmatprep.subr.bf16.mxu0 %v7841
    %10700 = vmatpush2.bf16.msra.mxu0 %v7840
    %10701 = vmatprep.subr.bf16.mxu0 %v7817
    %10702 = vmatpush2.bf16.msra.mxu0 %v7816
    %10703 = vmatprep.subr.bf16.mxu0 %v7793
    %10704 = vmatpush2.bf16.msra.mxu0 %v7792
    %10705 = vmatprep.subr.bf16.mxu0 %v7769
    %10706 = vmatpush2.bf16.msra.mxu0 %v7768
    %10707 = vmatprep.subr.bf16.mxu0 %v7745
    %10708 = vmatpush2.bf16.msra.mxu0 %v7744
    %10709 = vmatprep.subr.bf16.mxu0 %v7721
    %10710 = vmatpush2.bf16.msra.mxu0 %v7720
    %10711 = vmatprep.subr.bf16.mxu0 %v7697
    %10712 = vmatpush2.bf16.msra.mxu0 %v7696
    %10713 = vmatprep.mubr.bf16.mxu0 %v67
    %10714 = vmatmul.mubr.bf16.gmra.mxu0 %v66
    %v10715 = vpop.f32.mrf.mxu0
    %v10716 = vadd.f32 %v10675, %v10715
    %v10717 = vpop.f32.mrf.mxu0
    %v10718 = vadd.f32 %v10677, %v10717
    %v10719 = vpop.f32.mrf.mxu0
    %v10720 = vpop.f32.mrf.mxu0
    %10721 = vdwg.mxu0
    %10722 = vmatprep.subr.bf16.mxu0 %v6523
    %10723 = vmatpush1.bf16.msra.mxu0 %v6522
    %10724 = vmatprep.subr.bf16.mxu0 %v6499
    %10725 = vmatpush1.bf16.msra.mxu0 %v6498
    %10726 = vmatprep.subr.bf16.mxu0 %v6475
    %10727 = vmatpush1.bf16.msra.mxu0 %v6474
    %10728 = vmatprep.subr.bf16.mxu0 %v6451
    %10729 = vmatpush1.bf16.msra.mxu0 %v6450
    %10730 = vmatprep.subr.bf16.mxu0 %v6427
    %10731 = vmatpush1.bf16.msra.mxu0 %v6426
    %10732 = vmatprep.subr.bf16.mxu0 %v6403
    %10733 = vmatpush1.bf16.msra.mxu0 %v6402
    %10734 = vmatprep.subr.bf16.mxu0 %v6379
    %10735 = vmatpush1.bf16.msra.mxu0 %v6378
    %10736 = vmatprep.subr.bf16.mxu0 %v6355
    %10737 = vmatpush1.bf16.msra.mxu0 %v6354
    %10738 = vmatprep.subr.bf16.mxu0 %v6715
    %10739 = vmatpush2.bf16.msra.mxu0 %v6714
    %10740 = vmatprep.subr.bf16.mxu0 %v6691
    %10741 = vmatpush2.bf16.msra.mxu0 %v6690
    %10742 = vmatprep.subr.bf16.mxu0 %v6667
    %10743 = vmatpush2.bf16.msra.mxu0 %v6666
    %10744 = vmatprep.subr.bf16.mxu0 %v6643
    %10745 = vmatpush2.bf16.msra.mxu0 %v6642
    %10746 = vmatprep.subr.bf16.mxu0 %v6619
    %10747 = vmatpush2.bf16.msra.mxu0 %v6618
    %10748 = vmatprep.subr.bf16.mxu0 %v6595
    %10749 = vmatpush2.bf16.msra.mxu0 %v6594
    %10750 = vmatprep.subr.bf16.mxu0 %v6571
    %10751 = vmatpush2.bf16.msra.mxu0 %v6570
    %10752 = vmatprep.subr.bf16.mxu0 %v6547
    %10753 = vmatpush2.bf16.msra.mxu0 %v6546
    %10754 = vmatprep.mubr.bf16.mxu0 %v61
    %10755 = vmatmul.mubr.bf16.gmra.mxu0 %v60
    %v10756 = vpop.f32.mrf.mxu0
    %v10757 = vadd.f32 %v1677, %v10756
    %v10758 = vpop.f32.mrf.mxu0
    %v10759 = vadd.f32 %v1681, %v10758
    %v10760 = vpop.f32.mrf.mxu0
    %v10761 = vpop.f32.mrf.mxu0
    %10762 = vdwg.mxu0
    %10763 = vmatprep.subr.bf16.mxu0 %v6907
    %10764 = vmatpush1.bf16.msra.mxu0 %v6906
    %10765 = vmatprep.subr.bf16.mxu0 %v6883
    %10766 = vmatpush1.bf16.msra.mxu0 %v6882
    %10767 = vmatprep.subr.bf16.mxu0 %v6859
    %10768 = vmatpush1.bf16.msra.mxu0 %v6858
    %10769 = vmatprep.subr.bf16.mxu0 %v6835
    %10770 = vmatpush1.bf16.msra.mxu0 %v6834
    %10771 = vmatprep.subr.bf16.mxu0 %v6811
    %10772 = vmatpush1.bf16.msra.mxu0 %v6810
    %10773 = vmatprep.subr.bf16.mxu0 %v6787
    %10774 = vmatpush1.bf16.msra.mxu0 %v6786
    %10775 = vmatprep.subr.bf16.mxu0 %v6763
    %10776 = vmatpush1.bf16.msra.mxu0 %v6762
    %10777 = vmatprep.subr.bf16.mxu0 %v6739
    %10778 = vmatpush1.bf16.msra.mxu0 %v6738
    %10779 = vmatprep.subr.bf16.mxu0 %v7099
    %10780 = vmatpush2.bf16.msra.mxu0 %v7098
    %10781 = vmatprep.subr.bf16.mxu0 %v7075
    %10782 = vmatpush2.bf16.msra.mxu0 %v7074
    %10783 = vmatprep.subr.bf16.mxu0 %v7051
    %10784 = vmatpush2.bf16.msra.mxu0 %v7050
    %10785 = vmatprep.subr.bf16.mxu0 %v7027
    %10786 = vmatpush2.bf16.msra.mxu0 %v7026
    %10787 = vmatprep.subr.bf16.mxu0 %v7003
    %10788 = vmatpush2.bf16.msra.mxu0 %v7002
    %10789 = vmatprep.subr.bf16.mxu0 %v6979
    %10790 = vmatpush2.bf16.msra.mxu0 %v6978
    %10791 = vmatprep.subr.bf16.mxu0 %v6955
    %10792 = vmatpush2.bf16.msra.mxu0 %v6954
    %10793 = vmatprep.subr.bf16.mxu0 %v6931
    %10794 = vmatpush2.bf16.msra.mxu0 %v6930
    %10795 = vmatprep.mubr.bf16.mxu0 %v63
    %10796 = vmatmul.mubr.bf16.gmra.mxu0 %v62
    %v10797 = vpop.f32.mrf.mxu0
    %v10798 = vadd.f32 %v10757, %v10797
    %v10799 = vpop.f32.mrf.mxu0
    %v10800 = vadd.f32 %v10759, %v10799
    %v10801 = vpop.f32.mrf.mxu0
    %v10802 = vpop.f32.mrf.mxu0
    %10803 = vdwg.mxu0
    %10804 = vmatprep.subr.bf16.mxu0 %v7291
    %10805 = vmatpush1.bf16.msra.mxu0 %v7290
    %10806 = vmatprep.subr.bf16.mxu0 %v7267
    %10807 = vmatpush1.bf16.msra.mxu0 %v7266
    %10808 = vmatprep.subr.bf16.mxu0 %v7243
    %10809 = vmatpush1.bf16.msra.mxu0 %v7242
    %10810 = vmatprep.subr.bf16.mxu0 %v7219
    %10811 = vmatpush1.bf16.msra.mxu0 %v7218
    %10812 = vmatprep.subr.bf16.mxu0 %v7195
    %10813 = vmatpush1.bf16.msra.mxu0 %v7194
    %10814 = vmatprep.subr.bf16.mxu0 %v7171
    %10815 = vmatpush1.bf16.msra.mxu0 %v7170
    %10816 = vmatprep.subr.bf16.mxu0 %v7147
    %10817 = vmatpush1.bf16.msra.mxu0 %v7146
    %10818 = vmatprep.subr.bf16.mxu0 %v7123
    %10819 = vmatpush1.bf16.msra.mxu0 %v7122
    %10820 = vmatprep.subr.bf16.mxu0 %v7483
    %10821 = vmatpush2.bf16.msra.mxu0 %v7482
    %10822 = vmatprep.subr.bf16.mxu0 %v7459
    %10823 = vmatpush2.bf16.msra.mxu0 %v7458
    %10824 = vmatprep.subr.bf16.mxu0 %v7435
    %10825 = vmatpush2.bf16.msra.mxu0 %v7434
    %10826 = vmatprep.subr.bf16.mxu0 %v7411
    %10827 = vmatpush2.bf16.msra.mxu0 %v7410
    %10828 = vmatprep.subr.bf16.mxu0 %v7387
    %10829 = vmatpush2.bf16.msra.mxu0 %v7386
    %10830 = vmatprep.subr.bf16.mxu0 %v7363
    %10831 = vmatpush2.bf16.msra.mxu0 %v7362
    %10832 = vmatprep.subr.bf16.mxu0 %v7339
    %10833 = vmatpush2.bf16.msra.mxu0 %v7338
    %10834 = vmatprep.subr.bf16.mxu0 %v7315
    %10835 = vmatpush2.bf16.msra.mxu0 %v7314
    %10836 = vmatprep.mubr.bf16.mxu0 %v65
    %10837 = vmatmul.mubr.bf16.gmra.mxu0 %v64
    %v10838 = vpop.f32.mrf.mxu0
    %v10839 = vadd.f32 %v10798, %v10838
    %v10840 = vpop.f32.mrf.mxu0
    %v10841 = vadd.f32 %v10800, %v10840
    %v10842 = vpop.f32.mrf.mxu0
    %v10843 = vpop.f32.mrf.mxu0
    %10844 = vdwg.mxu0
    %10845 = vmatprep.subr.bf16.mxu0 %v7675
    %10846 = vmatpush1.bf16.msra.mxu0 %v7674
    %10847 = vmatprep.subr.bf16.mxu0 %v7651
    %10848 = vmatpush1.bf16.msra.mxu0 %v7650
    %10849 = vmatprep.subr.bf16.mxu0 %v7627
    %10850 = vmatpush1.bf16.msra.mxu0 %v7626
    %10851 = vmatprep.subr.bf16.mxu0 %v7603
    %10852 = vmatpush1.bf16.msra.mxu0 %v7602
    %10853 = vmatprep.subr.bf16.mxu0 %v7579
    %10854 = vmatpush1.bf16.msra.mxu0 %v7578
    %10855 = vmatprep.subr.bf16.mxu0 %v7555
    %10856 = vmatpush1.bf16.msra.mxu0 %v7554
    %10857 = vmatprep.subr.bf16.mxu0 %v7531
    %10858 = vmatpush1.bf16.msra.mxu0 %v7530
    %10859 = vmatprep.subr.bf16.mxu0 %v7507
    %10860 = vmatpush1.bf16.msra.mxu0 %v7506
    %10861 = vmatprep.subr.bf16.mxu0 %v7867
    %10862 = vmatpush2.bf16.msra.mxu0 %v7866
    %10863 = vmatprep.subr.bf16.mxu0 %v7843
    %10864 = vmatpush2.bf16.msra.mxu0 %v7842
    %10865 = vmatprep.subr.bf16.mxu0 %v7819
    %10866 = vmatpush2.bf16.msra.mxu0 %v7818
    %10867 = vmatprep.subr.bf16.mxu0 %v7795
    %10868 = vmatpush2.bf16.msra.mxu0 %v7794
    %10869 = vmatprep.subr.bf16.mxu0 %v7771
    %10870 = vmatpush2.bf16.msra.mxu0 %v7770
    %10871 = vmatprep.subr.bf16.mxu0 %v7747
    %10872 = vmatpush2.bf16.msra.mxu0 %v7746
    %10873 = vmatprep.subr.bf16.mxu0 %v7723
    %10874 = vmatpush2.bf16.msra.mxu0 %v7722
    %10875 = vmatprep.subr.bf16.mxu0 %v7699
    %10876 = vmatpush2.bf16.msra.mxu0 %v7698
    %10877 = vmatprep.mubr.bf16.mxu0 %v67
    %10878 = vmatmul.mubr.bf16.gmra.mxu0 %v66
    %v10879 = vpop.f32.mrf.mxu0
    %v10880 = vadd.f32 %v10839, %v10879
    %v10881 = vpop.f32.mrf.mxu0
    %v10882 = vadd.f32 %v10841, %v10881
    %v10883 = vpop.f32.mrf.mxu0
    %v10884 = vpop.f32.mrf.mxu0
    %10885 = vdwg.mxu0
    %10886 = vmatprep.subr.bf16.mxu0 %v6525
    %10887 = vmatpush1.bf16.msra.mxu0 %v6524
    %10888 = vmatprep.subr.bf16.mxu0 %v6501
    %10889 = vmatpush1.bf16.msra.mxu0 %v6500
    %10890 = vmatprep.subr.bf16.mxu0 %v6477
    %10891 = vmatpush1.bf16.msra.mxu0 %v6476
    %10892 = vmatprep.subr.bf16.mxu0 %v6453
    %10893 = vmatpush1.bf16.msra.mxu0 %v6452
    %10894 = vmatprep.subr.bf16.mxu0 %v6429
    %10895 = vmatpush1.bf16.msra.mxu0 %v6428
    %10896 = vmatprep.subr.bf16.mxu0 %v6405
    %10897 = vmatpush1.bf16.msra.mxu0 %v6404
    %10898 = vmatprep.subr.bf16.mxu0 %v6381
    %10899 = vmatpush1.bf16.msra.mxu0 %v6380
    %10900 = vmatprep.subr.bf16.mxu0 %v6357
    %10901 = vmatpush1.bf16.msra.mxu0 %v6356
    %10902 = vmatprep.subr.bf16.mxu0 %v6717
    %10903 = vmatpush2.bf16.msra.mxu0 %v6716
    %10904 = vmatprep.subr.bf16.mxu0 %v6693
    %10905 = vmatpush2.bf16.msra.mxu0 %v6692
    %10906 = vmatprep.subr.bf16.mxu0 %v6669
    %10907 = vmatpush2.bf16.msra.mxu0 %v6668
    %10908 = vmatprep.subr.bf16.mxu0 %v6645
    %10909 = vmatpush2.bf16.msra.mxu0 %v6644
    %10910 = vmatprep.subr.bf16.mxu0 %v6621
    %10911 = vmatpush2.bf16.msra.mxu0 %v6620
    %10912 = vmatprep.subr.bf16.mxu0 %v6597
    %10913 = vmatpush2.bf16.msra.mxu0 %v6596
    %10914 = vmatprep.subr.bf16.mxu0 %v6573
    %10915 = vmatpush2.bf16.msra.mxu0 %v6572
    %10916 = vmatprep.subr.bf16.mxu0 %v6549
    %10917 = vmatpush2.bf16.msra.mxu0 %v6548
    %10918 = vmatprep.mubr.bf16.mxu0 %v61
    %10919 = vmatmul.mubr.bf16.gmra.mxu0 %v60
    %v10920 = vpop.f32.mrf.mxu0
    %v10921 = vadd.f32 %v1685, %v10920
    %v10922 = vpop.f32.mrf.mxu0
    %v10923 = vadd.f32 %v1689, %v10922
    %v10924 = vpop.f32.mrf.mxu0
    %v10925 = vpop.f32.mrf.mxu0
    %10926 = vdwg.mxu0
    %10927 = vmatprep.subr.bf16.mxu0 %v6909
    %10928 = vmatpush1.bf16.msra.mxu0 %v6908
    %10929 = vmatprep.subr.bf16.mxu0 %v6885
    %10930 = vmatpush1.bf16.msra.mxu0 %v6884
    %10931 = vmatprep.subr.bf16.mxu0 %v6861
    %10932 = vmatpush1.bf16.msra.mxu0 %v6860
    %10933 = vmatprep.subr.bf16.mxu0 %v6837
    %10934 = vmatpush1.bf16.msra.mxu0 %v6836
    %10935 = vmatprep.subr.bf16.mxu0 %v6813
    %10936 = vmatpush1.bf16.msra.mxu0 %v6812
    %10937 = vmatprep.subr.bf16.mxu0 %v6789
    %10938 = vmatpush1.bf16.msra.mxu0 %v6788
    %10939 = vmatprep.subr.bf16.mxu0 %v6765
    %10940 = vmatpush1.bf16.msra.mxu0 %v6764
    %10941 = vmatprep.subr.bf16.mxu0 %v6741
    %10942 = vmatpush1.bf16.msra.mxu0 %v6740
    %10943 = vmatprep.subr.bf16.mxu0 %v7101
    %10944 = vmatpush2.bf16.msra.mxu0 %v7100
    %10945 = vmatprep.subr.bf16.mxu0 %v7077
    %10946 = vmatpush2.bf16.msra.mxu0 %v7076
    %10947 = vmatprep.subr.bf16.mxu0 %v7053
    %10948 = vmatpush2.bf16.msra.mxu0 %v7052
    %10949 = vmatprep.subr.bf16.mxu0 %v7029
    %10950 = vmatpush2.bf16.msra.mxu0 %v7028
    %10951 = vmatprep.subr.bf16.mxu0 %v7005
    %10952 = vmatpush2.bf16.msra.mxu0 %v7004
    %10953 = vmatprep.subr.bf16.mxu0 %v6981
    %10954 = vmatpush2.bf16.msra.mxu0 %v6980
    %10955 = vmatprep.subr.bf16.mxu0 %v6957
    %10956 = vmatpush2.bf16.msra.mxu0 %v6956
    %10957 = vmatprep.subr.bf16.mxu0 %v6933
    %10958 = vmatpush2.bf16.msra.mxu0 %v6932
    %10959 = vmatprep.mubr.bf16.mxu0 %v63
    %10960 = vmatmul.mubr.bf16.gmra.mxu0 %v62
    %v10961 = vpop.f32.mrf.mxu0
    %v10962 = vadd.f32 %v10921, %v10961
    %v10963 = vpop.f32.mrf.mxu0
    %v10964 = vadd.f32 %v10923, %v10963
    %v10965 = vpop.f32.mrf.mxu0
    %v10966 = vpop.f32.mrf.mxu0
    %10967 = vdwg.mxu0
    %10968 = vmatprep.subr.bf16.mxu0 %v7293
    %10969 = vmatpush1.bf16.msra.mxu0 %v7292
    %10970 = vmatprep.subr.bf16.mxu0 %v7269
    %10971 = vmatpush1.bf16.msra.mxu0 %v7268
    %10972 = vmatprep.subr.bf16.mxu0 %v7245
    %10973 = vmatpush1.bf16.msra.mxu0 %v7244
    %10974 = vmatprep.subr.bf16.mxu0 %v7221
    %10975 = vmatpush1.bf16.msra.mxu0 %v7220
    %10976 = vmatprep.subr.bf16.mxu0 %v7197
    %10977 = vmatpush1.bf16.msra.mxu0 %v7196
    %10978 = vmatprep.subr.bf16.mxu0 %v7173
    %10979 = vmatpush1.bf16.msra.mxu0 %v7172
    %10980 = vmatprep.subr.bf16.mxu0 %v7149
    %10981 = vmatpush1.bf16.msra.mxu0 %v7148
    %10982 = vmatprep.subr.bf16.mxu0 %v7125
    %10983 = vmatpush1.bf16.msra.mxu0 %v7124
    %10984 = vmatprep.subr.bf16.mxu0 %v7485
    %10985 = vmatpush2.bf16.msra.mxu0 %v7484
    %10986 = vmatprep.subr.bf16.mxu0 %v7461
    %10987 = vmatpush2.bf16.msra.mxu0 %v7460
    %10988 = vmatprep.subr.bf16.mxu0 %v7437
    %10989 = vmatpush2.bf16.msra.mxu0 %v7436
    %10990 = vmatprep.subr.bf16.mxu0 %v7413
    %10991 = vmatpush2.bf16.msra.mxu0 %v7412
    %10992 = vmatprep.subr.bf16.mxu0 %v7389
    %10993 = vmatpush2.bf16.msra.mxu0 %v7388
    %10994 = vmatprep.subr.bf16.mxu0 %v7365
    %10995 = vmatpush2.bf16.msra.mxu0 %v7364
    %10996 = vmatprep.subr.bf16.mxu0 %v7341
    %10997 = vmatpush2.bf16.msra.mxu0 %v7340
    %10998 = vmatprep.subr.bf16.mxu0 %v7317
    %10999 = vmatpush2.bf16.msra.mxu0 %v7316
    %11000 = vmatprep.mubr.bf16.mxu0 %v65
    %11001 = vmatmul.mubr.bf16.gmra.mxu0 %v64
    %v11002 = vpop.f32.mrf.mxu0
    %v11003 = vadd.f32 %v10962, %v11002
    %v11004 = vpop.f32.mrf.mxu0
    %v11005 = vadd.f32 %v10964, %v11004
    %v11006 = vpop.f32.mrf.mxu0
    %v11007 = vpop.f32.mrf.mxu0
    %11008 = vdwg.mxu0
    %11009 = vmatprep.subr.bf16.mxu0 %v7677
    %11010 = vmatpush1.bf16.msra.mxu0 %v7676
    %11011 = vmatprep.subr.bf16.mxu0 %v7653
    %11012 = vmatpush1.bf16.msra.mxu0 %v7652
    %11013 = vmatprep.subr.bf16.mxu0 %v7629
    %11014 = vmatpush1.bf16.msra.mxu0 %v7628
    %11015 = vmatprep.subr.bf16.mxu0 %v7605
    %11016 = vmatpush1.bf16.msra.mxu0 %v7604
    %11017 = vmatprep.subr.bf16.mxu0 %v7581
    %11018 = vmatpush1.bf16.msra.mxu0 %v7580
    %11019 = vmatprep.subr.bf16.mxu0 %v7557
    %11020 = vmatpush1.bf16.msra.mxu0 %v7556
    %11021 = vmatprep.subr.bf16.mxu0 %v7533
    %11022 = vmatpush1.bf16.msra.mxu0 %v7532
    %11023 = vmatprep.subr.bf16.mxu0 %v7509
    %11024 = vmatpush1.bf16.msra.mxu0 %v7508
    %11025 = vmatprep.subr.bf16.mxu0 %v7869
    %11026 = vmatpush2.bf16.msra.mxu0 %v7868
    %11027 = vmatprep.subr.bf16.mxu0 %v7845
    %11028 = vmatpush2.bf16.msra.mxu0 %v7844
    %11029 = vmatprep.subr.bf16.mxu0 %v7821
    %11030 = vmatpush2.bf16.msra.mxu0 %v7820
    %11031 = vmatprep.subr.bf16.mxu0 %v7797
    %11032 = vmatpush2.bf16.msra.mxu0 %v7796
    %11033 = vmatprep.subr.bf16.mxu0 %v7773
    %11034 = vmatpush2.bf16.msra.mxu0 %v7772
    %11035 = vmatprep.subr.bf16.mxu0 %v7749
    %11036 = vmatpush2.bf16.msra.mxu0 %v7748
    %11037 = vmatprep.subr.bf16.mxu0 %v7725
    %11038 = vmatpush2.bf16.msra.mxu0 %v7724
    %11039 = vmatprep.subr.bf16.mxu0 %v7701
    %11040 = vmatpush2.bf16.msra.mxu0 %v7700
    %11041 = vmatprep.mubr.bf16.mxu0 %v67
    %11042 = vmatmul.mubr.bf16.gmra.mxu0 %v66
    %v11043 = vpop.f32.mrf.mxu0
    %v11044 = vadd.f32 %v11003, %v11043
    %v11045 = vpop.f32.mrf.mxu0
    %v11046 = vadd.f32 %v11005, %v11045
    %v11047 = vpop.f32.mrf.mxu0
    %v11048 = vpop.f32.mrf.mxu0
    %11049 = vdwg.mxu0
    %11050 = vmatprep.subr.bf16.mxu0 %v6527
    %11051 = vmatpush1.bf16.msra.mxu0 %v6526
    %11052 = vmatprep.subr.bf16.mxu0 %v6503
    %11053 = vmatpush1.bf16.msra.mxu0 %v6502
    %11054 = vmatprep.subr.bf16.mxu0 %v6479
    %11055 = vmatpush1.bf16.msra.mxu0 %v6478
    %11056 = vmatprep.subr.bf16.mxu0 %v6455
    %11057 = vmatpush1.bf16.msra.mxu0 %v6454
    %11058 = vmatprep.subr.bf16.mxu0 %v6431
    %11059 = vmatpush1.bf16.msra.mxu0 %v6430
    %11060 = vmatprep.subr.bf16.mxu0 %v6407
    %11061 = vmatpush1.bf16.msra.mxu0 %v6406
    %11062 = vmatprep.subr.bf16.mxu0 %v6383
    %11063 = vmatpush1.bf16.msra.mxu0 %v6382
    %11064 = vmatprep.subr.bf16.mxu0 %v6359
    %11065 = vmatpush1.bf16.msra.mxu0 %v6358
    %11066 = vmatprep.subr.bf16.mxu0 %v6719
    %11067 = vmatpush2.bf16.msra.mxu0 %v6718
    %11068 = vmatprep.subr.bf16.mxu0 %v6695
    %11069 = vmatpush2.bf16.msra.mxu0 %v6694
    %11070 = vmatprep.subr.bf16.mxu0 %v6671
    %11071 = vmatpush2.bf16.msra.mxu0 %v6670
    %11072 = vmatprep.subr.bf16.mxu0 %v6647
    %11073 = vmatpush2.bf16.msra.mxu0 %v6646
    %11074 = vmatprep.subr.bf16.mxu0 %v6623
    %11075 = vmatpush2.bf16.msra.mxu0 %v6622
    %11076 = vmatprep.subr.bf16.mxu0 %v6599
    %11077 = vmatpush2.bf16.msra.mxu0 %v6598
    %11078 = vmatprep.subr.bf16.mxu0 %v6575
    %11079 = vmatpush2.bf16.msra.mxu0 %v6574
    %11080 = vmatprep.subr.bf16.mxu0 %v6551
    %11081 = vmatpush2.bf16.msra.mxu0 %v6550
    %11082 = vmatprep.mubr.bf16.mxu0 %v61
    %11083 = vmatmul.mubr.bf16.gmra.mxu0 %v60
    %v11084 = vpop.f32.mrf.mxu0
    %v11085 = vadd.f32 %v1693, %v11084
    %v11086 = vpop.f32.mrf.mxu0
    %v11087 = vadd.f32 %v1697, %v11086
    %v11088 = vpop.f32.mrf.mxu0
    %v11089 = vpop.f32.mrf.mxu0
    %11090 = vdwg.mxu0
    %11091 = vmatprep.subr.bf16.mxu0 %v6911
    %11092 = vmatpush1.bf16.msra.mxu0 %v6910
    %11093 = vmatprep.subr.bf16.mxu0 %v6887
    %11094 = vmatpush1.bf16.msra.mxu0 %v6886
    %11095 = vmatprep.subr.bf16.mxu0 %v6863
    %11096 = vmatpush1.bf16.msra.mxu0 %v6862
    %11097 = vmatprep.subr.bf16.mxu0 %v6839
    %11098 = vmatpush1.bf16.msra.mxu0 %v6838
    %11099 = vmatprep.subr.bf16.mxu0 %v6815
    %11100 = vmatpush1.bf16.msra.mxu0 %v6814
    %11101 = vmatprep.subr.bf16.mxu0 %v6791
    %11102 = vmatpush1.bf16.msra.mxu0 %v6790
    %11103 = vmatprep.subr.bf16.mxu0 %v6767
    %11104 = vmatpush1.bf16.msra.mxu0 %v6766
    %11105 = vmatprep.subr.bf16.mxu0 %v6743
    %11106 = vmatpush1.bf16.msra.mxu0 %v6742
    %11107 = vmatprep.subr.bf16.mxu0 %v7103
    %11108 = vmatpush2.bf16.msra.mxu0 %v7102
    %11109 = vmatprep.subr.bf16.mxu0 %v7079
    %11110 = vmatpush2.bf16.msra.mxu0 %v7078
    %11111 = vmatprep.subr.bf16.mxu0 %v7055
    %11112 = vmatpush2.bf16.msra.mxu0 %v7054
    %11113 = vmatprep.subr.bf16.mxu0 %v7031
    %11114 = vmatpush2.bf16.msra.mxu0 %v7030
    %11115 = vmatprep.subr.bf16.mxu0 %v7007
    %11116 = vmatpush2.bf16.msra.mxu0 %v7006
    %11117 = vmatprep.subr.bf16.mxu0 %v6983
    %11118 = vmatpush2.bf16.msra.mxu0 %v6982
    %11119 = vmatprep.subr.bf16.mxu0 %v6959
    %11120 = vmatpush2.bf16.msra.mxu0 %v6958
    %11121 = vmatprep.subr.bf16.mxu0 %v6935
    %11122 = vmatpush2.bf16.msra.mxu0 %v6934
    %11123 = vmatprep.mubr.bf16.mxu0 %v63
    %11124 = vmatmul.mubr.bf16.gmra.mxu0 %v62
    %v11125 = vpop.f32.mrf.mxu0
    %v11126 = vadd.f32 %v11085, %v11125
    %v11127 = vpop.f32.mrf.mxu0
    %v11128 = vadd.f32 %v11087, %v11127
    %v11129 = vpop.f32.mrf.mxu0
    %v11130 = vpop.f32.mrf.mxu0
    %11131 = vdwg.mxu0
    %11132 = vmatprep.subr.bf16.mxu0 %v7295
    %11133 = vmatpush1.bf16.msra.mxu0 %v7294
    %11134 = vmatprep.subr.bf16.mxu0 %v7271
    %11135 = vmatpush1.bf16.msra.mxu0 %v7270
    %11136 = vmatprep.subr.bf16.mxu0 %v7247
    %11137 = vmatpush1.bf16.msra.mxu0 %v7246
    %11138 = vmatprep.subr.bf16.mxu0 %v7223
    %11139 = vmatpush1.bf16.msra.mxu0 %v7222
    %11140 = vmatprep.subr.bf16.mxu0 %v7199
    %11141 = vmatpush1.bf16.msra.mxu0 %v7198
    %11142 = vmatprep.subr.bf16.mxu0 %v7175
    %11143 = vmatpush1.bf16.msra.mxu0 %v7174
    %11144 = vmatprep.subr.bf16.mxu0 %v7151
    %11145 = vmatpush1.bf16.msra.mxu0 %v7150
    %11146 = vmatprep.subr.bf16.mxu0 %v7127
    %11147 = vmatpush1.bf16.msra.mxu0 %v7126
    %11148 = vmatprep.subr.bf16.mxu0 %v7487
    %11149 = vmatpush2.bf16.msra.mxu0 %v7486
    %11150 = vmatprep.subr.bf16.mxu0 %v7463
    %11151 = vmatpush2.bf16.msra.mxu0 %v7462
    %11152 = vmatprep.subr.bf16.mxu0 %v7439
    %11153 = vmatpush2.bf16.msra.mxu0 %v7438
    %11154 = vmatprep.subr.bf16.mxu0 %v7415
    %11155 = vmatpush2.bf16.msra.mxu0 %v7414
    %11156 = vmatprep.subr.bf16.mxu0 %v7391
    %11157 = vmatpush2.bf16.msra.mxu0 %v7390
    %11158 = vmatprep.subr.bf16.mxu0 %v7367
    %11159 = vmatpush2.bf16.msra.mxu0 %v7366
    %11160 = vmatprep.subr.bf16.mxu0 %v7343
    %11161 = vmatpush2.bf16.msra.mxu0 %v7342
    %11162 = vmatprep.subr.bf16.mxu0 %v7319
    %11163 = vmatpush2.bf16.msra.mxu0 %v7318
    %11164 = vmatprep.mubr.bf16.mxu0 %v65
    %11165 = vmatmul.mubr.bf16.gmra.mxu0 %v64
    %v11166 = vpop.f32.mrf.mxu0
    %v11167 = vadd.f32 %v11126, %v11166
    %v11168 = vpop.f32.mrf.mxu0
    %v11169 = vadd.f32 %v11128, %v11168
    %v11170 = vpop.f32.mrf.mxu0
    %v11171 = vpop.f32.mrf.mxu0
    %11172 = vdwg.mxu0
    %11173 = vmatprep.subr.bf16.mxu0 %v7679
    %11174 = vmatpush1.bf16.msra.mxu0 %v7678
    %11175 = vmatprep.subr.bf16.mxu0 %v7655
    %11176 = vmatpush1.bf16.msra.mxu0 %v7654
    %11177 = vmatprep.subr.bf16.mxu0 %v7631
    %11178 = vmatpush1.bf16.msra.mxu0 %v7630
    %11179 = vmatprep.subr.bf16.mxu0 %v7607
    %11180 = vmatpush1.bf16.msra.mxu0 %v7606
    %11181 = vmatprep.subr.bf16.mxu0 %v7583
    %11182 = vmatpush1.bf16.msra.mxu0 %v7582
    %11183 = vmatprep.subr.bf16.mxu0 %v7559
    %11184 = vmatpush1.bf16.msra.mxu0 %v7558
    %11185 = vmatprep.subr.bf16.mxu0 %v7535
    %11186 = vmatpush1.bf16.msra.mxu0 %v7534
    %11187 = vmatprep.subr.bf16.mxu0 %v7511
    %11188 = vmatpush1.bf16.msra.mxu0 %v7510
    %11189 = vmatprep.subr.bf16.mxu0 %v7871
    %11190 = vmatpush2.bf16.msra.mxu0 %v7870
    %11191 = vmatprep.subr.bf16.mxu0 %v7847
    %11192 = vmatpush2.bf16.msra.mxu0 %v7846
    %11193 = vmatprep.subr.bf16.mxu0 %v7823
    %11194 = vmatpush2.bf16.msra.mxu0 %v7822
    %11195 = vmatprep.subr.bf16.mxu0 %v7799
    %11196 = vmatpush2.bf16.msra.mxu0 %v7798
    %11197 = vmatprep.subr.bf16.mxu0 %v7775
    %11198 = vmatpush2.bf16.msra.mxu0 %v7774
    %11199 = vmatprep.subr.bf16.mxu0 %v7751
    %11200 = vmatpush2.bf16.msra.mxu0 %v7750
    %11201 = vmatprep.subr.bf16.mxu0 %v7727
    %11202 = vmatpush2.bf16.msra.mxu0 %v7726
    %11203 = vmatprep.subr.bf16.mxu0 %v7703
    %11204 = vmatpush2.bf16.msra.mxu0 %v7702
    %11205 = vmatprep.mubr.bf16.mxu0 %v67
    %11206 = vmatmul.mubr.bf16.gmra.mxu0 %v66
    %v11207 = vpop.f32.mrf.mxu0
    %v11208 = vadd.f32 %v11167, %v11207
    %v11209 = vpop.f32.mrf.mxu0
    %v11210 = vadd.f32 %v11169, %v11209
    %v11211 = vpop.f32.mrf.mxu0
    %v11212 = vpop.f32.mrf.mxu0
    %11213 = vdwg.mxu0
    %11214 = vmatprep.subr.bf16.mxu0 %v6529
    %11215 = vmatpush1.bf16.msra.mxu0 %v6528
    %11216 = vmatprep.subr.bf16.mxu0 %v6505
    %11217 = vmatpush1.bf16.msra.mxu0 %v6504
    %11218 = vmatprep.subr.bf16.mxu0 %v6481
    %11219 = vmatpush1.bf16.msra.mxu0 %v6480
    %11220 = vmatprep.subr.bf16.mxu0 %v6457
    %11221 = vmatpush1.bf16.msra.mxu0 %v6456
    %11222 = vmatprep.subr.bf16.mxu0 %v6433
    %11223 = vmatpush1.bf16.msra.mxu0 %v6432
    %11224 = vmatprep.subr.bf16.mxu0 %v6409
    %11225 = vmatpush1.bf16.msra.mxu0 %v6408
    %11226 = vmatprep.subr.bf16.mxu0 %v6385
    %11227 = vmatpush1.bf16.msra.mxu0 %v6384
    %11228 = vmatprep.subr.bf16.mxu0 %v6361
    %11229 = vmatpush1.bf16.msra.mxu0 %v6360
    %11230 = vmatprep.subr.bf16.mxu0 %v6721
    %11231 = vmatpush2.bf16.msra.mxu0 %v6720
    %11232 = vmatprep.subr.bf16.mxu0 %v6697
    %11233 = vmatpush2.bf16.msra.mxu0 %v6696
    %11234 = vmatprep.subr.bf16.mxu0 %v6673
    %11235 = vmatpush2.bf16.msra.mxu0 %v6672
    %11236 = vmatprep.subr.bf16.mxu0 %v6649
    %11237 = vmatpush2.bf16.msra.mxu0 %v6648
    %11238 = vmatprep.subr.bf16.mxu0 %v6625
    %11239 = vmatpush2.bf16.msra.mxu0 %v6624
    %11240 = vmatprep.subr.bf16.mxu0 %v6601
    %11241 = vmatpush2.bf16.msra.mxu0 %v6600
    %11242 = vmatprep.subr.bf16.mxu0 %v6577
    %11243 = vmatpush2.bf16.msra.mxu0 %v6576
    %11244 = vmatprep.subr.bf16.mxu0 %v6553
    %11245 = vmatpush2.bf16.msra.mxu0 %v6552
    %11246 = vmatprep.mubr.bf16.mxu0 %v61
    %11247 = vmatmul.mubr.bf16.gmra.mxu0 %v60
    %v11248 = vpop.f32.mrf.mxu0
    %v11249 = vadd.f32 %v1701, %v11248
    %v11250 = vpop.f32.mrf.mxu0
    %v11251 = vadd.f32 %v1705, %v11250
    %v11252 = vpop.f32.mrf.mxu0
    %v11253 = vpop.f32.mrf.mxu0
    %11254 = vdwg.mxu0
    %11255 = vmatprep.subr.bf16.mxu0 %v6913
    %11256 = vmatpush1.bf16.msra.mxu0 %v6912
    %11257 = vmatprep.subr.bf16.mxu0 %v6889
    %11258 = vmatpush1.bf16.msra.mxu0 %v6888
    %11259 = vmatprep.subr.bf16.mxu0 %v6865
    %11260 = vmatpush1.bf16.msra.mxu0 %v6864
    %11261 = vmatprep.subr.bf16.mxu0 %v6841
    %11262 = vmatpush1.bf16.msra.mxu0 %v6840
    %11263 = vmatprep.subr.bf16.mxu0 %v6817
    %11264 = vmatpush1.bf16.msra.mxu0 %v6816
    %11265 = vmatprep.subr.bf16.mxu0 %v6793
    %11266 = vmatpush1.bf16.msra.mxu0 %v6792
    %11267 = vmatprep.subr.bf16.mxu0 %v6769
    %11268 = vmatpush1.bf16.msra.mxu0 %v6768
    %11269 = vmatprep.subr.bf16.mxu0 %v6745
    %11270 = vmatpush1.bf16.msra.mxu0 %v6744
    %11271 = vmatprep.subr.bf16.mxu0 %v7105
    %11272 = vmatpush2.bf16.msra.mxu0 %v7104
    %11273 = vmatprep.subr.bf16.mxu0 %v7081
    %11274 = vmatpush2.bf16.msra.mxu0 %v7080
    %11275 = vmatprep.subr.bf16.mxu0 %v7057
    %11276 = vmatpush2.bf16.msra.mxu0 %v7056
    %11277 = vmatprep.subr.bf16.mxu0 %v7033
    %11278 = vmatpush2.bf16.msra.mxu0 %v7032
    %11279 = vmatprep.subr.bf16.mxu0 %v7009
    %11280 = vmatpush2.bf16.msra.mxu0 %v7008
    %11281 = vmatprep.subr.bf16.mxu0 %v6985
    %11282 = vmatpush2.bf16.msra.mxu0 %v6984
    %11283 = vmatprep.subr.bf16.mxu0 %v6961
    %11284 = vmatpush2.bf16.msra.mxu0 %v6960
    %11285 = vmatprep.subr.bf16.mxu0 %v6937
    %11286 = vmatpush2.bf16.msra.mxu0 %v6936
    %11287 = vmatprep.mubr.bf16.mxu0 %v63
    %11288 = vmatmul.mubr.bf16.gmra.mxu0 %v62
    %v11289 = vpop.f32.mrf.mxu0
    %v11290 = vadd.f32 %v11249, %v11289
    %v11291 = vpop.f32.mrf.mxu0
    %v11292 = vadd.f32 %v11251, %v11291
    %v11293 = vpop.f32.mrf.mxu0
    %v11294 = vpop.f32.mrf.mxu0
    %11295 = vdwg.mxu0
    %11296 = vmatprep.subr.bf16.mxu0 %v7297
    %11297 = vmatpush1.bf16.msra.mxu0 %v7296
    %11298 = vmatprep.subr.bf16.mxu0 %v7273
    %11299 = vmatpush1.bf16.msra.mxu0 %v7272
    %11300 = vmatprep.subr.bf16.mxu0 %v7249
    %11301 = vmatpush1.bf16.msra.mxu0 %v7248
    %11302 = vmatprep.subr.bf16.mxu0 %v7225
    %11303 = vmatpush1.bf16.msra.mxu0 %v7224
    %11304 = vmatprep.subr.bf16.mxu0 %v7201
    %11305 = vmatpush1.bf16.msra.mxu0 %v7200
    %11306 = vmatprep.subr.bf16.mxu0 %v7177
    %11307 = vmatpush1.bf16.msra.mxu0 %v7176
    %11308 = vmatprep.subr.bf16.mxu0 %v7153
    %11309 = vmatpush1.bf16.msra.mxu0 %v7152
    %11310 = vmatprep.subr.bf16.mxu0 %v7129
    %11311 = vmatpush1.bf16.msra.mxu0 %v7128
    %11312 = vmatprep.subr.bf16.mxu0 %v7489
    %11313 = vmatpush2.bf16.msra.mxu0 %v7488
    %11314 = vmatprep.subr.bf16.mxu0 %v7465
    %11315 = vmatpush2.bf16.msra.mxu0 %v7464
    %11316 = vmatprep.subr.bf16.mxu0 %v7441
    %11317 = vmatpush2.bf16.msra.mxu0 %v7440
    %11318 = vmatprep.subr.bf16.mxu0 %v7417
    %11319 = vmatpush2.bf16.msra.mxu0 %v7416
    %11320 = vmatprep.subr.bf16.mxu0 %v7393
    %11321 = vmatpush2.bf16.msra.mxu0 %v7392
    %11322 = vmatprep.subr.bf16.mxu0 %v7369
    %11323 = vmatpush2.bf16.msra.mxu0 %v7368
    %11324 = vmatprep.subr.bf16.mxu0 %v7345
    %11325 = vmatpush2.bf16.msra.mxu0 %v7344
    %11326 = vmatprep.subr.bf16.mxu0 %v7321
    %11327 = vmatpush2.bf16.msra.mxu0 %v7320
    %11328 = vmatprep.mubr.bf16.mxu0 %v65
    %11329 = vmatmul.mubr.bf16.gmra.mxu0 %v64
    %v11330 = vpop.f32.mrf.mxu0
    %v11331 = vadd.f32 %v11290, %v11330
    %v11332 = vpop.f32.mrf.mxu0
    %v11333 = vadd.f32 %v11292, %v11332
    %v11334 = vpop.f32.mrf.mxu0
    %v11335 = vpop.f32.mrf.mxu0
    %11336 = vdwg.mxu0
    %11337 = vmatprep.subr.bf16.mxu0 %v7681
    %11338 = vmatpush1.bf16.msra.mxu0 %v7680
    %11339 = vmatprep.subr.bf16.mxu0 %v7657
    %11340 = vmatpush1.bf16.msra.mxu0 %v7656
    %11341 = vmatprep.subr.bf16.mxu0 %v7633
    %11342 = vmatpush1.bf16.msra.mxu0 %v7632
    %11343 = vmatprep.subr.bf16.mxu0 %v7609
    %11344 = vmatpush1.bf16.msra.mxu0 %v7608
    %11345 = vmatprep.subr.bf16.mxu0 %v7585
    %11346 = vmatpush1.bf16.msra.mxu0 %v7584
    %11347 = vmatprep.subr.bf16.mxu0 %v7561
    %11348 = vmatpush1.bf16.msra.mxu0 %v7560
    %11349 = vmatprep.subr.bf16.mxu0 %v7537
    %11350 = vmatpush1.bf16.msra.mxu0 %v7536
    %11351 = vmatprep.subr.bf16.mxu0 %v7513
    %11352 = vmatpush1.bf16.msra.mxu0 %v7512
    %11353 = vmatprep.subr.bf16.mxu0 %v7873
    %11354 = vmatpush2.bf16.msra.mxu0 %v7872
    %11355 = vmatprep.subr.bf16.mxu0 %v7849
    %11356 = vmatpush2.bf16.msra.mxu0 %v7848
    %11357 = vmatprep.subr.bf16.mxu0 %v7825
    %11358 = vmatpush2.bf16.msra.mxu0 %v7824
    %11359 = vmatprep.subr.bf16.mxu0 %v7801
    %11360 = vmatpush2.bf16.msra.mxu0 %v7800
    %11361 = vmatprep.subr.bf16.mxu0 %v7777
    %11362 = vmatpush2.bf16.msra.mxu0 %v7776
    %11363 = vmatprep.subr.bf16.mxu0 %v7753
    %11364 = vmatpush2.bf16.msra.mxu0 %v7752
    %11365 = vmatprep.subr.bf16.mxu0 %v7729
    %11366 = vmatpush2.bf16.msra.mxu0 %v7728
    %11367 = vmatprep.subr.bf16.mxu0 %v7705
    %11368 = vmatpush2.bf16.msra.mxu0 %v7704
    %11369 = vmatprep.mubr.bf16.mxu0 %v67
    %11370 = vmatmul.mubr.bf16.gmra.mxu0 %v66
    %v11371 = vpop.f32.mrf.mxu0
    %v11372 = vadd.f32 %v11331, %v11371
    %v11373 = vpop.f32.mrf.mxu0
    %v11374 = vadd.f32 %v11333, %v11373
    %v11375 = vpop.f32.mrf.mxu0
    %v11376 = vpop.f32.mrf.mxu0
    %11377 = vdwg.mxu0
    %v11378 = vmul.f32 %v9568, %v10224
    %11379 = vadd.xlane.f32.xlu0 %v11378
    %v11380 = vpop.xlane.xlu0 %11379
    %v11381 = vmul.f32 %v11380, -0.088388346
    %v11382 = vmul.f32 %v9568, %v10226
    %11383 = vadd.xlane.f32.xlu0 %v11382
    %v11384 = vpop.xlane.xlu0 %11383
    %v11385 = vmul.f32 %v11384, -0.088388346
    %v11386 = vmul.f32 %v9568, %v10388
    %11387 = vadd.xlane.f32.xlu0 %v11386
    %v11388 = vpop.xlane.xlu0 %11387
    %v11389 = vmul.f32 %v11388, -0.088388346
    %v11390 = vmul.f32 %v9568, %v10390
    %11391 = vadd.xlane.f32.xlu0 %v11390
    %v11392 = vpop.xlane.xlu0 %11391
    %v11393 = vmul.f32 %v11392, -0.088388346
    %v11394 = vmul.f32 %v9568, %v10552
    %11395 = vadd.xlane.f32.xlu0 %v11394
    %v11396 = vpop.xlane.xlu0 %11395
    %v11397 = vmul.f32 %v11396, -0.088388346
    %v11398 = vmul.f32 %v9568, %v10554
    %11399 = vadd.xlane.f32.xlu0 %v11398
    %v11400 = vpop.xlane.xlu0 %11399
    %v11401 = vmul.f32 %v11400, -0.088388346
    %v11402 = vmul.f32 %v9568, %v10716
    %11403 = vadd.xlane.f32.xlu0 %v11402
    %v11404 = vpop.xlane.xlu0 %11403
    %v11405 = vmul.f32 %v11404, -0.088388346
    %v11406 = vmul.f32 %v9568, %v10718
    %11407 = vadd.xlane.f32.xlu0 %v11406
    %v11408 = vpop.xlane.xlu0 %11407
    %v11409 = vmul.f32 %v11408, -0.088388346
    %v11410 = vmax.f32 %v11381, %v11385
    %v11411 = vmax.f32 %v11410, %v11389
    %v11412 = vmax.f32 %v11411, %v11393
    %v11413 = vmax.f32 %v11412, %v11397
    %v11414 = vmax.f32 %v11413, %v11401
    %v11415 = vmax.f32 %v11414, %v11405
    %v11416 = vmax.f32 %v11415, %v11409
    %v11417 = vsub.f32 %v11381, %v11416
    %v11418 = vmul.f32 %v11417, 1.442695
    %v11419 = vpow.pop %v11418
    %v11420 = vsub.f32 %v11385, %v11416
    %v11421 = vmul.f32 %v11420, 1.442695
    %v11422 = vpow.pop %v11421
    %v11423 = vsub.f32 %v11389, %v11416
    %v11424 = vmul.f32 %v11423, 1.442695
    %v11425 = vpow.pop %v11424
    %v11426 = vsub.f32 %v11393, %v11416
    %v11427 = vmul.f32 %v11426, 1.442695
    %v11428 = vpow.pop %v11427
    %v11429 = vsub.f32 %v11397, %v11416
    %v11430 = vmul.f32 %v11429, 1.442695
    %v11431 = vpow.pop %v11430
    %v11432 = vsub.f32 %v11401, %v11416
    %v11433 = vmul.f32 %v11432, 1.442695
    %v11434 = vpow.pop %v11433
    %v11435 = vsub.f32 %v11405, %v11416
    %v11436 = vmul.f32 %v11435, 1.442695
    %v11437 = vpow.pop %v11436
    %v11438 = vsub.f32 %v11409, %v11416
    %v11439 = vmul.f32 %v11438, 1.442695
    %v11440 = vpow.pop %v11439
    %v11441 = vadd.f32 %v11419, %v11422
    %v11442 = vadd.f32 %v11441, %v11425
    %v11443 = vadd.f32 %v11442, %v11428
    %v11444 = vadd.f32 %v11443, %v11431
    %v11445 = vadd.f32 %v11444, %v11434
    %v11446 = vadd.f32 %v11445, %v11437
    %v11447 = vadd.f32 %v11446, %v11440
    %v11448 = vrcp.pop %v11447
    %v11449 = vmul.f32 %v11419, %v11448
    %v11450 = vmul.f32 %v11449, %v10880
    %v11451 = vmul.f32 %v11422, %v11448
    %v11452 = vmul.f32 %v11451, %v10882
    %v11453 = vadd.f32 %v11450, %v11452
    %v11454 = vmul.f32 %v11425, %v11448
    %v11455 = vmul.f32 %v11454, %v11044
    %v11456 = vadd.f32 %v11453, %v11455
    %v11457 = vmul.f32 %v11428, %v11448
    %v11458 = vmul.f32 %v11457, %v11046
    %v11459 = vadd.f32 %v11456, %v11458
    %v11460 = vmul.f32 %v11431, %v11448
    %v11461 = vmul.f32 %v11460, %v11208
    %v11462 = vadd.f32 %v11459, %v11461
    %v11463 = vmul.f32 %v11434, %v11448
    %v11464 = vmul.f32 %v11463, %v11210
    %v11465 = vadd.f32 %v11462, %v11464
    %v11466 = vmul.f32 %v11437, %v11448
    %v11467 = vmul.f32 %v11466, %v11372
    %v11468 = vadd.f32 %v11465, %v11467
    %v11469 = vmul.f32 %v11440, %v11448
    %v11470 = vmul.f32 %v11469, %v11374
    %v11471 = vadd.f32 %v11468, %v11470
    %11472 = vst [vmem:[#allocation8] sm:$0xff] %v11471
    %v11473 = vmul.f32 %v9570, %v10224
    %11474 = vadd.xlane.f32.xlu0 %v11473
    %v11475 = vpop.xlane.xlu0 %11474
    %v11476 = vmul.f32 %v11475, -0.088388346
    %v11477 = vmul.f32 %v9570, %v10226
    %11478 = vadd.xlane.f32.xlu0 %v11477
    %v11479 = vpop.xlane.xlu0 %11478
    %v11480 = vmul.f32 %v11479, -0.088388346
    %v11481 = vmul.f32 %v9570, %v10388
    %11482 = vadd.xlane.f32.xlu0 %v11481
    %v11483 = vpop.xlane.xlu0 %11482
    %v11484 = vmul.f32 %v11483, -0.088388346
    %v11485 = vmul.f32 %v9570, %v10390
    %11486 = vadd.xlane.f32.xlu0 %v11485
    %v11487 = vpop.xlane.xlu0 %11486
    %v11488 = vmul.f32 %v11487, -0.088388346
    %v11489 = vmul.f32 %v9570, %v10552
    %11490 = vadd.xlane.f32.xlu0 %v11489
    %v11491 = vpop.xlane.xlu0 %11490
    %v11492 = vmul.f32 %v11491, -0.088388346
    %v11493 = vmul.f32 %v9570, %v10554
    %11494 = vadd.xlane.f32.xlu0 %v11493
    %v11495 = vpop.xlane.xlu0 %11494
    %v11496 = vmul.f32 %v11495, -0.088388346
    %v11497 = vmul.f32 %v9570, %v10716
    %11498 = vadd.xlane.f32.xlu0 %v11497
    %v11499 = vpop.xlane.xlu0 %11498
    %v11500 = vmul.f32 %v11499, -0.088388346
    %v11501 = vmul.f32 %v9570, %v10718
    %11502 = vadd.xlane.f32.xlu0 %v11501
    %v11503 = vpop.xlane.xlu0 %11502
    %v11504 = vmul.f32 %v11503, -0.088388346
    %v11505 = vmax.f32 %v11476, %v11480
    %v11506 = vmax.f32 %v11505, %v11484
    %v11507 = vmax.f32 %v11506, %v11488
    %v11508 = vmax.f32 %v11507, %v11492
    %v11509 = vmax.f32 %v11508, %v11496
    %v11510 = vmax.f32 %v11509, %v11500
    %v11511 = vmax.f32 %v11510, %v11504
    %v11512 = vsub.f32 %v11476, %v11511
    %v11513 = vmul.f32 %v11512, 1.442695
    %v11514 = vpow.pop %v11513
    %v11515 = vsub.f32 %v11480, %v11511
    %v11516 = vmul.f32 %v11515, 1.442695
    %v11517 = vpow.pop %v11516
    %v11518 = vsub.f32 %v11484, %v11511
    %v11519 = vmul.f32 %v11518, 1.442695
    %v11520 = vpow.pop %v11519
    %v11521 = vsub.f32 %v11488, %v11511
    %v11522 = vmul.f32 %v11521, 1.442695
    %v11523 = vpow.pop %v11522
    %v11524 = vsub.f32 %v11492, %v11511
    %v11525 = vmul.f32 %v11524, 1.442695
    %v11526 = vpow.pop %v11525
    %v11527 = vsub.f32 %v11496, %v11511
    %v11528 = vmul.f32 %v11527, 1.442695
    %v11529 = vpow.pop %v11528
    %v11530 = vsub.f32 %v11500, %v11511
    %v11531 = vmul.f32 %v11530, 1.442695
    %v11532 = vpow.pop %v11531
    %v11533 = vsub.f32 %v11504, %v11511
    %v11534 = vmul.f32 %v11533, 1.442695
    %v11535 = vpow.pop %v11534
    %v11536 = vadd.f32 %v11514, %v11517
    %v11537 = vadd.f32 %v11536, %v11520
    %v11538 = vadd.f32 %v11537, %v11523
    %v11539 = vadd.f32 %v11538, %v11526
    %v11540 = vadd.f32 %v11539, %v11529
    %v11541 = vadd.f32 %v11540, %v11532
    %v11542 = vadd.f32 %v11541, %v11535
    %v11543 = vrcp.pop %v11542
    %v11544 = vmul.f32 %v11514, %v11543
    %v11545 = vmul.f32 %v11544, %v10880
    %v11546 = vmul.f32 %v11517, %v11543
    %v11547 = vmul.f32 %v11546, %v10882
    %v11548 = vadd.f32 %v11545, %v11547
    %v11549 = vmul.f32 %v11520, %v11543
    %v11550 = vmul.f32 %v11549, %v11044
    %v11551 = vadd.f32 %v11548, %v11550
    %v11552 = vmul.f32 %v11523, %v11543
    %v11553 = vmul.f32 %v11552, %v11046
    %v11554 = vadd.f32 %v11551, %v11553
    %v11555 = vmul.f32 %v11526, %v11543
    %v11556 = vmul.f32 %v11555, %v11208
    %v11557 = vadd.f32 %v11554, %v11556
    %v11558 = vmul.f32 %v11529, %v11543
    %v11559 = vmul.f32 %v11558, %v11210
    %v11560 = vadd.f32 %v11557, %v11559
    %v11561 = vmul.f32 %v11532, %v11543
    %v11562 = vmul.f32 %v11561, %v11372
    %v11563 = vadd.f32 %v11560, %v11562
    %v11564 = vmul.f32 %v11535, %v11543
    %v11565 = vmul.f32 %v11564, %v11374
    %v11566 = vadd.f32 %v11563, %v11565
    %11567 = vst [vmem:[#allocation8 + $0x8] sm:$0xff] %v11566
    %v11568 = vmul.f32 %v9732, %v10224
    %11569 = vadd.xlane.f32.xlu0 %v11568
    %v11570 = vpop.xlane.xlu0 %11569
    %v11571 = vmul.f32 %v11570, -0.088388346
    %v11572 = vmul.f32 %v9732, %v10226
    %11573 = vadd.xlane.f32.xlu0 %v11572
    %v11574 = vpop.xlane.xlu0 %11573
    %v11575 = vmul.f32 %v11574, -0.088388346
    %v11576 = vmul.f32 %v9732, %v10388
    %11577 = vadd.xlane.f32.xlu0 %v11576
    %v11578 = vpop.xlane.xlu0 %11577
    %v11579 = vmul.f32 %v11578, -0.088388346
    %v11580 = vmul.f32 %v9732, %v10390
    %11581 = vadd.xlane.f32.xlu0 %v11580
    %v11582 = vpop.xlane.xlu0 %11581
    %v11583 = vmul.f32 %v11582, -0.088388346
    %v11584 = vmul.f32 %v9732, %v10552
    %11585 = vadd.xlane.f32.xlu0 %v11584
    %v11586 = vpop.xlane.xlu0 %11585
    %v11587 = vmul.f32 %v11586, -0.088388346
    %v11588 = vmul.f32 %v9732, %v10554
    %11589 = vadd.xlane.f32.xlu0 %v11588
    %v11590 = vpop.xlane.xlu0 %11589
    %v11591 = vmul.f32 %v11590, -0.088388346
    %v11592 = vmul.f32 %v9732, %v10716
    %11593 = vadd.xlane.f32.xlu0 %v11592
    %v11594 = vpop.xlane.xlu0 %11593
    %v11595 = vmul.f32 %v11594, -0.088388346
    %v11596 = vmul.f32 %v9732, %v10718
    %11597 = vadd.xlane.f32.xlu0 %v11596
    %v11598 = vpop.xlane.xlu0 %11597
    %v11599 = vmul.f32 %v11598, -0.088388346
    %v11600 = vmax.f32 %v11571, %v11575
    %v11601 = vmax.f32 %v11600, %v11579
    %v11602 = vmax.f32 %v11601, %v11583
    %v11603 = vmax.f32 %v11602, %v11587
    %v11604 = vmax.f32 %v11603, %v11591
    %v11605 = vmax.f32 %v11604, %v11595
    %v11606 = vmax.f32 %v11605, %v11599
    %v11607 = vsub.f32 %v11571, %v11606
    %v11608 = vmul.f32 %v11607, 1.442695
    %v11609 = vpow.pop %v11608
    %v11610 = vsub.f32 %v11575, %v11606
    %v11611 = vmul.f32 %v11610, 1.442695
    %v11612 = vpow.pop %v11611
    %v11613 = vsub.f32 %v11579, %v11606
    %v11614 = vmul.f32 %v11613, 1.442695
    %v11615 = vpow.pop %v11614
    %v11616 = vsub.f32 %v11583, %v11606
    %v11617 = vmul.f32 %v11616, 1.442695
    %v11618 = vpow.pop %v11617
    %v11619 = vsub.f32 %v11587, %v11606
    %v11620 = vmul.f32 %v11619, 1.442695
    %v11621 = vpow.pop %v11620
    %v11622 = vsub.f32 %v11591, %v11606
    %v11623 = vmul.f32 %v11622, 1.442695
    %v11624 = vpow.pop %v11623
    %v11625 = vsub.f32 %v11595, %v11606
    %v11626 = vmul.f32 %v11625, 1.442695
    %v11627 = vpow.pop %v11626
    %v11628 = vsub.f32 %v11599, %v11606
    %v11629 = vmul.f32 %v11628, 1.442695
    %v11630 = vpow.pop %v11629
    %v11631 = vadd.f32 %v11609, %v11612
    %v11632 = vadd.f32 %v11631, %v11615
    %v11633 = vadd.f32 %v11632, %v11618
    %v11634 = vadd.f32 %v11633, %v11621
    %v11635 = vadd.f32 %v11634, %v11624
    %v11636 = vadd.f32 %v11635, %v11627
    %v11637 = vadd.f32 %v11636, %v11630
    %v11638 = vrcp.pop %v11637
    %v11639 = vmul.f32 %v11609, %v11638
    %v11640 = vmul.f32 %v11639, %v10880
    %v11641 = vmul.f32 %v11612, %v11638
    %v11642 = vmul.f32 %v11641, %v10882
    %v11643 = vadd.f32 %v11640, %v11642
    %v11644 = vmul.f32 %v11615, %v11638
    %v11645 = vmul.f32 %v11644, %v11044
    %v11646 = vadd.f32 %v11643, %v11645
    %v11647 = vmul.f32 %v11618, %v11638
    %v11648 = vmul.f32 %v11647, %v11046
    %v11649 = vadd.f32 %v11646, %v11648
    %v11650 = vmul.f32 %v11621, %v11638
    %v11651 = vmul.f32 %v11650, %v11208
    %v11652 = vadd.f32 %v11649, %v11651
    %v11653 = vmul.f32 %v11624, %v11638
    %v11654 = vmul.f32 %v11653, %v11210
    %v11655 = vadd.f32 %v11652, %v11654
    %v11656 = vmul.f32 %v11627, %v11638
    %v11657 = vmul.f32 %v11656, %v11372
    %v11658 = vadd.f32 %v11655, %v11657
    %v11659 = vmul.f32 %v11630, %v11638
    %v11660 = vmul.f32 %v11659, %v11374
    %v11661 = vadd.f32 %v11658, %v11660
    %11662 = vst [vmem:[#allocation8 + $0x10] sm:$0xff] %v11661
    %v11663 = vmul.f32 %v9734, %v10224
    %11664 = vadd.xlane.f32.xlu0 %v11663
    %v11665 = vpop.xlane.xlu0 %11664
    %v11666 = vmul.f32 %v11665, -0.088388346
    %v11667 = vmul.f32 %v9734, %v10226
    %11668 = vadd.xlane.f32.xlu0 %v11667
    %v11669 = vpop.xlane.xlu0 %11668
    %v11670 = vmul.f32 %v11669, -0.088388346
    %v11671 = vmul.f32 %v9734, %v10388
    %11672 = vadd.xlane.f32.xlu0 %v11671
    %v11673 = vpop.xlane.xlu0 %11672
    %v11674 = vmul.f32 %v11673, -0.088388346
    %v11675 = vmul.f32 %v9734, %v10390
    %11676 = vadd.xlane.f32.xlu0 %v11675
    %v11677 = vpop.xlane.xlu0 %11676
    %v11678 = vmul.f32 %v11677, -0.088388346
    %v11679 = vmul.f32 %v9734, %v10552
    %11680 = vadd.xlane.f32.xlu0 %v11679
    %v11681 = vpop.xlane.xlu0 %11680
    %v11682 = vmul.f32 %v11681, -0.088388346
    %v11683 = vmul.f32 %v9734, %v10554
    %11684 = vadd.xlane.f32.xlu0 %v11683
    %v11685 = vpop.xlane.xlu0 %11684
    %v11686 = vmul.f32 %v11685, -0.088388346
    %v11687 = vmul.f32 %v9734, %v10716
    %11688 = vadd.xlane.f32.xlu0 %v11687
    %v11689 = vpop.xlane.xlu0 %11688
    %v11690 = vmul.f32 %v11689, -0.088388346
    %v11691 = vmul.f32 %v9734, %v10718
    %11692 = vadd.xlane.f32.xlu0 %v11691
    %v11693 = vpop.xlane.xlu0 %11692
    %v11694 = vmul.f32 %v11693, -0.088388346
    %v11695 = vmax.f32 %v11666, %v11670
    %v11696 = vmax.f32 %v11695, %v11674
    %v11697 = vmax.f32 %v11696, %v11678
    %v11698 = vmax.f32 %v11697, %v11682
    %v11699 = vmax.f32 %v11698, %v11686
    %v11700 = vmax.f32 %v11699, %v11690
    %v11701 = vmax.f32 %v11700, %v11694
    %v11702 = vsub.f32 %v11666, %v11701
    %v11703 = vmul.f32 %v11702, 1.442695
    %v11704 = vpow.pop %v11703
    %v11705 = vsub.f32 %v11670, %v11701
    %v11706 = vmul.f32 %v11705, 1.442695
    %v11707 = vpow.pop %v11706
    %v11708 = vsub.f32 %v11674, %v11701
    %v11709 = vmul.f32 %v11708, 1.442695
    %v11710 = vpow.pop %v11709
    %v11711 = vsub.f32 %v11678, %v11701
    %v11712 = vmul.f32 %v11711, 1.442695
    %v11713 = vpow.pop %v11712
    %v11714 = vsub.f32 %v11682, %v11701
    %v11715 = vmul.f32 %v11714, 1.442695
    %v11716 = vpow.pop %v11715
    %v11717 = vsub.f32 %v11686, %v11701
    %v11718 = vmul.f32 %v11717, 1.442695
    %v11719 = vpow.pop %v11718
    %v11720 = vsub.f32 %v11690, %v11701
    %v11721 = vmul.f32 %v11720, 1.442695
    %v11722 = vpow.pop %v11721
    %v11723 = vsub.f32 %v11694, %v11701
    %v11724 = vmul.f32 %v11723, 1.442695
    %v11725 = vpow.pop %v11724
    %v11726 = vadd.f32 %v11704, %v11707
    %v11727 = vadd.f32 %v11726, %v11710
    %v11728 = vadd.f32 %v11727, %v11713
    %v11729 = vadd.f32 %v11728, %v11716
    %v11730 = vadd.f32 %v11729, %v11719
    %v11731 = vadd.f32 %v11730, %v11722
    %v11732 = vadd.f32 %v11731, %v11725
    %v11733 = vrcp.pop %v11732
    %v11734 = vmul.f32 %v11704, %v11733
    %v11735 = vmul.f32 %v11734, %v10880
    %v11736 = vmul.f32 %v11707, %v11733
    %v11737 = vmul.f32 %v11736, %v10882
    %v11738 = vadd.f32 %v11735, %v11737
    %v11739 = vmul.f32 %v11710, %v11733
    %v11740 = vmul.f32 %v11739, %v11044
    %v11741 = vadd.f32 %v11738, %v11740
    %v11742 = vmul.f32 %v11713, %v11733
    %v11743 = vmul.f32 %v11742, %v11046
    %v11744 = vadd.f32 %v11741, %v11743
    %v11745 = vmul.f32 %v11716, %v11733
    %v11746 = vmul.f32 %v11745, %v11208
    %v11747 = vadd.f32 %v11744, %v11746
    %v11748 = vmul.f32 %v11719, %v11733
    %v11749 = vmul.f32 %v11748, %v11210
    %v11750 = vadd.f32 %v11747, %v11749
    %v11751 = vmul.f32 %v11722, %v11733
    %v11752 = vmul.f32 %v11751, %v11372
    %v11753 = vadd.f32 %v11750, %v11752
    %v11754 = vmul.f32 %v11725, %v11733
    %v11755 = vmul.f32 %v11754, %v11374
    %v11756 = vadd.f32 %v11753, %v11755
    %11757 = vst [vmem:[#allocation8 + $0x18] sm:$0xff] %v11756
    %v11758 = vmul.f32 %v9896, %v10224
    %11759 = vadd.xlane.f32.xlu0 %v11758
    %v11760 = vpop.xlane.xlu0 %11759
    %v11761 = vmul.f32 %v11760, -0.088388346
    %v11762 = vmul.f32 %v9896, %v10226
    %11763 = vadd.xlane.f32.xlu0 %v11762
    %v11764 = vpop.xlane.xlu0 %11763
    %v11765 = vmul.f32 %v11764, -0.088388346
    %v11766 = vmul.f32 %v9896, %v10388
    %11767 = vadd.xlane.f32.xlu0 %v11766
    %v11768 = vpop.xlane.xlu0 %11767
    %v11769 = vmul.f32 %v11768, -0.088388346
    %v11770 = vmul.f32 %v9896, %v10390
    %11771 = vadd.xlane.f32.xlu0 %v11770
    %v11772 = vpop.xlane.xlu0 %11771
    %v11773 = vmul.f32 %v11772, -0.088388346
    %v11774 = vmul.f32 %v9896, %v10552
    %11775 = vadd.xlane.f32.xlu0 %v11774
    %v11776 = vpop.xlane.xlu0 %11775
    %v11777 = vmul.f32 %v11776, -0.088388346
    %v11778 = vmul.f32 %v9896, %v10554
    %11779 = vadd.xlane.f32.xlu0 %v11778
    %v11780 = vpop.xlane.xlu0 %11779
    %v11781 = vmul.f32 %v11780, -0.088388346
    %v11782 = vmul.f32 %v9896, %v10716
    %11783 = vadd.xlane.f32.xlu0 %v11782
    %v11784 = vpop.xlane.xlu0 %11783
    %v11785 = vmul.f32 %v11784, -0.088388346
    %v11786 = vmul.f32 %v9896, %v10718
    %11787 = vadd.xlane.f32.xlu0 %v11786
    %v11788 = vpop.xlane.xlu0 %11787
    %v11789 = vmul.f32 %v11788, -0.088388346
    %v11790 = vmax.f32 %v11761, %v11765
    %v11791 = vmax.f32 %v11790, %v11769
    %v11792 = vmax.f32 %v11791, %v11773
    %v11793 = vmax.f32 %v11792, %v11777
    %v11794 = vmax.f32 %v11793, %v11781
    %v11795 = vmax.f32 %v11794, %v11785
    %v11796 = vmax.f32 %v11795, %v11789
    %v11797 = vsub.f32 %v11761, %v11796
    %v11798 = vmul.f32 %v11797, 1.442695
    %v11799 = vpow.pop %v11798
    %v11800 = vsub.f32 %v11765, %v11796
    %v11801 = vmul.f32 %v11800, 1.442695
    %v11802 = vpow.pop %v11801
    %v11803 = vsub.f32 %v11769, %v11796
    %v11804 = vmul.f32 %v11803, 1.442695
    %v11805 = vpow.pop %v11804
    %v11806 = vsub.f32 %v11773, %v11796
    %v11807 = vmul.f32 %v11806, 1.442695
    %v11808 = vpow.pop %v11807
    %v11809 = vsub.f32 %v11777, %v11796
    %v11810 = vmul.f32 %v11809, 1.442695
    %v11811 = vpow.pop %v11810
    %v11812 = vsub.f32 %v11781, %v11796
    %v11813 = vmul.f32 %v11812, 1.442695
    %v11814 = vpow.pop %v11813
    %v11815 = vsub.f32 %v11785, %v11796
    %v11816 = vmul.f32 %v11815, 1.442695
    %v11817 = vpow.pop %v11816
    %v11818 = vsub.f32 %v11789, %v11796
    %v11819 = vmul.f32 %v11818, 1.442695
    %v11820 = vpow.pop %v11819
    %v11821 = vadd.f32 %v11799, %v11802
    %v11822 = vadd.f32 %v11821, %v11805
    %v11823 = vadd.f32 %v11822, %v11808
    %v11824 = vadd.f32 %v11823, %v11811
    %v11825 = vadd.f32 %v11824, %v11814
    %v11826 = vadd.f32 %v11825, %v11817
    %v11827 = vadd.f32 %v11826, %v11820
    %v11828 = vrcp.pop %v11827
    %v11829 = vmul.f32 %v11799, %v11828
    %v11830 = vmul.f32 %v11829, %v10880
    %v11831 = vmul.f32 %v11802, %v11828
    %v11832 = vmul.f32 %v11831, %v10882
    %v11833 = vadd.f32 %v11830, %v11832
    %v11834 = vmul.f32 %v11805, %v11828
    %v11835 = vmul.f32 %v11834, %v11044
    %v11836 = vadd.f32 %v11833, %v11835
    %v11837 = vmul.f32 %v11808, %v11828
    %v11838 = vmul.f32 %v11837, %v11046
    %v11839 = vadd.f32 %v11836, %v11838
    %v11840 = vmul.f32 %v11811, %v11828
    %v11841 = vmul.f32 %v11840, %v11208
    %v11842 = vadd.f32 %v11839, %v11841
    %v11843 = vmul.f32 %v11814, %v11828
    %v11844 = vmul.f32 %v11843, %v11210
    %v11845 = vadd.f32 %v11842, %v11844
    %v11846 = vmul.f32 %v11817, %v11828
    %v11847 = vmul.f32 %v11846, %v11372
    %v11848 = vadd.f32 %v11845, %v11847
    %v11849 = vmul.f32 %v11820, %v11828
    %v11850 = vmul.f32 %v11849, %v11374
    %v11851 = vadd.f32 %v11848, %v11850
    %11852 = vst [vmem:[#allocation8 + $0x20] sm:$0xff] %v11851
    %v11853 = vmul.f32 %v9898, %v10224
    %11854 = vadd.xlane.f32.xlu0 %v11853
    %v11855 = vpop.xlane.xlu0 %11854
    %v11856 = vmul.f32 %v11855, -0.088388346
    %v11857 = vmul.f32 %v9898, %v10226
    %11858 = vadd.xlane.f32.xlu0 %v11857
    %v11859 = vpop.xlane.xlu0 %11858
    %v11860 = vmul.f32 %v11859, -0.088388346
    %v11861 = vmul.f32 %v9898, %v10388
    %11862 = vadd.xlane.f32.xlu0 %v11861
    %v11863 = vpop.xlane.xlu0 %11862
    %v11864 = vmul.f32 %v11863, -0.088388346
    %v11865 = vmul.f32 %v9898, %v10390
    %11866 = vadd.xlane.f32.xlu0 %v11865
    %v11867 = vpop.xlane.xlu0 %11866
    %v11868 = vmul.f32 %v11867, -0.088388346
    %v11869 = vmul.f32 %v9898, %v10552
    %11870 = vadd.xlane.f32.xlu0 %v11869
    %v11871 = vpop.xlane.xlu0 %11870
    %v11872 = vmul.f32 %v11871, -0.088388346
    %v11873 = vmul.f32 %v9898, %v10554
    %11874 = vadd.xlane.f32.xlu0 %v11873
    %v11875 = vpop.xlane.xlu0 %11874
    %v11876 = vmul.f32 %v11875, -0.088388346
    %v11877 = vmul.f32 %v9898, %v10716
    %11878 = vadd.xlane.f32.xlu0 %v11877
    %v11879 = vpop.xlane.xlu0 %11878
    %v11880 = vmul.f32 %v11879, -0.088388346
    %v11881 = vmul.f32 %v9898, %v10718
    %11882 = vadd.xlane.f32.xlu0 %v11881
    %v11883 = vpop.xlane.xlu0 %11882
    %v11884 = vmul.f32 %v11883, -0.088388346
    %v11885 = vmax.f32 %v11856, %v11860
    %v11886 = vmax.f32 %v11885, %v11864
    %v11887 = vmax.f32 %v11886, %v11868
    %v11888 = vmax.f32 %v11887, %v11872
    %v11889 = vmax.f32 %v11888, %v11876
    %v11890 = vmax.f32 %v11889, %v11880
    %v11891 = vmax.f32 %v11890, %v11884
    %v11892 = vsub.f32 %v11856, %v11891
    %v11893 = vmul.f32 %v11892, 1.442695
    %v11894 = vpow.pop %v11893
    %v11895 = vsub.f32 %v11860, %v11891
    %v11896 = vmul.f32 %v11895, 1.442695
    %v11897 = vpow.pop %v11896
    %v11898 = vsub.f32 %v11864, %v11891
    %v11899 = vmul.f32 %v11898, 1.442695
    %v11900 = vpow.pop %v11899
    %v11901 = vsub.f32 %v11868, %v11891
    %v11902 = vmul.f32 %v11901, 1.442695
    %v11903 = vpow.pop %v11902
    %v11904 = vsub.f32 %v11872, %v11891
    %v11905 = vmul.f32 %v11904, 1.442695
    %v11906 = vpow.pop %v11905
    %v11907 = vsub.f32 %v11876, %v11891
    %v11908 = vmul.f32 %v11907, 1.442695
    %v11909 = vpow.pop %v11908
    %v11910 = vsub.f32 %v11880, %v11891
    %v11911 = vmul.f32 %v11910, 1.442695
    %v11912 = vpow.pop %v11911
    %v11913 = vsub.f32 %v11884, %v11891
    %v11914 = vmul.f32 %v11913, 1.442695
    %v11915 = vpow.pop %v11914
    %v11916 = vadd.f32 %v11894, %v11897
    %v11917 = vadd.f32 %v11916, %v11900
    %v11918 = vadd.f32 %v11917, %v11903
    %v11919 = vadd.f32 %v11918, %v11906
    %v11920 = vadd.f32 %v11919, %v11909
    %v11921 = vadd.f32 %v11920, %v11912
    %v11922 = vadd.f32 %v11921, %v11915
    %v11923 = vrcp.pop %v11922
    %v11924 = vmul.f32 %v11894, %v11923
    %v11925 = vmul.f32 %v11924, %v10880
    %v11926 = vmul.f32 %v11897, %v11923
    %v11927 = vmul.f32 %v11926, %v10882
    %v11928 = vadd.f32 %v11925, %v11927
    %v11929 = vmul.f32 %v11900, %v11923
    %v11930 = vmul.f32 %v11929, %v11044
    %v11931 = vadd.f32 %v11928, %v11930
    %v11932 = vmul.f32 %v11903, %v11923
    %v11933 = vmul.f32 %v11932, %v11046
    %v11934 = vadd.f32 %v11931, %v11933
    %v11935 = vmul.f32 %v11906, %v11923
    %v11936 = vmul.f32 %v11935, %v11208
    %v11937 = vadd.f32 %v11934, %v11936
    %v11938 = vmul.f32 %v11909, %v11923
    %v11939 = vmul.f32 %v11938, %v11210
    %v11940 = vadd.f32 %v11937, %v11939
    %v11941 = vmul.f32 %v11912, %v11923
    %v11942 = vmul.f32 %v11941, %v11372
    %v11943 = vadd.f32 %v11940, %v11942
    %v11944 = vmul.f32 %v11915, %v11923
    %v11945 = vmul.f32 %v11944, %v11374
    %v11946 = vadd.f32 %v11943, %v11945
    %11947 = vst [vmem:[#allocation8 + $0x28] sm:$0xff] %v11946
    %v11948 = vmul.f32 %v10060, %v10224
    %11949 = vadd.xlane.f32.xlu0 %v11948
    %v11950 = vpop.xlane.xlu0 %11949
    %v11951 = vmul.f32 %v11950, -0.088388346
    %v11952 = vmul.f32 %v10060, %v10226
    %11953 = vadd.xlane.f32.xlu0 %v11952
    %v11954 = vpop.xlane.xlu0 %11953
    %v11955 = vmul.f32 %v11954, -0.088388346
    %v11956 = vmul.f32 %v10060, %v10388
    %11957 = vadd.xlane.f32.xlu0 %v11956
    %v11958 = vpop.xlane.xlu0 %11957
    %v11959 = vmul.f32 %v11958, -0.088388346
    %v11960 = vmul.f32 %v10060, %v10390
    %11961 = vadd.xlane.f32.xlu0 %v11960
    %v11962 = vpop.xlane.xlu0 %11961
    %v11963 = vmul.f32 %v11962, -0.088388346
    %v11964 = vmul.f32 %v10060, %v10552
    %11965 = vadd.xlane.f32.xlu0 %v11964
    %v11966 = vpop.xlane.xlu0 %11965
    %v11967 = vmul.f32 %v11966, -0.088388346
    %v11968 = vmul.f32 %v10060, %v10554
    %11969 = vadd.xlane.f32.xlu0 %v11968
    %v11970 = vpop.xlane.xlu0 %11969
    %v11971 = vmul.f32 %v11970, -0.088388346
    %v11972 = vmul.f32 %v10060, %v10716
    %11973 = vadd.xlane.f32.xlu0 %v11972
    %v11974 = vpop.xlane.xlu0 %11973
    %v11975 = vmul.f32 %v11974, -0.088388346
    %v11976 = vmul.f32 %v10060, %v10718
    %11977 = vadd.xlane.f32.xlu0 %v11976
    %v11978 = vpop.xlane.xlu0 %11977
    %v11979 = vmul.f32 %v11978, -0.088388346
    %v11980 = vmax.f32 %v11951, %v11955
    %v11981 = vmax.f32 %v11980, %v11959
    %v11982 = vmax.f32 %v11981, %v11963
    %v11983 = vmax.f32 %v11982, %v11967
    %v11984 = vmax.f32 %v11983, %v11971
    %v11985 = vmax.f32 %v11984, %v11975
    %v11986 = vmax.f32 %v11985, %v11979
    %v11987 = vsub.f32 %v11951, %v11986
    %v11988 = vmul.f32 %v11987, 1.442695
    %v11989 = vpow.pop %v11988
    %v11990 = vsub.f32 %v11955, %v11986
    %v11991 = vmul.f32 %v11990, 1.442695
    %v11992 = vpow.pop %v11991
    %v11993 = vsub.f32 %v11959, %v11986
    %v11994 = vmul.f32 %v11993, 1.442695
    %v11995 = vpow.pop %v11994
    %v11996 = vsub.f32 %v11963, %v11986
    %v11997 = vmul.f32 %v11996, 1.442695
    %v11998 = vpow.pop %v11997
    %v11999 = vsub.f32 %v11967, %v11986
    %v12000 = vmul.f32 %v11999, 1.442695
    %v12001 = vpow.pop %v12000
    %v12002 = vsub.f32 %v11971, %v11986
    %v12003 = vmul.f32 %v12002, 1.442695
    %v12004 = vpow.pop %v12003
    %v12005 = vsub.f32 %v11975, %v11986
    %v12006 = vmul.f32 %v12005, 1.442695
    %v12007 = vpow.pop %v12006
    %v12008 = vsub.f32 %v11979, %v11986
    %v12009 = vmul.f32 %v12008, 1.442695
    %v12010 = vpow.pop %v12009
    %v12011 = vadd.f32 %v11989, %v11992
    %v12012 = vadd.f32 %v12011, %v11995
    %v12013 = vadd.f32 %v12012, %v11998
    %v12014 = vadd.f32 %v12013, %v12001
    %v12015 = vadd.f32 %v12014, %v12004
    %v12016 = vadd.f32 %v12015, %v12007
    %v12017 = vadd.f32 %v12016, %v12010
    %v12018 = vrcp.pop %v12017
    %v12019 = vmul.f32 %v11989, %v12018
    %v12020 = vmul.f32 %v12019, %v10880
    %v12021 = vmul.f32 %v11992, %v12018
    %v12022 = vmul.f32 %v12021, %v10882
    %v12023 = vadd.f32 %v12020, %v12022
    %v12024 = vmul.f32 %v11995, %v12018
    %v12025 = vmul.f32 %v12024, %v11044
    %v12026 = vadd.f32 %v12023, %v12025
    %v12027 = vmul.f32 %v11998, %v12018
    %v12028 = vmul.f32 %v12027, %v11046
    %v12029 = vadd.f32 %v12026, %v12028
    %v12030 = vmul.f32 %v12001, %v12018
    %v12031 = vmul.f32 %v12030, %v11208
    %v12032 = vadd.f32 %v12029, %v12031
    %v12033 = vmul.f32 %v12004, %v12018
    %v12034 = vmul.f32 %v12033, %v11210
    %v12035 = vadd.f32 %v12032, %v12034
    %v12036 = vmul.f32 %v12007, %v12018
    %v12037 = vmul.f32 %v12036, %v11372
    %v12038 = vadd.f32 %v12035, %v12037
    %v12039 = vmul.f32 %v12010, %v12018
    %v12040 = vmul.f32 %v12039, %v11374
    %v12041 = vadd.f32 %v12038, %v12040
    %12042 = vst [vmem:[#allocation8 + $0x30] sm:$0xff] %v12041
    %v12043 = vmul.f32 %v10062, %v10224
    %12044 = vadd.xlane.f32.xlu0 %v12043
    %v12045 = vpop.xlane.xlu0 %12044
    %v12046 = vmul.f32 %v12045, -0.088388346
    %v12047 = vmul.f32 %v10062, %v10226
    %12048 = vadd.xlane.f32.xlu0 %v12047
    %v12049 = vpop.xlane.xlu0 %12048
    %v12050 = vmul.f32 %v12049, -0.088388346
    %v12051 = vmul.f32 %v10062, %v10388
    %12052 = vadd.xlane.f32.xlu0 %v12051
    %v12053 = vpop.xlane.xlu0 %12052
    %v12054 = vmul.f32 %v12053, -0.088388346
    %v12055 = vmul.f32 %v10062, %v10390
    %12056 = vadd.xlane.f32.xlu0 %v12055
    %v12057 = vpop.xlane.xlu0 %12056
    %v12058 = vmul.f32 %v12057, -0.088388346
    %v12059 = vmul.f32 %v10062, %v10552
    %12060 = vadd.xlane.f32.xlu0 %v12059
    %v12061 = vpop.xlane.xlu0 %12060
    %v12062 = vmul.f32 %v12061, -0.088388346
    %v12063 = vmul.f32 %v10062, %v10554
    %12064 = vadd.xlane.f32.xlu0 %v12063
    %v12065 = vpop.xlane.xlu0 %12064
    %v12066 = vmul.f32 %v12065, -0.088388346
    %v12067 = vmul.f32 %v10062, %v10716
    %12068 = vadd.xlane.f32.xlu0 %v12067
    %v12069 = vpop.xlane.xlu0 %12068
    %v12070 = vmul.f32 %v12069, -0.088388346
    %v12071 = vmul.f32 %v10062, %v10718
    %12072 = vadd.xlane.f32.xlu0 %v12071
    %v12073 = vpop.xlane.xlu0 %12072
    %v12074 = vmul.f32 %v12073, -0.088388346
    %v12075 = vmax.f32 %v12046, %v12050
    %v12076 = vmax.f32 %v12075, %v12054
    %v12077 = vmax.f32 %v12076, %v12058
    %v12078 = vmax.f32 %v12077, %v12062
    %v12079 = vmax.f32 %v12078, %v12066
    %v12080 = vmax.f32 %v12079, %v12070
    %v12081 = vmax.f32 %v12080, %v12074
    %v12082 = vsub.f32 %v12046, %v12081
    %v12083 = vmul.f32 %v12082, 1.442695
    %v12084 = vpow.pop %v12083
    %v12085 = vsub.f32 %v12050, %v12081
    %v12086 = vmul.f32 %v12085, 1.442695
    %v12087 = vpow.pop %v12086
    %v12088 = vsub.f32 %v12054, %v12081
    %v12089 = vmul.f32 %v12088, 1.442695
    %v12090 = vpow.pop %v12089
    %v12091 = vsub.f32 %v12058, %v12081
    %v12092 = vmul.f32 %v12091, 1.442695
    %v12093 = vpow.pop %v12092
    %v12094 = vsub.f32 %v12062, %v12081
    %v12095 = vmul.f32 %v12094, 1.442695
    %v12096 = vpow.pop %v12095
    %v12097 = vsub.f32 %v12066, %v12081
    %v12098 = vmul.f32 %v12097, 1.442695
    %v12099 = vpow.pop %v12098
    %v12100 = vsub.f32 %v12070, %v12081
    %v12101 = vmul.f32 %v12100, 1.442695
    %v12102 = vpow.pop %v12101
    %v12103 = vsub.f32 %v12074, %v12081
    %v12104 = vmul.f32 %v12103, 1.442695
    %v12105 = vpow.pop %v12104
    %v12106 = vadd.f32 %v12084, %v12087
    %v12107 = vadd.f32 %v12106, %v12090
    %v12108 = vadd.f32 %v12107, %v12093
    %v12109 = vadd.f32 %v12108, %v12096
    %v12110 = vadd.f32 %v12109, %v12099
    %v12111 = vadd.f32 %v12110, %v12102
    %v12112 = vadd.f32 %v12111, %v12105
    %v12113 = vrcp.pop %v12112
    %v12114 = vmul.f32 %v12084, %v12113
    %v12115 = vmul.f32 %v12114, %v10880
    %v12116 = vmul.f32 %v12087, %v12113
    %v12117 = vmul.f32 %v12116, %v10882
    %v12118 = vadd.f32 %v12115, %v12117
    %v12119 = vmul.f32 %v12090, %v12113
    %v12120 = vmul.f32 %v12119, %v11044
    %v12121 = vadd.f32 %v12118, %v12120
    %v12122 = vmul.f32 %v12093, %v12113
    %v12123 = vmul.f32 %v12122, %v11046
    %v12124 = vadd.f32 %v12121, %v12123
    %v12125 = vmul.f32 %v12096, %v12113
    %v12126 = vmul.f32 %v12125, %v11208
    %v12127 = vadd.f32 %v12124, %v12126
    %v12128 = vmul.f32 %v12099, %v12113
    %v12129 = vmul.f32 %v12128, %v11210
    %v12130 = vadd.f32 %v12127, %v12129
    %v12131 = vmul.f32 %v12102, %v12113
    %v12132 = vmul.f32 %v12131, %v11372
    %v12133 = vadd.f32 %v12130, %v12132
    %v12134 = vmul.f32 %v12105, %v12113
    %v12135 = vmul.f32 %v12134, %v11374
    %v12136 = vadd.f32 %v12133, %v12135
    %12137 = vst [vmem:[#allocation8 + $0x38] sm:$0xff] %v12136
    // Predicated region
    $region26: #{tpu_custom_call.1} parent=1 // pred_check
      _
    $region27: #{tpu_custom_call.1} parent=1 // pred_check_branch
      %12139 = sbr.rel (0) target = $region29
    $region28: #{tpu_custom_call.1} parent=1 // pred_region
      %s12141 = ssub.s32 1024, 1024
      %12142 = vsyncadd [#allocation4], %s12141
      %s12144 = sshll.u32 [#allocation8], 4
      %s12145 = int_to_ptr.vmem [resolvable:$true] %s12144
      %12147 = dma.vmem_to_hbm [thread:$0]  %s12145, 1024, %s3, [#allocation4]
    $region29: #{tpu_custom_call.1} parent=1 // pred_fallthru
      _
    // Predicated region
    $region30: #{tpu_custom_call.1} parent=1 // pred_check
      _
    $region31: #{tpu_custom_call.1} parent=1 // pred_check_branch
      %12149 = sbr.rel (0) target = $region33
    $region32: #{tpu_custom_call.1} parent=1 // pred_region
      %12150 = dma.done [#allocation4], 1024
    $region33: #{tpu_custom_call.1} parent=1 // pred_fallthru
      _
    %12151 = vsyncpa [#allocation3], 1
    %12152 = vsyncpa [#allocation6], 1
    %12153 = vsyncpa [#allocation4], 1

</llo_original>
